<compile_context>
chip_gen: v7x
topology: tpu7x:2x2x1
jax: 0.10.0
libtpu: 0.0.40
codegen_flags: <defaults>
</compile_context>

<pallas_src>
import jax
import jax.numpy as jnp
from jax.experimental import pallas as pl
from jax.experimental.pallas import tpu as pltpu

# Hidden sizes fixed by the PyTorch module.
H1, H2, H3, H4, H5 = 4096, 2048, 128, 64, 1
N_SPLIT = 2       # parallel split of the layer-2 output (H2) dimension
MAX_TK = 2048     # cap so the double-buffered W2 tile stays VMEM-friendly on v7x


def _mlp_head_kernel(x_ref, b1_ref, w1_ref, w2_ref, b2_ref, h2_ref, h2_acc):
    """Layers 1-2: relu(relu(x@W1+b1) @ W2 + b2).

    Grid = (j: H2 halves, parallel) x (k: split-K over H1, arbitrary).
    """
    k = pl.program_id(1)

    @pl.when(k == 0)
    def _():
        h2_acc[...] = jnp.zeros_like(h2_acc)

    # Layer 1: one tk-wide slice of the H1 hidden units, + bias + ReLU.
    h1 = jnp.dot(x_ref[...], w1_ref[...], preferred_element_type=jnp.float32)
    h1 = jnp.maximum(h1 + b1_ref[k], 0.0)          # b1 resident, sliced per k

    # Layer 2: partial reduction over this tk slice, into this core's H2 half.
    h2_acc[...] += jnp.dot(h1.astype(w2_ref.dtype), w2_ref[...],
                           preferred_element_type=jnp.float32)

    @pl.when(k == pl.num_programs(1) - 1)
    def _():
        h2_ref[...] = jnp.maximum(h2_acc[...] + b2_ref[...], 0.0).astype(h2_ref.dtype)


def _mlp_tail_kernel(h2_ref, w3_ref, b3_ref, w4_ref, b4_ref, w5_ref, b5_ref, o_ref):
    """Layers 3-5 (tiny, fully VMEM-resident, single grid step)."""
    h3 = jnp.dot(h2_ref[...].astype(w3_ref.dtype), w3_ref[...],
                 preferred_element_type=jnp.float32)
    h3 = jnp.maximum(h3 + b3_ref[...], 0.0)
    h4 = jnp.dot(h3.astype(w4_ref.dtype), w4_ref[...],
                 preferred_element_type=jnp.float32)
    h4 = jnp.maximum(h4 + b4_ref[...], 0.0)
    h5 = jnp.dot(h4.astype(w5_ref.dtype), w5_ref[...],
                 preferred_element_type=jnp.float32) + b5_ref[...]
    o_ref[...] = h5.astype(o_ref.dtype)


def nonlinear_regression_forward(x, params, *, tk=2048, stream_dtype=jnp.bfloat16):
    """Forward pass of the 5-layer MLP.

    x: (M, input_dim) f32.  params: [(W, b)] with W stored (in, out), so each
    layer is y = x @ W + b.  stream_dtype controls the dtype the big W1/W2/W3
    are streamed in (bf16 halves HBM traffic; jnp.float32 = exact mode).
    """
    (w1, b1), (w2, b2), (w3, b3), (w4, b4), (w5, b5) = params
    M, D = x.shape
    assert w1.shape == (D, H1) and w2.shape == (H1, H2)
    assert w3.shape == (H2, H3) and w4.shape == (H3, H4) and w5.shape == (H4, H5)
    assert H2 % N_SPLIT == 0

    # Clamp tk: must divide H1 and never exceed MAX_TK (a tk=H1 fallback would
    # request a 64 MB double-buffered W2 tile -> OOM on v7x).
    tk = min(tk, MAX_TK, H1)
    while H1 % tk != 0:
        tk //= 2
    gk = H1 // tk
    hh = H2 // N_SPLIT
    wbytes = jnp.dtype(stream_dtype).itemsize

    # Big weights streamed in stream_dtype; activations cast to match at the
    # MXU inputs, all accumulation stays f32.
    x_s = x.astype(stream_dtype)
    w1_s = w1.astype(stream_dtype)
    w2_s = w2.astype(stream_dtype)
    w3_s = w3.astype(stream_dtype)
    # Biases stay f32 (added to f32 accumulators).  b1 reshaped so the whole
    # vector is VMEM-resident and indexed per k-step (no tiny per-step DMA).
    b1_r = b1.reshape(gk, 1, tk).astype(jnp.float32)
    b2_r = b2.reshape(1, H2).astype(jnp.float32)
    b3_r = b3.reshape(1, H3).astype(jnp.float32)
    b4_r = b4.reshape(1, H4).astype(jnp.float32)
    b5_r = b5.reshape(1, H5).astype(jnp.float32)

    head_cost = pl.CostEstimate(
        flops=2 * M * (D * H1 + H1 * H2),
        transcendentals=0,
        bytes_accessed=(wbytes * (D * H1 + H1 * H2) + 4 * (H1 + H2)
                        + wbytes * M * D + 4 * M * H2),
    )
    h2 = pl.pallas_call(
        _mlp_head_kernel,
        out_shape=jax.ShapeDtypeStruct((M, H2), jnp.float32),
        grid_spec=pltpu.PrefetchScalarGridSpec(
            num_scalar_prefetch=0,
            grid=(N_SPLIT, gk),                                 # (parallel, reduction)
            in_specs=[
                pl.BlockSpec((M, D), lambda j, k: (0, 0)),          # x   (resident)
                pl.BlockSpec((gk, 1, tk), lambda j, k: (0, 0, 0)),  # b1  (resident)
                pl.BlockSpec((D, tk), lambda j, k: (0, k)),         # W1  (streamed)
                pl.BlockSpec((tk, hh), lambda j, k: (k, j)),        # W2  (streamed)
                pl.BlockSpec((1, hh), lambda j, k: (0, j)),         # b2 half
            ],
            out_specs=pl.BlockSpec((M, hh), lambda j, k: (0, j)),
            scratch_shapes=[pltpu.VMEM((M, hh), jnp.float32)],
        ),
        compiler_params=pltpu.CompilerParams(
            dimension_semantics=("parallel", "arbitrary"),
            vmem_limit_bytes=48 * 1024 * 1024,
        ),
        cost_estimate=head_cost,
    )(x_s, b1_r, w1_s, w2_s, b2_r)

    tail_cost = pl.CostEstimate(
        flops=2 * M * (H2 * H3 + H3 * H4 + H4 * H5),
        transcendentals=0,
        bytes_accessed=(wbytes * H2 * H3 + 4 * (H3 * H4 + H4 * H5)
                        + 4 * (H3 + H4 + H5) + 4 * M * (H2 + H5)),
    )
    out = pl.pallas_call(
        _mlp_tail_kernel,
        out_shape=jax.ShapeDtypeStruct((M, H5), x.dtype),
        cost_estimate=tail_cost,
    )(h2, w3_s, b3_r, w4.astype(jnp.float32), b4_r, w5.astype(jnp.float32), b5_r)
    return out


def init_params(input_dim, key):
    """Mimics nn.Linear's U(-1/sqrt(fan_in), +1/sqrt(fan_in)) init.
    Weights stored as (in, out) so the kernel computes y = x @ W + b."""
    dims = [input_dim, H1, H2, H3, H4, H5]
    params = []
    for i in range(5):
        fan_in, fan_out = dims[i], dims[i + 1]
        key, kw, kb = jax.random.split(key, 3)
        bound = 1.0 / float(fan_in) ** 0.5
        w = jax.random.uniform(kw, (fan_in, fan_out), jnp.float32, -bound, bound)
        b = jax.random.uniform(kb, (fan_out,), jnp.float32, -bound, bound)
        params.append((w, b))
    return params


def _ref_forward(x, params, stream_dtype):
    """Pure-JAX reference using the same mixed precision as the kernel."""
    (w1, b1), (w2, b2), (w3, b3), (w4, b4), (w5, b5) = params
    sd, f32 = stream_dtype, jnp.float32
    h = jnp.maximum(jnp.dot(x.astype(sd), w1.astype(sd), preferred_element_type=f32) + b1, 0.0)
    h = jnp.maximum(jnp.dot(h.astype(sd), w2.astype(sd), preferred_element_type=f32) + b2, 0.0)
    h = jnp.maximum(jnp.dot(h.astype(sd), w3.astype(sd), preferred_element_type=f32) + b3, 0.0)
    h = jnp.maximum(jnp.dot(h, w4, preferred_element_type=f32) + b4, 0.0)
    return jnp.dot(h, w5, preferred_element_type=f32) + b5


if __name__ == "__main__":
    key = jax.random.PRNGKey(0)
    key, kx, kp = jax.random.split(key, 3)

    batch, input_dim = 8, 32
    x = jax.random.normal(kx, (batch, input_dim), dtype=jnp.float32)
    params = init_params(input_dim, kp)

    # Default fast path: bf16 weight streaming, f32 accumulation.
    out_bf16 = nonlinear_regression_forward(x, params)
    jax.block_until_ready(out_bf16)
    assert out_bf16.shape == (batch, 1)
    ref_bf16 = _ref_forward(x, params, jnp.bfloat16)
    assert jnp.allclose(out_bf16, ref_bf16, atol=2e-3, rtol=2e-3)

    # Exact f32 mode matches the full-precision (PyTorch) reference tightly.
    out_f32 = nonlinear_regression_forward(x, params, stream_dtype=jnp.float32)
    jax.block_until_ready(out_f32)
    ref_f32 = _ref_forward(x, params, jnp.float32)
    assert jnp.allclose(out_f32, ref_f32, atol=2e-4, rtol=2e-4)

    # bf16-streamed output stays close to the f32 reference as well.
    assert jnp.allclose(out_bf16, ref_f32, atol=5e-2, rtol=5e-2)

    print("KERNEL_OK")
</pallas_src>

<mosaic_0001>
module attributes {stable_mosaic.version = 11 : i64} {
  func.func @_mlp_head_kernel(%arg0: i32, %arg1: i32, %arg2: memref<8x32xbf16, #tpu.memory_space<vmem>>, %arg3: memref<2x1x2048xf32, #tpu.memory_space<vmem>>, %arg4: memref<32x2048xbf16, #tpu.memory_space<vmem>>, %arg5: memref<2048x1024xbf16, #tpu.memory_space<vmem>>, %arg6: memref<1x1024xf32, #tpu.memory_space<vmem>>, %arg7: memref<8x1024xf32, #tpu.memory_space<vmem>>, %arg8: memref<8x1024xf32, #tpu.memory_space<vmem>>) attributes {dimension_semantics = [#tpu.dimension_semantics<parallel>, #tpu.dimension_semantics<arbitrary>], iteration_bounds = array<i64: 2, 2>, scalar_prefetch = 0 : i64, scratch_operands = 1 : i64, tpu.core_type = #tpu.core_type<tc>, window_params = [{pipeline_mode = #tpu.pipeline_mode<synchronous>, transform_indices = @transform_0, window_bounds = array<i64: 8, 32>}, {pipeline_mode = #tpu.pipeline_mode<synchronous>, transform_indices = @transform_1, window_bounds = array<i64: 2, 1, 2048>}, {transform_indices = @transform_2, window_bounds = array<i64: 32, 2048>}, {transform_indices = @transform_3, window_bounds = array<i64: 2048, 1024>}, {transform_indices = @transform_4, window_bounds = array<i64: 1, 1024>}, {transform_indices = @transform_5, window_bounds = array<i64: 8, 1024>}]} {
    %c0_i32 = arith.constant 0 : i32
    %0 = arith.cmpi eq, %arg1, %c0_i32 : i32
    %1 = arith.extui %0 : i1 to i32
    %c0_i32_0 = arith.constant 0 : i32
    %2 = arith.cmpi ne, %1, %c0_i32_0 : i32
    scf.if %2 {
      %cst_15 = arith.constant 0.000000e+00 : f32
      %22 = vector.broadcast %cst_15 : f32 to vector<8x1024xf32>
      %c0_16 = arith.constant 0 : index
      %c0_17 = arith.constant 0 : index
      %23 = vector.load %arg8[%c0_16, %c0_17] : memref<8x1024xf32, #tpu.memory_space<vmem>>, vector<8x1024xf32>
      tpu.vector_store %arg8[%c0_16, %c0_17], %22 {strides = array<i32>} : memref<8x1024xf32, #tpu.memory_space<vmem>>, vector<8x1024xf32>,
    } else {
    }
    %c0 = arith.constant 0 : index
    %c0_1 = arith.constant 0 : index
    %3 = vector.load %arg2[%c0, %c0_1] : memref<8x32xbf16, #tpu.memory_space<vmem>>, vector<8x32xbf16>
    %c0_2 = arith.constant 0 : index
    %c0_3 = arith.constant 0 : index
    %4 = vector.load %arg4[%c0_2, %c0_3] : memref<32x2048xbf16, #tpu.memory_space<vmem>>, vector<32x2048xbf16>
    %cst = arith.constant dense<0.000000e+00> : vector<8x2048xf32>
    %5 = tpu.matmul %3, %4, %cst {dimension_numbers = #tpu.dot_dimension_numbers<[1], [0], [0], [1], [0, 0, 1, 1], [], []>} : vector<8x32xbf16>, vector<32x2048xbf16>, vector<8x2048xf32> -> vector<8x2048xf32>
    %6 = arith.index_cast %arg1 : i32 to index
    %c0_4 = arith.constant 0 : index
    %c0_5 = arith.constant 0 : index
    %7 = vector.load %arg3[%6, %c0_4, %c0_5] : memref<2x1x2048xf32, #tpu.memory_space<vmem>>, vector<1x1x2048xf32>
    %8 = vector.shape_cast %7 : vector<1x1x2048xf32> to vector<1x2048xf32>
    %9 = vector.broadcast %8 : vector<1x2048xf32> to vector<8x2048xf32>
    %10 = arith.addf %5, %9 : vector<8x2048xf32>
    %cst_6 = arith.constant 0.000000e+00 : f32
    %11 = vector.broadcast %cst_6 : f32 to vector<8x2048xf32>
    %12 = arith.maximumf %10, %11 : vector<8x2048xf32>
    %c0_7 = arith.constant 0 : index
    %c0_8 = arith.constant 0 : index
    %13 = vector.load %arg8[%c0_7, %c0_8] : memref<8x1024xf32, #tpu.memory_space<vmem>>, vector<8x1024xf32>
    %14 = arith.truncf %12 : vector<8x2048xf32> to vector<8x2048xbf16>
    %c0_9 = arith.constant 0 : index
    %c0_10 = arith.constant 0 : index
    %15 = vector.load %arg5[%c0_9, %c0_10] : memref<2048x1024xbf16, #tpu.memory_space<vmem>>, vector<2048x1024xbf16>
    %cst_11 = arith.constant dense<0.000000e+00> : vector<8x1024xf32>
    %16 = tpu.matmul %14, %15, %cst_11 {dimension_numbers = #tpu.dot_dimension_numbers<[1], [0], [0], [1], [0, 0, 1, 1], [], []>} : vector<8x2048xbf16>, vector<2048x1024xbf16>, vector<8x1024xf32> -> vector<8x1024xf32>
    %17 = arith.addf %13, %16 : vector<8x1024xf32>
    %c0_12 = arith.constant 0 : index
    %c0_13 = arith.constant 0 : index
    %18 = vector.load %arg8[%c0_12, %c0_13] : memref<8x1024xf32, #tpu.memory_space<vmem>>, vector<8x1024xf32>
    tpu.vector_store %arg8[%c0_12, %c0_13], %17 {strides = array<i32>} : memref<8x1024xf32, #tpu.memory_space<vmem>>, vector<8x1024xf32>,
    %c1_i32 = arith.constant 1 : i32
    %19 = arith.cmpi eq, %arg1, %c1_i32 : i32
    %20 = arith.extui %19 : i1 to i32
    %c0_i32_14 = arith.constant 0 : i32
    %21 = arith.cmpi ne, %20, %c0_i32_14 : i32
    scf.if %21 {
      %c0_15 = arith.constant 0 : index
      %c0_16 = arith.constant 0 : index
      %22 = vector.load %arg8[%c0_15, %c0_16] : memref<8x1024xf32, #tpu.memory_space<vmem>>, vector<8x1024xf32>
      %c0_17 = arith.constant 0 : index
      %c0_18 = arith.constant 0 : index
      %23 = vector.load %arg6[%c0_17, %c0_18] : memref<1x1024xf32, #tpu.memory_space<vmem>>, vector<1x1024xf32>
      %24 = vector.broadcast %23 : vector<1x1024xf32> to vector<8x1024xf32>
      %25 = arith.addf %22, %24 : vector<8x1024xf32>
      %cst_19 = arith.constant 0.000000e+00 : f32
      %26 = vector.broadcast %cst_19 : f32 to vector<8x1024xf32>
      %27 = arith.maximumf %25, %26 : vector<8x1024xf32>
      %c0_20 = arith.constant 0 : index
      %c0_21 = arith.constant 0 : index
      %28 = vector.load %arg7[%c0_20, %c0_21] : memref<8x1024xf32, #tpu.memory_space<vmem>>, vector<8x1024xf32>
      tpu.vector_store %arg7[%c0_20, %c0_21], %27 {strides = array<i32>} : memref<8x1024xf32, #tpu.memory_space<vmem>>, vector<8x1024xf32>,
    } else {
    }
    return
  }
  func.func @transform_0(%arg0: i32, %arg1: i32) -> (i32, i32) {
    %c0_i32 = arith.constant 0 : i32
    %c0_i32_0 = arith.constant 0 : i32
    %c0_i32_1 = arith.constant 0 : i32
    return %c0_i32, %c0_i32_0 : i32, i32
  }
  func.func @transform_1(%arg0: i32, %arg1: i32) -> (i32, i32, i32) {
    %c0_i32 = arith.constant 0 : i32
    %c0_i32_0 = arith.constant 0 : i32
    %c0_i32_1 = arith.constant 0 : i32
    %c0_i32_2 = arith.constant 0 : i32
    return %c0_i32, %c0_i32_0, %c0_i32_1 : i32, i32, i32
  }
  func.func @transform_2(%arg0: i32, %arg1: i32) -> (i32, i32) {
    %c0_i32 = arith.constant 0 : i32
    %c0_i32_0 = arith.constant 0 : i32
    return %c0_i32, %arg1 : i32, i32
  }
  func.func @transform_3(%arg0: i32, %arg1: i32) -> (i32, i32) {
    %c0_i32 = arith.constant 0 : i32
    return %arg1, %arg0 : i32, i32
  }
  func.func @transform_4(%arg0: i32, %arg1: i32) -> (i32, i32) {
    %c0_i32 = arith.constant 0 : i32
    %c0_i32_0 = arith.constant 0 : i32
    return %c0_i32, %arg0 : i32, i32
  }
  func.func @transform_5(%arg0: i32, %arg1: i32) -> (i32, i32) {
    %c0_i32 = arith.constant 0 : i32
    %c0_i32_0 = arith.constant 0 : i32
    return %c0_i32, %arg0 : i32, i32
  }
}

</mosaic_0001>

<llo_original>
// kernel: tpu_custom_call.1
$region0: #{tpu_custom_call.1}
  #allocation0 [shape = 'u32[]', space=smem, size = 0x4, offset = 0x4, fixed_abs, tag = 'smem constant byte address 0x4 - core index']
  #allocation1 [shape = 'u32[144,128]{1,0:T(1,128)}', space=vmem, size = 0x12000, scoped, tag = 'internal scratch']
  #allocation2 [shape = 'f32[8,1024]{1,0:T(8,128)}', space=vmem, size = 0x8000, scoped, tag = 'scratch operand']
  %s0 = inlined_call_operand.hbm [shape: bf16[8,32], index: 0, kind: input, shape index: {}]
  %s1 = inlined_call_operand.hbm [shape: f32[2,1,2048], index: 1, kind: input, shape index: {}]
  %s2 = inlined_call_operand.hbm [shape: bf16[32,4096], index: 2, kind: input, shape index: {}]
  %s3 = inlined_call_operand.hbm [shape: bf16[4096,2048], index: 3, kind: input, shape index: {}]
  %s4 = inlined_call_operand.hbm [shape: f32[1,2048], index: 4, kind: input, shape index: {}]
  %s5 = inlined_call_operand.hbm [shape: f32[8,2048], index: 5, kind: output, shape index: {}]
  %s6 = sld [smem:[#allocation0]]
  $region81: #{tpu_custom_call.1} parent=0
    _
  %s8 = ssub.s32 1, %s6
  %s9 = scalar_select 0, %s8, %s6
  $region1: #{tpu_custom_call.1} parent=0
    #allocation3 [shape = 'u8[2048]{0}', space=vmem, size = 0x800, scoped, tag = 'input window, operand 0, single buffered']
    #allocation4 [shape = 's32[2]{0}', space=sflag, size = 0x8, scoped, tag = 'scoped memory for tpu_custom_call.1']
    #allocation5 [shape = 's32[2]{0}', space=sflag, size = 0x8, scoped, tag = 'scoped memory for tpu_custom_call.1']
    #allocation6 [shape = 'u8[16384]{0}', space=vmem, size = 0x4000, scoped, tag = 'input window, operand 1, single buffered']
    #allocation7 [shape = 's32[1]{0}', space=sflag, size = 0x4, scoped, tag = 'scoped memory for tpu_custom_call.1']
    #allocation8 [shape = 'u8[262144]{0}', space=vmem, size = 0x40000, scoped, tag = 'input window, operand 2']
    #allocation9 [shape = 'u8[8388608]{0}', space=vmem, size = 0x800000, scoped, tag = 'input window, operand 3']
    #allocation10 [shape = 'u8[8192]{0}', space=vmem, size = 0x2000, scoped, tag = 'input window, operand 4']
    #allocation11 [shape = 'u8[65536]{0}', space=vmem, size = 0x10000, scoped, tag = 'output window, operand 0']
    %10 = vsyncpa [#allocation4], 0
    %11 = vsyncpa [#allocation7], 0
    %12 = vsyncpa [#allocation5], 0
    %s13 = scalar_lea.sflag [#allocation5], 1
    %14 = vsyncpa %s13, 0
    loop: start=0, step=1, limit=6
    $region2: #{tpu_custom_call.1} parent=1 // loop_pre_header
      _
    $region3: #{tpu_custom_call.1} parent=1 // loop_header
      %s16 = sphi 0, %s20
      %p17 = scmp.ge.s32.totalorder %s16, 6
      %s23 = sphi 0, %s35
      %s24 = sphi 0, %s31
      %s25 = sphi 0, %s23
      %s26 = sphi 0, %s24
      %s27 = sphi 0, %s25
      %s28 = sphi 0, %s26
      %s36 = sphi 0, %s36
      %s38 = sphi 0, %s36
      %s39 = sphi 0, %s38
      %s53 = sphi 0, %s39
      %s57 = sphi 0, %s57
      %s59 = sphi 0, %s57
      %s60 = sphi 0, %s59
      %s74 = sphi 0, %s60
      %s80 = sphi 0, %s82
      %s83 = sphi 0, %s80
      %s84 = sphi 0, %s83
      %s100 = sphi 0, %s84
      %s108 = sphi 0, %s110
      %s111 = sphi 0, %s108
      %s112 = sphi 0, %s111
      %s128 = sphi 0, %s112
      %s134 = sphi 0, %s136
      %s137 = sphi 0, %s134
      %s138 = sphi 0, %s137
      %s154 = sphi 0, %s138
      %s160 = sphi 0, %s162
      %s163 = sphi 0, %s160
      %s164 = sphi 0, %s163
      %s180 = sphi 0, %s164
    $region4: #{tpu_custom_call.1} parent=1 // loop_header_branch
      %19 = sbr.rel (%p17) target = $region8
    $region5: #{tpu_custom_call.1} parent=1 // loop_body
      %s21 = ssub.s32 %s16, 1
      %s22 = ssub.s32 %s16, 2
      %s29 = sadd.s32 1, %s24
      %p30 = scmp.ge.s32.totalorder %s29, 2
      %s31 = scalar_select %p30, 0, %s29
      %s32 = sadd.s32 1, %s23
      %s33 = scalar_select %p30, %s32, %s23
      %p34 = scmp.ge.s32.totalorder %s33, 2
      %s35 = scalar_select %p34, 0, %s33
      %s37 = sadd.s32 %s36, 1
      %p40 = scmp.eq.s32.totalorder %s16, 3
      %p41 = scmp.ne.s32.totalorder %s36, %s38
      %p42 = scmp.eq.s32.totalorder %s16, 0
      %p43 = por %p41, %p42
      %p44 = scmp.ne.s32.totalorder %s36, %s38
      %p45 = scmp.eq.s32.totalorder %s21, 3
      %p46 = por %p44, %p45
      %p47 = scmp.ne.s32.totalorder %s38, %s39
      %p48 = scmp.eq.s32.totalorder %s21, 0
      %p49 = por %p47, %p48
      %p50 = scmp.ne.s32.totalorder %s38, %s39
      %p51 = scmp.eq.s32.totalorder %s22, 3
      %p52 = por %p50, %p51
      %p54 = scmp.ne.s32.totalorder %s39, %s53
      %p55 = scmp.eq.s32.totalorder %s22, 0
      %p56 = por %p54, %p55
      %s58 = sadd.s32 %s57, 1
      %p61 = scmp.eq.s32.totalorder %s16, 3
      %p62 = scmp.ne.s32.totalorder %s57, %s59
      %p63 = scmp.eq.s32.totalorder %s16, 0
      %p64 = por %p62, %p63
      %p65 = scmp.ne.s32.totalorder %s57, %s59
      %p66 = scmp.eq.s32.totalorder %s21, 3
      %p67 = por %p65, %p66
      %p68 = scmp.ne.s32.totalorder %s59, %s60
      %p69 = scmp.eq.s32.totalorder %s21, 0
      %p70 = por %p68, %p69
      %p71 = scmp.ne.s32.totalorder %s59, %s60
      %p72 = scmp.eq.s32.totalorder %s22, 3
      %p73 = por %p71, %p72
      %p75 = scmp.ne.s32.totalorder %s60, %s74
      %p76 = scmp.eq.s32.totalorder %s22, 0
      %p77 = por %p75, %p76
      %s78 = ssub.s32 %s24, %s31
      %p79 = scmp.eq.s32.totalorder %s78, 0
      %s81 = sadd.s32 %s80, 1
      %s82 = scalar_select %p79, %s80, %s81
      %p85 = pneg %p79
      %p86 = scmp.eq.s32.totalorder %s16, 3
      %p87 = por %p85, %p86
      %p88 = scmp.ne.s32.totalorder %s80, %s83
      %p89 = scmp.eq.s32.totalorder %s16, 0
      %p90 = por %p88, %p89
      %p91 = scmp.ne.s32.totalorder %s80, %s83
      %p92 = scmp.eq.s32.totalorder %s21, 3
      %p93 = por %p91, %p92
      %p94 = scmp.ne.s32.totalorder %s83, %s84
      %p95 = scmp.eq.s32.totalorder %s21, 0
      %p96 = por %p94, %p95
      %p97 = scmp.ne.s32.totalorder %s83, %s84
      %p98 = scmp.eq.s32.totalorder %s22, 3
      %p99 = por %p97, %p98
      %p101 = scmp.ne.s32.totalorder %s84, %s100
      %p102 = scmp.eq.s32.totalorder %s22, 0
      %p103 = por %p101, %p102
      %s104 = ssub.s32 %s24, %s31
      %s105 = ssub.s32 %s23, %s35
      %s106 = sor.u32 %s104, %s105
      %p107 = scmp.eq.s32.totalorder %s106, 0
      %s109 = sadd.s32 %s108, 1
      %s110 = scalar_select %p107, %s108, %s109
      %p113 = pneg %p107
      %p114 = scmp.eq.s32.totalorder %s16, 3
      %p115 = por %p113, %p114
      %p116 = scmp.ne.s32.totalorder %s108, %s111
      %p117 = scmp.eq.s32.totalorder %s16, 0
      %p118 = por %p116, %p117
      %p119 = scmp.ne.s32.totalorder %s108, %s111
      %p120 = scmp.eq.s32.totalorder %s21, 3
      %p121 = por %p119, %p120
      %p122 = scmp.ne.s32.totalorder %s111, %s112
      %p123 = scmp.eq.s32.totalorder %s21, 0
      %p124 = por %p122, %p123
      %p125 = scmp.ne.s32.totalorder %s111, %s112
      %p126 = scmp.eq.s32.totalorder %s22, 3
      %p127 = por %p125, %p126
      %p129 = scmp.ne.s32.totalorder %s112, %s128
      %p130 = scmp.eq.s32.totalorder %s22, 0
      %p131 = por %p129, %p130
      %s132 = ssub.s32 %s23, %s35
      %p133 = scmp.eq.s32.totalorder %s132, 0
      %s135 = sadd.s32 %s134, 1
      %s136 = scalar_select %p133, %s134, %s135
      %p139 = pneg %p133
      %p140 = scmp.eq.s32.totalorder %s16, 3
      %p141 = por %p139, %p140
      %p142 = scmp.ne.s32.totalorder %s134, %s137
      %p143 = scmp.eq.s32.totalorder %s16, 0
      %p144 = por %p142, %p143
      %p145 = scmp.ne.s32.totalorder %s134, %s137
      %p146 = scmp.eq.s32.totalorder %s21, 3
      %p147 = por %p145, %p146
      %p148 = scmp.ne.s32.totalorder %s137, %s138
      %p149 = scmp.eq.s32.totalorder %s21, 0
      %p150 = por %p148, %p149
      %p151 = scmp.ne.s32.totalorder %s137, %s138
      %p152 = scmp.eq.s32.totalorder %s22, 3
      %p153 = por %p151, %p152
      %p155 = scmp.ne.s32.totalorder %s138, %s154
      %p156 = scmp.eq.s32.totalorder %s22, 0
      %p157 = por %p155, %p156
      %s158 = ssub.s32 %s23, %s35
      %p159 = scmp.eq.s32.totalorder %s158, 0
      %s161 = sadd.s32 %s160, 1
      %s162 = scalar_select %p159, %s160, %s161
      %p165 = pneg %p159
      %p166 = scmp.eq.s32.totalorder %s16, 3
      %p167 = por %p165, %p166
      %p168 = scmp.ne.s32.totalorder %s160, %s163
      %p169 = scmp.eq.s32.totalorder %s16, 0
      %p170 = por %p168, %p169
      %p171 = scmp.ne.s32.totalorder %s160, %s163
      %p172 = scmp.eq.s32.totalorder %s21, 3
      %p173 = por %p171, %p172
      %p174 = scmp.ne.s32.totalorder %s163, %s164
      %p175 = scmp.eq.s32.totalorder %s21, 0
      %p176 = por %p174, %p175
      %p177 = scmp.ne.s32.totalorder %s163, %s164
      %p178 = scmp.eq.s32.totalorder %s22, 3
      %p179 = por %p177, %p178
      %p181 = scmp.ne.s32.totalorder %s164, %s180
      %p182 = scmp.eq.s32.totalorder %s22, 0
      %p183 = por %p181, %p182
      %p184 = scmp.le.s32.totalorder 1, %s16
      %p185 = scmp.lt.s32.totalorder %s16, 5
      %p186 = pnand %p184, %p185
      %p187 = pneg %p186
      // Predicated region
      $region9: #{tpu_custom_call.1} parent=5 // pred_check
        _
      $region10: #{tpu_custom_call.1} parent=5 // pred_check_branch
        %189 = sbr.rel (%p186) target = $region12
      $region11: #{tpu_custom_call.1} parent=5 // pred_region
        %s190 = ssub.s32 %s16, 1
        // Predicated region
        $region13: #{tpu_custom_call.1} parent=11 // pred_check
          %p191 = pneg %p49
        $region14: #{tpu_custom_call.1} parent=11 // pred_check_branch
          %193 = sbr.rel (%p191) target = $region16
        $region15: #{tpu_custom_call.1} parent=11 // pred_region
          %s195 = ssub.s32 64, 64
          %196 = vsyncadd [#allocation4], %s195
          %s198 = sshll.u32 [#allocation3], 4
          %s199 = int_to_ptr.vmem [resolvable:$true] %s198
          %201 = dma.hbm_to_vmem [thread:$0]  %s0, 64, %s199, [#allocation4]
        $region16: #{tpu_custom_call.1} parent=11 // pred_fallthru
          _
        // Predicated region
        $region17: #{tpu_custom_call.1} parent=11 // pred_check
          %p202 = pneg %p70
        $region18: #{tpu_custom_call.1} parent=11 // pred_check_branch
          %204 = sbr.rel (%p202) target = $region20
        $region19: #{tpu_custom_call.1} parent=11 // pred_region
          %s206 = ssub.s32 512, 512
          %207 = vsyncadd [#allocation7], %s206
          %s208 = sshll.u32 [#allocation6], 4
          %s209 = int_to_ptr.vmem [resolvable:$true] %s208
          %214 = dma.hbm_to_vmem [thread:$0]  %s1, 512, %s209, [#allocation7], 256, 256, 16
        $region20: #{tpu_custom_call.1} parent=11 // pred_fallthru
          _
      $region12: #{tpu_custom_call.1} parent=5 // pred_fallthru
        _
      %p215 = scmp.lt.s32.totalorder %s16, 4
      // Predicated region
      $region21: #{tpu_custom_call.1} parent=5 // pred_check
        %p216 = pneg %p215
      $region22: #{tpu_custom_call.1} parent=5 // pred_check_branch
        %218 = sbr.rel (%p216) target = $region24
      $region23: #{tpu_custom_call.1} parent=5 // pred_region
        // Predicated region
        $region25: #{tpu_custom_call.1} parent=23 // pred_check
          %p219 = pneg %p90
        $region26: #{tpu_custom_call.1} parent=23 // pred_check_branch
          %221 = sbr.rel (%p219) target = $region28
        $region27: #{tpu_custom_call.1} parent=23 // pred_region
          %s222 = sand.u32 %s16, 1
          %s223 = scalar_lea.sflag [#allocation4], %s222
          %s224 = sand.u32 %s80, 1
          %s225 = smul.addr %s224, 256
          %s226 = scalar_lea.vmem [#allocation8], %s225
          %s227 = smul.u32 16, %s24
          %s229 = ssub.s32 4096, 4096
          %230 = vsyncadd %s223, %s229
          %s231 = smul.addr %s227, 64
          %s232 = scalar_lea.hbm %s2, %s231
          %s233 = sshll.u32 %s226, 4
          %s234 = int_to_ptr.vmem [resolvable:$true] %s233
          %239 = dma.hbm_to_vmem [thread:$0]  %s232, 4096, %s234, %s223, 2048, 1024, 64
        $region28: #{tpu_custom_call.1} parent=23 // pred_fallthru
          _
        // Predicated region
        $region29: #{tpu_custom_call.1} parent=23 // pred_check
          %p240 = pneg %p118
        $region30: #{tpu_custom_call.1} parent=23 // pred_check_branch
          %242 = sbr.rel (%p240) target = $region32
        $region31: #{tpu_custom_call.1} parent=23 // pred_region
          %s243 = sand.u32 %s16, 1
          %s244 = scalar_lea.sflag [#allocation4], %s243
          %s245 = sand.u32 %s108, 1
          %s246 = smul.addr %s245, 8192
          %s247 = scalar_lea.vmem [#allocation9], %s246
          %s248 = smul.u32 256, %s24
          %s249 = smul.u32 8, %s23
          %s251 = ssub.s32 131072, 131072
          %252 = vsyncadd %s244, %s251
          %s253 = smul.addr %s248, 16
          %s254 = sadd.s32 %s249, %s253
          %s255 = smul.addr %s254, 64
          %s256 = scalar_lea.hbm %s3, %s255
          %s257 = sshll.u32 %s247, 4
          %s258 = int_to_ptr.vmem [resolvable:$true] %s257
          %263 = dma.hbm_to_vmem [thread:$0]  %s256, 131072, %s258, %s244, 1024, 512, 32
        $region32: #{tpu_custom_call.1} parent=23 // pred_fallthru
          _
        // Predicated region
        $region33: #{tpu_custom_call.1} parent=23 // pred_check
          %p264 = pneg %p144
        $region34: #{tpu_custom_call.1} parent=23 // pred_check_branch
          %266 = sbr.rel (%p264) target = $region36
        $region35: #{tpu_custom_call.1} parent=23 // pred_region
          %s267 = sand.u32 %s16, 1
          %s268 = scalar_lea.sflag [#allocation4], %s267
          %s269 = sand.u32 %s134, 1
          %s270 = smul.addr %s269, 8
          %s271 = scalar_lea.vmem [#allocation10], %s270
          %s272 = smul.u32 8, %s23
          %s274 = ssub.s32 128, 128
          %275 = vsyncadd %s268, %s274
          %s276 = smul.addr %s272, 16
          %s277 = scalar_lea.hbm %s4, %s276
          %s279 = sshll.u32 %s271, 4
          %s280 = int_to_ptr.vmem [resolvable:$true] %s279
          %282 = dma.hbm_to_vmem [thread:$0]  %s277, 128, %s280, %s268
        $region36: #{tpu_custom_call.1} parent=23 // pred_fallthru
          _
      $region24: #{tpu_custom_call.1} parent=5 // pred_fallthru
        _
      %p283 = scmp.le.s32.totalorder 1, %s16
      %p284 = scmp.lt.s32.totalorder %s16, 5
      %p285 = pnand %p283, %p284
      %p286 = pneg %p285
      // Predicated region
      $region37: #{tpu_custom_call.1} parent=5 // pred_check
        _
      $region38: #{tpu_custom_call.1} parent=5 // pred_check_branch
        %288 = sbr.rel (%p285) target = $region40
      $region39: #{tpu_custom_call.1} parent=5 // pred_region
        %s289 = ssub.s32 %s16, 1
        // Predicated region
        $region41: #{tpu_custom_call.1} parent=39 // pred_check
          %p290 = pneg %p49
        $region42: #{tpu_custom_call.1} parent=39 // pred_check_branch
          %292 = sbr.rel (%p290) target = $region44
        $region43: #{tpu_custom_call.1} parent=39 // pred_region
          %293 = dma.done [#allocation4], 64
        $region44: #{tpu_custom_call.1} parent=39 // pred_fallthru
          _
        // Predicated region
        $region45: #{tpu_custom_call.1} parent=39 // pred_check
          %p294 = pneg %p70
        $region46: #{tpu_custom_call.1} parent=39 // pred_check_branch
          %296 = sbr.rel (%p294) target = $region48
        $region47: #{tpu_custom_call.1} parent=39 // pred_region
          %297 = dma.done [#allocation7], 512
        $region48: #{tpu_custom_call.1} parent=39 // pred_fallthru
          _
        %s298 = sand.u32 %s21, 1
        %s299 = scalar_lea.sflag [#allocation4], %s298
        %s300 = sand.u32 %s83, 1
        %s301 = smul.addr %s300, 256
        %s302 = scalar_lea.vmem [#allocation8], %s301
        // Predicated region
        $region49: #{tpu_custom_call.1} parent=39 // pred_check
          %p303 = pneg %p96
        $region50: #{tpu_custom_call.1} parent=39 // pred_check_branch
          %305 = sbr.rel (%p303) target = $region52
        $region51: #{tpu_custom_call.1} parent=39 // pred_region
          %306 = dma.done %s299, 4096
        $region52: #{tpu_custom_call.1} parent=39 // pred_fallthru
          _
        %s307 = sand.u32 %s21, 1
        %s308 = scalar_lea.sflag [#allocation4], %s307
        %s309 = sand.u32 %s111, 1
        %s310 = smul.addr %s309, 8192
        %s311 = scalar_lea.vmem [#allocation9], %s310
        // Predicated region
        $region53: #{tpu_custom_call.1} parent=39 // pred_check
          %p312 = pneg %p124
        $region54: #{tpu_custom_call.1} parent=39 // pred_check_branch
          %314 = sbr.rel (%p312) target = $region56
        $region55: #{tpu_custom_call.1} parent=39 // pred_region
          %315 = dma.done %s308, 131072
        $region56: #{tpu_custom_call.1} parent=39 // pred_fallthru
          _
        %s316 = sand.u32 %s21, 1
        %s317 = scalar_lea.sflag [#allocation4], %s316
        %s318 = sand.u32 %s137, 1
        %s319 = smul.addr %s318, 8
        %s320 = scalar_lea.vmem [#allocation10], %s319
        // Predicated region
        $region57: #{tpu_custom_call.1} parent=39 // pred_check
          %p321 = pneg %p150
        $region58: #{tpu_custom_call.1} parent=39 // pred_check_branch
          %323 = sbr.rel (%p321) target = $region60
        $region59: #{tpu_custom_call.1} parent=39 // pred_region
          %324 = dma.done %s317, 128
        $region60: #{tpu_custom_call.1} parent=39 // pred_fallthru
          _
        %p325 = pneg %p49
        %p326 = pneg %p46
        %p327 = pneg %p70
        %p328 = pneg %p67
        %s329 = sand.u32 %s21, 1
        %s330 = scalar_lea.sflag [#allocation4], %s329
        %s331 = sand.u32 %s83, 1
        %s332 = smul.addr %s331, 256
        %s333 = scalar_lea.vmem [#allocation8], %s332
        %p334 = pneg %p96
        %p335 = pneg %p93
        %s336 = sand.u32 %s21, 1
        %s337 = scalar_lea.sflag [#allocation4], %s336
        %s338 = sand.u32 %s111, 1
        %s339 = smul.addr %s338, 8192
        %s340 = scalar_lea.vmem [#allocation9], %s339
        %p341 = pneg %p124
        %p342 = pneg %p121
        %s343 = sand.u32 %s21, 1
        %s344 = scalar_lea.sflag [#allocation4], %s343
        %s345 = sand.u32 %s137, 1
        %s346 = smul.addr %s345, 8
        %s347 = scalar_lea.vmem [#allocation10], %s346
        %p348 = pneg %p150
        %p349 = pneg %p147
        %p350 = pneg %p176
        %p351 = pneg %p173
        %s352 = sand.u32 %s163, 1
        %s353 = scalar_lea.sflag [#allocation5], %s352
        %s354 = sand.u32 %s163, 1
        %s355 = smul.addr %s354, 64
        %s356 = scalar_lea.vmem [#allocation11], %s355
        %s357 = smul.u32 16, %s26
        %s358 = smul.u32 256, %s26
        %s359 = smul.u32 8, %s25
        %s360 = smul.u32 8, %s25
        %s361 = smul.u32 8, %s25
        %p363 = scmp.eq.s32.totalorder %s26, 0
        // Predicated region
        $region61: #{tpu_custom_call.1} parent=39 // pred_check
          %p364 = pneg %p363
        $region62: #{tpu_custom_call.1} parent=39 // pred_check_branch
          %366 = sbr.rel (%p364) target = $region64
        $region63: #{tpu_custom_call.1} parent=39 // pred_region
          %367 = vst [vmem:[#allocation2] sm:$0xff] 0.0
          %368 = vst [vmem:[#allocation2 + $0x8] sm:$0xff] 0.0
          %369 = vst [vmem:[#allocation2 + $0x10] sm:$0xff] 0.0
          %370 = vst [vmem:[#allocation2 + $0x18] sm:$0xff] 0.0
          %371 = vst [vmem:[#allocation2 + $0x20] sm:$0xff] 0.0
          %372 = vst [vmem:[#allocation2 + $0x28] sm:$0xff] 0.0
          %373 = vst [vmem:[#allocation2 + $0x30] sm:$0xff] 0.0
          %374 = vst [vmem:[#allocation2 + $0x38] sm:$0xff] 0.0
        $region64: #{tpu_custom_call.1} parent=39 // pred_fallthru
          _
        %v375 = vld [vmem:[#allocation3] sm:$0xf]
        %v376 = vld [vmem:[%s302] sm:$0xff]
        %v377 = vld [vmem:[%s302 + $0x8] sm:$0xff]
        %v378 = vld [vmem:[%s302 + $0x10] sm:$0xff]
        %v379 = vld [vmem:[%s302 + $0x18] sm:$0xff]
        %v380 = vld [vmem:[%s302 + $0x20] sm:$0xff]
        %v381 = vld [vmem:[%s302 + $0x28] sm:$0xff]
        %v382 = vld [vmem:[%s302 + $0x30] sm:$0xff]
        %v383 = vld [vmem:[%s302 + $0x38] sm:$0xff]
        %v384 = vld [vmem:[%s302 + $0x40] sm:$0xff]
        %v385 = vld [vmem:[%s302 + $0x48] sm:$0xff]
        %v386 = vld [vmem:[%s302 + $0x50] sm:$0xff]
        %v387 = vld [vmem:[%s302 + $0x58] sm:$0xff]
        %v388 = vld [vmem:[%s302 + $0x60] sm:$0xff]
        %v389 = vld [vmem:[%s302 + $0x68] sm:$0xff]
        %v390 = vld [vmem:[%s302 + $0x70] sm:$0xff]
        %v391 = vld [vmem:[%s302 + $0x78] sm:$0xff]
        %v392 = vld [vmem:[%s302 + $0x80] sm:$0xff]
        %v393 = vld [vmem:[%s302 + $0x88] sm:$0xff]
        %v394 = vld [vmem:[%s302 + $0x90] sm:$0xff]
        %v395 = vld [vmem:[%s302 + $0x98] sm:$0xff]
        %v396 = vld [vmem:[%s302 + $0xa0] sm:$0xff]
        %v397 = vld [vmem:[%s302 + $0xa8] sm:$0xff]
        %v398 = vld [vmem:[%s302 + $0xb0] sm:$0xff]
        %v399 = vld [vmem:[%s302 + $0xb8] sm:$0xff]
        %v400 = vld [vmem:[%s302 + $0xc0] sm:$0xff]
        %v401 = vld [vmem:[%s302 + $0xc8] sm:$0xff]
        %v402 = vld [vmem:[%s302 + $0xd0] sm:$0xff]
        %v403 = vld [vmem:[%s302 + $0xd8] sm:$0xff]
        %v404 = vld [vmem:[%s302 + $0xe0] sm:$0xff]
        %v405 = vld [vmem:[%s302 + $0xe8] sm:$0xff]
        %v406 = vld [vmem:[%s302 + $0xf0] sm:$0xff]
        %v407 = vld [vmem:[%s302 + $0xf8] sm:$0xff]
        %s408 = smul.u32 %s26, 16
        %s409 = scalar_lea.vmem [#allocation6], %s408
        %v410 = vld [vmem:[%s409] sm:$0xff]
        %v411 = vld [vmem:[%s409 + $0x8] sm:$0xff]
        %v414 = vlaneseq
        %v415 = vshrl.u32 %v414, 7
        %v416 = vsub.s32 0, %v415
        %v417 = vrot.slane %v410, %v416
        %v418 = vlaneseq
        %v419 = vshrl.u32 %v418, 7
        %v420 = vsub.s32 1, %v419
        %v421 = vrot.slane %v410, %v420
        %v422 = vlaneseq
        %v423 = vshrl.u32 %v422, 7
        %v424 = vsub.s32 2, %v423
        %v425 = vrot.slane %v410, %v424
        %v426 = vlaneseq
        %v427 = vshrl.u32 %v426, 7
        %v428 = vsub.s32 3, %v427
        %v429 = vrot.slane %v410, %v428
        %v430 = vlaneseq
        %v431 = vshrl.u32 %v430, 7
        %v432 = vsub.s32 4, %v431
        %v433 = vrot.slane %v410, %v432
        %v434 = vlaneseq
        %v435 = vshrl.u32 %v434, 7
        %v436 = vsub.s32 5, %v435
        %v437 = vrot.slane %v410, %v436
        %v438 = vlaneseq
        %v439 = vshrl.u32 %v438, 7
        %v440 = vsub.s32 6, %v439
        %v441 = vrot.slane %v410, %v440
        %v442 = vlaneseq
        %v443 = vshrl.u32 %v442, 7
        %v444 = vsub.s32 7, %v443
        %v445 = vrot.slane %v410, %v444
        %v446 = vlaneseq
        %v447 = vshrl.u32 %v446, 7
        %v448 = vsub.s32 0, %v447
        %v449 = vrot.slane %v411, %v448
        %v450 = vlaneseq
        %v451 = vshrl.u32 %v450, 7
        %v452 = vsub.s32 1, %v451
        %v453 = vrot.slane %v411, %v452
        %v454 = vlaneseq
        %v455 = vshrl.u32 %v454, 7
        %v456 = vsub.s32 2, %v455
        %v457 = vrot.slane %v411, %v456
        %v458 = vlaneseq
        %v459 = vshrl.u32 %v458, 7
        %v460 = vsub.s32 3, %v459
        %v461 = vrot.slane %v411, %v460
        %v462 = vlaneseq
        %v463 = vshrl.u32 %v462, 7
        %v464 = vsub.s32 4, %v463
        %v465 = vrot.slane %v411, %v464
        %v466 = vlaneseq
        %v467 = vshrl.u32 %v466, 7
        %v468 = vsub.s32 5, %v467
        %v469 = vrot.slane %v411, %v468
        %v470 = vlaneseq
        %v471 = vshrl.u32 %v470, 7
        %v472 = vsub.s32 6, %v471
        %v473 = vrot.slane %v411, %v472
        %v474 = vlaneseq
        %v475 = vshrl.u32 %v474, 7
        %v476 = vsub.s32 7, %v475
        %v477 = vrot.slane %v411, %v476
        %v526 = vunpack.c.l.b16 %v376
        %v527 = vunpack.c.h.b16 %v376
        %v528 = vunpack.c.l.b16 %v377
        %v529 = vunpack.c.h.b16 %v377
        %v530 = vunpack.c.l.b16 %v378
        %v531 = vunpack.c.h.b16 %v378
        %v532 = vunpack.c.l.b16 %v379
        %v533 = vunpack.c.h.b16 %v379
        %v534 = vunpack.c.l.b16 %v380
        %v535 = vunpack.c.h.b16 %v380
        %v536 = vunpack.c.l.b16 %v381
        %v537 = vunpack.c.h.b16 %v381
        %v538 = vunpack.c.l.b16 %v382
        %v539 = vunpack.c.h.b16 %v382
        %v540 = vunpack.c.l.b16 %v383
        %v541 = vunpack.c.h.b16 %v383
        %v542 = vunpack.c.l.b16 %v384
        %v543 = vunpack.c.h.b16 %v384
        %v544 = vunpack.c.l.b16 %v385
        %v545 = vunpack.c.h.b16 %v385
        %v546 = vunpack.c.l.b16 %v386
        %v547 = vunpack.c.h.b16 %v386
        %v548 = vunpack.c.l.b16 %v387
        %v549 = vunpack.c.h.b16 %v387
        %v550 = vunpack.c.l.b16 %v388
        %v551 = vunpack.c.h.b16 %v388
        %v552 = vunpack.c.l.b16 %v389
        %v553 = vunpack.c.h.b16 %v389
        %v554 = vunpack.c.l.b16 %v390
        %v555 = vunpack.c.h.b16 %v390
        %v556 = vunpack.c.l.b16 %v391
        %v557 = vunpack.c.h.b16 %v391
        %v558 = vunpack.c.l.b16 %v392
        %v559 = vunpack.c.h.b16 %v392
        %v560 = vunpack.c.l.b16 %v393
        %v561 = vunpack.c.h.b16 %v393
        %v562 = vunpack.c.l.b16 %v394
        %v563 = vunpack.c.h.b16 %v394
        %v564 = vunpack.c.l.b16 %v395
        %v565 = vunpack.c.h.b16 %v395
        %v566 = vunpack.c.l.b16 %v396
        %v567 = vunpack.c.h.b16 %v396
        %v568 = vunpack.c.l.b16 %v397
        %v569 = vunpack.c.h.b16 %v397
        %v570 = vunpack.c.l.b16 %v398
        %v571 = vunpack.c.h.b16 %v398
        %v572 = vunpack.c.l.b16 %v399
        %v573 = vunpack.c.h.b16 %v399
        %v574 = vunpack.c.l.b16 %v400
        %v575 = vunpack.c.h.b16 %v400
        %v576 = vunpack.c.l.b16 %v401
        %v577 = vunpack.c.h.b16 %v401
        %v578 = vunpack.c.l.b16 %v402
        %v579 = vunpack.c.h.b16 %v402
        %v580 = vunpack.c.l.b16 %v403
        %v581 = vunpack.c.h.b16 %v403
        %v582 = vunpack.c.l.b16 %v404
        %v583 = vunpack.c.h.b16 %v404
        %v584 = vunpack.c.l.b16 %v405
        %v585 = vunpack.c.h.b16 %v405
        %v586 = vunpack.c.l.b16 %v406
        %v587 = vunpack.c.h.b16 %v406
        %v588 = vunpack.c.l.b16 %v407
        %v589 = vunpack.c.h.b16 %v407
        %v590 = vpack.c.b16 %v542, %v526
        %v591 = vpack.c.b16 %v543, %v527
        %v592 = vpack.c.b16 %v544, %v528
        %v593 = vpack.c.b16 %v545, %v529
        %v594 = vpack.c.b16 %v546, %v530
        %v595 = vpack.c.b16 %v547, %v531
        %v596 = vpack.c.b16 %v548, %v532
        %v597 = vpack.c.b16 %v549, %v533
        %v598 = vpack.c.b16 %v550, %v534
        %v599 = vpack.c.b16 %v551, %v535
        %v600 = vpack.c.b16 %v552, %v536
        %v601 = vpack.c.b16 %v553, %v537
        %v602 = vpack.c.b16 %v554, %v538
        %v603 = vpack.c.b16 %v555, %v539
        %v604 = vpack.c.b16 %v556, %v540
        %v605 = vpack.c.b16 %v557, %v541
        %v606 = vpack.c.b16 %v574, %v558
        %v607 = vpack.c.b16 %v575, %v559
        %v608 = vpack.c.b16 %v576, %v560
        %v609 = vpack.c.b16 %v577, %v561
        %v610 = vpack.c.b16 %v578, %v562
        %v611 = vpack.c.b16 %v579, %v563
        %v612 = vpack.c.b16 %v580, %v564
        %v613 = vpack.c.b16 %v581, %v565
        %v614 = vpack.c.b16 %v582, %v566
        %v615 = vpack.c.b16 %v583, %v567
        %v616 = vpack.c.b16 %v584, %v568
        %v617 = vpack.c.b16 %v585, %v569
        %v618 = vpack.c.b16 %v586, %v570
        %v619 = vpack.c.b16 %v587, %v571
        %v620 = vpack.c.b16 %v588, %v572
        %v621 = vpack.c.b16 %v589, %v573
        %vm654 = vcmask 261120
        %v656 = vsel %vm654, %v375, 0
        %658 = vmatprep.subr.bf16.mxu0 %v591
        %659 = vmatpush1.bf16.msra.mxu0 %v590
        %660 = vmatprep.subr.bf16.mxu0 %v607
        %661 = vmatpush1.bf16.msra.mxu0 %v606
        %662 = vmatprep.subr.bf16.mxu0 0
        %663 = vmatpush1.bf16.msra.mxu0 0
        %664 = vmatprep.subr.bf16.mxu0 0
        %665 = vmatpush1.bf16.msra.mxu0 0
        %666 = vmatprep.subr.bf16.mxu0 0
        %667 = vmatpush1.bf16.msra.mxu0 0
        %668 = vmatprep.subr.bf16.mxu0 0
        %669 = vmatpush1.bf16.msra.mxu0 0
        %670 = vmatprep.subr.bf16.mxu0 0
        %671 = vmatpush1.bf16.msra.mxu0 0
        %672 = vmatprep.subr.bf16.mxu0 0
        %673 = vmatpush1.bf16.msra.mxu0 0
        %674 = vmatprep.subr.bf16.mxu0 0
        %675 = vmatpush1.bf16.msra.mxu0 0
        %676 = vmatprep.subr.bf16.mxu0 0
        %677 = vmatpush1.bf16.msra.mxu0 0
        %678 = vmatprep.subr.bf16.mxu0 0
        %679 = vmatpush1.bf16.msra.mxu0 0
        %680 = vmatprep.subr.bf16.mxu0 0
        %681 = vmatpush1.bf16.msra.mxu0 0
        %682 = vmatprep.subr.bf16.mxu0 0
        %683 = vmatpush1.bf16.msra.mxu0 0
        %684 = vmatprep.subr.bf16.mxu0 0
        %685 = vmatpush1.bf16.msra.mxu0 0
        %686 = vmatprep.subr.bf16.mxu0 0
        %687 = vmatpush1.bf16.msra.mxu0 0
        %688 = vmatprep.subr.bf16.mxu0 0
        %689 = vmatpush1.bf16.msra.mxu0 0
        %690 = vmatprep.mubr.bf16.mxu0 0
        %691 = vmatmul.mubr.bf16.gmra.mrb[0].mxu0 %v656
        %v692 = vpop.f32.mrb[0].mxu0
        %v693 = vadd.f32 %v417, %v692
        %v694 = vpop.f32.mrb[0].mxu0
        %v695 = vadd.f32 %v421, %v694
        %v696 = vpop.f32.mrb[0].mxu0
        %v697 = vpop.f32.mrb[0].mxu0
        %698 = vdwg.mxu0
        %699 = vmatprep.subr.bf16.mxu0 %v593
        %700 = vmatpush1.bf16.msra.mxu0 %v592
        %701 = vmatprep.subr.bf16.mxu0 %v609
        %702 = vmatpush1.bf16.msra.mxu0 %v608
        %703 = vmatprep.subr.bf16.mxu0 0
        %704 = vmatpush1.bf16.msra.mxu0 0
        %705 = vmatprep.subr.bf16.mxu0 0
        %706 = vmatpush1.bf16.msra.mxu0 0
        %707 = vmatprep.subr.bf16.mxu0 0
        %708 = vmatpush1.bf16.msra.mxu0 0
        %709 = vmatprep.subr.bf16.mxu0 0
        %710 = vmatpush1.bf16.msra.mxu0 0
        %711 = vmatprep.subr.bf16.mxu0 0
        %712 = vmatpush1.bf16.msra.mxu0 0
        %713 = vmatprep.subr.bf16.mxu0 0
        %714 = vmatpush1.bf16.msra.mxu0 0
        %715 = vmatprep.subr.bf16.mxu0 0
        %716 = vmatpush1.bf16.msra.mxu0 0
        %717 = vmatprep.subr.bf16.mxu0 0
        %718 = vmatpush1.bf16.msra.mxu0 0
        %719 = vmatprep.subr.bf16.mxu0 0
        %720 = vmatpush1.bf16.msra.mxu0 0
        %721 = vmatprep.subr.bf16.mxu0 0
        %722 = vmatpush1.bf16.msra.mxu0 0
        %723 = vmatprep.subr.bf16.mxu0 0
        %724 = vmatpush1.bf16.msra.mxu0 0
        %725 = vmatprep.subr.bf16.mxu0 0
        %726 = vmatpush1.bf16.msra.mxu0 0
        %727 = vmatprep.subr.bf16.mxu0 0
        %728 = vmatpush1.bf16.msra.mxu0 0
        %729 = vmatprep.subr.bf16.mxu0 0
        %730 = vmatpush1.bf16.msra.mxu0 0
        %731 = vmatprep.mubr.bf16.mxu0 0
        %732 = vmatmul.mubr.bf16.gmra.mrb[0].mxu0 %v656
        %v733 = vpop.f32.mrb[0].mxu0
        %v734 = vadd.f32 %v425, %v733
        %v735 = vpop.f32.mrb[0].mxu0
        %v736 = vadd.f32 %v429, %v735
        %v737 = vpop.f32.mrb[0].mxu0
        %v738 = vpop.f32.mrb[0].mxu0
        %739 = vdwg.mxu0
        %740 = vmatprep.subr.bf16.mxu0 %v595
        %741 = vmatpush1.bf16.msra.mxu0 %v594
        %742 = vmatprep.subr.bf16.mxu0 %v611
        %743 = vmatpush1.bf16.msra.mxu0 %v610
        %744 = vmatprep.subr.bf16.mxu0 0
        %745 = vmatpush1.bf16.msra.mxu0 0
        %746 = vmatprep.subr.bf16.mxu0 0
        %747 = vmatpush1.bf16.msra.mxu0 0
        %748 = vmatprep.subr.bf16.mxu0 0
        %749 = vmatpush1.bf16.msra.mxu0 0
        %750 = vmatprep.subr.bf16.mxu0 0
        %751 = vmatpush1.bf16.msra.mxu0 0
        %752 = vmatprep.subr.bf16.mxu0 0
        %753 = vmatpush1.bf16.msra.mxu0 0
        %754 = vmatprep.subr.bf16.mxu0 0
        %755 = vmatpush1.bf16.msra.mxu0 0
        %756 = vmatprep.subr.bf16.mxu0 0
        %757 = vmatpush1.bf16.msra.mxu0 0
        %758 = vmatprep.subr.bf16.mxu0 0
        %759 = vmatpush1.bf16.msra.mxu0 0
        %760 = vmatprep.subr.bf16.mxu0 0
        %761 = vmatpush1.bf16.msra.mxu0 0
        %762 = vmatprep.subr.bf16.mxu0 0
        %763 = vmatpush1.bf16.msra.mxu0 0
        %764 = vmatprep.subr.bf16.mxu0 0
        %765 = vmatpush1.bf16.msra.mxu0 0
        %766 = vmatprep.subr.bf16.mxu0 0
        %767 = vmatpush1.bf16.msra.mxu0 0
        %768 = vmatprep.subr.bf16.mxu0 0
        %769 = vmatpush1.bf16.msra.mxu0 0
        %770 = vmatprep.subr.bf16.mxu0 0
        %771 = vmatpush1.bf16.msra.mxu0 0
        %772 = vmatprep.mubr.bf16.mxu0 0
        %773 = vmatmul.mubr.bf16.gmra.mrb[0].mxu0 %v656
        %v774 = vpop.f32.mrb[0].mxu0
        %v775 = vadd.f32 %v433, %v774
        %v776 = vpop.f32.mrb[0].mxu0
        %v777 = vadd.f32 %v437, %v776
        %v778 = vpop.f32.mrb[0].mxu0
        %v779 = vpop.f32.mrb[0].mxu0
        %780 = vdwg.mxu0
        %781 = vmatprep.subr.bf16.mxu0 %v597
        %782 = vmatpush1.bf16.msra.mxu0 %v596
        %783 = vmatprep.subr.bf16.mxu0 %v613
        %784 = vmatpush1.bf16.msra.mxu0 %v612
        %785 = vmatprep.subr.bf16.mxu0 0
        %786 = vmatpush1.bf16.msra.mxu0 0
        %787 = vmatprep.subr.bf16.mxu0 0
        %788 = vmatpush1.bf16.msra.mxu0 0
        %789 = vmatprep.subr.bf16.mxu0 0
        %790 = vmatpush1.bf16.msra.mxu0 0
        %791 = vmatprep.subr.bf16.mxu0 0
        %792 = vmatpush1.bf16.msra.mxu0 0
        %793 = vmatprep.subr.bf16.mxu0 0
        %794 = vmatpush1.bf16.msra.mxu0 0
        %795 = vmatprep.subr.bf16.mxu0 0
        %796 = vmatpush1.bf16.msra.mxu0 0
        %797 = vmatprep.subr.bf16.mxu0 0
        %798 = vmatpush1.bf16.msra.mxu0 0
        %799 = vmatprep.subr.bf16.mxu0 0
        %800 = vmatpush1.bf16.msra.mxu0 0
        %801 = vmatprep.subr.bf16.mxu0 0
        %802 = vmatpush1.bf16.msra.mxu0 0
        %803 = vmatprep.subr.bf16.mxu0 0
        %804 = vmatpush1.bf16.msra.mxu0 0
        %805 = vmatprep.subr.bf16.mxu0 0
        %806 = vmatpush1.bf16.msra.mxu0 0
        %807 = vmatprep.subr.bf16.mxu0 0
        %808 = vmatpush1.bf16.msra.mxu0 0
        %809 = vmatprep.subr.bf16.mxu0 0
        %810 = vmatpush1.bf16.msra.mxu0 0
        %811 = vmatprep.subr.bf16.mxu0 0
        %812 = vmatpush1.bf16.msra.mxu0 0
        %813 = vmatprep.mubr.bf16.mxu0 0
        %814 = vmatmul.mubr.bf16.gmra.mrb[0].mxu0 %v656
        %v815 = vpop.f32.mrb[0].mxu0
        %v816 = vadd.f32 %v441, %v815
        %v817 = vpop.f32.mrb[0].mxu0
        %v818 = vadd.f32 %v445, %v817
        %v819 = vpop.f32.mrb[0].mxu0
        %v820 = vpop.f32.mrb[0].mxu0
        %821 = vdwg.mxu0
        %822 = vmatprep.subr.bf16.mxu0 %v599
        %823 = vmatpush1.bf16.msra.mxu0 %v598
        %824 = vmatprep.subr.bf16.mxu0 %v615
        %825 = vmatpush1.bf16.msra.mxu0 %v614
        %826 = vmatprep.subr.bf16.mxu0 0
        %827 = vmatpush1.bf16.msra.mxu0 0
        %828 = vmatprep.subr.bf16.mxu0 0
        %829 = vmatpush1.bf16.msra.mxu0 0
        %830 = vmatprep.subr.bf16.mxu0 0
        %831 = vmatpush1.bf16.msra.mxu0 0
        %832 = vmatprep.subr.bf16.mxu0 0
        %833 = vmatpush1.bf16.msra.mxu0 0
        %834 = vmatprep.subr.bf16.mxu0 0
        %835 = vmatpush1.bf16.msra.mxu0 0
        %836 = vmatprep.subr.bf16.mxu0 0
        %837 = vmatpush1.bf16.msra.mxu0 0
        %838 = vmatprep.subr.bf16.mxu0 0
        %839 = vmatpush1.bf16.msra.mxu0 0
        %840 = vmatprep.subr.bf16.mxu0 0
        %841 = vmatpush1.bf16.msra.mxu0 0
        %842 = vmatprep.subr.bf16.mxu0 0
        %843 = vmatpush1.bf16.msra.mxu0 0
        %844 = vmatprep.subr.bf16.mxu0 0
        %845 = vmatpush1.bf16.msra.mxu0 0
        %846 = vmatprep.subr.bf16.mxu0 0
        %847 = vmatpush1.bf16.msra.mxu0 0
        %848 = vmatprep.subr.bf16.mxu0 0
        %849 = vmatpush1.bf16.msra.mxu0 0
        %850 = vmatprep.subr.bf16.mxu0 0
        %851 = vmatpush1.bf16.msra.mxu0 0
        %852 = vmatprep.subr.bf16.mxu0 0
        %853 = vmatpush1.bf16.msra.mxu0 0
        %854 = vmatprep.mubr.bf16.mxu0 0
        %855 = vmatmul.mubr.bf16.gmra.mrb[0].mxu0 %v656
        %v856 = vpop.f32.mrb[0].mxu0
        %v857 = vadd.f32 %v449, %v856
        %v858 = vpop.f32.mrb[0].mxu0
        %v859 = vadd.f32 %v453, %v858
        %v860 = vpop.f32.mrb[0].mxu0
        %v861 = vpop.f32.mrb[0].mxu0
        %862 = vdwg.mxu0
        %863 = vmatprep.subr.bf16.mxu0 %v601
        %864 = vmatpush1.bf16.msra.mxu0 %v600
        %865 = vmatprep.subr.bf16.mxu0 %v617
        %866 = vmatpush1.bf16.msra.mxu0 %v616
        %867 = vmatprep.subr.bf16.mxu0 0
        %868 = vmatpush1.bf16.msra.mxu0 0
        %869 = vmatprep.subr.bf16.mxu0 0
        %870 = vmatpush1.bf16.msra.mxu0 0
        %871 = vmatprep.subr.bf16.mxu0 0
        %872 = vmatpush1.bf16.msra.mxu0 0
        %873 = vmatprep.subr.bf16.mxu0 0
        %874 = vmatpush1.bf16.msra.mxu0 0
        %875 = vmatprep.subr.bf16.mxu0 0
        %876 = vmatpush1.bf16.msra.mxu0 0
        %877 = vmatprep.subr.bf16.mxu0 0
        %878 = vmatpush1.bf16.msra.mxu0 0
        %879 = vmatprep.subr.bf16.mxu0 0
        %880 = vmatpush1.bf16.msra.mxu0 0
        %881 = vmatprep.subr.bf16.mxu0 0
        %882 = vmatpush1.bf16.msra.mxu0 0
        %883 = vmatprep.subr.bf16.mxu0 0
        %884 = vmatpush1.bf16.msra.mxu0 0
        %885 = vmatprep.subr.bf16.mxu0 0
        %886 = vmatpush1.bf16.msra.mxu0 0
        %887 = vmatprep.subr.bf16.mxu0 0
        %888 = vmatpush1.bf16.msra.mxu0 0
        %889 = vmatprep.subr.bf16.mxu0 0
        %890 = vmatpush1.bf16.msra.mxu0 0
        %891 = vmatprep.subr.bf16.mxu0 0
        %892 = vmatpush1.bf16.msra.mxu0 0
        %893 = vmatprep.subr.bf16.mxu0 0
        %894 = vmatpush1.bf16.msra.mxu0 0
        %895 = vmatprep.mubr.bf16.mxu0 0
        %896 = vmatmul.mubr.bf16.gmra.mrb[0].mxu0 %v656
        %v897 = vpop.f32.mrb[0].mxu0
        %v898 = vadd.f32 %v457, %v897
        %v899 = vpop.f32.mrb[0].mxu0
        %v900 = vadd.f32 %v461, %v899
        %v901 = vpop.f32.mrb[0].mxu0
        %v902 = vpop.f32.mrb[0].mxu0
        %903 = vdwg.mxu0
        %904 = vmatprep.subr.bf16.mxu0 %v603
        %905 = vmatpush1.bf16.msra.mxu0 %v602
        %906 = vmatprep.subr.bf16.mxu0 %v619
        %907 = vmatpush1.bf16.msra.mxu0 %v618
        %908 = vmatprep.subr.bf16.mxu0 0
        %909 = vmatpush1.bf16.msra.mxu0 0
        %910 = vmatprep.subr.bf16.mxu0 0
        %911 = vmatpush1.bf16.msra.mxu0 0
        %912 = vmatprep.subr.bf16.mxu0 0
        %913 = vmatpush1.bf16.msra.mxu0 0
        %914 = vmatprep.subr.bf16.mxu0 0
        %915 = vmatpush1.bf16.msra.mxu0 0
        %916 = vmatprep.subr.bf16.mxu0 0
        %917 = vmatpush1.bf16.msra.mxu0 0
        %918 = vmatprep.subr.bf16.mxu0 0
        %919 = vmatpush1.bf16.msra.mxu0 0
        %920 = vmatprep.subr.bf16.mxu0 0
        %921 = vmatpush1.bf16.msra.mxu0 0
        %922 = vmatprep.subr.bf16.mxu0 0
        %923 = vmatpush1.bf16.msra.mxu0 0
        %924 = vmatprep.subr.bf16.mxu0 0
        %925 = vmatpush1.bf16.msra.mxu0 0
        %926 = vmatprep.subr.bf16.mxu0 0
        %927 = vmatpush1.bf16.msra.mxu0 0
        %928 = vmatprep.subr.bf16.mxu0 0
        %929 = vmatpush1.bf16.msra.mxu0 0
        %930 = vmatprep.subr.bf16.mxu0 0
        %931 = vmatpush1.bf16.msra.mxu0 0
        %932 = vmatprep.subr.bf16.mxu0 0
        %933 = vmatpush1.bf16.msra.mxu0 0
        %934 = vmatprep.subr.bf16.mxu0 0
        %935 = vmatpush1.bf16.msra.mxu0 0
        %936 = vmatprep.mubr.bf16.mxu0 0
        %937 = vmatmul.mubr.bf16.gmra.mrb[0].mxu0 %v656
        %v938 = vpop.f32.mrb[0].mxu0
        %v939 = vadd.f32 %v465, %v938
        %v940 = vpop.f32.mrb[0].mxu0
        %v941 = vadd.f32 %v469, %v940
        %v942 = vpop.f32.mrb[0].mxu0
        %v943 = vpop.f32.mrb[0].mxu0
        %944 = vdwg.mxu0
        %945 = vmatprep.subr.bf16.mxu0 %v605
        %946 = vmatpush1.bf16.msra.mxu0 %v604
        %947 = vmatprep.subr.bf16.mxu0 %v621
        %948 = vmatpush1.bf16.msra.mxu0 %v620
        %949 = vmatprep.subr.bf16.mxu0 0
        %950 = vmatpush1.bf16.msra.mxu0 0
        %951 = vmatprep.subr.bf16.mxu0 0
        %952 = vmatpush1.bf16.msra.mxu0 0
        %953 = vmatprep.subr.bf16.mxu0 0
        %954 = vmatpush1.bf16.msra.mxu0 0
        %955 = vmatprep.subr.bf16.mxu0 0
        %956 = vmatpush1.bf16.msra.mxu0 0
        %957 = vmatprep.subr.bf16.mxu0 0
        %958 = vmatpush1.bf16.msra.mxu0 0
        %959 = vmatprep.subr.bf16.mxu0 0
        %960 = vmatpush1.bf16.msra.mxu0 0
        %961 = vmatprep.subr.bf16.mxu0 0
        %962 = vmatpush1.bf16.msra.mxu0 0
        %963 = vmatprep.subr.bf16.mxu0 0
        %964 = vmatpush1.bf16.msra.mxu0 0
        %965 = vmatprep.subr.bf16.mxu0 0
        %966 = vmatpush1.bf16.msra.mxu0 0
        %967 = vmatprep.subr.bf16.mxu0 0
        %968 = vmatpush1.bf16.msra.mxu0 0
        %969 = vmatprep.subr.bf16.mxu0 0
        %970 = vmatpush1.bf16.msra.mxu0 0
        %971 = vmatprep.subr.bf16.mxu0 0
        %972 = vmatpush1.bf16.msra.mxu0 0
        %973 = vmatprep.subr.bf16.mxu0 0
        %974 = vmatpush1.bf16.msra.mxu0 0
        %975 = vmatprep.subr.bf16.mxu0 0
        %976 = vmatpush1.bf16.msra.mxu0 0
        %977 = vmatprep.mubr.bf16.mxu0 0
        %978 = vmatmul.mubr.bf16.gmra.mrb[0].mxu0 %v656
        %v979 = vpop.f32.mrb[0].mxu0
        %v980 = vadd.f32 %v473, %v979
        %v981 = vpop.f32.mrb[0].mxu0
        %v982 = vadd.f32 %v477, %v981
        %v983 = vpop.f32.mrb[0].mxu0
        %v984 = vpop.f32.mrb[0].mxu0
        %985 = vdwg.mxu0
        %v986 = vmax.f32 %v693, 0.0
        %v987 = vmax.f32 %v695, 0.0
        %v988 = vmax.f32 %v734, 0.0
        %v989 = vmax.f32 %v736, 0.0
        %v990 = vmax.f32 %v775, 0.0
        %v991 = vmax.f32 %v777, 0.0
        %v992 = vmax.f32 %v816, 0.0
        %v993 = vmax.f32 %v818, 0.0
        %v994 = vmax.f32 %v857, 0.0
        %v995 = vmax.f32 %v859, 0.0
        %v996 = vmax.f32 %v898, 0.0
        %v997 = vmax.f32 %v900, 0.0
        %v998 = vmax.f32 %v939, 0.0
        %v999 = vmax.f32 %v941, 0.0
        %v1000 = vmax.f32 %v980, 0.0
        %v1001 = vmax.f32 %v982, 0.0
        %v1002 = vld [vmem:[#allocation2] sm:$0xff]
        %v1003 = vld [vmem:[#allocation2 + $0x8] sm:$0xff]
        %v1004 = vld [vmem:[#allocation2 + $0x10] sm:$0xff]
        %v1005 = vld [vmem:[#allocation2 + $0x18] sm:$0xff]
        %v1006 = vld [vmem:[#allocation2 + $0x20] sm:$0xff]
        %v1007 = vld [vmem:[#allocation2 + $0x28] sm:$0xff]
        %v1008 = vld [vmem:[#allocation2 + $0x30] sm:$0xff]
        %v1009 = vld [vmem:[#allocation2 + $0x38] sm:$0xff]
        %v1010 = vpack.c.bf16 %v986, %v986
        %v1011 = vpack.c.bf16 %v987, %v987
        %v1012 = vpack.c.bf16 %v988, %v988
        %v1013 = vpack.c.bf16 %v989, %v989
        %v1014 = vpack.c.bf16 %v990, %v990
        %v1015 = vpack.c.bf16 %v991, %v991
        %v1016 = vpack.c.bf16 %v992, %v992
        %v1017 = vpack.c.bf16 %v993, %v993
        %v1018 = vpack.c.bf16 %v994, %v994
        %v1019 = vpack.c.bf16 %v995, %v995
        %v1020 = vpack.c.bf16 %v996, %v996
        %v1021 = vpack.c.bf16 %v997, %v997
        %v1022 = vpack.c.bf16 %v998, %v998
        %v1023 = vpack.c.bf16 %v999, %v999
        %v1024 = vpack.c.bf16 %v1000, %v1000
        %v1025 = vpack.c.bf16 %v1001, %v1001
        %v1026 = vld [vmem:[%s311] sm:$0xff]
        %v1027 = vld [vmem:[%s311 + $0x8] sm:$0xff]
        %v1028 = vld [vmem:[%s311 + $0x10] sm:$0xff]
        %v1029 = vld [vmem:[%s311 + $0x18] sm:$0xff]
        %v1030 = vld [vmem:[%s311 + $0x20] sm:$0xff]
        %v1031 = vld [vmem:[%s311 + $0x28] sm:$0xff]
        %v1032 = vld [vmem:[%s311 + $0x30] sm:$0xff]
        %v1033 = vld [vmem:[%s311 + $0x38] sm:$0xff]
        %v1034 = vld [vmem:[%s311 + $0x40] sm:$0xff]
        %v1035 = vld [vmem:[%s311 + $0x48] sm:$0xff]
        %v1036 = vld [vmem:[%s311 + $0x50] sm:$0xff]
        %v1037 = vld [vmem:[%s311 + $0x58] sm:$0xff]
        %v1038 = vld [vmem:[%s311 + $0x60] sm:$0xff]
        %v1039 = vld [vmem:[%s311 + $0x68] sm:$0xff]
        %v1040 = vld [vmem:[%s311 + $0x70] sm:$0xff]
        %v1041 = vld [vmem:[%s311 + $0x78] sm:$0xff]
        %v1042 = vld [vmem:[%s311 + $0x80] sm:$0xff]
        %v1043 = vld [vmem:[%s311 + $0x88] sm:$0xff]
        %v1044 = vld [vmem:[%s311 + $0x90] sm:$0xff]
        %v1045 = vld [vmem:[%s311 + $0x98] sm:$0xff]
        %v1046 = vld [vmem:[%s311 + $0xa0] sm:$0xff]
        %v1047 = vld [vmem:[%s311 + $0xa8] sm:$0xff]
        %v1048 = vld [vmem:[%s311 + $0xb0] sm:$0xff]
        %v1049 = vld [vmem:[%s311 + $0xb8] sm:$0xff]
        %v1050 = vld [vmem:[%s311 + $0xc0] sm:$0xff]
        %v1051 = vld [vmem:[%s311 + $0xc8] sm:$0xff]
        %v1052 = vld [vmem:[%s311 + $0xd0] sm:$0xff]
        %v1053 = vld [vmem:[%s311 + $0xd8] sm:$0xff]
        %v1054 = vld [vmem:[%s311 + $0xe0] sm:$0xff]
        %v1055 = vld [vmem:[%s311 + $0xe8] sm:$0xff]
        %v1056 = vld [vmem:[%s311 + $0xf0] sm:$0xff]
        %v1057 = vld [vmem:[%s311 + $0xf8] sm:$0xff]
        %v1058 = vld [vmem:[%s311 + $0x100] sm:$0xff]
        %v1059 = vld [vmem:[%s311 + $0x108] sm:$0xff]
        %v1060 = vld [vmem:[%s311 + $0x110] sm:$0xff]
        %v1061 = vld [vmem:[%s311 + $0x118] sm:$0xff]
        %v1062 = vld [vmem:[%s311 + $0x120] sm:$0xff]
        %v1063 = vld [vmem:[%s311 + $0x128] sm:$0xff]
        %v1064 = vld [vmem:[%s311 + $0x130] sm:$0xff]
        %v1065 = vld [vmem:[%s311 + $0x138] sm:$0xff]
        %v1066 = vld [vmem:[%s311 + $0x140] sm:$0xff]
        %v1067 = vld [vmem:[%s311 + $0x148] sm:$0xff]
        %v1068 = vld [vmem:[%s311 + $0x150] sm:$0xff]
        %v1069 = vld [vmem:[%s311 + $0x158] sm:$0xff]
        %v1070 = vld [vmem:[%s311 + $0x160] sm:$0xff]
        %v1071 = vld [vmem:[%s311 + $0x168] sm:$0xff]
        %v1072 = vld [vmem:[%s311 + $0x170] sm:$0xff]
        %v1073 = vld [vmem:[%s311 + $0x178] sm:$0xff]
        %v1074 = vld [vmem:[%s311 + $0x180] sm:$0xff]
        %v1075 = vld [vmem:[%s311 + $0x188] sm:$0xff]
        %v1076 = vld [vmem:[%s311 + $0x190] sm:$0xff]
        %v1077 = vld [vmem:[%s311 + $0x198] sm:$0xff]
        %v1078 = vld [vmem:[%s311 + $0x1a0] sm:$0xff]
        %v1079 = vld [vmem:[%s311 + $0x1a8] sm:$0xff]
        %v1080 = vld [vmem:[%s311 + $0x1b0] sm:$0xff]
        %v1081 = vld [vmem:[%s311 + $0x1b8] sm:$0xff]
        %v1082 = vld [vmem:[%s311 + $0x1c0] sm:$0xff]
        %v1083 = vld [vmem:[%s311 + $0x1c8] sm:$0xff]
        %v1084 = vld [vmem:[%s311 + $0x1d0] sm:$0xff]
        %v1085 = vld [vmem:[%s311 + $0x1d8] sm:$0xff]
        %v1086 = vld [vmem:[%s311 + $0x1e0] sm:$0xff]
        %v1087 = vld [vmem:[%s311 + $0x1e8] sm:$0xff]
        %v1088 = vld [vmem:[%s311 + $0x1f0] sm:$0xff]
        %v1089 = vld [vmem:[%s311 + $0x1f8] sm:$0xff]
        %v1090 = vld [vmem:[%s311 + $0x200] sm:$0xff]
        %v1091 = vld [vmem:[%s311 + $0x208] sm:$0xff]
        %v1092 = vld [vmem:[%s311 + $0x210] sm:$0xff]
        %v1093 = vld [vmem:[%s311 + $0x218] sm:$0xff]
        %v1094 = vld [vmem:[%s311 + $0x220] sm:$0xff]
        %v1095 = vld [vmem:[%s311 + $0x228] sm:$0xff]
        %v1096 = vld [vmem:[%s311 + $0x230] sm:$0xff]
        %v1097 = vld [vmem:[%s311 + $0x238] sm:$0xff]
        %v1098 = vld [vmem:[%s311 + $0x240] sm:$0xff]
        %v1099 = vld [vmem:[%s311 + $0x248] sm:$0xff]
        %v1100 = vld [vmem:[%s311 + $0x250] sm:$0xff]
        %v1101 = vld [vmem:[%s311 + $0x258] sm:$0xff]
        %v1102 = vld [vmem:[%s311 + $0x260] sm:$0xff]
        %v1103 = vld [vmem:[%s311 + $0x268] sm:$0xff]
        %v1104 = vld [vmem:[%s311 + $0x270] sm:$0xff]
        %v1105 = vld [vmem:[%s311 + $0x278] sm:$0xff]
        %v1106 = vld [vmem:[%s311 + $0x280] sm:$0xff]
        %v1107 = vld [vmem:[%s311 + $0x288] sm:$0xff]
        %v1108 = vld [vmem:[%s311 + $0x290] sm:$0xff]
        %v1109 = vld [vmem:[%s311 + $0x298] sm:$0xff]
        %v1110 = vld [vmem:[%s311 + $0x2a0] sm:$0xff]
        %v1111 = vld [vmem:[%s311 + $0x2a8] sm:$0xff]
        %v1112 = vld [vmem:[%s311 + $0x2b0] sm:$0xff]
        %v1113 = vld [vmem:[%s311 + $0x2b8] sm:$0xff]
        %v1114 = vld [vmem:[%s311 + $0x2c0] sm:$0xff]
        %v1115 = vld [vmem:[%s311 + $0x2c8] sm:$0xff]
        %v1116 = vld [vmem:[%s311 + $0x2d0] sm:$0xff]
        %v1117 = vld [vmem:[%s311 + $0x2d8] sm:$0xff]
        %v1118 = vld [vmem:[%s311 + $0x2e0] sm:$0xff]
        %v1119 = vld [vmem:[%s311 + $0x2e8] sm:$0xff]
        %v1120 = vld [vmem:[%s311 + $0x2f0] sm:$0xff]
        %v1121 = vld [vmem:[%s311 + $0x2f8] sm:$0xff]
        %v1122 = vld [vmem:[%s311 + $0x300] sm:$0xff]
        %v1123 = vld [vmem:[%s311 + $0x308] sm:$0xff]
        %v1124 = vld [vmem:[%s311 + $0x310] sm:$0xff]
        %v1125 = vld [vmem:[%s311 + $0x318] sm:$0xff]
        %v1126 = vld [vmem:[%s311 + $0x320] sm:$0xff]
        %v1127 = vld [vmem:[%s311 + $0x328] sm:$0xff]
        %v1128 = vld [vmem:[%s311 + $0x330] sm:$0xff]
        %v1129 = vld [vmem:[%s311 + $0x338] sm:$0xff]
        %v1130 = vld [vmem:[%s311 + $0x340] sm:$0xff]
        %v1131 = vld [vmem:[%s311 + $0x348] sm:$0xff]
        %v1132 = vld [vmem:[%s311 + $0x350] sm:$0xff]
        %v1133 = vld [vmem:[%s311 + $0x358] sm:$0xff]
        %v1134 = vld [vmem:[%s311 + $0x360] sm:$0xff]
        %v1135 = vld [vmem:[%s311 + $0x368] sm:$0xff]
        %v1136 = vld [vmem:[%s311 + $0x370] sm:$0xff]
        %v1137 = vld [vmem:[%s311 + $0x378] sm:$0xff]
        %v1138 = vld [vmem:[%s311 + $0x380] sm:$0xff]
        %v1139 = vld [vmem:[%s311 + $0x388] sm:$0xff]
        %v1140 = vld [vmem:[%s311 + $0x390] sm:$0xff]
        %v1141 = vld [vmem:[%s311 + $0x398] sm:$0xff]
        %v1142 = vld [vmem:[%s311 + $0x3a0] sm:$0xff]
        %v1143 = vld [vmem:[%s311 + $0x3a8] sm:$0xff]
        %v1144 = vld [vmem:[%s311 + $0x3b0] sm:$0xff]
        %v1145 = vld [vmem:[%s311 + $0x3b8] sm:$0xff]
        %v1146 = vld [vmem:[%s311 + $0x3c0] sm:$0xff]
        %v1147 = vld [vmem:[%s311 + $0x3c8] sm:$0xff]
        %v1148 = vld [vmem:[%s311 + $0x3d0] sm:$0xff]
        %v1149 = vld [vmem:[%s311 + $0x3d8] sm:$0xff]
        %v1150 = vld [vmem:[%s311 + $0x3e0] sm:$0xff]
        %v1151 = vld [vmem:[%s311 + $0x3e8] sm:$0xff]
        %v1152 = vld [vmem:[%s311 + $0x3f0] sm:$0xff]
        %v1153 = vld [vmem:[%s311 + $0x3f8] sm:$0xff]
        %v1154 = vld [vmem:[%s311 + $0x400] sm:$0xff]
        %v1155 = vld [vmem:[%s311 + $0x408] sm:$0xff]
        %v1156 = vld [vmem:[%s311 + $0x410] sm:$0xff]
        %v1157 = vld [vmem:[%s311 + $0x418] sm:$0xff]
        %v1158 = vld [vmem:[%s311 + $0x420] sm:$0xff]
        %v1159 = vld [vmem:[%s311 + $0x428] sm:$0xff]
        %v1160 = vld [vmem:[%s311 + $0x430] sm:$0xff]
        %v1161 = vld [vmem:[%s311 + $0x438] sm:$0xff]
        %v1162 = vld [vmem:[%s311 + $0x440] sm:$0xff]
        %v1163 = vld [vmem:[%s311 + $0x448] sm:$0xff]
        %v1164 = vld [vmem:[%s311 + $0x450] sm:$0xff]
        %v1165 = vld [vmem:[%s311 + $0x458] sm:$0xff]
        %v1166 = vld [vmem:[%s311 + $0x460] sm:$0xff]
        %v1167 = vld [vmem:[%s311 + $0x468] sm:$0xff]
        %v1168 = vld [vmem:[%s311 + $0x470] sm:$0xff]
        %v1169 = vld [vmem:[%s311 + $0x478] sm:$0xff]
        %v1170 = vld [vmem:[%s311 + $0x480] sm:$0xff]
        %v1171 = vld [vmem:[%s311 + $0x488] sm:$0xff]
        %v1172 = vld [vmem:[%s311 + $0x490] sm:$0xff]
        %v1173 = vld [vmem:[%s311 + $0x498] sm:$0xff]
        %v1174 = vld [vmem:[%s311 + $0x4a0] sm:$0xff]
        %v1175 = vld [vmem:[%s311 + $0x4a8] sm:$0xff]
        %v1176 = vld [vmem:[%s311 + $0x4b0] sm:$0xff]
        %v1177 = vld [vmem:[%s311 + $0x4b8] sm:$0xff]
        %v1178 = vld [vmem:[%s311 + $0x4c0] sm:$0xff]
        %v1179 = vld [vmem:[%s311 + $0x4c8] sm:$0xff]
        %v1180 = vld [vmem:[%s311 + $0x4d0] sm:$0xff]
        %v1181 = vld [vmem:[%s311 + $0x4d8] sm:$0xff]
        %v1182 = vld [vmem:[%s311 + $0x4e0] sm:$0xff]
        %v1183 = vld [vmem:[%s311 + $0x4e8] sm:$0xff]
        %v1184 = vld [vmem:[%s311 + $0x4f0] sm:$0xff]
        %v1185 = vld [vmem:[%s311 + $0x4f8] sm:$0xff]
        %v1186 = vld [vmem:[%s311 + $0x500] sm:$0xff]
        %v1187 = vld [vmem:[%s311 + $0x508] sm:$0xff]
        %v1188 = vld [vmem:[%s311 + $0x510] sm:$0xff]
        %v1189 = vld [vmem:[%s311 + $0x518] sm:$0xff]
        %v1190 = vld [vmem:[%s311 + $0x520] sm:$0xff]
        %v1191 = vld [vmem:[%s311 + $0x528] sm:$0xff]
        %v1192 = vld [vmem:[%s311 + $0x530] sm:$0xff]
        %v1193 = vld [vmem:[%s311 + $0x538] sm:$0xff]
        %v1194 = vld [vmem:[%s311 + $0x540] sm:$0xff]
        %v1195 = vld [vmem:[%s311 + $0x548] sm:$0xff]
        %v1196 = vld [vmem:[%s311 + $0x550] sm:$0xff]
        %v1197 = vld [vmem:[%s311 + $0x558] sm:$0xff]
        %v1198 = vld [vmem:[%s311 + $0x560] sm:$0xff]
        %v1199 = vld [vmem:[%s311 + $0x568] sm:$0xff]
        %v1200 = vld [vmem:[%s311 + $0x570] sm:$0xff]
        %v1201 = vld [vmem:[%s311 + $0x578] sm:$0xff]
        %v1202 = vld [vmem:[%s311 + $0x580] sm:$0xff]
        %v1203 = vld [vmem:[%s311 + $0x588] sm:$0xff]
        %v1204 = vld [vmem:[%s311 + $0x590] sm:$0xff]
        %v1205 = vld [vmem:[%s311 + $0x598] sm:$0xff]
        %v1206 = vld [vmem:[%s311 + $0x5a0] sm:$0xff]
        %v1207 = vld [vmem:[%s311 + $0x5a8] sm:$0xff]
        %v1208 = vld [vmem:[%s311 + $0x5b0] sm:$0xff]
        %v1209 = vld [vmem:[%s311 + $0x5b8] sm:$0xff]
        %v1210 = vld [vmem:[%s311 + $0x5c0] sm:$0xff]
        %v1211 = vld [vmem:[%s311 + $0x5c8] sm:$0xff]
        %v1212 = vld [vmem:[%s311 + $0x5d0] sm:$0xff]
        %v1213 = vld [vmem:[%s311 + $0x5d8] sm:$0xff]
        %v1214 = vld [vmem:[%s311 + $0x5e0] sm:$0xff]
        %v1215 = vld [vmem:[%s311 + $0x5e8] sm:$0xff]
        %v1216 = vld [vmem:[%s311 + $0x5f0] sm:$0xff]
        %v1217 = vld [vmem:[%s311 + $0x5f8] sm:$0xff]
        %v1218 = vld [vmem:[%s311 + $0x600] sm:$0xff]
        %v1219 = vld [vmem:[%s311 + $0x608] sm:$0xff]
        %v1220 = vld [vmem:[%s311 + $0x610] sm:$0xff]
        %v1221 = vld [vmem:[%s311 + $0x618] sm:$0xff]
        %v1222 = vld [vmem:[%s311 + $0x620] sm:$0xff]
        %v1223 = vld [vmem:[%s311 + $0x628] sm:$0xff]
        %v1224 = vld [vmem:[%s311 + $0x630] sm:$0xff]
        %v1225 = vld [vmem:[%s311 + $0x638] sm:$0xff]
        %v1226 = vld [vmem:[%s311 + $0x640] sm:$0xff]
        %v1227 = vld [vmem:[%s311 + $0x648] sm:$0xff]
        %v1228 = vld [vmem:[%s311 + $0x650] sm:$0xff]
        %v1229 = vld [vmem:[%s311 + $0x658] sm:$0xff]
        %v1230 = vld [vmem:[%s311 + $0x660] sm:$0xff]
        %v1231 = vld [vmem:[%s311 + $0x668] sm:$0xff]
        %v1232 = vld [vmem:[%s311 + $0x670] sm:$0xff]
        %v1233 = vld [vmem:[%s311 + $0x678] sm:$0xff]
        %v1234 = vld [vmem:[%s311 + $0x680] sm:$0xff]
        %v1235 = vld [vmem:[%s311 + $0x688] sm:$0xff]
        %v1236 = vld [vmem:[%s311 + $0x690] sm:$0xff]
        %v1237 = vld [vmem:[%s311 + $0x698] sm:$0xff]
        %v1238 = vld [vmem:[%s311 + $0x6a0] sm:$0xff]
        %v1239 = vld [vmem:[%s311 + $0x6a8] sm:$0xff]
        %v1240 = vld [vmem:[%s311 + $0x6b0] sm:$0xff]
        %v1241 = vld [vmem:[%s311 + $0x6b8] sm:$0xff]
        %v1242 = vld [vmem:[%s311 + $0x6c0] sm:$0xff]
        %v1243 = vld [vmem:[%s311 + $0x6c8] sm:$0xff]
        %v1244 = vld [vmem:[%s311 + $0x6d0] sm:$0xff]
        %v1245 = vld [vmem:[%s311 + $0x6d8] sm:$0xff]
        %v1246 = vld [vmem:[%s311 + $0x6e0] sm:$0xff]
        %v1247 = vld [vmem:[%s311 + $0x6e8] sm:$0xff]
        %v1248 = vld [vmem:[%s311 + $0x6f0] sm:$0xff]
        %v1249 = vld [vmem:[%s311 + $0x6f8] sm:$0xff]
        %v1250 = vld [vmem:[%s311 + $0x700] sm:$0xff]
        %v1251 = vld [vmem:[%s311 + $0x708] sm:$0xff]
        %v1252 = vld [vmem:[%s311 + $0x710] sm:$0xff]
        %v1253 = vld [vmem:[%s311 + $0x718] sm:$0xff]
        %v1254 = vld [vmem:[%s311 + $0x720] sm:$0xff]
        %v1255 = vld [vmem:[%s311 + $0x728] sm:$0xff]
        %v1256 = vld [vmem:[%s311 + $0x730] sm:$0xff]
        %v1257 = vld [vmem:[%s311 + $0x738] sm:$0xff]
        %v1258 = vld [vmem:[%s311 + $0x740] sm:$0xff]
        %v1259 = vld [vmem:[%s311 + $0x748] sm:$0xff]
        %v1260 = vld [vmem:[%s311 + $0x750] sm:$0xff]
        %v1261 = vld [vmem:[%s311 + $0x758] sm:$0xff]
        %v1262 = vld [vmem:[%s311 + $0x760] sm:$0xff]
        %v1263 = vld [vmem:[%s311 + $0x768] sm:$0xff]
        %v1264 = vld [vmem:[%s311 + $0x770] sm:$0xff]
        %v1265 = vld [vmem:[%s311 + $0x778] sm:$0xff]
        %v1266 = vld [vmem:[%s311 + $0x780] sm:$0xff]
        %v1267 = vld [vmem:[%s311 + $0x788] sm:$0xff]
        %v1268 = vld [vmem:[%s311 + $0x790] sm:$0xff]
        %v1269 = vld [vmem:[%s311 + $0x798] sm:$0xff]
        %v1270 = vld [vmem:[%s311 + $0x7a0] sm:$0xff]
        %v1271 = vld [vmem:[%s311 + $0x7a8] sm:$0xff]
        %v1272 = vld [vmem:[%s311 + $0x7b0] sm:$0xff]
        %v1273 = vld [vmem:[%s311 + $0x7b8] sm:$0xff]
        %v1274 = vld [vmem:[%s311 + $0x7c0] sm:$0xff]
        %v1275 = vld [vmem:[%s311 + $0x7c8] sm:$0xff]
        %v1276 = vld [vmem:[%s311 + $0x7d0] sm:$0xff]
        %v1277 = vld [vmem:[%s311 + $0x7d8] sm:$0xff]
        %v1278 = vld [vmem:[%s311 + $0x7e0] sm:$0xff]
        %v1279 = vld [vmem:[%s311 + $0x7e8] sm:$0xff]
        %v1280 = vld [vmem:[%s311 + $0x7f0] sm:$0xff]
        %v1281 = vld [vmem:[%s311 + $0x7f8] sm:$0xff]
        %v1282 = vld [vmem:[%s311 + $0x800] sm:$0xff]
        %v1283 = vld [vmem:[%s311 + $0x808] sm:$0xff]
        %v1284 = vld [vmem:[%s311 + $0x810] sm:$0xff]
        %v1285 = vld [vmem:[%s311 + $0x818] sm:$0xff]
        %v1286 = vld [vmem:[%s311 + $0x820] sm:$0xff]
        %v1287 = vld [vmem:[%s311 + $0x828] sm:$0xff]
        %v1288 = vld [vmem:[%s311 + $0x830] sm:$0xff]
        %v1289 = vld [vmem:[%s311 + $0x838] sm:$0xff]
        %v1290 = vld [vmem:[%s311 + $0x840] sm:$0xff]
        %v1291 = vld [vmem:[%s311 + $0x848] sm:$0xff]
        %v1292 = vld [vmem:[%s311 + $0x850] sm:$0xff]
        %v1293 = vld [vmem:[%s311 + $0x858] sm:$0xff]
        %v1294 = vld [vmem:[%s311 + $0x860] sm:$0xff]
        %v1295 = vld [vmem:[%s311 + $0x868] sm:$0xff]
        %v1296 = vld [vmem:[%s311 + $0x870] sm:$0xff]
        %v1297 = vld [vmem:[%s311 + $0x878] sm:$0xff]
        %v1298 = vld [vmem:[%s311 + $0x880] sm:$0xff]
        %v1299 = vld [vmem:[%s311 + $0x888] sm:$0xff]
        %v1300 = vld [vmem:[%s311 + $0x890] sm:$0xff]
        %v1301 = vld [vmem:[%s311 + $0x898] sm:$0xff]
        %v1302 = vld [vmem:[%s311 + $0x8a0] sm:$0xff]
        %v1303 = vld [vmem:[%s311 + $0x8a8] sm:$0xff]
        %v1304 = vld [vmem:[%s311 + $0x8b0] sm:$0xff]
        %v1305 = vld [vmem:[%s311 + $0x8b8] sm:$0xff]
        %v1306 = vld [vmem:[%s311 + $0x8c0] sm:$0xff]
        %v1307 = vld [vmem:[%s311 + $0x8c8] sm:$0xff]
        %v1308 = vld [vmem:[%s311 + $0x8d0] sm:$0xff]
        %v1309 = vld [vmem:[%s311 + $0x8d8] sm:$0xff]
        %v1310 = vld [vmem:[%s311 + $0x8e0] sm:$0xff]
        %v1311 = vld [vmem:[%s311 + $0x8e8] sm:$0xff]
        %v1312 = vld [vmem:[%s311 + $0x8f0] sm:$0xff]
        %v1313 = vld [vmem:[%s311 + $0x8f8] sm:$0xff]
        %v1314 = vld [vmem:[%s311 + $0x900] sm:$0xff]
        %v1315 = vld [vmem:[%s311 + $0x908] sm:$0xff]
        %v1316 = vld [vmem:[%s311 + $0x910] sm:$0xff]
        %v1317 = vld [vmem:[%s311 + $0x918] sm:$0xff]
        %v1318 = vld [vmem:[%s311 + $0x920] sm:$0xff]
        %v1319 = vld [vmem:[%s311 + $0x928] sm:$0xff]
        %v1320 = vld [vmem:[%s311 + $0x930] sm:$0xff]
        %v1321 = vld [vmem:[%s311 + $0x938] sm:$0xff]
        %v1322 = vld [vmem:[%s311 + $0x940] sm:$0xff]
        %v1323 = vld [vmem:[%s311 + $0x948] sm:$0xff]
        %v1324 = vld [vmem:[%s311 + $0x950] sm:$0xff]
        %v1325 = vld [vmem:[%s311 + $0x958] sm:$0xff]
        %v1326 = vld [vmem:[%s311 + $0x960] sm:$0xff]
        %v1327 = vld [vmem:[%s311 + $0x968] sm:$0xff]
        %v1328 = vld [vmem:[%s311 + $0x970] sm:$0xff]
        %v1329 = vld [vmem:[%s311 + $0x978] sm:$0xff]
        %v1330 = vld [vmem:[%s311 + $0x980] sm:$0xff]
        %v1331 = vld [vmem:[%s311 + $0x988] sm:$0xff]
        %v1332 = vld [vmem:[%s311 + $0x990] sm:$0xff]
        %v1333 = vld [vmem:[%s311 + $0x998] sm:$0xff]
        %v1334 = vld [vmem:[%s311 + $0x9a0] sm:$0xff]
        %v1335 = vld [vmem:[%s311 + $0x9a8] sm:$0xff]
        %v1336 = vld [vmem:[%s311 + $0x9b0] sm:$0xff]
        %v1337 = vld [vmem:[%s311 + $0x9b8] sm:$0xff]
        %v1338 = vld [vmem:[%s311 + $0x9c0] sm:$0xff]
        %v1339 = vld [vmem:[%s311 + $0x9c8] sm:$0xff]
        %v1340 = vld [vmem:[%s311 + $0x9d0] sm:$0xff]
        %v1341 = vld [vmem:[%s311 + $0x9d8] sm:$0xff]
        %v1342 = vld [vmem:[%s311 + $0x9e0] sm:$0xff]
        %v1343 = vld [vmem:[%s311 + $0x9e8] sm:$0xff]
        %v1344 = vld [vmem:[%s311 + $0x9f0] sm:$0xff]
        %v1345 = vld [vmem:[%s311 + $0x9f8] sm:$0xff]
        %v1346 = vld [vmem:[%s311 + $0xa00] sm:$0xff]
        %v1347 = vld [vmem:[%s311 + $0xa08] sm:$0xff]
        %v1348 = vld [vmem:[%s311 + $0xa10] sm:$0xff]
        %v1349 = vld [vmem:[%s311 + $0xa18] sm:$0xff]
        %v1350 = vld [vmem:[%s311 + $0xa20] sm:$0xff]
        %v1351 = vld [vmem:[%s311 + $0xa28] sm:$0xff]
        %v1352 = vld [vmem:[%s311 + $0xa30] sm:$0xff]
        %v1353 = vld [vmem:[%s311 + $0xa38] sm:$0xff]
        %v1354 = vld [vmem:[%s311 + $0xa40] sm:$0xff]
        %v1355 = vld [vmem:[%s311 + $0xa48] sm:$0xff]
        %v1356 = vld [vmem:[%s311 + $0xa50] sm:$0xff]
        %v1357 = vld [vmem:[%s311 + $0xa58] sm:$0xff]
        %v1358 = vld [vmem:[%s311 + $0xa60] sm:$0xff]
        %v1359 = vld [vmem:[%s311 + $0xa68] sm:$0xff]
        %v1360 = vld [vmem:[%s311 + $0xa70] sm:$0xff]
        %v1361 = vld [vmem:[%s311 + $0xa78] sm:$0xff]
        %v1362 = vld [vmem:[%s311 + $0xa80] sm:$0xff]
        %v1363 = vld [vmem:[%s311 + $0xa88] sm:$0xff]
        %v1364 = vld [vmem:[%s311 + $0xa90] sm:$0xff]
        %v1365 = vld [vmem:[%s311 + $0xa98] sm:$0xff]
        %v1366 = vld [vmem:[%s311 + $0xaa0] sm:$0xff]
        %v1367 = vld [vmem:[%s311 + $0xaa8] sm:$0xff]
        %v1368 = vld [vmem:[%s311 + $0xab0] sm:$0xff]
        %v1369 = vld [vmem:[%s311 + $0xab8] sm:$0xff]
        %v1370 = vld [vmem:[%s311 + $0xac0] sm:$0xff]
        %v1371 = vld [vmem:[%s311 + $0xac8] sm:$0xff]
        %v1372 = vld [vmem:[%s311 + $0xad0] sm:$0xff]
        %v1373 = vld [vmem:[%s311 + $0xad8] sm:$0xff]
        %v1374 = vld [vmem:[%s311 + $0xae0] sm:$0xff]
        %v1375 = vld [vmem:[%s311 + $0xae8] sm:$0xff]
        %v1376 = vld [vmem:[%s311 + $0xaf0] sm:$0xff]
        %v1377 = vld [vmem:[%s311 + $0xaf8] sm:$0xff]
        %v1378 = vld [vmem:[%s311 + $0xb00] sm:$0xff]
        %v1379 = vld [vmem:[%s311 + $0xb08] sm:$0xff]
        %v1380 = vld [vmem:[%s311 + $0xb10] sm:$0xff]
        %v1381 = vld [vmem:[%s311 + $0xb18] sm:$0xff]
        %v1382 = vld [vmem:[%s311 + $0xb20] sm:$0xff]
        %v1383 = vld [vmem:[%s311 + $0xb28] sm:$0xff]
        %v1384 = vld [vmem:[%s311 + $0xb30] sm:$0xff]
        %v1385 = vld [vmem:[%s311 + $0xb38] sm:$0xff]
        %v1386 = vld [vmem:[%s311 + $0xb40] sm:$0xff]
        %v1387 = vld [vmem:[%s311 + $0xb48] sm:$0xff]
        %v1388 = vld [vmem:[%s311 + $0xb50] sm:$0xff]
        %v1389 = vld [vmem:[%s311 + $0xb58] sm:$0xff]
        %v1390 = vld [vmem:[%s311 + $0xb60] sm:$0xff]
        %v1391 = vld [vmem:[%s311 + $0xb68] sm:$0xff]
        %v1392 = vld [vmem:[%s311 + $0xb70] sm:$0xff]
        %v1393 = vld [vmem:[%s311 + $0xb78] sm:$0xff]
        %v1394 = vld [vmem:[%s311 + $0xb80] sm:$0xff]
        %v1395 = vld [vmem:[%s311 + $0xb88] sm:$0xff]
        %v1396 = vld [vmem:[%s311 + $0xb90] sm:$0xff]
        %v1397 = vld [vmem:[%s311 + $0xb98] sm:$0xff]
        %v1398 = vld [vmem:[%s311 + $0xba0] sm:$0xff]
        %v1399 = vld [vmem:[%s311 + $0xba8] sm:$0xff]
        %v1400 = vld [vmem:[%s311 + $0xbb0] sm:$0xff]
        %v1401 = vld [vmem:[%s311 + $0xbb8] sm:$0xff]
        %v1402 = vld [vmem:[%s311 + $0xbc0] sm:$0xff]
        %v1403 = vld [vmem:[%s311 + $0xbc8] sm:$0xff]
        %v1404 = vld [vmem:[%s311 + $0xbd0] sm:$0xff]
        %v1405 = vld [vmem:[%s311 + $0xbd8] sm:$0xff]
        %v1406 = vld [vmem:[%s311 + $0xbe0] sm:$0xff]
        %v1407 = vld [vmem:[%s311 + $0xbe8] sm:$0xff]
        %v1408 = vld [vmem:[%s311 + $0xbf0] sm:$0xff]
        %v1409 = vld [vmem:[%s311 + $0xbf8] sm:$0xff]
        %v1410 = vld [vmem:[%s311 + $0xc00] sm:$0xff]
        %v1411 = vld [vmem:[%s311 + $0xc08] sm:$0xff]
        %v1412 = vld [vmem:[%s311 + $0xc10] sm:$0xff]
        %v1413 = vld [vmem:[%s311 + $0xc18] sm:$0xff]
        %v1414 = vld [vmem:[%s311 + $0xc20] sm:$0xff]
        %v1415 = vld [vmem:[%s311 + $0xc28] sm:$0xff]
        %v1416 = vld [vmem:[%s311 + $0xc30] sm:$0xff]
        %v1417 = vld [vmem:[%s311 + $0xc38] sm:$0xff]
        %v1418 = vld [vmem:[%s311 + $0xc40] sm:$0xff]
        %v1419 = vld [vmem:[%s311 + $0xc48] sm:$0xff]
        %v1420 = vld [vmem:[%s311 + $0xc50] sm:$0xff]
        %v1421 = vld [vmem:[%s311 + $0xc58] sm:$0xff]
        %v1422 = vld [vmem:[%s311 + $0xc60] sm:$0xff]
        %v1423 = vld [vmem:[%s311 + $0xc68] sm:$0xff]
        %v1424 = vld [vmem:[%s311 + $0xc70] sm:$0xff]
        %v1425 = vld [vmem:[%s311 + $0xc78] sm:$0xff]
        %v1426 = vld [vmem:[%s311 + $0xc80] sm:$0xff]
        %v1427 = vld [vmem:[%s311 + $0xc88] sm:$0xff]
        %v1428 = vld [vmem:[%s311 + $0xc90] sm:$0xff]
        %v1429 = vld [vmem:[%s311 + $0xc98] sm:$0xff]
        %v1430 = vld [vmem:[%s311 + $0xca0] sm:$0xff]
        %v1431 = vld [vmem:[%s311 + $0xca8] sm:$0xff]
        %v1432 = vld [vmem:[%s311 + $0xcb0] sm:$0xff]
        %v1433 = vld [vmem:[%s311 + $0xcb8] sm:$0xff]
        %v1434 = vld [vmem:[%s311 + $0xcc0] sm:$0xff]
        %v1435 = vld [vmem:[%s311 + $0xcc8] sm:$0xff]
        %v1436 = vld [vmem:[%s311 + $0xcd0] sm:$0xff]
        %v1437 = vld [vmem:[%s311 + $0xcd8] sm:$0xff]
        %v1438 = vld [vmem:[%s311 + $0xce0] sm:$0xff]
        %v1439 = vld [vmem:[%s311 + $0xce8] sm:$0xff]
        %v1440 = vld [vmem:[%s311 + $0xcf0] sm:$0xff]
        %v1441 = vld [vmem:[%s311 + $0xcf8] sm:$0xff]
        %v1442 = vld [vmem:[%s311 + $0xd00] sm:$0xff]
        %v1443 = vld [vmem:[%s311 + $0xd08] sm:$0xff]
        %v1444 = vld [vmem:[%s311 + $0xd10] sm:$0xff]
        %v1445 = vld [vmem:[%s311 + $0xd18] sm:$0xff]
        %v1446 = vld [vmem:[%s311 + $0xd20] sm:$0xff]
        %v1447 = vld [vmem:[%s311 + $0xd28] sm:$0xff]
        %v1448 = vld [vmem:[%s311 + $0xd30] sm:$0xff]
        %v1449 = vld [vmem:[%s311 + $0xd38] sm:$0xff]
        %v1450 = vld [vmem:[%s311 + $0xd40] sm:$0xff]
        %v1451 = vld [vmem:[%s311 + $0xd48] sm:$0xff]
        %v1452 = vld [vmem:[%s311 + $0xd50] sm:$0xff]
        %v1453 = vld [vmem:[%s311 + $0xd58] sm:$0xff]
        %v1454 = vld [vmem:[%s311 + $0xd60] sm:$0xff]
        %v1455 = vld [vmem:[%s311 + $0xd68] sm:$0xff]
        %v1456 = vld [vmem:[%s311 + $0xd70] sm:$0xff]
        %v1457 = vld [vmem:[%s311 + $0xd78] sm:$0xff]
        %v1458 = vld [vmem:[%s311 + $0xd80] sm:$0xff]
        %v1459 = vld [vmem:[%s311 + $0xd88] sm:$0xff]
        %v1460 = vld [vmem:[%s311 + $0xd90] sm:$0xff]
        %v1461 = vld [vmem:[%s311 + $0xd98] sm:$0xff]
        %v1462 = vld [vmem:[%s311 + $0xda0] sm:$0xff]
        %v1463 = vld [vmem:[%s311 + $0xda8] sm:$0xff]
        %v1464 = vld [vmem:[%s311 + $0xdb0] sm:$0xff]
        %v1465 = vld [vmem:[%s311 + $0xdb8] sm:$0xff]
        %v1466 = vld [vmem:[%s311 + $0xdc0] sm:$0xff]
        %v1467 = vld [vmem:[%s311 + $0xdc8] sm:$0xff]
        %v1468 = vld [vmem:[%s311 + $0xdd0] sm:$0xff]
        %v1469 = vld [vmem:[%s311 + $0xdd8] sm:$0xff]
        %v1470 = vld [vmem:[%s311 + $0xde0] sm:$0xff]
        %v1471 = vld [vmem:[%s311 + $0xde8] sm:$0xff]
        %v1472 = vld [vmem:[%s311 + $0xdf0] sm:$0xff]
        %v1473 = vld [vmem:[%s311 + $0xdf8] sm:$0xff]
        %v1474 = vld [vmem:[%s311 + $0xe00] sm:$0xff]
        %v1475 = vld [vmem:[%s311 + $0xe08] sm:$0xff]
        %v1476 = vld [vmem:[%s311 + $0xe10] sm:$0xff]
        %v1477 = vld [vmem:[%s311 + $0xe18] sm:$0xff]
        %v1478 = vld [vmem:[%s311 + $0xe20] sm:$0xff]
        %v1479 = vld [vmem:[%s311 + $0xe28] sm:$0xff]
        %v1480 = vld [vmem:[%s311 + $0xe30] sm:$0xff]
        %v1481 = vld [vmem:[%s311 + $0xe38] sm:$0xff]
        %v1482 = vld [vmem:[%s311 + $0xe40] sm:$0xff]
        %v1483 = vld [vmem:[%s311 + $0xe48] sm:$0xff]
        %v1484 = vld [vmem:[%s311 + $0xe50] sm:$0xff]
        %v1485 = vld [vmem:[%s311 + $0xe58] sm:$0xff]
        %v1486 = vld [vmem:[%s311 + $0xe60] sm:$0xff]
        %v1487 = vld [vmem:[%s311 + $0xe68] sm:$0xff]
        %v1488 = vld [vmem:[%s311 + $0xe70] sm:$0xff]
        %v1489 = vld [vmem:[%s311 + $0xe78] sm:$0xff]
        %v1490 = vld [vmem:[%s311 + $0xe80] sm:$0xff]
        %v1491 = vld [vmem:[%s311 + $0xe88] sm:$0xff]
        %v1492 = vld [vmem:[%s311 + $0xe90] sm:$0xff]
        %v1493 = vld [vmem:[%s311 + $0xe98] sm:$0xff]
        %v1494 = vld [vmem:[%s311 + $0xea0] sm:$0xff]
        %v1495 = vld [vmem:[%s311 + $0xea8] sm:$0xff]
        %v1496 = vld [vmem:[%s311 + $0xeb0] sm:$0xff]
        %v1497 = vld [vmem:[%s311 + $0xeb8] sm:$0xff]
        %v1498 = vld [vmem:[%s311 + $0xec0] sm:$0xff]
        %v1499 = vld [vmem:[%s311 + $0xec8] sm:$0xff]
        %v1500 = vld [vmem:[%s311 + $0xed0] sm:$0xff]
        %v1501 = vld [vmem:[%s311 + $0xed8] sm:$0xff]
        %v1502 = vld [vmem:[%s311 + $0xee0] sm:$0xff]
        %v1503 = vld [vmem:[%s311 + $0xee8] sm:$0xff]
        %v1504 = vld [vmem:[%s311 + $0xef0] sm:$0xff]
        %v1505 = vld [vmem:[%s311 + $0xef8] sm:$0xff]
        %v1506 = vld [vmem:[%s311 + $0xf00] sm:$0xff]
        %v1507 = vld [vmem:[%s311 + $0xf08] sm:$0xff]
        %v1508 = vld [vmem:[%s311 + $0xf10] sm:$0xff]
        %v1509 = vld [vmem:[%s311 + $0xf18] sm:$0xff]
        %v1510 = vld [vmem:[%s311 + $0xf20] sm:$0xff]
        %v1511 = vld [vmem:[%s311 + $0xf28] sm:$0xff]
        %v1512 = vld [vmem:[%s311 + $0xf30] sm:$0xff]
        %v1513 = vld [vmem:[%s311 + $0xf38] sm:$0xff]
        %v1514 = vld [vmem:[%s311 + $0xf40] sm:$0xff]
        %v1515 = vld [vmem:[%s311 + $0xf48] sm:$0xff]
        %v1516 = vld [vmem:[%s311 + $0xf50] sm:$0xff]
        %v1517 = vld [vmem:[%s311 + $0xf58] sm:$0xff]
        %v1518 = vld [vmem:[%s311 + $0xf60] sm:$0xff]
        %v1519 = vld [vmem:[%s311 + $0xf68] sm:$0xff]
        %v1520 = vld [vmem:[%s311 + $0xf70] sm:$0xff]
        %v1521 = vld [vmem:[%s311 + $0xf78] sm:$0xff]
        %v1522 = vld [vmem:[%s311 + $0xf80] sm:$0xff]
        %v1523 = vld [vmem:[%s311 + $0xf88] sm:$0xff]
        %v1524 = vld [vmem:[%s311 + $0xf90] sm:$0xff]
        %v1525 = vld [vmem:[%s311 + $0xf98] sm:$0xff]
        %v1526 = vld [vmem:[%s311 + $0xfa0] sm:$0xff]
        %v1527 = vld [vmem:[%s311 + $0xfa8] sm:$0xff]
        %v1528 = vld [vmem:[%s311 + $0xfb0] sm:$0xff]
        %v1529 = vld [vmem:[%s311 + $0xfb8] sm:$0xff]
        %v1530 = vld [vmem:[%s311 + $0xfc0] sm:$0xff]
        %v1531 = vld [vmem:[%s311 + $0xfc8] sm:$0xff]
        %v1532 = vld [vmem:[%s311 + $0xfd0] sm:$0xff]
        %v1533 = vld [vmem:[%s311 + $0xfd8] sm:$0xff]
        %v1534 = vld [vmem:[%s311 + $0xfe0] sm:$0xff]
        %v1535 = vld [vmem:[%s311 + $0xfe8] sm:$0xff]
        %v1536 = vld [vmem:[%s311 + $0xff0] sm:$0xff]
        %v1537 = vld [vmem:[%s311 + $0xff8] sm:$0xff]
        %v1538 = vld [vmem:[%s311 + $0x1000] sm:$0xff]
        %v1539 = vld [vmem:[%s311 + $0x1008] sm:$0xff]
        %v1540 = vld [vmem:[%s311 + $0x1010] sm:$0xff]
        %v1541 = vld [vmem:[%s311 + $0x1018] sm:$0xff]
        %v1542 = vld [vmem:[%s311 + $0x1020] sm:$0xff]
        %v1543 = vld [vmem:[%s311 + $0x1028] sm:$0xff]
        %v1544 = vld [vmem:[%s311 + $0x1030] sm:$0xff]
        %v1545 = vld [vmem:[%s311 + $0x1038] sm:$0xff]
        %v1546 = vld [vmem:[%s311 + $0x1040] sm:$0xff]
        %v1547 = vld [vmem:[%s311 + $0x1048] sm:$0xff]
        %v1548 = vld [vmem:[%s311 + $0x1050] sm:$0xff]
        %v1549 = vld [vmem:[%s311 + $0x1058] sm:$0xff]
        %v1550 = vld [vmem:[%s311 + $0x1060] sm:$0xff]
        %v1551 = vld [vmem:[%s311 + $0x1068] sm:$0xff]
        %v1552 = vld [vmem:[%s311 + $0x1070] sm:$0xff]
        %v1553 = vld [vmem:[%s311 + $0x1078] sm:$0xff]
        %v1554 = vld [vmem:[%s311 + $0x1080] sm:$0xff]
        %v1555 = vld [vmem:[%s311 + $0x1088] sm:$0xff]
        %v1556 = vld [vmem:[%s311 + $0x1090] sm:$0xff]
        %v1557 = vld [vmem:[%s311 + $0x1098] sm:$0xff]
        %v1558 = vld [vmem:[%s311 + $0x10a0] sm:$0xff]
        %v1559 = vld [vmem:[%s311 + $0x10a8] sm:$0xff]
        %v1560 = vld [vmem:[%s311 + $0x10b0] sm:$0xff]
        %v1561 = vld [vmem:[%s311 + $0x10b8] sm:$0xff]
        %v1562 = vld [vmem:[%s311 + $0x10c0] sm:$0xff]
        %v1563 = vld [vmem:[%s311 + $0x10c8] sm:$0xff]
        %v1564 = vld [vmem:[%s311 + $0x10d0] sm:$0xff]
        %v1565 = vld [vmem:[%s311 + $0x10d8] sm:$0xff]
        %v1566 = vld [vmem:[%s311 + $0x10e0] sm:$0xff]
        %v1567 = vld [vmem:[%s311 + $0x10e8] sm:$0xff]
        %v1568 = vld [vmem:[%s311 + $0x10f0] sm:$0xff]
        %v1569 = vld [vmem:[%s311 + $0x10f8] sm:$0xff]
        %v1570 = vld [vmem:[%s311 + $0x1100] sm:$0xff]
        %v1571 = vld [vmem:[%s311 + $0x1108] sm:$0xff]
        %v1572 = vld [vmem:[%s311 + $0x1110] sm:$0xff]
        %v1573 = vld [vmem:[%s311 + $0x1118] sm:$0xff]
        %v1574 = vld [vmem:[%s311 + $0x1120] sm:$0xff]
        %v1575 = vld [vmem:[%s311 + $0x1128] sm:$0xff]
        %v1576 = vld [vmem:[%s311 + $0x1130] sm:$0xff]
        %v1577 = vld [vmem:[%s311 + $0x1138] sm:$0xff]
        %v1578 = vld [vmem:[%s311 + $0x1140] sm:$0xff]
        %v1579 = vld [vmem:[%s311 + $0x1148] sm:$0xff]
        %v1580 = vld [vmem:[%s311 + $0x1150] sm:$0xff]
        %v1581 = vld [vmem:[%s311 + $0x1158] sm:$0xff]
        %v1582 = vld [vmem:[%s311 + $0x1160] sm:$0xff]
        %v1583 = vld [vmem:[%s311 + $0x1168] sm:$0xff]
        %v1584 = vld [vmem:[%s311 + $0x1170] sm:$0xff]
        %v1585 = vld [vmem:[%s311 + $0x1178] sm:$0xff]
        %v1586 = vld [vmem:[%s311 + $0x1180] sm:$0xff]
        %v1587 = vld [vmem:[%s311 + $0x1188] sm:$0xff]
        %v1588 = vld [vmem:[%s311 + $0x1190] sm:$0xff]
        %v1589 = vld [vmem:[%s311 + $0x1198] sm:$0xff]
        %v1590 = vld [vmem:[%s311 + $0x11a0] sm:$0xff]
        %v1591 = vld [vmem:[%s311 + $0x11a8] sm:$0xff]
        %v1592 = vld [vmem:[%s311 + $0x11b0] sm:$0xff]
        %v1593 = vld [vmem:[%s311 + $0x11b8] sm:$0xff]
        %v1594 = vld [vmem:[%s311 + $0x11c0] sm:$0xff]
        %v1595 = vld [vmem:[%s311 + $0x11c8] sm:$0xff]
        %v1596 = vld [vmem:[%s311 + $0x11d0] sm:$0xff]
        %v1597 = vld [vmem:[%s311 + $0x11d8] sm:$0xff]
        %v1598 = vld [vmem:[%s311 + $0x11e0] sm:$0xff]
        %v1599 = vld [vmem:[%s311 + $0x11e8] sm:$0xff]
        %v1600 = vld [vmem:[%s311 + $0x11f0] sm:$0xff]
        %v1601 = vld [vmem:[%s311 + $0x11f8] sm:$0xff]
        %v1602 = vld [vmem:[%s311 + $0x1200] sm:$0xff]
        %v1603 = vld [vmem:[%s311 + $0x1208] sm:$0xff]
        %v1604 = vld [vmem:[%s311 + $0x1210] sm:$0xff]
        %v1605 = vld [vmem:[%s311 + $0x1218] sm:$0xff]
        %v1606 = vld [vmem:[%s311 + $0x1220] sm:$0xff]
        %v1607 = vld [vmem:[%s311 + $0x1228] sm:$0xff]
        %v1608 = vld [vmem:[%s311 + $0x1230] sm:$0xff]
        %v1609 = vld [vmem:[%s311 + $0x1238] sm:$0xff]
        %v1610 = vld [vmem:[%s311 + $0x1240] sm:$0xff]
        %v1611 = vld [vmem:[%s311 + $0x1248] sm:$0xff]
        %v1612 = vld [vmem:[%s311 + $0x1250] sm:$0xff]
        %v1613 = vld [vmem:[%s311 + $0x1258] sm:$0xff]
        %v1614 = vld [vmem:[%s311 + $0x1260] sm:$0xff]
        %v1615 = vld [vmem:[%s311 + $0x1268] sm:$0xff]
        %v1616 = vld [vmem:[%s311 + $0x1270] sm:$0xff]
        %v1617 = vld [vmem:[%s311 + $0x1278] sm:$0xff]
        %v1618 = vld [vmem:[%s311 + $0x1280] sm:$0xff]
        %v1619 = vld [vmem:[%s311 + $0x1288] sm:$0xff]
        %v1620 = vld [vmem:[%s311 + $0x1290] sm:$0xff]
        %v1621 = vld [vmem:[%s311 + $0x1298] sm:$0xff]
        %v1622 = vld [vmem:[%s311 + $0x12a0] sm:$0xff]
        %v1623 = vld [vmem:[%s311 + $0x12a8] sm:$0xff]
        %v1624 = vld [vmem:[%s311 + $0x12b0] sm:$0xff]
        %v1625 = vld [vmem:[%s311 + $0x12b8] sm:$0xff]
        %v1626 = vld [vmem:[%s311 + $0x12c0] sm:$0xff]
        %v1627 = vld [vmem:[%s311 + $0x12c8] sm:$0xff]
        %v1628 = vld [vmem:[%s311 + $0x12d0] sm:$0xff]
        %v1629 = vld [vmem:[%s311 + $0x12d8] sm:$0xff]
        %v1630 = vld [vmem:[%s311 + $0x12e0] sm:$0xff]
        %v1631 = vld [vmem:[%s311 + $0x12e8] sm:$0xff]
        %v1632 = vld [vmem:[%s311 + $0x12f0] sm:$0xff]
        %v1633 = vld [vmem:[%s311 + $0x12f8] sm:$0xff]
        %v1634 = vld [vmem:[%s311 + $0x1300] sm:$0xff]
        %v1635 = vld [vmem:[%s311 + $0x1308] sm:$0xff]
        %v1636 = vld [vmem:[%s311 + $0x1310] sm:$0xff]
        %v1637 = vld [vmem:[%s311 + $0x1318] sm:$0xff]
        %v1638 = vld [vmem:[%s311 + $0x1320] sm:$0xff]
        %v1639 = vld [vmem:[%s311 + $0x1328] sm:$0xff]
        %v1640 = vld [vmem:[%s311 + $0x1330] sm:$0xff]
        %v1641 = vld [vmem:[%s311 + $0x1338] sm:$0xff]
        %v1642 = vld [vmem:[%s311 + $0x1340] sm:$0xff]
        %v1643 = vld [vmem:[%s311 + $0x1348] sm:$0xff]
        %v1644 = vld [vmem:[%s311 + $0x1350] sm:$0xff]
        %v1645 = vld [vmem:[%s311 + $0x1358] sm:$0xff]
        %v1646 = vld [vmem:[%s311 + $0x1360] sm:$0xff]
        %v1647 = vld [vmem:[%s311 + $0x1368] sm:$0xff]
        %v1648 = vld [vmem:[%s311 + $0x1370] sm:$0xff]
        %v1649 = vld [vmem:[%s311 + $0x1378] sm:$0xff]
        %v1650 = vld [vmem:[%s311 + $0x1380] sm:$0xff]
        %v1651 = vld [vmem:[%s311 + $0x1388] sm:$0xff]
        %v1652 = vld [vmem:[%s311 + $0x1390] sm:$0xff]
        %v1653 = vld [vmem:[%s311 + $0x1398] sm:$0xff]
        %v1654 = vld [vmem:[%s311 + $0x13a0] sm:$0xff]
        %v1655 = vld [vmem:[%s311 + $0x13a8] sm:$0xff]
        %v1656 = vld [vmem:[%s311 + $0x13b0] sm:$0xff]
        %v1657 = vld [vmem:[%s311 + $0x13b8] sm:$0xff]
        %v1658 = vld [vmem:[%s311 + $0x13c0] sm:$0xff]
        %v1659 = vld [vmem:[%s311 + $0x13c8] sm:$0xff]
        %v1660 = vld [vmem:[%s311 + $0x13d0] sm:$0xff]
        %v1661 = vld [vmem:[%s311 + $0x13d8] sm:$0xff]
        %v1662 = vld [vmem:[%s311 + $0x13e0] sm:$0xff]
        %v1663 = vld [vmem:[%s311 + $0x13e8] sm:$0xff]
        %v1664 = vld [vmem:[%s311 + $0x13f0] sm:$0xff]
        %v1665 = vld [vmem:[%s311 + $0x13f8] sm:$0xff]
        %v1666 = vld [vmem:[%s311 + $0x1400] sm:$0xff]
        %v1667 = vld [vmem:[%s311 + $0x1408] sm:$0xff]
        %v1668 = vld [vmem:[%s311 + $0x1410] sm:$0xff]
        %v1669 = vld [vmem:[%s311 + $0x1418] sm:$0xff]
        %v1670 = vld [vmem:[%s311 + $0x1420] sm:$0xff]
        %v1671 = vld [vmem:[%s311 + $0x1428] sm:$0xff]
        %v1672 = vld [vmem:[%s311 + $0x1430] sm:$0xff]
        %v1673 = vld [vmem:[%s311 + $0x1438] sm:$0xff]
        %v1674 = vld [vmem:[%s311 + $0x1440] sm:$0xff]
        %v1675 = vld [vmem:[%s311 + $0x1448] sm:$0xff]
        %v1676 = vld [vmem:[%s311 + $0x1450] sm:$0xff]
        %v1677 = vld [vmem:[%s311 + $0x1458] sm:$0xff]
        %v1678 = vld [vmem:[%s311 + $0x1460] sm:$0xff]
        %v1679 = vld [vmem:[%s311 + $0x1468] sm:$0xff]
        %v1680 = vld [vmem:[%s311 + $0x1470] sm:$0xff]
        %v1681 = vld [vmem:[%s311 + $0x1478] sm:$0xff]
        %v1682 = vld [vmem:[%s311 + $0x1480] sm:$0xff]
        %v1683 = vld [vmem:[%s311 + $0x1488] sm:$0xff]
        %v1684 = vld [vmem:[%s311 + $0x1490] sm:$0xff]
        %v1685 = vld [vmem:[%s311 + $0x1498] sm:$0xff]
        %v1686 = vld [vmem:[%s311 + $0x14a0] sm:$0xff]
        %v1687 = vld [vmem:[%s311 + $0x14a8] sm:$0xff]
        %v1688 = vld [vmem:[%s311 + $0x14b0] sm:$0xff]
        %v1689 = vld [vmem:[%s311 + $0x14b8] sm:$0xff]
        %v1690 = vld [vmem:[%s311 + $0x14c0] sm:$0xff]
        %v1691 = vld [vmem:[%s311 + $0x14c8] sm:$0xff]
        %v1692 = vld [vmem:[%s311 + $0x14d0] sm:$0xff]
        %v1693 = vld [vmem:[%s311 + $0x14d8] sm:$0xff]
        %v1694 = vld [vmem:[%s311 + $0x14e0] sm:$0xff]
        %v1695 = vld [vmem:[%s311 + $0x14e8] sm:$0xff]
        %v1696 = vld [vmem:[%s311 + $0x14f0] sm:$0xff]
        %v1697 = vld [vmem:[%s311 + $0x14f8] sm:$0xff]
        %v1698 = vld [vmem:[%s311 + $0x1500] sm:$0xff]
        %v1699 = vld [vmem:[%s311 + $0x1508] sm:$0xff]
        %v1700 = vld [vmem:[%s311 + $0x1510] sm:$0xff]
        %v1701 = vld [vmem:[%s311 + $0x1518] sm:$0xff]
        %v1702 = vld [vmem:[%s311 + $0x1520] sm:$0xff]
        %v1703 = vld [vmem:[%s311 + $0x1528] sm:$0xff]
        %v1704 = vld [vmem:[%s311 + $0x1530] sm:$0xff]
        %v1705 = vld [vmem:[%s311 + $0x1538] sm:$0xff]
        %v1706 = vld [vmem:[%s311 + $0x1540] sm:$0xff]
        %v1707 = vld [vmem:[%s311 + $0x1548] sm:$0xff]
        %v1708 = vld [vmem:[%s311 + $0x1550] sm:$0xff]
        %v1709 = vld [vmem:[%s311 + $0x1558] sm:$0xff]
        %v1710 = vld [vmem:[%s311 + $0x1560] sm:$0xff]
        %v1711 = vld [vmem:[%s311 + $0x1568] sm:$0xff]
        %v1712 = vld [vmem:[%s311 + $0x1570] sm:$0xff]
        %v1713 = vld [vmem:[%s311 + $0x1578] sm:$0xff]
        %v1714 = vld [vmem:[%s311 + $0x1580] sm:$0xff]
        %v1715 = vld [vmem:[%s311 + $0x1588] sm:$0xff]
        %v1716 = vld [vmem:[%s311 + $0x1590] sm:$0xff]
        %v1717 = vld [vmem:[%s311 + $0x1598] sm:$0xff]
        %v1718 = vld [vmem:[%s311 + $0x15a0] sm:$0xff]
        %v1719 = vld [vmem:[%s311 + $0x15a8] sm:$0xff]
        %v1720 = vld [vmem:[%s311 + $0x15b0] sm:$0xff]
        %v1721 = vld [vmem:[%s311 + $0x15b8] sm:$0xff]
        %v1722 = vld [vmem:[%s311 + $0x15c0] sm:$0xff]
        %v1723 = vld [vmem:[%s311 + $0x15c8] sm:$0xff]
        %v1724 = vld [vmem:[%s311 + $0x15d0] sm:$0xff]
        %v1725 = vld [vmem:[%s311 + $0x15d8] sm:$0xff]
        %v1726 = vld [vmem:[%s311 + $0x15e0] sm:$0xff]
        %v1727 = vld [vmem:[%s311 + $0x15e8] sm:$0xff]
        %v1728 = vld [vmem:[%s311 + $0x15f0] sm:$0xff]
        %v1729 = vld [vmem:[%s311 + $0x15f8] sm:$0xff]
        %v1730 = vld [vmem:[%s311 + $0x1600] sm:$0xff]
        %v1731 = vld [vmem:[%s311 + $0x1608] sm:$0xff]
        %v1732 = vld [vmem:[%s311 + $0x1610] sm:$0xff]
        %v1733 = vld [vmem:[%s311 + $0x1618] sm:$0xff]
        %v1734 = vld [vmem:[%s311 + $0x1620] sm:$0xff]
        %v1735 = vld [vmem:[%s311 + $0x1628] sm:$0xff]
        %v1736 = vld [vmem:[%s311 + $0x1630] sm:$0xff]
        %v1737 = vld [vmem:[%s311 + $0x1638] sm:$0xff]
        %v1738 = vld [vmem:[%s311 + $0x1640] sm:$0xff]
        %v1739 = vld [vmem:[%s311 + $0x1648] sm:$0xff]
        %v1740 = vld [vmem:[%s311 + $0x1650] sm:$0xff]
        %v1741 = vld [vmem:[%s311 + $0x1658] sm:$0xff]
        %v1742 = vld [vmem:[%s311 + $0x1660] sm:$0xff]
        %v1743 = vld [vmem:[%s311 + $0x1668] sm:$0xff]
        %v1744 = vld [vmem:[%s311 + $0x1670] sm:$0xff]
        %v1745 = vld [vmem:[%s311 + $0x1678] sm:$0xff]
        %v1746 = vld [vmem:[%s311 + $0x1680] sm:$0xff]
        %v1747 = vld [vmem:[%s311 + $0x1688] sm:$0xff]
        %v1748 = vld [vmem:[%s311 + $0x1690] sm:$0xff]
        %v1749 = vld [vmem:[%s311 + $0x1698] sm:$0xff]
        %v1750 = vld [vmem:[%s311 + $0x16a0] sm:$0xff]
        %v1751 = vld [vmem:[%s311 + $0x16a8] sm:$0xff]
        %v1752 = vld [vmem:[%s311 + $0x16b0] sm:$0xff]
        %v1753 = vld [vmem:[%s311 + $0x16b8] sm:$0xff]
        %v1754 = vld [vmem:[%s311 + $0x16c0] sm:$0xff]
        %v1755 = vld [vmem:[%s311 + $0x16c8] sm:$0xff]
        %v1756 = vld [vmem:[%s311 + $0x16d0] sm:$0xff]
        %v1757 = vld [vmem:[%s311 + $0x16d8] sm:$0xff]
        %v1758 = vld [vmem:[%s311 + $0x16e0] sm:$0xff]
        %v1759 = vld [vmem:[%s311 + $0x16e8] sm:$0xff]
        %v1760 = vld [vmem:[%s311 + $0x16f0] sm:$0xff]
        %v1761 = vld [vmem:[%s311 + $0x16f8] sm:$0xff]
        %v1762 = vld [vmem:[%s311 + $0x1700] sm:$0xff]
        %v1763 = vld [vmem:[%s311 + $0x1708] sm:$0xff]
        %v1764 = vld [vmem:[%s311 + $0x1710] sm:$0xff]
        %v1765 = vld [vmem:[%s311 + $0x1718] sm:$0xff]
        %v1766 = vld [vmem:[%s311 + $0x1720] sm:$0xff]
        %v1767 = vld [vmem:[%s311 + $0x1728] sm:$0xff]
        %v1768 = vld [vmem:[%s311 + $0x1730] sm:$0xff]
        %v1769 = vld [vmem:[%s311 + $0x1738] sm:$0xff]
        %v1770 = vld [vmem:[%s311 + $0x1740] sm:$0xff]
        %v1771 = vld [vmem:[%s311 + $0x1748] sm:$0xff]
        %v1772 = vld [vmem:[%s311 + $0x1750] sm:$0xff]
        %v1773 = vld [vmem:[%s311 + $0x1758] sm:$0xff]
        %v1774 = vld [vmem:[%s311 + $0x1760] sm:$0xff]
        %v1775 = vld [vmem:[%s311 + $0x1768] sm:$0xff]
        %v1776 = vld [vmem:[%s311 + $0x1770] sm:$0xff]
        %v1777 = vld [vmem:[%s311 + $0x1778] sm:$0xff]
        %v1778 = vld [vmem:[%s311 + $0x1780] sm:$0xff]
        %v1779 = vld [vmem:[%s311 + $0x1788] sm:$0xff]
        %v1780 = vld [vmem:[%s311 + $0x1790] sm:$0xff]
        %v1781 = vld [vmem:[%s311 + $0x1798] sm:$0xff]
        %v1782 = vld [vmem:[%s311 + $0x17a0] sm:$0xff]
        %v1783 = vld [vmem:[%s311 + $0x17a8] sm:$0xff]
        %v1784 = vld [vmem:[%s311 + $0x17b0] sm:$0xff]
        %v1785 = vld [vmem:[%s311 + $0x17b8] sm:$0xff]
        %v1786 = vld [vmem:[%s311 + $0x17c0] sm:$0xff]
        %v1787 = vld [vmem:[%s311 + $0x17c8] sm:$0xff]
        %v1788 = vld [vmem:[%s311 + $0x17d0] sm:$0xff]
        %v1789 = vld [vmem:[%s311 + $0x17d8] sm:$0xff]
        %v1790 = vld [vmem:[%s311 + $0x17e0] sm:$0xff]
        %v1791 = vld [vmem:[%s311 + $0x17e8] sm:$0xff]
        %v1792 = vld [vmem:[%s311 + $0x17f0] sm:$0xff]
        %v1793 = vld [vmem:[%s311 + $0x17f8] sm:$0xff]
        %v1794 = vld [vmem:[%s311 + $0x1800] sm:$0xff]
        %v1795 = vld [vmem:[%s311 + $0x1808] sm:$0xff]
        %v1796 = vld [vmem:[%s311 + $0x1810] sm:$0xff]
        %v1797 = vld [vmem:[%s311 + $0x1818] sm:$0xff]
        %v1798 = vld [vmem:[%s311 + $0x1820] sm:$0xff]
        %v1799 = vld [vmem:[%s311 + $0x1828] sm:$0xff]
        %v1800 = vld [vmem:[%s311 + $0x1830] sm:$0xff]
        %v1801 = vld [vmem:[%s311 + $0x1838] sm:$0xff]
        %v1802 = vld [vmem:[%s311 + $0x1840] sm:$0xff]
        %v1803 = vld [vmem:[%s311 + $0x1848] sm:$0xff]
        %v1804 = vld [vmem:[%s311 + $0x1850] sm:$0xff]
        %v1805 = vld [vmem:[%s311 + $0x1858] sm:$0xff]
        %v1806 = vld [vmem:[%s311 + $0x1860] sm:$0xff]
        %v1807 = vld [vmem:[%s311 + $0x1868] sm:$0xff]
        %v1808 = vld [vmem:[%s311 + $0x1870] sm:$0xff]
        %v1809 = vld [vmem:[%s311 + $0x1878] sm:$0xff]
        %v1810 = vld [vmem:[%s311 + $0x1880] sm:$0xff]
        %v1811 = vld [vmem:[%s311 + $0x1888] sm:$0xff]
        %v1812 = vld [vmem:[%s311 + $0x1890] sm:$0xff]
        %v1813 = vld [vmem:[%s311 + $0x1898] sm:$0xff]
        %v1814 = vld [vmem:[%s311 + $0x18a0] sm:$0xff]
        %v1815 = vld [vmem:[%s311 + $0x18a8] sm:$0xff]
        %v1816 = vld [vmem:[%s311 + $0x18b0] sm:$0xff]
        %v1817 = vld [vmem:[%s311 + $0x18b8] sm:$0xff]
        %v1818 = vld [vmem:[%s311 + $0x18c0] sm:$0xff]
        %v1819 = vld [vmem:[%s311 + $0x18c8] sm:$0xff]
        %v1820 = vld [vmem:[%s311 + $0x18d0] sm:$0xff]
        %v1821 = vld [vmem:[%s311 + $0x18d8] sm:$0xff]
        %v1822 = vld [vmem:[%s311 + $0x18e0] sm:$0xff]
        %v1823 = vld [vmem:[%s311 + $0x18e8] sm:$0xff]
        %v1824 = vld [vmem:[%s311 + $0x18f0] sm:$0xff]
        %v1825 = vld [vmem:[%s311 + $0x18f8] sm:$0xff]
        %v1826 = vld [vmem:[%s311 + $0x1900] sm:$0xff]
        %v1827 = vld [vmem:[%s311 + $0x1908] sm:$0xff]
        %v1828 = vld [vmem:[%s311 + $0x1910] sm:$0xff]
        %v1829 = vld [vmem:[%s311 + $0x1918] sm:$0xff]
        %v1830 = vld [vmem:[%s311 + $0x1920] sm:$0xff]
        %v1831 = vld [vmem:[%s311 + $0x1928] sm:$0xff]
        %v1832 = vld [vmem:[%s311 + $0x1930] sm:$0xff]
        %v1833 = vld [vmem:[%s311 + $0x1938] sm:$0xff]
        %v1834 = vld [vmem:[%s311 + $0x1940] sm:$0xff]
        %v1835 = vld [vmem:[%s311 + $0x1948] sm:$0xff]
        %v1836 = vld [vmem:[%s311 + $0x1950] sm:$0xff]
        %v1837 = vld [vmem:[%s311 + $0x1958] sm:$0xff]
        %v1838 = vld [vmem:[%s311 + $0x1960] sm:$0xff]
        %v1839 = vld [vmem:[%s311 + $0x1968] sm:$0xff]
        %v1840 = vld [vmem:[%s311 + $0x1970] sm:$0xff]
        %v1841 = vld [vmem:[%s311 + $0x1978] sm:$0xff]
        %v1842 = vld [vmem:[%s311 + $0x1980] sm:$0xff]
        %v1843 = vld [vmem:[%s311 + $0x1988] sm:$0xff]
        %v1844 = vld [vmem:[%s311 + $0x1990] sm:$0xff]
        %v1845 = vld [vmem:[%s311 + $0x1998] sm:$0xff]
        %v1846 = vld [vmem:[%s311 + $0x19a0] sm:$0xff]
        %v1847 = vld [vmem:[%s311 + $0x19a8] sm:$0xff]
        %v1848 = vld [vmem:[%s311 + $0x19b0] sm:$0xff]
        %v1849 = vld [vmem:[%s311 + $0x19b8] sm:$0xff]
        %v1850 = vld [vmem:[%s311 + $0x19c0] sm:$0xff]
        %v1851 = vld [vmem:[%s311 + $0x19c8] sm:$0xff]
        %v1852 = vld [vmem:[%s311 + $0x19d0] sm:$0xff]
        %v1853 = vld [vmem:[%s311 + $0x19d8] sm:$0xff]
        %v1854 = vld [vmem:[%s311 + $0x19e0] sm:$0xff]
        %v1855 = vld [vmem:[%s311 + $0x19e8] sm:$0xff]
        %v1856 = vld [vmem:[%s311 + $0x19f0] sm:$0xff]
        %v1857 = vld [vmem:[%s311 + $0x19f8] sm:$0xff]
        %v1858 = vld [vmem:[%s311 + $0x1a00] sm:$0xff]
        %v1859 = vld [vmem:[%s311 + $0x1a08] sm:$0xff]
        %v1860 = vld [vmem:[%s311 + $0x1a10] sm:$0xff]
        %v1861 = vld [vmem:[%s311 + $0x1a18] sm:$0xff]
        %v1862 = vld [vmem:[%s311 + $0x1a20] sm:$0xff]
        %v1863 = vld [vmem:[%s311 + $0x1a28] sm:$0xff]
        %v1864 = vld [vmem:[%s311 + $0x1a30] sm:$0xff]
        %v1865 = vld [vmem:[%s311 + $0x1a38] sm:$0xff]
        %v1866 = vld [vmem:[%s311 + $0x1a40] sm:$0xff]
        %v1867 = vld [vmem:[%s311 + $0x1a48] sm:$0xff]
        %v1868 = vld [vmem:[%s311 + $0x1a50] sm:$0xff]
        %v1869 = vld [vmem:[%s311 + $0x1a58] sm:$0xff]
        %v1870 = vld [vmem:[%s311 + $0x1a60] sm:$0xff]
        %v1871 = vld [vmem:[%s311 + $0x1a68] sm:$0xff]
        %v1872 = vld [vmem:[%s311 + $0x1a70] sm:$0xff]
        %v1873 = vld [vmem:[%s311 + $0x1a78] sm:$0xff]
        %v1874 = vld [vmem:[%s311 + $0x1a80] sm:$0xff]
        %v1875 = vld [vmem:[%s311 + $0x1a88] sm:$0xff]
        %v1876 = vld [vmem:[%s311 + $0x1a90] sm:$0xff]
        %v1877 = vld [vmem:[%s311 + $0x1a98] sm:$0xff]
        %v1878 = vld [vmem:[%s311 + $0x1aa0] sm:$0xff]
        %v1879 = vld [vmem:[%s311 + $0x1aa8] sm:$0xff]
        %v1880 = vld [vmem:[%s311 + $0x1ab0] sm:$0xff]
        %v1881 = vld [vmem:[%s311 + $0x1ab8] sm:$0xff]
        %v1882 = vld [vmem:[%s311 + $0x1ac0] sm:$0xff]
        %v1883 = vld [vmem:[%s311 + $0x1ac8] sm:$0xff]
        %v1884 = vld [vmem:[%s311 + $0x1ad0] sm:$0xff]
        %v1885 = vld [vmem:[%s311 + $0x1ad8] sm:$0xff]
        %v1886 = vld [vmem:[%s311 + $0x1ae0] sm:$0xff]
        %v1887 = vld [vmem:[%s311 + $0x1ae8] sm:$0xff]
        %v1888 = vld [vmem:[%s311 + $0x1af0] sm:$0xff]
        %v1889 = vld [vmem:[%s311 + $0x1af8] sm:$0xff]
        %v1890 = vld [vmem:[%s311 + $0x1b00] sm:$0xff]
        %v1891 = vld [vmem:[%s311 + $0x1b08] sm:$0xff]
        %v1892 = vld [vmem:[%s311 + $0x1b10] sm:$0xff]
        %v1893 = vld [vmem:[%s311 + $0x1b18] sm:$0xff]
        %v1894 = vld [vmem:[%s311 + $0x1b20] sm:$0xff]
        %v1895 = vld [vmem:[%s311 + $0x1b28] sm:$0xff]
        %v1896 = vld [vmem:[%s311 + $0x1b30] sm:$0xff]
        %v1897 = vld [vmem:[%s311 + $0x1b38] sm:$0xff]
        %v1898 = vld [vmem:[%s311 + $0x1b40] sm:$0xff]
        %v1899 = vld [vmem:[%s311 + $0x1b48] sm:$0xff]
        %v1900 = vld [vmem:[%s311 + $0x1b50] sm:$0xff]
        %v1901 = vld [vmem:[%s311 + $0x1b58] sm:$0xff]
        %v1902 = vld [vmem:[%s311 + $0x1b60] sm:$0xff]
        %v1903 = vld [vmem:[%s311 + $0x1b68] sm:$0xff]
        %v1904 = vld [vmem:[%s311 + $0x1b70] sm:$0xff]
        %v1905 = vld [vmem:[%s311 + $0x1b78] sm:$0xff]
        %v1906 = vld [vmem:[%s311 + $0x1b80] sm:$0xff]
        %v1907 = vld [vmem:[%s311 + $0x1b88] sm:$0xff]
        %v1908 = vld [vmem:[%s311 + $0x1b90] sm:$0xff]
        %v1909 = vld [vmem:[%s311 + $0x1b98] sm:$0xff]
        %v1910 = vld [vmem:[%s311 + $0x1ba0] sm:$0xff]
        %v1911 = vld [vmem:[%s311 + $0x1ba8] sm:$0xff]
        %v1912 = vld [vmem:[%s311 + $0x1bb0] sm:$0xff]
        %v1913 = vld [vmem:[%s311 + $0x1bb8] sm:$0xff]
        %v1914 = vld [vmem:[%s311 + $0x1bc0] sm:$0xff]
        %v1915 = vld [vmem:[%s311 + $0x1bc8] sm:$0xff]
        %v1916 = vld [vmem:[%s311 + $0x1bd0] sm:$0xff]
        %v1917 = vld [vmem:[%s311 + $0x1bd8] sm:$0xff]
        %v1918 = vld [vmem:[%s311 + $0x1be0] sm:$0xff]
        %v1919 = vld [vmem:[%s311 + $0x1be8] sm:$0xff]
        %v1920 = vld [vmem:[%s311 + $0x1bf0] sm:$0xff]
        %v1921 = vld [vmem:[%s311 + $0x1bf8] sm:$0xff]
        %v1922 = vld [vmem:[%s311 + $0x1c00] sm:$0xff]
        %v1923 = vld [vmem:[%s311 + $0x1c08] sm:$0xff]
        %v1924 = vld [vmem:[%s311 + $0x1c10] sm:$0xff]
        %v1925 = vld [vmem:[%s311 + $0x1c18] sm:$0xff]
        %v1926 = vld [vmem:[%s311 + $0x1c20] sm:$0xff]
        %v1927 = vld [vmem:[%s311 + $0x1c28] sm:$0xff]
        %v1928 = vld [vmem:[%s311 + $0x1c30] sm:$0xff]
        %v1929 = vld [vmem:[%s311 + $0x1c38] sm:$0xff]
        %v1930 = vld [vmem:[%s311 + $0x1c40] sm:$0xff]
        %v1931 = vld [vmem:[%s311 + $0x1c48] sm:$0xff]
        %v1932 = vld [vmem:[%s311 + $0x1c50] sm:$0xff]
        %v1933 = vld [vmem:[%s311 + $0x1c58] sm:$0xff]
        %v1934 = vld [vmem:[%s311 + $0x1c60] sm:$0xff]
        %v1935 = vld [vmem:[%s311 + $0x1c68] sm:$0xff]
        %v1936 = vld [vmem:[%s311 + $0x1c70] sm:$0xff]
        %v1937 = vld [vmem:[%s311 + $0x1c78] sm:$0xff]
        %v1938 = vld [vmem:[%s311 + $0x1c80] sm:$0xff]
        %v1939 = vld [vmem:[%s311 + $0x1c88] sm:$0xff]
        %v1940 = vld [vmem:[%s311 + $0x1c90] sm:$0xff]
        %v1941 = vld [vmem:[%s311 + $0x1c98] sm:$0xff]
        %v1942 = vld [vmem:[%s311 + $0x1ca0] sm:$0xff]
        %v1943 = vld [vmem:[%s311 + $0x1ca8] sm:$0xff]
        %v1944 = vld [vmem:[%s311 + $0x1cb0] sm:$0xff]
        %v1945 = vld [vmem:[%s311 + $0x1cb8] sm:$0xff]
        %v1946 = vld [vmem:[%s311 + $0x1cc0] sm:$0xff]
        %v1947 = vld [vmem:[%s311 + $0x1cc8] sm:$0xff]
        %v1948 = vld [vmem:[%s311 + $0x1cd0] sm:$0xff]
        %v1949 = vld [vmem:[%s311 + $0x1cd8] sm:$0xff]
        %v1950 = vld [vmem:[%s311 + $0x1ce0] sm:$0xff]
        %v1951 = vld [vmem:[%s311 + $0x1ce8] sm:$0xff]
        %v1952 = vld [vmem:[%s311 + $0x1cf0] sm:$0xff]
        %v1953 = vld [vmem:[%s311 + $0x1cf8] sm:$0xff]
        %v1954 = vld [vmem:[%s311 + $0x1d00] sm:$0xff]
        %v1955 = vld [vmem:[%s311 + $0x1d08] sm:$0xff]
        %v1956 = vld [vmem:[%s311 + $0x1d10] sm:$0xff]
        %v1957 = vld [vmem:[%s311 + $0x1d18] sm:$0xff]
        %v1958 = vld [vmem:[%s311 + $0x1d20] sm:$0xff]
        %v1959 = vld [vmem:[%s311 + $0x1d28] sm:$0xff]
        %v1960 = vld [vmem:[%s311 + $0x1d30] sm:$0xff]
        %v1961 = vld [vmem:[%s311 + $0x1d38] sm:$0xff]
        %v1962 = vld [vmem:[%s311 + $0x1d40] sm:$0xff]
        %v1963 = vld [vmem:[%s311 + $0x1d48] sm:$0xff]
        %v1964 = vld [vmem:[%s311 + $0x1d50] sm:$0xff]
        %v1965 = vld [vmem:[%s311 + $0x1d58] sm:$0xff]
        %v1966 = vld [vmem:[%s311 + $0x1d60] sm:$0xff]
        %v1967 = vld [vmem:[%s311 + $0x1d68] sm:$0xff]
        %v1968 = vld [vmem:[%s311 + $0x1d70] sm:$0xff]
        %v1969 = vld [vmem:[%s311 + $0x1d78] sm:$0xff]
        %v1970 = vld [vmem:[%s311 + $0x1d80] sm:$0xff]
        %v1971 = vld [vmem:[%s311 + $0x1d88] sm:$0xff]
        %v1972 = vld [vmem:[%s311 + $0x1d90] sm:$0xff]
        %v1973 = vld [vmem:[%s311 + $0x1d98] sm:$0xff]
        %v1974 = vld [vmem:[%s311 + $0x1da0] sm:$0xff]
        %v1975 = vld [vmem:[%s311 + $0x1da8] sm:$0xff]
        %v1976 = vld [vmem:[%s311 + $0x1db0] sm:$0xff]
        %v1977 = vld [vmem:[%s311 + $0x1db8] sm:$0xff]
        %v1978 = vld [vmem:[%s311 + $0x1dc0] sm:$0xff]
        %v1979 = vld [vmem:[%s311 + $0x1dc8] sm:$0xff]
        %v1980 = vld [vmem:[%s311 + $0x1dd0] sm:$0xff]
        %v1981 = vld [vmem:[%s311 + $0x1dd8] sm:$0xff]
        %v1982 = vld [vmem:[%s311 + $0x1de0] sm:$0xff]
        %v1983 = vld [vmem:[%s311 + $0x1de8] sm:$0xff]
        %v1984 = vld [vmem:[%s311 + $0x1df0] sm:$0xff]
        %v1985 = vld [vmem:[%s311 + $0x1df8] sm:$0xff]
        %v1986 = vld [vmem:[%s311 + $0x1e00] sm:$0xff]
        %v1987 = vld [vmem:[%s311 + $0x1e08] sm:$0xff]
        %v1988 = vld [vmem:[%s311 + $0x1e10] sm:$0xff]
        %v1989 = vld [vmem:[%s311 + $0x1e18] sm:$0xff]
        %v1990 = vld [vmem:[%s311 + $0x1e20] sm:$0xff]
        %v1991 = vld [vmem:[%s311 + $0x1e28] sm:$0xff]
        %v1992 = vld [vmem:[%s311 + $0x1e30] sm:$0xff]
        %v1993 = vld [vmem:[%s311 + $0x1e38] sm:$0xff]
        %v1994 = vld [vmem:[%s311 + $0x1e40] sm:$0xff]
        %v1995 = vld [vmem:[%s311 + $0x1e48] sm:$0xff]
        %v1996 = vld [vmem:[%s311 + $0x1e50] sm:$0xff]
        %v1997 = vld [vmem:[%s311 + $0x1e58] sm:$0xff]
        %v1998 = vld [vmem:[%s311 + $0x1e60] sm:$0xff]
        %v1999 = vld [vmem:[%s311 + $0x1e68] sm:$0xff]
        %v2000 = vld [vmem:[%s311 + $0x1e70] sm:$0xff]
        %v2001 = vld [vmem:[%s311 + $0x1e78] sm:$0xff]
        %v2002 = vld [vmem:[%s311 + $0x1e80] sm:$0xff]
        %v2003 = vld [vmem:[%s311 + $0x1e88] sm:$0xff]
        %v2004 = vld [vmem:[%s311 + $0x1e90] sm:$0xff]
        %v2005 = vld [vmem:[%s311 + $0x1e98] sm:$0xff]
        %v2006 = vld [vmem:[%s311 + $0x1ea0] sm:$0xff]
        %v2007 = vld [vmem:[%s311 + $0x1ea8] sm:$0xff]
        %v2008 = vld [vmem:[%s311 + $0x1eb0] sm:$0xff]
        %v2009 = vld [vmem:[%s311 + $0x1eb8] sm:$0xff]
        %v2010 = vld [vmem:[%s311 + $0x1ec0] sm:$0xff]
        %v2011 = vld [vmem:[%s311 + $0x1ec8] sm:$0xff]
        %v2012 = vld [vmem:[%s311 + $0x1ed0] sm:$0xff]
        %v2013 = vld [vmem:[%s311 + $0x1ed8] sm:$0xff]
        %v2014 = vld [vmem:[%s311 + $0x1ee0] sm:$0xff]
        %v2015 = vld [vmem:[%s311 + $0x1ee8] sm:$0xff]
        %v2016 = vld [vmem:[%s311 + $0x1ef0] sm:$0xff]
        %v2017 = vld [vmem:[%s311 + $0x1ef8] sm:$0xff]
        %v2018 = vld [vmem:[%s311 + $0x1f00] sm:$0xff]
        %v2019 = vld [vmem:[%s311 + $0x1f08] sm:$0xff]
        %v2020 = vld [vmem:[%s311 + $0x1f10] sm:$0xff]
        %v2021 = vld [vmem:[%s311 + $0x1f18] sm:$0xff]
        %v2022 = vld [vmem:[%s311 + $0x1f20] sm:$0xff]
        %v2023 = vld [vmem:[%s311 + $0x1f28] sm:$0xff]
        %v2024 = vld [vmem:[%s311 + $0x1f30] sm:$0xff]
        %v2025 = vld [vmem:[%s311 + $0x1f38] sm:$0xff]
        %v2026 = vld [vmem:[%s311 + $0x1f40] sm:$0xff]
        %v2027 = vld [vmem:[%s311 + $0x1f48] sm:$0xff]
        %v2028 = vld [vmem:[%s311 + $0x1f50] sm:$0xff]
        %v2029 = vld [vmem:[%s311 + $0x1f58] sm:$0xff]
        %v2030 = vld [vmem:[%s311 + $0x1f60] sm:$0xff]
        %v2031 = vld [vmem:[%s311 + $0x1f68] sm:$0xff]
        %v2032 = vld [vmem:[%s311 + $0x1f70] sm:$0xff]
        %v2033 = vld [vmem:[%s311 + $0x1f78] sm:$0xff]
        %v2034 = vld [vmem:[%s311 + $0x1f80] sm:$0xff]
        %v2035 = vld [vmem:[%s311 + $0x1f88] sm:$0xff]
        %v2036 = vld [vmem:[%s311 + $0x1f90] sm:$0xff]
        %v2037 = vld [vmem:[%s311 + $0x1f98] sm:$0xff]
        %v2038 = vld [vmem:[%s311 + $0x1fa0] sm:$0xff]
        %v2039 = vld [vmem:[%s311 + $0x1fa8] sm:$0xff]
        %v2040 = vld [vmem:[%s311 + $0x1fb0] sm:$0xff]
        %v2041 = vld [vmem:[%s311 + $0x1fb8] sm:$0xff]
        %v2042 = vld [vmem:[%s311 + $0x1fc0] sm:$0xff]
        %v2043 = vld [vmem:[%s311 + $0x1fc8] sm:$0xff]
        %v2044 = vld [vmem:[%s311 + $0x1fd0] sm:$0xff]
        %v2045 = vld [vmem:[%s311 + $0x1fd8] sm:$0xff]
        %v2046 = vld [vmem:[%s311 + $0x1fe0] sm:$0xff]
        %v2047 = vld [vmem:[%s311 + $0x1fe8] sm:$0xff]
        %v2048 = vld [vmem:[%s311 + $0x1ff0] sm:$0xff]
        %v2049 = vld [vmem:[%s311 + $0x1ff8] sm:$0xff]
        %v3074 = vunpack.c.l.b16 %v1026
        %v3075 = vunpack.c.h.b16 %v1026
        %v3076 = vunpack.c.l.b16 %v1027
        %v3077 = vunpack.c.h.b16 %v1027
        %v3078 = vunpack.c.l.b16 %v1028
        %v3079 = vunpack.c.h.b16 %v1028
        %v3080 = vunpack.c.l.b16 %v1029
        %v3081 = vunpack.c.h.b16 %v1029
        %v3082 = vunpack.c.l.b16 %v1030
        %v3083 = vunpack.c.h.b16 %v1030
        %v3084 = vunpack.c.l.b16 %v1031
        %v3085 = vunpack.c.h.b16 %v1031
        %v3086 = vunpack.c.l.b16 %v1032
        %v3087 = vunpack.c.h.b16 %v1032
        %v3088 = vunpack.c.l.b16 %v1033
        %v3089 = vunpack.c.h.b16 %v1033
        %v3090 = vunpack.c.l.b16 %v1034
        %v3091 = vunpack.c.h.b16 %v1034
        %v3092 = vunpack.c.l.b16 %v1035
        %v3093 = vunpack.c.h.b16 %v1035
        %v3094 = vunpack.c.l.b16 %v1036
        %v3095 = vunpack.c.h.b16 %v1036
        %v3096 = vunpack.c.l.b16 %v1037
        %v3097 = vunpack.c.h.b16 %v1037
        %v3098 = vunpack.c.l.b16 %v1038
        %v3099 = vunpack.c.h.b16 %v1038
        %v3100 = vunpack.c.l.b16 %v1039
        %v3101 = vunpack.c.h.b16 %v1039
        %v3102 = vunpack.c.l.b16 %v1040
        %v3103 = vunpack.c.h.b16 %v1040
        %v3104 = vunpack.c.l.b16 %v1041
        %v3105 = vunpack.c.h.b16 %v1041
        %v3106 = vunpack.c.l.b16 %v1042
        %v3107 = vunpack.c.h.b16 %v1042
        %v3108 = vunpack.c.l.b16 %v1043
        %v3109 = vunpack.c.h.b16 %v1043
        %v3110 = vunpack.c.l.b16 %v1044
        %v3111 = vunpack.c.h.b16 %v1044
        %v3112 = vunpack.c.l.b16 %v1045
        %v3113 = vunpack.c.h.b16 %v1045
        %v3114 = vunpack.c.l.b16 %v1046
        %v3115 = vunpack.c.h.b16 %v1046
        %v3116 = vunpack.c.l.b16 %v1047
        %v3117 = vunpack.c.h.b16 %v1047
        %v3118 = vunpack.c.l.b16 %v1048
        %v3119 = vunpack.c.h.b16 %v1048
        %v3120 = vunpack.c.l.b16 %v1049
        %v3121 = vunpack.c.h.b16 %v1049
        %v3122 = vunpack.c.l.b16 %v1050
        %v3123 = vunpack.c.h.b16 %v1050
        %v3124 = vunpack.c.l.b16 %v1051
        %v3125 = vunpack.c.h.b16 %v1051
        %v3126 = vunpack.c.l.b16 %v1052
        %v3127 = vunpack.c.h.b16 %v1052
        %v3128 = vunpack.c.l.b16 %v1053
        %v3129 = vunpack.c.h.b16 %v1053
        %v3130 = vunpack.c.l.b16 %v1054
        %v3131 = vunpack.c.h.b16 %v1054
        %v3132 = vunpack.c.l.b16 %v1055
        %v3133 = vunpack.c.h.b16 %v1055
        %v3134 = vunpack.c.l.b16 %v1056
        %v3135 = vunpack.c.h.b16 %v1056
        %v3136 = vunpack.c.l.b16 %v1057
        %v3137 = vunpack.c.h.b16 %v1057
        %v3138 = vunpack.c.l.b16 %v1058
        %v3139 = vunpack.c.h.b16 %v1058
        %v3140 = vunpack.c.l.b16 %v1059
        %v3141 = vunpack.c.h.b16 %v1059
        %v3142 = vunpack.c.l.b16 %v1060
        %v3143 = vunpack.c.h.b16 %v1060
        %v3144 = vunpack.c.l.b16 %v1061
        %v3145 = vunpack.c.h.b16 %v1061
        %v3146 = vunpack.c.l.b16 %v1062
        %v3147 = vunpack.c.h.b16 %v1062
        %v3148 = vunpack.c.l.b16 %v1063
        %v3149 = vunpack.c.h.b16 %v1063
        %v3150 = vunpack.c.l.b16 %v1064
        %v3151 = vunpack.c.h.b16 %v1064
        %v3152 = vunpack.c.l.b16 %v1065
        %v3153 = vunpack.c.h.b16 %v1065
        %v3154 = vunpack.c.l.b16 %v1066
        %v3155 = vunpack.c.h.b16 %v1066
        %v3156 = vunpack.c.l.b16 %v1067
        %v3157 = vunpack.c.h.b16 %v1067
        %v3158 = vunpack.c.l.b16 %v1068
        %v3159 = vunpack.c.h.b16 %v1068
        %v3160 = vunpack.c.l.b16 %v1069
        %v3161 = vunpack.c.h.b16 %v1069
        %v3162 = vunpack.c.l.b16 %v1070
        %v3163 = vunpack.c.h.b16 %v1070
        %v3164 = vunpack.c.l.b16 %v1071
        %v3165 = vunpack.c.h.b16 %v1071
        %v3166 = vunpack.c.l.b16 %v1072
        %v3167 = vunpack.c.h.b16 %v1072
        %v3168 = vunpack.c.l.b16 %v1073
        %v3169 = vunpack.c.h.b16 %v1073
        %v3170 = vunpack.c.l.b16 %v1074
        %v3171 = vunpack.c.h.b16 %v1074
        %v3172 = vunpack.c.l.b16 %v1075
        %v3173 = vunpack.c.h.b16 %v1075
        %v3174 = vunpack.c.l.b16 %v1076
        %v3175 = vunpack.c.h.b16 %v1076
        %v3176 = vunpack.c.l.b16 %v1077
        %v3177 = vunpack.c.h.b16 %v1077
        %v3178 = vunpack.c.l.b16 %v1078
        %v3179 = vunpack.c.h.b16 %v1078
        %v3180 = vunpack.c.l.b16 %v1079
        %v3181 = vunpack.c.h.b16 %v1079
        %v3182 = vunpack.c.l.b16 %v1080
        %v3183 = vunpack.c.h.b16 %v1080
        %v3184 = vunpack.c.l.b16 %v1081
        %v3185 = vunpack.c.h.b16 %v1081
        %v3186 = vunpack.c.l.b16 %v1082
        %v3187 = vunpack.c.h.b16 %v1082
        %v3188 = vunpack.c.l.b16 %v1083
        %v3189 = vunpack.c.h.b16 %v1083
        %v3190 = vunpack.c.l.b16 %v1084
        %v3191 = vunpack.c.h.b16 %v1084
        %v3192 = vunpack.c.l.b16 %v1085
        %v3193 = vunpack.c.h.b16 %v1085
        %v3194 = vunpack.c.l.b16 %v1086
        %v3195 = vunpack.c.h.b16 %v1086
        %v3196 = vunpack.c.l.b16 %v1087
        %v3197 = vunpack.c.h.b16 %v1087
        %v3198 = vunpack.c.l.b16 %v1088
        %v3199 = vunpack.c.h.b16 %v1088
        %v3200 = vunpack.c.l.b16 %v1089
        %v3201 = vunpack.c.h.b16 %v1089
        %v3202 = vunpack.c.l.b16 %v1090
        %v3203 = vunpack.c.h.b16 %v1090
        %v3204 = vunpack.c.l.b16 %v1091
        %v3205 = vunpack.c.h.b16 %v1091
        %v3206 = vunpack.c.l.b16 %v1092
        %v3207 = vunpack.c.h.b16 %v1092
        %v3208 = vunpack.c.l.b16 %v1093
        %v3209 = vunpack.c.h.b16 %v1093
        %v3210 = vunpack.c.l.b16 %v1094
        %v3211 = vunpack.c.h.b16 %v1094
        %v3212 = vunpack.c.l.b16 %v1095
        %v3213 = vunpack.c.h.b16 %v1095
        %v3214 = vunpack.c.l.b16 %v1096
        %v3215 = vunpack.c.h.b16 %v1096
        %v3216 = vunpack.c.l.b16 %v1097
        %v3217 = vunpack.c.h.b16 %v1097
        %v3218 = vunpack.c.l.b16 %v1098
        %v3219 = vunpack.c.h.b16 %v1098
        %v3220 = vunpack.c.l.b16 %v1099
        %v3221 = vunpack.c.h.b16 %v1099
        %v3222 = vunpack.c.l.b16 %v1100
        %v3223 = vunpack.c.h.b16 %v1100
        %v3224 = vunpack.c.l.b16 %v1101
        %v3225 = vunpack.c.h.b16 %v1101
        %v3226 = vunpack.c.l.b16 %v1102
        %v3227 = vunpack.c.h.b16 %v1102
        %v3228 = vunpack.c.l.b16 %v1103
        %v3229 = vunpack.c.h.b16 %v1103
        %v3230 = vunpack.c.l.b16 %v1104
        %v3231 = vunpack.c.h.b16 %v1104
        %v3232 = vunpack.c.l.b16 %v1105
        %v3233 = vunpack.c.h.b16 %v1105
        %v3234 = vunpack.c.l.b16 %v1106
        %v3235 = vunpack.c.h.b16 %v1106
        %v3236 = vunpack.c.l.b16 %v1107
        %v3237 = vunpack.c.h.b16 %v1107
        %v3238 = vunpack.c.l.b16 %v1108
        %v3239 = vunpack.c.h.b16 %v1108
        %v3240 = vunpack.c.l.b16 %v1109
        %v3241 = vunpack.c.h.b16 %v1109
        %v3242 = vunpack.c.l.b16 %v1110
        %v3243 = vunpack.c.h.b16 %v1110
        %v3244 = vunpack.c.l.b16 %v1111
        %v3245 = vunpack.c.h.b16 %v1111
        %v3246 = vunpack.c.l.b16 %v1112
        %v3247 = vunpack.c.h.b16 %v1112
        %v3248 = vunpack.c.l.b16 %v1113
        %v3249 = vunpack.c.h.b16 %v1113
        %v3250 = vunpack.c.l.b16 %v1114
        %v3251 = vunpack.c.h.b16 %v1114
        %v3252 = vunpack.c.l.b16 %v1115
        %v3253 = vunpack.c.h.b16 %v1115
        %v3254 = vunpack.c.l.b16 %v1116
        %v3255 = vunpack.c.h.b16 %v1116
        %v3256 = vunpack.c.l.b16 %v1117
        %v3257 = vunpack.c.h.b16 %v1117
        %v3258 = vunpack.c.l.b16 %v1118
        %v3259 = vunpack.c.h.b16 %v1118
        %v3260 = vunpack.c.l.b16 %v1119
        %v3261 = vunpack.c.h.b16 %v1119
        %v3262 = vunpack.c.l.b16 %v1120
        %v3263 = vunpack.c.h.b16 %v1120
        %v3264 = vunpack.c.l.b16 %v1121
        %v3265 = vunpack.c.h.b16 %v1121
        %v3266 = vunpack.c.l.b16 %v1122
        %v3267 = vunpack.c.h.b16 %v1122
        %v3268 = vunpack.c.l.b16 %v1123
        %v3269 = vunpack.c.h.b16 %v1123
        %v3270 = vunpack.c.l.b16 %v1124
        %v3271 = vunpack.c.h.b16 %v1124
        %v3272 = vunpack.c.l.b16 %v1125
        %v3273 = vunpack.c.h.b16 %v1125
        %v3274 = vunpack.c.l.b16 %v1126
        %v3275 = vunpack.c.h.b16 %v1126
        %v3276 = vunpack.c.l.b16 %v1127
        %v3277 = vunpack.c.h.b16 %v1127
        %v3278 = vunpack.c.l.b16 %v1128
        %v3279 = vunpack.c.h.b16 %v1128
        %v3280 = vunpack.c.l.b16 %v1129
        %v3281 = vunpack.c.h.b16 %v1129
        %v3282 = vunpack.c.l.b16 %v1130
        %v3283 = vunpack.c.h.b16 %v1130
        %v3284 = vunpack.c.l.b16 %v1131
        %v3285 = vunpack.c.h.b16 %v1131
        %v3286 = vunpack.c.l.b16 %v1132
        %v3287 = vunpack.c.h.b16 %v1132
        %v3288 = vunpack.c.l.b16 %v1133
        %v3289 = vunpack.c.h.b16 %v1133
        %v3290 = vunpack.c.l.b16 %v1134
        %v3291 = vunpack.c.h.b16 %v1134
        %v3292 = vunpack.c.l.b16 %v1135
        %v3293 = vunpack.c.h.b16 %v1135
        %v3294 = vunpack.c.l.b16 %v1136
        %v3295 = vunpack.c.h.b16 %v1136
        %v3296 = vunpack.c.l.b16 %v1137
        %v3297 = vunpack.c.h.b16 %v1137
        %v3298 = vunpack.c.l.b16 %v1138
        %v3299 = vunpack.c.h.b16 %v1138
        %v3300 = vunpack.c.l.b16 %v1139
        %v3301 = vunpack.c.h.b16 %v1139
        %v3302 = vunpack.c.l.b16 %v1140
        %v3303 = vunpack.c.h.b16 %v1140
        %v3304 = vunpack.c.l.b16 %v1141
        %v3305 = vunpack.c.h.b16 %v1141
        %v3306 = vunpack.c.l.b16 %v1142
        %v3307 = vunpack.c.h.b16 %v1142
        %v3308 = vunpack.c.l.b16 %v1143
        %v3309 = vunpack.c.h.b16 %v1143
        %v3310 = vunpack.c.l.b16 %v1144
        %v3311 = vunpack.c.h.b16 %v1144
        %v3312 = vunpack.c.l.b16 %v1145
        %v3313 = vunpack.c.h.b16 %v1145
        %v3314 = vunpack.c.l.b16 %v1146
        %v3315 = vunpack.c.h.b16 %v1146
        %v3316 = vunpack.c.l.b16 %v1147
        %v3317 = vunpack.c.h.b16 %v1147
        %v3318 = vunpack.c.l.b16 %v1148
        %v3319 = vunpack.c.h.b16 %v1148
        %v3320 = vunpack.c.l.b16 %v1149
        %v3321 = vunpack.c.h.b16 %v1149
        %v3322 = vunpack.c.l.b16 %v1150
        %v3323 = vunpack.c.h.b16 %v1150
        %v3324 = vunpack.c.l.b16 %v1151
        %v3325 = vunpack.c.h.b16 %v1151
        %v3326 = vunpack.c.l.b16 %v1152
        %v3327 = vunpack.c.h.b16 %v1152
        %v3328 = vunpack.c.l.b16 %v1153
        %v3329 = vunpack.c.h.b16 %v1153
        %v3330 = vunpack.c.l.b16 %v1154
        %v3331 = vunpack.c.h.b16 %v1154
        %v3332 = vunpack.c.l.b16 %v1155
        %v3333 = vunpack.c.h.b16 %v1155
        %v3334 = vunpack.c.l.b16 %v1156
        %v3335 = vunpack.c.h.b16 %v1156
        %v3336 = vunpack.c.l.b16 %v1157
        %v3337 = vunpack.c.h.b16 %v1157
        %v3338 = vunpack.c.l.b16 %v1158
        %v3339 = vunpack.c.h.b16 %v1158
        %v3340 = vunpack.c.l.b16 %v1159
        %v3341 = vunpack.c.h.b16 %v1159
        %v3342 = vunpack.c.l.b16 %v1160
        %v3343 = vunpack.c.h.b16 %v1160
        %v3344 = vunpack.c.l.b16 %v1161
        %v3345 = vunpack.c.h.b16 %v1161
        %v3346 = vunpack.c.l.b16 %v1162
        %v3347 = vunpack.c.h.b16 %v1162
        %v3348 = vunpack.c.l.b16 %v1163
        %v3349 = vunpack.c.h.b16 %v1163
        %v3350 = vunpack.c.l.b16 %v1164
        %v3351 = vunpack.c.h.b16 %v1164
        %v3352 = vunpack.c.l.b16 %v1165
        %v3353 = vunpack.c.h.b16 %v1165
        %v3354 = vunpack.c.l.b16 %v1166
        %v3355 = vunpack.c.h.b16 %v1166
        %v3356 = vunpack.c.l.b16 %v1167
        %v3357 = vunpack.c.h.b16 %v1167
        %v3358 = vunpack.c.l.b16 %v1168
        %v3359 = vunpack.c.h.b16 %v1168
        %v3360 = vunpack.c.l.b16 %v1169
        %v3361 = vunpack.c.h.b16 %v1169
        %v3362 = vunpack.c.l.b16 %v1170
        %v3363 = vunpack.c.h.b16 %v1170
        %v3364 = vunpack.c.l.b16 %v1171
        %v3365 = vunpack.c.h.b16 %v1171
        %v3366 = vunpack.c.l.b16 %v1172
        %v3367 = vunpack.c.h.b16 %v1172
        %v3368 = vunpack.c.l.b16 %v1173
        %v3369 = vunpack.c.h.b16 %v1173
        %v3370 = vunpack.c.l.b16 %v1174
        %v3371 = vunpack.c.h.b16 %v1174
        %v3372 = vunpack.c.l.b16 %v1175
        %v3373 = vunpack.c.h.b16 %v1175
        %v3374 = vunpack.c.l.b16 %v1176
        %v3375 = vunpack.c.h.b16 %v1176
        %v3376 = vunpack.c.l.b16 %v1177
        %v3377 = vunpack.c.h.b16 %v1177
        %v3378 = vunpack.c.l.b16 %v1178
        %v3379 = vunpack.c.h.b16 %v1178
        %v3380 = vunpack.c.l.b16 %v1179
        %v3381 = vunpack.c.h.b16 %v1179
        %v3382 = vunpack.c.l.b16 %v1180
        %v3383 = vunpack.c.h.b16 %v1180
        %v3384 = vunpack.c.l.b16 %v1181
        %v3385 = vunpack.c.h.b16 %v1181
        %v3386 = vunpack.c.l.b16 %v1182
        %v3387 = vunpack.c.h.b16 %v1182
        %v3388 = vunpack.c.l.b16 %v1183
        %v3389 = vunpack.c.h.b16 %v1183
        %v3390 = vunpack.c.l.b16 %v1184
        %v3391 = vunpack.c.h.b16 %v1184
        %v3392 = vunpack.c.l.b16 %v1185
        %v3393 = vunpack.c.h.b16 %v1185
        %v3394 = vunpack.c.l.b16 %v1186
        %v3395 = vunpack.c.h.b16 %v1186
        %v3396 = vunpack.c.l.b16 %v1187
        %v3397 = vunpack.c.h.b16 %v1187
        %v3398 = vunpack.c.l.b16 %v1188
        %v3399 = vunpack.c.h.b16 %v1188
        %v3400 = vunpack.c.l.b16 %v1189
        %v3401 = vunpack.c.h.b16 %v1189
        %v3402 = vunpack.c.l.b16 %v1190
        %v3403 = vunpack.c.h.b16 %v1190
        %v3404 = vunpack.c.l.b16 %v1191
        %v3405 = vunpack.c.h.b16 %v1191
        %v3406 = vunpack.c.l.b16 %v1192
        %v3407 = vunpack.c.h.b16 %v1192
        %v3408 = vunpack.c.l.b16 %v1193
        %v3409 = vunpack.c.h.b16 %v1193
        %v3410 = vunpack.c.l.b16 %v1194
        %v3411 = vunpack.c.h.b16 %v1194
        %v3412 = vunpack.c.l.b16 %v1195
        %v3413 = vunpack.c.h.b16 %v1195
        %v3414 = vunpack.c.l.b16 %v1196
        %v3415 = vunpack.c.h.b16 %v1196
        %v3416 = vunpack.c.l.b16 %v1197
        %v3417 = vunpack.c.h.b16 %v1197
        %v3418 = vunpack.c.l.b16 %v1198
        %v3419 = vunpack.c.h.b16 %v1198
        %v3420 = vunpack.c.l.b16 %v1199
        %v3421 = vunpack.c.h.b16 %v1199
        %v3422 = vunpack.c.l.b16 %v1200
        %v3423 = vunpack.c.h.b16 %v1200
        %v3424 = vunpack.c.l.b16 %v1201
        %v3425 = vunpack.c.h.b16 %v1201
        %v3426 = vunpack.c.l.b16 %v1202
        %v3427 = vunpack.c.h.b16 %v1202
        %v3428 = vunpack.c.l.b16 %v1203
        %v3429 = vunpack.c.h.b16 %v1203
        %v3430 = vunpack.c.l.b16 %v1204
        %v3431 = vunpack.c.h.b16 %v1204
        %v3432 = vunpack.c.l.b16 %v1205
        %v3433 = vunpack.c.h.b16 %v1205
        %v3434 = vunpack.c.l.b16 %v1206
        %v3435 = vunpack.c.h.b16 %v1206
        %v3436 = vunpack.c.l.b16 %v1207
        %v3437 = vunpack.c.h.b16 %v1207
        %v3438 = vunpack.c.l.b16 %v1208
        %v3439 = vunpack.c.h.b16 %v1208
        %v3440 = vunpack.c.l.b16 %v1209
        %v3441 = vunpack.c.h.b16 %v1209
        %v3442 = vunpack.c.l.b16 %v1210
        %v3443 = vunpack.c.h.b16 %v1210
        %v3444 = vunpack.c.l.b16 %v1211
        %v3445 = vunpack.c.h.b16 %v1211
        %v3446 = vunpack.c.l.b16 %v1212
        %v3447 = vunpack.c.h.b16 %v1212
        %v3448 = vunpack.c.l.b16 %v1213
        %v3449 = vunpack.c.h.b16 %v1213
        %v3450 = vunpack.c.l.b16 %v1214
        %v3451 = vunpack.c.h.b16 %v1214
        %v3452 = vunpack.c.l.b16 %v1215
        %v3453 = vunpack.c.h.b16 %v1215
        %v3454 = vunpack.c.l.b16 %v1216
        %v3455 = vunpack.c.h.b16 %v1216
        %v3456 = vunpack.c.l.b16 %v1217
        %v3457 = vunpack.c.h.b16 %v1217
        %v3458 = vunpack.c.l.b16 %v1218
        %v3459 = vunpack.c.h.b16 %v1218
        %v3460 = vunpack.c.l.b16 %v1219
        %v3461 = vunpack.c.h.b16 %v1219
        %v3462 = vunpack.c.l.b16 %v1220
        %v3463 = vunpack.c.h.b16 %v1220
        %v3464 = vunpack.c.l.b16 %v1221
        %v3465 = vunpack.c.h.b16 %v1221
        %v3466 = vunpack.c.l.b16 %v1222
        %v3467 = vunpack.c.h.b16 %v1222
        %v3468 = vunpack.c.l.b16 %v1223
        %v3469 = vunpack.c.h.b16 %v1223
        %v3470 = vunpack.c.l.b16 %v1224
        %v3471 = vunpack.c.h.b16 %v1224
        %v3472 = vunpack.c.l.b16 %v1225
        %v3473 = vunpack.c.h.b16 %v1225
        %v3474 = vunpack.c.l.b16 %v1226
        %v3475 = vunpack.c.h.b16 %v1226
        %v3476 = vunpack.c.l.b16 %v1227
        %v3477 = vunpack.c.h.b16 %v1227
        %v3478 = vunpack.c.l.b16 %v1228
        %v3479 = vunpack.c.h.b16 %v1228
        %v3480 = vunpack.c.l.b16 %v1229
        %v3481 = vunpack.c.h.b16 %v1229
        %v3482 = vunpack.c.l.b16 %v1230
        %v3483 = vunpack.c.h.b16 %v1230
        %v3484 = vunpack.c.l.b16 %v1231
        %v3485 = vunpack.c.h.b16 %v1231
        %v3486 = vunpack.c.l.b16 %v1232
        %v3487 = vunpack.c.h.b16 %v1232
        %v3488 = vunpack.c.l.b16 %v1233
        %v3489 = vunpack.c.h.b16 %v1233
        %v3490 = vunpack.c.l.b16 %v1234
        %v3491 = vunpack.c.h.b16 %v1234
        %v3492 = vunpack.c.l.b16 %v1235
        %v3493 = vunpack.c.h.b16 %v1235
        %v3494 = vunpack.c.l.b16 %v1236
        %v3495 = vunpack.c.h.b16 %v1236
        %v3496 = vunpack.c.l.b16 %v1237
        %v3497 = vunpack.c.h.b16 %v1237
        %v3498 = vunpack.c.l.b16 %v1238
        %v3499 = vunpack.c.h.b16 %v1238
        %v3500 = vunpack.c.l.b16 %v1239
        %v3501 = vunpack.c.h.b16 %v1239
        %v3502 = vunpack.c.l.b16 %v1240
        %v3503 = vunpack.c.h.b16 %v1240
        %v3504 = vunpack.c.l.b16 %v1241
        %v3505 = vunpack.c.h.b16 %v1241
        %v3506 = vunpack.c.l.b16 %v1242
        %v3507 = vunpack.c.h.b16 %v1242
        %v3508 = vunpack.c.l.b16 %v1243
        %v3509 = vunpack.c.h.b16 %v1243
        %v3510 = vunpack.c.l.b16 %v1244
        %v3511 = vunpack.c.h.b16 %v1244
        %v3512 = vunpack.c.l.b16 %v1245
        %v3513 = vunpack.c.h.b16 %v1245
        %v3514 = vunpack.c.l.b16 %v1246
        %v3515 = vunpack.c.h.b16 %v1246
        %v3516 = vunpack.c.l.b16 %v1247
        %v3517 = vunpack.c.h.b16 %v1247
        %v3518 = vunpack.c.l.b16 %v1248
        %v3519 = vunpack.c.h.b16 %v1248
        %v3520 = vunpack.c.l.b16 %v1249
        %v3521 = vunpack.c.h.b16 %v1249
        %v3522 = vunpack.c.l.b16 %v1250
        %v3523 = vunpack.c.h.b16 %v1250
        %v3524 = vunpack.c.l.b16 %v1251
        %v3525 = vunpack.c.h.b16 %v1251
        %v3526 = vunpack.c.l.b16 %v1252
        %v3527 = vunpack.c.h.b16 %v1252
        %v3528 = vunpack.c.l.b16 %v1253
        %v3529 = vunpack.c.h.b16 %v1253
        %v3530 = vunpack.c.l.b16 %v1254
        %v3531 = vunpack.c.h.b16 %v1254
        %v3532 = vunpack.c.l.b16 %v1255
        %v3533 = vunpack.c.h.b16 %v1255
        %v3534 = vunpack.c.l.b16 %v1256
        %v3535 = vunpack.c.h.b16 %v1256
        %v3536 = vunpack.c.l.b16 %v1257
        %v3537 = vunpack.c.h.b16 %v1257
        %v3538 = vunpack.c.l.b16 %v1258
        %v3539 = vunpack.c.h.b16 %v1258
        %v3540 = vunpack.c.l.b16 %v1259
        %v3541 = vunpack.c.h.b16 %v1259
        %v3542 = vunpack.c.l.b16 %v1260
        %v3543 = vunpack.c.h.b16 %v1260
        %v3544 = vunpack.c.l.b16 %v1261
        %v3545 = vunpack.c.h.b16 %v1261
        %v3546 = vunpack.c.l.b16 %v1262
        %v3547 = vunpack.c.h.b16 %v1262
        %v3548 = vunpack.c.l.b16 %v1263
        %v3549 = vunpack.c.h.b16 %v1263
        %v3550 = vunpack.c.l.b16 %v1264
        %v3551 = vunpack.c.h.b16 %v1264
        %v3552 = vunpack.c.l.b16 %v1265
        %v3553 = vunpack.c.h.b16 %v1265
        %v3554 = vunpack.c.l.b16 %v1266
        %v3555 = vunpack.c.h.b16 %v1266
        %v3556 = vunpack.c.l.b16 %v1267
        %v3557 = vunpack.c.h.b16 %v1267
        %v3558 = vunpack.c.l.b16 %v1268
        %v3559 = vunpack.c.h.b16 %v1268
        %v3560 = vunpack.c.l.b16 %v1269
        %v3561 = vunpack.c.h.b16 %v1269
        %v3562 = vunpack.c.l.b16 %v1270
        %v3563 = vunpack.c.h.b16 %v1270
        %v3564 = vunpack.c.l.b16 %v1271
        %v3565 = vunpack.c.h.b16 %v1271
        %v3566 = vunpack.c.l.b16 %v1272
        %v3567 = vunpack.c.h.b16 %v1272
        %v3568 = vunpack.c.l.b16 %v1273
        %v3569 = vunpack.c.h.b16 %v1273
        %v3570 = vunpack.c.l.b16 %v1274
        %v3571 = vunpack.c.h.b16 %v1274
        %v3572 = vunpack.c.l.b16 %v1275
        %v3573 = vunpack.c.h.b16 %v1275
        %v3574 = vunpack.c.l.b16 %v1276
        %v3575 = vunpack.c.h.b16 %v1276
        %v3576 = vunpack.c.l.b16 %v1277
        %v3577 = vunpack.c.h.b16 %v1277
        %v3578 = vunpack.c.l.b16 %v1278
        %v3579 = vunpack.c.h.b16 %v1278
        %v3580 = vunpack.c.l.b16 %v1279
        %v3581 = vunpack.c.h.b16 %v1279
        %v3582 = vunpack.c.l.b16 %v1280
        %v3583 = vunpack.c.h.b16 %v1280
        %v3584 = vunpack.c.l.b16 %v1281
        %v3585 = vunpack.c.h.b16 %v1281
        %v3586 = vunpack.c.l.b16 %v1282
        %v3587 = vunpack.c.h.b16 %v1282
        %v3588 = vunpack.c.l.b16 %v1283
        %v3589 = vunpack.c.h.b16 %v1283
        %v3590 = vunpack.c.l.b16 %v1284
        %v3591 = vunpack.c.h.b16 %v1284
        %v3592 = vunpack.c.l.b16 %v1285
        %v3593 = vunpack.c.h.b16 %v1285
        %v3594 = vunpack.c.l.b16 %v1286
        %v3595 = vunpack.c.h.b16 %v1286
        %v3596 = vunpack.c.l.b16 %v1287
        %v3597 = vunpack.c.h.b16 %v1287
        %v3598 = vunpack.c.l.b16 %v1288
        %v3599 = vunpack.c.h.b16 %v1288
        %v3600 = vunpack.c.l.b16 %v1289
        %v3601 = vunpack.c.h.b16 %v1289
        %v3602 = vunpack.c.l.b16 %v1290
        %v3603 = vunpack.c.h.b16 %v1290
        %v3604 = vunpack.c.l.b16 %v1291
        %v3605 = vunpack.c.h.b16 %v1291
        %v3606 = vunpack.c.l.b16 %v1292
        %v3607 = vunpack.c.h.b16 %v1292
        %v3608 = vunpack.c.l.b16 %v1293
        %v3609 = vunpack.c.h.b16 %v1293
        %v3610 = vunpack.c.l.b16 %v1294
        %v3611 = vunpack.c.h.b16 %v1294
        %v3612 = vunpack.c.l.b16 %v1295
        %v3613 = vunpack.c.h.b16 %v1295
        %v3614 = vunpack.c.l.b16 %v1296
        %v3615 = vunpack.c.h.b16 %v1296
        %v3616 = vunpack.c.l.b16 %v1297
        %v3617 = vunpack.c.h.b16 %v1297
        %v3618 = vunpack.c.l.b16 %v1298
        %v3619 = vunpack.c.h.b16 %v1298
        %v3620 = vunpack.c.l.b16 %v1299
        %v3621 = vunpack.c.h.b16 %v1299
        %v3622 = vunpack.c.l.b16 %v1300
        %v3623 = vunpack.c.h.b16 %v1300
        %v3624 = vunpack.c.l.b16 %v1301
        %v3625 = vunpack.c.h.b16 %v1301
        %v3626 = vunpack.c.l.b16 %v1302
        %v3627 = vunpack.c.h.b16 %v1302
        %v3628 = vunpack.c.l.b16 %v1303
        %v3629 = vunpack.c.h.b16 %v1303
        %v3630 = vunpack.c.l.b16 %v1304
        %v3631 = vunpack.c.h.b16 %v1304
        %v3632 = vunpack.c.l.b16 %v1305
        %v3633 = vunpack.c.h.b16 %v1305
        %v3634 = vunpack.c.l.b16 %v1306
        %v3635 = vunpack.c.h.b16 %v1306
        %v3636 = vunpack.c.l.b16 %v1307
        %v3637 = vunpack.c.h.b16 %v1307
        %v3638 = vunpack.c.l.b16 %v1308
        %v3639 = vunpack.c.h.b16 %v1308
        %v3640 = vunpack.c.l.b16 %v1309
        %v3641 = vunpack.c.h.b16 %v1309
        %v3642 = vunpack.c.l.b16 %v1310
        %v3643 = vunpack.c.h.b16 %v1310
        %v3644 = vunpack.c.l.b16 %v1311
        %v3645 = vunpack.c.h.b16 %v1311
        %v3646 = vunpack.c.l.b16 %v1312
        %v3647 = vunpack.c.h.b16 %v1312
        %v3648 = vunpack.c.l.b16 %v1313
        %v3649 = vunpack.c.h.b16 %v1313
        %v3650 = vunpack.c.l.b16 %v1314
        %v3651 = vunpack.c.h.b16 %v1314
        %v3652 = vunpack.c.l.b16 %v1315
        %v3653 = vunpack.c.h.b16 %v1315
        %v3654 = vunpack.c.l.b16 %v1316
        %v3655 = vunpack.c.h.b16 %v1316
        %v3656 = vunpack.c.l.b16 %v1317
        %v3657 = vunpack.c.h.b16 %v1317
        %v3658 = vunpack.c.l.b16 %v1318
        %v3659 = vunpack.c.h.b16 %v1318
        %v3660 = vunpack.c.l.b16 %v1319
        %v3661 = vunpack.c.h.b16 %v1319
        %v3662 = vunpack.c.l.b16 %v1320
        %v3663 = vunpack.c.h.b16 %v1320
        %v3664 = vunpack.c.l.b16 %v1321
        %v3665 = vunpack.c.h.b16 %v1321
        %v3666 = vunpack.c.l.b16 %v1322
        %v3667 = vunpack.c.h.b16 %v1322
        %v3668 = vunpack.c.l.b16 %v1323
        %v3669 = vunpack.c.h.b16 %v1323
        %v3670 = vunpack.c.l.b16 %v1324
        %v3671 = vunpack.c.h.b16 %v1324
        %v3672 = vunpack.c.l.b16 %v1325
        %v3673 = vunpack.c.h.b16 %v1325
        %v3674 = vunpack.c.l.b16 %v1326
        %v3675 = vunpack.c.h.b16 %v1326
        %v3676 = vunpack.c.l.b16 %v1327
        %v3677 = vunpack.c.h.b16 %v1327
        %v3678 = vunpack.c.l.b16 %v1328
        %v3679 = vunpack.c.h.b16 %v1328
        %v3680 = vunpack.c.l.b16 %v1329
        %v3681 = vunpack.c.h.b16 %v1329
        %v3682 = vunpack.c.l.b16 %v1330
        %v3683 = vunpack.c.h.b16 %v1330
        %v3684 = vunpack.c.l.b16 %v1331
        %v3685 = vunpack.c.h.b16 %v1331
        %v3686 = vunpack.c.l.b16 %v1332
        %v3687 = vunpack.c.h.b16 %v1332
        %v3688 = vunpack.c.l.b16 %v1333
        %v3689 = vunpack.c.h.b16 %v1333
        %v3690 = vunpack.c.l.b16 %v1334
        %v3691 = vunpack.c.h.b16 %v1334
        %v3692 = vunpack.c.l.b16 %v1335
        %v3693 = vunpack.c.h.b16 %v1335
        %v3694 = vunpack.c.l.b16 %v1336
        %v3695 = vunpack.c.h.b16 %v1336
        %v3696 = vunpack.c.l.b16 %v1337
        %v3697 = vunpack.c.h.b16 %v1337
        %v3698 = vunpack.c.l.b16 %v1338
        %v3699 = vunpack.c.h.b16 %v1338
        %v3700 = vunpack.c.l.b16 %v1339
        %v3701 = vunpack.c.h.b16 %v1339
        %v3702 = vunpack.c.l.b16 %v1340
        %v3703 = vunpack.c.h.b16 %v1340
        %v3704 = vunpack.c.l.b16 %v1341
        %v3705 = vunpack.c.h.b16 %v1341
        %v3706 = vunpack.c.l.b16 %v1342
        %v3707 = vunpack.c.h.b16 %v1342
        %v3708 = vunpack.c.l.b16 %v1343
        %v3709 = vunpack.c.h.b16 %v1343
        %v3710 = vunpack.c.l.b16 %v1344
        %v3711 = vunpack.c.h.b16 %v1344
        %v3712 = vunpack.c.l.b16 %v1345
        %v3713 = vunpack.c.h.b16 %v1345
        %v3714 = vunpack.c.l.b16 %v1346
        %v3715 = vunpack.c.h.b16 %v1346
        %v3716 = vunpack.c.l.b16 %v1347
        %v3717 = vunpack.c.h.b16 %v1347
        %v3718 = vunpack.c.l.b16 %v1348
        %v3719 = vunpack.c.h.b16 %v1348
        %v3720 = vunpack.c.l.b16 %v1349
        %v3721 = vunpack.c.h.b16 %v1349
        %v3722 = vunpack.c.l.b16 %v1350
        %v3723 = vunpack.c.h.b16 %v1350
        %v3724 = vunpack.c.l.b16 %v1351
        %v3725 = vunpack.c.h.b16 %v1351
        %v3726 = vunpack.c.l.b16 %v1352
        %v3727 = vunpack.c.h.b16 %v1352
        %v3728 = vunpack.c.l.b16 %v1353
        %v3729 = vunpack.c.h.b16 %v1353
        %v3730 = vunpack.c.l.b16 %v1354
        %v3731 = vunpack.c.h.b16 %v1354
        %v3732 = vunpack.c.l.b16 %v1355
        %v3733 = vunpack.c.h.b16 %v1355
        %v3734 = vunpack.c.l.b16 %v1356
        %v3735 = vunpack.c.h.b16 %v1356
        %v3736 = vunpack.c.l.b16 %v1357
        %v3737 = vunpack.c.h.b16 %v1357
        %v3738 = vunpack.c.l.b16 %v1358
        %v3739 = vunpack.c.h.b16 %v1358
        %v3740 = vunpack.c.l.b16 %v1359
        %v3741 = vunpack.c.h.b16 %v1359
        %v3742 = vunpack.c.l.b16 %v1360
        %v3743 = vunpack.c.h.b16 %v1360
        %v3744 = vunpack.c.l.b16 %v1361
        %v3745 = vunpack.c.h.b16 %v1361
        %v3746 = vunpack.c.l.b16 %v1362
        %v3747 = vunpack.c.h.b16 %v1362
        %v3748 = vunpack.c.l.b16 %v1363
        %v3749 = vunpack.c.h.b16 %v1363
        %v3750 = vunpack.c.l.b16 %v1364
        %v3751 = vunpack.c.h.b16 %v1364
        %v3752 = vunpack.c.l.b16 %v1365
        %v3753 = vunpack.c.h.b16 %v1365
        %v3754 = vunpack.c.l.b16 %v1366
        %v3755 = vunpack.c.h.b16 %v1366
        %v3756 = vunpack.c.l.b16 %v1367
        %v3757 = vunpack.c.h.b16 %v1367
        %v3758 = vunpack.c.l.b16 %v1368
        %v3759 = vunpack.c.h.b16 %v1368
        %v3760 = vunpack.c.l.b16 %v1369
        %v3761 = vunpack.c.h.b16 %v1369
        %v3762 = vunpack.c.l.b16 %v1370
        %v3763 = vunpack.c.h.b16 %v1370
        %v3764 = vunpack.c.l.b16 %v1371
        %v3765 = vunpack.c.h.b16 %v1371
        %v3766 = vunpack.c.l.b16 %v1372
        %v3767 = vunpack.c.h.b16 %v1372
        %v3768 = vunpack.c.l.b16 %v1373
        %v3769 = vunpack.c.h.b16 %v1373
        %v3770 = vunpack.c.l.b16 %v1374
        %v3771 = vunpack.c.h.b16 %v1374
        %v3772 = vunpack.c.l.b16 %v1375
        %v3773 = vunpack.c.h.b16 %v1375
        %v3774 = vunpack.c.l.b16 %v1376
        %v3775 = vunpack.c.h.b16 %v1376
        %v3776 = vunpack.c.l.b16 %v1377
        %v3777 = vunpack.c.h.b16 %v1377
        %v3778 = vunpack.c.l.b16 %v1378
        %v3779 = vunpack.c.h.b16 %v1378
        %v3780 = vunpack.c.l.b16 %v1379
        %v3781 = vunpack.c.h.b16 %v1379
        %v3782 = vunpack.c.l.b16 %v1380
        %v3783 = vunpack.c.h.b16 %v1380
        %v3784 = vunpack.c.l.b16 %v1381
        %v3785 = vunpack.c.h.b16 %v1381
        %v3786 = vunpack.c.l.b16 %v1382
        %v3787 = vunpack.c.h.b16 %v1382
        %v3788 = vunpack.c.l.b16 %v1383
        %v3789 = vunpack.c.h.b16 %v1383
        %v3790 = vunpack.c.l.b16 %v1384
        %v3791 = vunpack.c.h.b16 %v1384
        %v3792 = vunpack.c.l.b16 %v1385
        %v3793 = vunpack.c.h.b16 %v1385
        %v3794 = vunpack.c.l.b16 %v1386
        %v3795 = vunpack.c.h.b16 %v1386
        %v3796 = vunpack.c.l.b16 %v1387
        %v3797 = vunpack.c.h.b16 %v1387
        %v3798 = vunpack.c.l.b16 %v1388
        %v3799 = vunpack.c.h.b16 %v1388
        %v3800 = vunpack.c.l.b16 %v1389
        %v3801 = vunpack.c.h.b16 %v1389
        %v3802 = vunpack.c.l.b16 %v1390
        %v3803 = vunpack.c.h.b16 %v1390
        %v3804 = vunpack.c.l.b16 %v1391
        %v3805 = vunpack.c.h.b16 %v1391
        %v3806 = vunpack.c.l.b16 %v1392
        %v3807 = vunpack.c.h.b16 %v1392
        %v3808 = vunpack.c.l.b16 %v1393
        %v3809 = vunpack.c.h.b16 %v1393
        %v3810 = vunpack.c.l.b16 %v1394
        %v3811 = vunpack.c.h.b16 %v1394
        %v3812 = vunpack.c.l.b16 %v1395
        %v3813 = vunpack.c.h.b16 %v1395
        %v3814 = vunpack.c.l.b16 %v1396
        %v3815 = vunpack.c.h.b16 %v1396
        %v3816 = vunpack.c.l.b16 %v1397
        %v3817 = vunpack.c.h.b16 %v1397
        %v3818 = vunpack.c.l.b16 %v1398
        %v3819 = vunpack.c.h.b16 %v1398
        %v3820 = vunpack.c.l.b16 %v1399
        %v3821 = vunpack.c.h.b16 %v1399
        %v3822 = vunpack.c.l.b16 %v1400
        %v3823 = vunpack.c.h.b16 %v1400
        %v3824 = vunpack.c.l.b16 %v1401
        %v3825 = vunpack.c.h.b16 %v1401
        %v3826 = vunpack.c.l.b16 %v1402
        %v3827 = vunpack.c.h.b16 %v1402
        %v3828 = vunpack.c.l.b16 %v1403
        %v3829 = vunpack.c.h.b16 %v1403
        %v3830 = vunpack.c.l.b16 %v1404
        %v3831 = vunpack.c.h.b16 %v1404
        %v3832 = vunpack.c.l.b16 %v1405
        %v3833 = vunpack.c.h.b16 %v1405
        %v3834 = vunpack.c.l.b16 %v1406
        %v3835 = vunpack.c.h.b16 %v1406
        %v3836 = vunpack.c.l.b16 %v1407
        %v3837 = vunpack.c.h.b16 %v1407
        %v3838 = vunpack.c.l.b16 %v1408
        %v3839 = vunpack.c.h.b16 %v1408
        %v3840 = vunpack.c.l.b16 %v1409
        %v3841 = vunpack.c.h.b16 %v1409
        %v3842 = vunpack.c.l.b16 %v1410
        %v3843 = vunpack.c.h.b16 %v1410
        %v3844 = vunpack.c.l.b16 %v1411
        %v3845 = vunpack.c.h.b16 %v1411
        %v3846 = vunpack.c.l.b16 %v1412
        %v3847 = vunpack.c.h.b16 %v1412
        %v3848 = vunpack.c.l.b16 %v1413
        %v3849 = vunpack.c.h.b16 %v1413
        %v3850 = vunpack.c.l.b16 %v1414
        %v3851 = vunpack.c.h.b16 %v1414
        %v3852 = vunpack.c.l.b16 %v1415
        %v3853 = vunpack.c.h.b16 %v1415
        %v3854 = vunpack.c.l.b16 %v1416
        %v3855 = vunpack.c.h.b16 %v1416
        %v3856 = vunpack.c.l.b16 %v1417
        %v3857 = vunpack.c.h.b16 %v1417
        %v3858 = vunpack.c.l.b16 %v1418
        %v3859 = vunpack.c.h.b16 %v1418
        %v3860 = vunpack.c.l.b16 %v1419
        %v3861 = vunpack.c.h.b16 %v1419
        %v3862 = vunpack.c.l.b16 %v1420
        %v3863 = vunpack.c.h.b16 %v1420
        %v3864 = vunpack.c.l.b16 %v1421
        %v3865 = vunpack.c.h.b16 %v1421
        %v3866 = vunpack.c.l.b16 %v1422
        %v3867 = vunpack.c.h.b16 %v1422
        %v3868 = vunpack.c.l.b16 %v1423
        %v3869 = vunpack.c.h.b16 %v1423
        %v3870 = vunpack.c.l.b16 %v1424
        %v3871 = vunpack.c.h.b16 %v1424
        %v3872 = vunpack.c.l.b16 %v1425
        %v3873 = vunpack.c.h.b16 %v1425
        %v3874 = vunpack.c.l.b16 %v1426
        %v3875 = vunpack.c.h.b16 %v1426
        %v3876 = vunpack.c.l.b16 %v1427
        %v3877 = vunpack.c.h.b16 %v1427
        %v3878 = vunpack.c.l.b16 %v1428
        %v3879 = vunpack.c.h.b16 %v1428
        %v3880 = vunpack.c.l.b16 %v1429
        %v3881 = vunpack.c.h.b16 %v1429
        %v3882 = vunpack.c.l.b16 %v1430
        %v3883 = vunpack.c.h.b16 %v1430
        %v3884 = vunpack.c.l.b16 %v1431
        %v3885 = vunpack.c.h.b16 %v1431
        %v3886 = vunpack.c.l.b16 %v1432
        %v3887 = vunpack.c.h.b16 %v1432
        %v3888 = vunpack.c.l.b16 %v1433
        %v3889 = vunpack.c.h.b16 %v1433
        %v3890 = vunpack.c.l.b16 %v1434
        %v3891 = vunpack.c.h.b16 %v1434
        %v3892 = vunpack.c.l.b16 %v1435
        %v3893 = vunpack.c.h.b16 %v1435
        %v3894 = vunpack.c.l.b16 %v1436
        %v3895 = vunpack.c.h.b16 %v1436
        %v3896 = vunpack.c.l.b16 %v1437
        %v3897 = vunpack.c.h.b16 %v1437
        %v3898 = vunpack.c.l.b16 %v1438
        %v3899 = vunpack.c.h.b16 %v1438
        %v3900 = vunpack.c.l.b16 %v1439
        %v3901 = vunpack.c.h.b16 %v1439
        %v3902 = vunpack.c.l.b16 %v1440
        %v3903 = vunpack.c.h.b16 %v1440
        %v3904 = vunpack.c.l.b16 %v1441
        %v3905 = vunpack.c.h.b16 %v1441
        %v3906 = vunpack.c.l.b16 %v1442
        %v3907 = vunpack.c.h.b16 %v1442
        %v3908 = vunpack.c.l.b16 %v1443
        %v3909 = vunpack.c.h.b16 %v1443
        %v3910 = vunpack.c.l.b16 %v1444
        %v3911 = vunpack.c.h.b16 %v1444
        %v3912 = vunpack.c.l.b16 %v1445
        %v3913 = vunpack.c.h.b16 %v1445
        %v3914 = vunpack.c.l.b16 %v1446
        %v3915 = vunpack.c.h.b16 %v1446
        %v3916 = vunpack.c.l.b16 %v1447
        %v3917 = vunpack.c.h.b16 %v1447
        %v3918 = vunpack.c.l.b16 %v1448
        %v3919 = vunpack.c.h.b16 %v1448
        %v3920 = vunpack.c.l.b16 %v1449
        %v3921 = vunpack.c.h.b16 %v1449
        %v3922 = vunpack.c.l.b16 %v1450
        %v3923 = vunpack.c.h.b16 %v1450
        %v3924 = vunpack.c.l.b16 %v1451
        %v3925 = vunpack.c.h.b16 %v1451
        %v3926 = vunpack.c.l.b16 %v1452
        %v3927 = vunpack.c.h.b16 %v1452
        %v3928 = vunpack.c.l.b16 %v1453
        %v3929 = vunpack.c.h.b16 %v1453
        %v3930 = vunpack.c.l.b16 %v1454
        %v3931 = vunpack.c.h.b16 %v1454
        %v3932 = vunpack.c.l.b16 %v1455
        %v3933 = vunpack.c.h.b16 %v1455
        %v3934 = vunpack.c.l.b16 %v1456
        %v3935 = vunpack.c.h.b16 %v1456
        %v3936 = vunpack.c.l.b16 %v1457
        %v3937 = vunpack.c.h.b16 %v1457
        %v3938 = vunpack.c.l.b16 %v1458
        %v3939 = vunpack.c.h.b16 %v1458
        %v3940 = vunpack.c.l.b16 %v1459
        %v3941 = vunpack.c.h.b16 %v1459
        %v3942 = vunpack.c.l.b16 %v1460
        %v3943 = vunpack.c.h.b16 %v1460
        %v3944 = vunpack.c.l.b16 %v1461
        %v3945 = vunpack.c.h.b16 %v1461
        %v3946 = vunpack.c.l.b16 %v1462
        %v3947 = vunpack.c.h.b16 %v1462
        %v3948 = vunpack.c.l.b16 %v1463
        %v3949 = vunpack.c.h.b16 %v1463
        %v3950 = vunpack.c.l.b16 %v1464
        %v3951 = vunpack.c.h.b16 %v1464
        %v3952 = vunpack.c.l.b16 %v1465
        %v3953 = vunpack.c.h.b16 %v1465
        %v3954 = vunpack.c.l.b16 %v1466
        %v3955 = vunpack.c.h.b16 %v1466
        %v3956 = vunpack.c.l.b16 %v1467
        %v3957 = vunpack.c.h.b16 %v1467
        %v3958 = vunpack.c.l.b16 %v1468
        %v3959 = vunpack.c.h.b16 %v1468
        %v3960 = vunpack.c.l.b16 %v1469
        %v3961 = vunpack.c.h.b16 %v1469
        %v3962 = vunpack.c.l.b16 %v1470
        %v3963 = vunpack.c.h.b16 %v1470
        %v3964 = vunpack.c.l.b16 %v1471
        %v3965 = vunpack.c.h.b16 %v1471
        %v3966 = vunpack.c.l.b16 %v1472
        %v3967 = vunpack.c.h.b16 %v1472
        %v3968 = vunpack.c.l.b16 %v1473
        %v3969 = vunpack.c.h.b16 %v1473
        %v3970 = vunpack.c.l.b16 %v1474
        %v3971 = vunpack.c.h.b16 %v1474
        %v3972 = vunpack.c.l.b16 %v1475
        %v3973 = vunpack.c.h.b16 %v1475
        %v3974 = vunpack.c.l.b16 %v1476
        %v3975 = vunpack.c.h.b16 %v1476
        %v3976 = vunpack.c.l.b16 %v1477
        %v3977 = vunpack.c.h.b16 %v1477
        %v3978 = vunpack.c.l.b16 %v1478
        %v3979 = vunpack.c.h.b16 %v1478
        %v3980 = vunpack.c.l.b16 %v1479
        %v3981 = vunpack.c.h.b16 %v1479
        %v3982 = vunpack.c.l.b16 %v1480
        %v3983 = vunpack.c.h.b16 %v1480
        %v3984 = vunpack.c.l.b16 %v1481
        %v3985 = vunpack.c.h.b16 %v1481
        %v3986 = vunpack.c.l.b16 %v1482
        %v3987 = vunpack.c.h.b16 %v1482
        %v3988 = vunpack.c.l.b16 %v1483
        %v3989 = vunpack.c.h.b16 %v1483
        %v3990 = vunpack.c.l.b16 %v1484
        %v3991 = vunpack.c.h.b16 %v1484
        %v3992 = vunpack.c.l.b16 %v1485
        %v3993 = vunpack.c.h.b16 %v1485
        %v3994 = vunpack.c.l.b16 %v1486
        %v3995 = vunpack.c.h.b16 %v1486
        %v3996 = vunpack.c.l.b16 %v1487
        %v3997 = vunpack.c.h.b16 %v1487
        %v3998 = vunpack.c.l.b16 %v1488
        %v3999 = vunpack.c.h.b16 %v1488
        %v4000 = vunpack.c.l.b16 %v1489
        %v4001 = vunpack.c.h.b16 %v1489
        %v4002 = vunpack.c.l.b16 %v1490
        %v4003 = vunpack.c.h.b16 %v1490
        %v4004 = vunpack.c.l.b16 %v1491
        %v4005 = vunpack.c.h.b16 %v1491
        %v4006 = vunpack.c.l.b16 %v1492
        %v4007 = vunpack.c.h.b16 %v1492
        %v4008 = vunpack.c.l.b16 %v1493
        %v4009 = vunpack.c.h.b16 %v1493
        %v4010 = vunpack.c.l.b16 %v1494
        %v4011 = vunpack.c.h.b16 %v1494
        %v4012 = vunpack.c.l.b16 %v1495
        %v4013 = vunpack.c.h.b16 %v1495
        %v4014 = vunpack.c.l.b16 %v1496
        %v4015 = vunpack.c.h.b16 %v1496
        %v4016 = vunpack.c.l.b16 %v1497
        %v4017 = vunpack.c.h.b16 %v1497
        %v4018 = vunpack.c.l.b16 %v1498
        %v4019 = vunpack.c.h.b16 %v1498
        %v4020 = vunpack.c.l.b16 %v1499
        %v4021 = vunpack.c.h.b16 %v1499
        %v4022 = vunpack.c.l.b16 %v1500
        %v4023 = vunpack.c.h.b16 %v1500
        %v4024 = vunpack.c.l.b16 %v1501
        %v4025 = vunpack.c.h.b16 %v1501
        %v4026 = vunpack.c.l.b16 %v1502
        %v4027 = vunpack.c.h.b16 %v1502
        %v4028 = vunpack.c.l.b16 %v1503
        %v4029 = vunpack.c.h.b16 %v1503
        %v4030 = vunpack.c.l.b16 %v1504
        %v4031 = vunpack.c.h.b16 %v1504
        %v4032 = vunpack.c.l.b16 %v1505
        %v4033 = vunpack.c.h.b16 %v1505
        %v4034 = vunpack.c.l.b16 %v1506
        %v4035 = vunpack.c.h.b16 %v1506
        %v4036 = vunpack.c.l.b16 %v1507
        %v4037 = vunpack.c.h.b16 %v1507
        %v4038 = vunpack.c.l.b16 %v1508
        %v4039 = vunpack.c.h.b16 %v1508
        %v4040 = vunpack.c.l.b16 %v1509
        %v4041 = vunpack.c.h.b16 %v1509
        %v4042 = vunpack.c.l.b16 %v1510
        %v4043 = vunpack.c.h.b16 %v1510
        %v4044 = vunpack.c.l.b16 %v1511
        %v4045 = vunpack.c.h.b16 %v1511
        %v4046 = vunpack.c.l.b16 %v1512
        %v4047 = vunpack.c.h.b16 %v1512
        %v4048 = vunpack.c.l.b16 %v1513
        %v4049 = vunpack.c.h.b16 %v1513
        %v4050 = vunpack.c.l.b16 %v1514
        %v4051 = vunpack.c.h.b16 %v1514
        %v4052 = vunpack.c.l.b16 %v1515
        %v4053 = vunpack.c.h.b16 %v1515
        %v4054 = vunpack.c.l.b16 %v1516
        %v4055 = vunpack.c.h.b16 %v1516
        %v4056 = vunpack.c.l.b16 %v1517
        %v4057 = vunpack.c.h.b16 %v1517
        %v4058 = vunpack.c.l.b16 %v1518
        %v4059 = vunpack.c.h.b16 %v1518
        %v4060 = vunpack.c.l.b16 %v1519
        %v4061 = vunpack.c.h.b16 %v1519
        %v4062 = vunpack.c.l.b16 %v1520
        %v4063 = vunpack.c.h.b16 %v1520
        %v4064 = vunpack.c.l.b16 %v1521
        %v4065 = vunpack.c.h.b16 %v1521
        %v4066 = vunpack.c.l.b16 %v1522
        %v4067 = vunpack.c.h.b16 %v1522
        %v4068 = vunpack.c.l.b16 %v1523
        %v4069 = vunpack.c.h.b16 %v1523
        %v4070 = vunpack.c.l.b16 %v1524
        %v4071 = vunpack.c.h.b16 %v1524
        %v4072 = vunpack.c.l.b16 %v1525
        %v4073 = vunpack.c.h.b16 %v1525
        %v4074 = vunpack.c.l.b16 %v1526
        %v4075 = vunpack.c.h.b16 %v1526
        %v4076 = vunpack.c.l.b16 %v1527
        %v4077 = vunpack.c.h.b16 %v1527
        %v4078 = vunpack.c.l.b16 %v1528
        %v4079 = vunpack.c.h.b16 %v1528
        %v4080 = vunpack.c.l.b16 %v1529
        %v4081 = vunpack.c.h.b16 %v1529
        %v4082 = vunpack.c.l.b16 %v1530
        %v4083 = vunpack.c.h.b16 %v1530
        %v4084 = vunpack.c.l.b16 %v1531
        %v4085 = vunpack.c.h.b16 %v1531
        %v4086 = vunpack.c.l.b16 %v1532
        %v4087 = vunpack.c.h.b16 %v1532
        %v4088 = vunpack.c.l.b16 %v1533
        %v4089 = vunpack.c.h.b16 %v1533
        %v4090 = vunpack.c.l.b16 %v1534
        %v4091 = vunpack.c.h.b16 %v1534
        %v4092 = vunpack.c.l.b16 %v1535
        %v4093 = vunpack.c.h.b16 %v1535
        %v4094 = vunpack.c.l.b16 %v1536
        %v4095 = vunpack.c.h.b16 %v1536
        %v4096 = vunpack.c.l.b16 %v1537
        %v4097 = vunpack.c.h.b16 %v1537
        %v4098 = vunpack.c.l.b16 %v1538
        %v4099 = vunpack.c.h.b16 %v1538
        %v4100 = vunpack.c.l.b16 %v1539
        %v4101 = vunpack.c.h.b16 %v1539
        %v4102 = vunpack.c.l.b16 %v1540
        %v4103 = vunpack.c.h.b16 %v1540
        %v4104 = vunpack.c.l.b16 %v1541
        %v4105 = vunpack.c.h.b16 %v1541
        %v4106 = vunpack.c.l.b16 %v1542
        %v4107 = vunpack.c.h.b16 %v1542
        %v4108 = vunpack.c.l.b16 %v1543
        %v4109 = vunpack.c.h.b16 %v1543
        %v4110 = vunpack.c.l.b16 %v1544
        %v4111 = vunpack.c.h.b16 %v1544
        %v4112 = vunpack.c.l.b16 %v1545
        %v4113 = vunpack.c.h.b16 %v1545
        %v4114 = vunpack.c.l.b16 %v1546
        %v4115 = vunpack.c.h.b16 %v1546
        %v4116 = vunpack.c.l.b16 %v1547
        %v4117 = vunpack.c.h.b16 %v1547
        %v4118 = vunpack.c.l.b16 %v1548
        %v4119 = vunpack.c.h.b16 %v1548
        %v4120 = vunpack.c.l.b16 %v1549
        %v4121 = vunpack.c.h.b16 %v1549
        %v4122 = vunpack.c.l.b16 %v1550
        %v4123 = vunpack.c.h.b16 %v1550
        %v4124 = vunpack.c.l.b16 %v1551
        %v4125 = vunpack.c.h.b16 %v1551
        %v4126 = vunpack.c.l.b16 %v1552
        %v4127 = vunpack.c.h.b16 %v1552
        %v4128 = vunpack.c.l.b16 %v1553
        %v4129 = vunpack.c.h.b16 %v1553
        %v4130 = vunpack.c.l.b16 %v1554
        %v4131 = vunpack.c.h.b16 %v1554
        %v4132 = vunpack.c.l.b16 %v1555
        %v4133 = vunpack.c.h.b16 %v1555
        %v4134 = vunpack.c.l.b16 %v1556
        %v4135 = vunpack.c.h.b16 %v1556
        %v4136 = vunpack.c.l.b16 %v1557
        %v4137 = vunpack.c.h.b16 %v1557
        %v4138 = vunpack.c.l.b16 %v1558
        %v4139 = vunpack.c.h.b16 %v1558
        %v4140 = vunpack.c.l.b16 %v1559
        %v4141 = vunpack.c.h.b16 %v1559
        %v4142 = vunpack.c.l.b16 %v1560
        %v4143 = vunpack.c.h.b16 %v1560
        %v4144 = vunpack.c.l.b16 %v1561
        %v4145 = vunpack.c.h.b16 %v1561
        %v4146 = vunpack.c.l.b16 %v1562
        %v4147 = vunpack.c.h.b16 %v1562
        %v4148 = vunpack.c.l.b16 %v1563
        %v4149 = vunpack.c.h.b16 %v1563
        %v4150 = vunpack.c.l.b16 %v1564
        %v4151 = vunpack.c.h.b16 %v1564
        %v4152 = vunpack.c.l.b16 %v1565
        %v4153 = vunpack.c.h.b16 %v1565
        %v4154 = vunpack.c.l.b16 %v1566
        %v4155 = vunpack.c.h.b16 %v1566
        %v4156 = vunpack.c.l.b16 %v1567
        %v4157 = vunpack.c.h.b16 %v1567
        %v4158 = vunpack.c.l.b16 %v1568
        %v4159 = vunpack.c.h.b16 %v1568
        %v4160 = vunpack.c.l.b16 %v1569
        %v4161 = vunpack.c.h.b16 %v1569
        %v4162 = vunpack.c.l.b16 %v1570
        %v4163 = vunpack.c.h.b16 %v1570
        %v4164 = vunpack.c.l.b16 %v1571
        %v4165 = vunpack.c.h.b16 %v1571
        %v4166 = vunpack.c.l.b16 %v1572
        %v4167 = vunpack.c.h.b16 %v1572
        %v4168 = vunpack.c.l.b16 %v1573
        %v4169 = vunpack.c.h.b16 %v1573
        %v4170 = vunpack.c.l.b16 %v1574
        %v4171 = vunpack.c.h.b16 %v1574
        %v4172 = vunpack.c.l.b16 %v1575
        %v4173 = vunpack.c.h.b16 %v1575
        %v4174 = vunpack.c.l.b16 %v1576
        %v4175 = vunpack.c.h.b16 %v1576
        %v4176 = vunpack.c.l.b16 %v1577
        %v4177 = vunpack.c.h.b16 %v1577
        %v4178 = vunpack.c.l.b16 %v1578
        %v4179 = vunpack.c.h.b16 %v1578
        %v4180 = vunpack.c.l.b16 %v1579
        %v4181 = vunpack.c.h.b16 %v1579
        %v4182 = vunpack.c.l.b16 %v1580
        %v4183 = vunpack.c.h.b16 %v1580
        %v4184 = vunpack.c.l.b16 %v1581
        %v4185 = vunpack.c.h.b16 %v1581
        %v4186 = vunpack.c.l.b16 %v1582
        %v4187 = vunpack.c.h.b16 %v1582
        %v4188 = vunpack.c.l.b16 %v1583
        %v4189 = vunpack.c.h.b16 %v1583
        %v4190 = vunpack.c.l.b16 %v1584
        %v4191 = vunpack.c.h.b16 %v1584
        %v4192 = vunpack.c.l.b16 %v1585
        %v4193 = vunpack.c.h.b16 %v1585
        %v4194 = vunpack.c.l.b16 %v1586
        %v4195 = vunpack.c.h.b16 %v1586
        %v4196 = vunpack.c.l.b16 %v1587
        %v4197 = vunpack.c.h.b16 %v1587
        %v4198 = vunpack.c.l.b16 %v1588
        %v4199 = vunpack.c.h.b16 %v1588
        %v4200 = vunpack.c.l.b16 %v1589
        %v4201 = vunpack.c.h.b16 %v1589
        %v4202 = vunpack.c.l.b16 %v1590
        %v4203 = vunpack.c.h.b16 %v1590
        %v4204 = vunpack.c.l.b16 %v1591
        %v4205 = vunpack.c.h.b16 %v1591
        %v4206 = vunpack.c.l.b16 %v1592
        %v4207 = vunpack.c.h.b16 %v1592
        %v4208 = vunpack.c.l.b16 %v1593
        %v4209 = vunpack.c.h.b16 %v1593
        %v4210 = vunpack.c.l.b16 %v1594
        %v4211 = vunpack.c.h.b16 %v1594
        %v4212 = vunpack.c.l.b16 %v1595
        %v4213 = vunpack.c.h.b16 %v1595
        %v4214 = vunpack.c.l.b16 %v1596
        %v4215 = vunpack.c.h.b16 %v1596
        %v4216 = vunpack.c.l.b16 %v1597
        %v4217 = vunpack.c.h.b16 %v1597
        %v4218 = vunpack.c.l.b16 %v1598
        %v4219 = vunpack.c.h.b16 %v1598
        %v4220 = vunpack.c.l.b16 %v1599
        %v4221 = vunpack.c.h.b16 %v1599
        %v4222 = vunpack.c.l.b16 %v1600
        %v4223 = vunpack.c.h.b16 %v1600
        %v4224 = vunpack.c.l.b16 %v1601
        %v4225 = vunpack.c.h.b16 %v1601
        %v4226 = vunpack.c.l.b16 %v1602
        %v4227 = vunpack.c.h.b16 %v1602
        %v4228 = vunpack.c.l.b16 %v1603
        %v4229 = vunpack.c.h.b16 %v1603
        %v4230 = vunpack.c.l.b16 %v1604
        %v4231 = vunpack.c.h.b16 %v1604
        %v4232 = vunpack.c.l.b16 %v1605
        %v4233 = vunpack.c.h.b16 %v1605
        %v4234 = vunpack.c.l.b16 %v1606
        %v4235 = vunpack.c.h.b16 %v1606
        %v4236 = vunpack.c.l.b16 %v1607
        %v4237 = vunpack.c.h.b16 %v1607
        %v4238 = vunpack.c.l.b16 %v1608
        %v4239 = vunpack.c.h.b16 %v1608
        %v4240 = vunpack.c.l.b16 %v1609
        %v4241 = vunpack.c.h.b16 %v1609
        %v4242 = vunpack.c.l.b16 %v1610
        %v4243 = vunpack.c.h.b16 %v1610
        %v4244 = vunpack.c.l.b16 %v1611
        %v4245 = vunpack.c.h.b16 %v1611
        %v4246 = vunpack.c.l.b16 %v1612
        %v4247 = vunpack.c.h.b16 %v1612
        %v4248 = vunpack.c.l.b16 %v1613
        %v4249 = vunpack.c.h.b16 %v1613
        %v4250 = vunpack.c.l.b16 %v1614
        %v4251 = vunpack.c.h.b16 %v1614
        %v4252 = vunpack.c.l.b16 %v1615
        %v4253 = vunpack.c.h.b16 %v1615
        %v4254 = vunpack.c.l.b16 %v1616
        %v4255 = vunpack.c.h.b16 %v1616
        %v4256 = vunpack.c.l.b16 %v1617
        %v4257 = vunpack.c.h.b16 %v1617
        %v4258 = vunpack.c.l.b16 %v1618
        %v4259 = vunpack.c.h.b16 %v1618
        %v4260 = vunpack.c.l.b16 %v1619
        %v4261 = vunpack.c.h.b16 %v1619
        %v4262 = vunpack.c.l.b16 %v1620
        %v4263 = vunpack.c.h.b16 %v1620
        %v4264 = vunpack.c.l.b16 %v1621
        %v4265 = vunpack.c.h.b16 %v1621
        %v4266 = vunpack.c.l.b16 %v1622
        %v4267 = vunpack.c.h.b16 %v1622
        %v4268 = vunpack.c.l.b16 %v1623
        %v4269 = vunpack.c.h.b16 %v1623
        %v4270 = vunpack.c.l.b16 %v1624
        %v4271 = vunpack.c.h.b16 %v1624
        %v4272 = vunpack.c.l.b16 %v1625
        %v4273 = vunpack.c.h.b16 %v1625
        %v4274 = vunpack.c.l.b16 %v1626
        %v4275 = vunpack.c.h.b16 %v1626
        %v4276 = vunpack.c.l.b16 %v1627
        %v4277 = vunpack.c.h.b16 %v1627
        %v4278 = vunpack.c.l.b16 %v1628
        %v4279 = vunpack.c.h.b16 %v1628
        %v4280 = vunpack.c.l.b16 %v1629
        %v4281 = vunpack.c.h.b16 %v1629
        %v4282 = vunpack.c.l.b16 %v1630
        %v4283 = vunpack.c.h.b16 %v1630
        %v4284 = vunpack.c.l.b16 %v1631
        %v4285 = vunpack.c.h.b16 %v1631
        %v4286 = vunpack.c.l.b16 %v1632
        %v4287 = vunpack.c.h.b16 %v1632
        %v4288 = vunpack.c.l.b16 %v1633
        %v4289 = vunpack.c.h.b16 %v1633
        %v4290 = vunpack.c.l.b16 %v1634
        %v4291 = vunpack.c.h.b16 %v1634
        %v4292 = vunpack.c.l.b16 %v1635
        %v4293 = vunpack.c.h.b16 %v1635
        %v4294 = vunpack.c.l.b16 %v1636
        %v4295 = vunpack.c.h.b16 %v1636
        %v4296 = vunpack.c.l.b16 %v1637
        %v4297 = vunpack.c.h.b16 %v1637
        %v4298 = vunpack.c.l.b16 %v1638
        %v4299 = vunpack.c.h.b16 %v1638
        %v4300 = vunpack.c.l.b16 %v1639
        %v4301 = vunpack.c.h.b16 %v1639
        %v4302 = vunpack.c.l.b16 %v1640
        %v4303 = vunpack.c.h.b16 %v1640
        %v4304 = vunpack.c.l.b16 %v1641
        %v4305 = vunpack.c.h.b16 %v1641
        %v4306 = vunpack.c.l.b16 %v1642
        %v4307 = vunpack.c.h.b16 %v1642
        %v4308 = vunpack.c.l.b16 %v1643
        %v4309 = vunpack.c.h.b16 %v1643
        %v4310 = vunpack.c.l.b16 %v1644
        %v4311 = vunpack.c.h.b16 %v1644
        %v4312 = vunpack.c.l.b16 %v1645
        %v4313 = vunpack.c.h.b16 %v1645
        %v4314 = vunpack.c.l.b16 %v1646
        %v4315 = vunpack.c.h.b16 %v1646
        %v4316 = vunpack.c.l.b16 %v1647
        %v4317 = vunpack.c.h.b16 %v1647
        %v4318 = vunpack.c.l.b16 %v1648
        %v4319 = vunpack.c.h.b16 %v1648
        %v4320 = vunpack.c.l.b16 %v1649
        %v4321 = vunpack.c.h.b16 %v1649
        %v4322 = vunpack.c.l.b16 %v1650
        %v4323 = vunpack.c.h.b16 %v1650
        %v4324 = vunpack.c.l.b16 %v1651
        %v4325 = vunpack.c.h.b16 %v1651
        %v4326 = vunpack.c.l.b16 %v1652
        %v4327 = vunpack.c.h.b16 %v1652
        %v4328 = vunpack.c.l.b16 %v1653
        %v4329 = vunpack.c.h.b16 %v1653
        %v4330 = vunpack.c.l.b16 %v1654
        %v4331 = vunpack.c.h.b16 %v1654
        %v4332 = vunpack.c.l.b16 %v1655
        %v4333 = vunpack.c.h.b16 %v1655
        %v4334 = vunpack.c.l.b16 %v1656
        %v4335 = vunpack.c.h.b16 %v1656
        %v4336 = vunpack.c.l.b16 %v1657
        %v4337 = vunpack.c.h.b16 %v1657
        %v4338 = vunpack.c.l.b16 %v1658
        %v4339 = vunpack.c.h.b16 %v1658
        %v4340 = vunpack.c.l.b16 %v1659
        %v4341 = vunpack.c.h.b16 %v1659
        %v4342 = vunpack.c.l.b16 %v1660
        %v4343 = vunpack.c.h.b16 %v1660
        %v4344 = vunpack.c.l.b16 %v1661
        %v4345 = vunpack.c.h.b16 %v1661
        %v4346 = vunpack.c.l.b16 %v1662
        %v4347 = vunpack.c.h.b16 %v1662
        %v4348 = vunpack.c.l.b16 %v1663
        %v4349 = vunpack.c.h.b16 %v1663
        %v4350 = vunpack.c.l.b16 %v1664
        %v4351 = vunpack.c.h.b16 %v1664
        %v4352 = vunpack.c.l.b16 %v1665
        %v4353 = vunpack.c.h.b16 %v1665
        %v4354 = vunpack.c.l.b16 %v1666
        %v4355 = vunpack.c.h.b16 %v1666
        %v4356 = vunpack.c.l.b16 %v1667
        %v4357 = vunpack.c.h.b16 %v1667
        %v4358 = vunpack.c.l.b16 %v1668
        %v4359 = vunpack.c.h.b16 %v1668
        %v4360 = vunpack.c.l.b16 %v1669
        %v4361 = vunpack.c.h.b16 %v1669
        %v4362 = vunpack.c.l.b16 %v1670
        %v4363 = vunpack.c.h.b16 %v1670
        %v4364 = vunpack.c.l.b16 %v1671
        %v4365 = vunpack.c.h.b16 %v1671
        %v4366 = vunpack.c.l.b16 %v1672
        %v4367 = vunpack.c.h.b16 %v1672
        %v4368 = vunpack.c.l.b16 %v1673
        %v4369 = vunpack.c.h.b16 %v1673
        %v4370 = vunpack.c.l.b16 %v1674
        %v4371 = vunpack.c.h.b16 %v1674
        %v4372 = vunpack.c.l.b16 %v1675
        %v4373 = vunpack.c.h.b16 %v1675
        %v4374 = vunpack.c.l.b16 %v1676
        %v4375 = vunpack.c.h.b16 %v1676
        %v4376 = vunpack.c.l.b16 %v1677
        %v4377 = vunpack.c.h.b16 %v1677
        %v4378 = vunpack.c.l.b16 %v1678
        %v4379 = vunpack.c.h.b16 %v1678
        %v4380 = vunpack.c.l.b16 %v1679
        %v4381 = vunpack.c.h.b16 %v1679
        %v4382 = vunpack.c.l.b16 %v1680
        %v4383 = vunpack.c.h.b16 %v1680
        %v4384 = vunpack.c.l.b16 %v1681
        %v4385 = vunpack.c.h.b16 %v1681
        %v4386 = vunpack.c.l.b16 %v1682
        %v4387 = vunpack.c.h.b16 %v1682
        %v4388 = vunpack.c.l.b16 %v1683
        %v4389 = vunpack.c.h.b16 %v1683
        %v4390 = vunpack.c.l.b16 %v1684
        %v4391 = vunpack.c.h.b16 %v1684
        %v4392 = vunpack.c.l.b16 %v1685
        %v4393 = vunpack.c.h.b16 %v1685
        %v4394 = vunpack.c.l.b16 %v1686
        %v4395 = vunpack.c.h.b16 %v1686
        %v4396 = vunpack.c.l.b16 %v1687
        %v4397 = vunpack.c.h.b16 %v1687
        %v4398 = vunpack.c.l.b16 %v1688
        %v4399 = vunpack.c.h.b16 %v1688
        %v4400 = vunpack.c.l.b16 %v1689
        %v4401 = vunpack.c.h.b16 %v1689
        %v4402 = vunpack.c.l.b16 %v1690
        %v4403 = vunpack.c.h.b16 %v1690
        %v4404 = vunpack.c.l.b16 %v1691
        %v4405 = vunpack.c.h.b16 %v1691
        %v4406 = vunpack.c.l.b16 %v1692
        %v4407 = vunpack.c.h.b16 %v1692
        %v4408 = vunpack.c.l.b16 %v1693
        %v4409 = vunpack.c.h.b16 %v1693
        %v4410 = vunpack.c.l.b16 %v1694
        %v4411 = vunpack.c.h.b16 %v1694
        %v4412 = vunpack.c.l.b16 %v1695
        %v4413 = vunpack.c.h.b16 %v1695
        %v4414 = vunpack.c.l.b16 %v1696
        %v4415 = vunpack.c.h.b16 %v1696
        %v4416 = vunpack.c.l.b16 %v1697
        %v4417 = vunpack.c.h.b16 %v1697
        %v4418 = vunpack.c.l.b16 %v1698
        %v4419 = vunpack.c.h.b16 %v1698
        %v4420 = vunpack.c.l.b16 %v1699
        %v4421 = vunpack.c.h.b16 %v1699
        %v4422 = vunpack.c.l.b16 %v1700
        %v4423 = vunpack.c.h.b16 %v1700
        %v4424 = vunpack.c.l.b16 %v1701
        %v4425 = vunpack.c.h.b16 %v1701
        %v4426 = vunpack.c.l.b16 %v1702
        %v4427 = vunpack.c.h.b16 %v1702
        %v4428 = vunpack.c.l.b16 %v1703
        %v4429 = vunpack.c.h.b16 %v1703
        %v4430 = vunpack.c.l.b16 %v1704
        %v4431 = vunpack.c.h.b16 %v1704
        %v4432 = vunpack.c.l.b16 %v1705
        %v4433 = vunpack.c.h.b16 %v1705
        %v4434 = vunpack.c.l.b16 %v1706
        %v4435 = vunpack.c.h.b16 %v1706
        %v4436 = vunpack.c.l.b16 %v1707
        %v4437 = vunpack.c.h.b16 %v1707
        %v4438 = vunpack.c.l.b16 %v1708
        %v4439 = vunpack.c.h.b16 %v1708
        %v4440 = vunpack.c.l.b16 %v1709
        %v4441 = vunpack.c.h.b16 %v1709
        %v4442 = vunpack.c.l.b16 %v1710
        %v4443 = vunpack.c.h.b16 %v1710
        %v4444 = vunpack.c.l.b16 %v1711
        %v4445 = vunpack.c.h.b16 %v1711
        %v4446 = vunpack.c.l.b16 %v1712
        %v4447 = vunpack.c.h.b16 %v1712
        %v4448 = vunpack.c.l.b16 %v1713
        %v4449 = vunpack.c.h.b16 %v1713
        %v4450 = vunpack.c.l.b16 %v1714
        %v4451 = vunpack.c.h.b16 %v1714
        %v4452 = vunpack.c.l.b16 %v1715
        %v4453 = vunpack.c.h.b16 %v1715
        %v4454 = vunpack.c.l.b16 %v1716
        %v4455 = vunpack.c.h.b16 %v1716
        %v4456 = vunpack.c.l.b16 %v1717
        %v4457 = vunpack.c.h.b16 %v1717
        %v4458 = vunpack.c.l.b16 %v1718
        %v4459 = vunpack.c.h.b16 %v1718
        %v4460 = vunpack.c.l.b16 %v1719
        %v4461 = vunpack.c.h.b16 %v1719
        %v4462 = vunpack.c.l.b16 %v1720
        %v4463 = vunpack.c.h.b16 %v1720
        %v4464 = vunpack.c.l.b16 %v1721
        %v4465 = vunpack.c.h.b16 %v1721
        %v4466 = vunpack.c.l.b16 %v1722
        %v4467 = vunpack.c.h.b16 %v1722
        %v4468 = vunpack.c.l.b16 %v1723
        %v4469 = vunpack.c.h.b16 %v1723
        %v4470 = vunpack.c.l.b16 %v1724
        %v4471 = vunpack.c.h.b16 %v1724
        %v4472 = vunpack.c.l.b16 %v1725
        %v4473 = vunpack.c.h.b16 %v1725
        %v4474 = vunpack.c.l.b16 %v1726
        %v4475 = vunpack.c.h.b16 %v1726
        %v4476 = vunpack.c.l.b16 %v1727
        %v4477 = vunpack.c.h.b16 %v1727
        %v4478 = vunpack.c.l.b16 %v1728
        %v4479 = vunpack.c.h.b16 %v1728
        %v4480 = vunpack.c.l.b16 %v1729
        %v4481 = vunpack.c.h.b16 %v1729
        %v4482 = vunpack.c.l.b16 %v1730
        %v4483 = vunpack.c.h.b16 %v1730
        %v4484 = vunpack.c.l.b16 %v1731
        %v4485 = vunpack.c.h.b16 %v1731
        %v4486 = vunpack.c.l.b16 %v1732
        %v4487 = vunpack.c.h.b16 %v1732
        %v4488 = vunpack.c.l.b16 %v1733
        %v4489 = vunpack.c.h.b16 %v1733
        %v4490 = vunpack.c.l.b16 %v1734
        %v4491 = vunpack.c.h.b16 %v1734
        %v4492 = vunpack.c.l.b16 %v1735
        %v4493 = vunpack.c.h.b16 %v1735
        %v4494 = vunpack.c.l.b16 %v1736
        %v4495 = vunpack.c.h.b16 %v1736
        %v4496 = vunpack.c.l.b16 %v1737
        %v4497 = vunpack.c.h.b16 %v1737
        %v4498 = vunpack.c.l.b16 %v1738
        %v4499 = vunpack.c.h.b16 %v1738
        %v4500 = vunpack.c.l.b16 %v1739
        %v4501 = vunpack.c.h.b16 %v1739
        %v4502 = vunpack.c.l.b16 %v1740
        %v4503 = vunpack.c.h.b16 %v1740
        %v4504 = vunpack.c.l.b16 %v1741
        %v4505 = vunpack.c.h.b16 %v1741
        %v4506 = vunpack.c.l.b16 %v1742
        %v4507 = vunpack.c.h.b16 %v1742
        %v4508 = vunpack.c.l.b16 %v1743
        %v4509 = vunpack.c.h.b16 %v1743
        %v4510 = vunpack.c.l.b16 %v1744
        %v4511 = vunpack.c.h.b16 %v1744
        %v4512 = vunpack.c.l.b16 %v1745
        %v4513 = vunpack.c.h.b16 %v1745
        %v4514 = vunpack.c.l.b16 %v1746
        %v4515 = vunpack.c.h.b16 %v1746
        %v4516 = vunpack.c.l.b16 %v1747
        %v4517 = vunpack.c.h.b16 %v1747
        %v4518 = vunpack.c.l.b16 %v1748
        %v4519 = vunpack.c.h.b16 %v1748
        %v4520 = vunpack.c.l.b16 %v1749
        %v4521 = vunpack.c.h.b16 %v1749
        %v4522 = vunpack.c.l.b16 %v1750
        %v4523 = vunpack.c.h.b16 %v1750
        %v4524 = vunpack.c.l.b16 %v1751
        %v4525 = vunpack.c.h.b16 %v1751
        %v4526 = vunpack.c.l.b16 %v1752
        %v4527 = vunpack.c.h.b16 %v1752
        %v4528 = vunpack.c.l.b16 %v1753
        %v4529 = vunpack.c.h.b16 %v1753
        %v4530 = vunpack.c.l.b16 %v1754
        %v4531 = vunpack.c.h.b16 %v1754
        %v4532 = vunpack.c.l.b16 %v1755
        %v4533 = vunpack.c.h.b16 %v1755
        %v4534 = vunpack.c.l.b16 %v1756
        %v4535 = vunpack.c.h.b16 %v1756
        %v4536 = vunpack.c.l.b16 %v1757
        %v4537 = vunpack.c.h.b16 %v1757
        %v4538 = vunpack.c.l.b16 %v1758
        %v4539 = vunpack.c.h.b16 %v1758
        %v4540 = vunpack.c.l.b16 %v1759
        %v4541 = vunpack.c.h.b16 %v1759
        %v4542 = vunpack.c.l.b16 %v1760
        %v4543 = vunpack.c.h.b16 %v1760
        %v4544 = vunpack.c.l.b16 %v1761
        %v4545 = vunpack.c.h.b16 %v1761
        %v4546 = vunpack.c.l.b16 %v1762
        %v4547 = vunpack.c.h.b16 %v1762
        %v4548 = vunpack.c.l.b16 %v1763
        %v4549 = vunpack.c.h.b16 %v1763
        %v4550 = vunpack.c.l.b16 %v1764
        %v4551 = vunpack.c.h.b16 %v1764
        %v4552 = vunpack.c.l.b16 %v1765
        %v4553 = vunpack.c.h.b16 %v1765
        %v4554 = vunpack.c.l.b16 %v1766
        %v4555 = vunpack.c.h.b16 %v1766
        %v4556 = vunpack.c.l.b16 %v1767
        %v4557 = vunpack.c.h.b16 %v1767
        %v4558 = vunpack.c.l.b16 %v1768
        %v4559 = vunpack.c.h.b16 %v1768
        %v4560 = vunpack.c.l.b16 %v1769
        %v4561 = vunpack.c.h.b16 %v1769
        %v4562 = vunpack.c.l.b16 %v1770
        %v4563 = vunpack.c.h.b16 %v1770
        %v4564 = vunpack.c.l.b16 %v1771
        %v4565 = vunpack.c.h.b16 %v1771
        %v4566 = vunpack.c.l.b16 %v1772
        %v4567 = vunpack.c.h.b16 %v1772
        %v4568 = vunpack.c.l.b16 %v1773
        %v4569 = vunpack.c.h.b16 %v1773
        %v4570 = vunpack.c.l.b16 %v1774
        %v4571 = vunpack.c.h.b16 %v1774
        %v4572 = vunpack.c.l.b16 %v1775
        %v4573 = vunpack.c.h.b16 %v1775
        %v4574 = vunpack.c.l.b16 %v1776
        %v4575 = vunpack.c.h.b16 %v1776
        %v4576 = vunpack.c.l.b16 %v1777
        %v4577 = vunpack.c.h.b16 %v1777
        %v4578 = vunpack.c.l.b16 %v1778
        %v4579 = vunpack.c.h.b16 %v1778
        %v4580 = vunpack.c.l.b16 %v1779
        %v4581 = vunpack.c.h.b16 %v1779
        %v4582 = vunpack.c.l.b16 %v1780
        %v4583 = vunpack.c.h.b16 %v1780
        %v4584 = vunpack.c.l.b16 %v1781
        %v4585 = vunpack.c.h.b16 %v1781
        %v4586 = vunpack.c.l.b16 %v1782
        %v4587 = vunpack.c.h.b16 %v1782
        %v4588 = vunpack.c.l.b16 %v1783
        %v4589 = vunpack.c.h.b16 %v1783
        %v4590 = vunpack.c.l.b16 %v1784
        %v4591 = vunpack.c.h.b16 %v1784
        %v4592 = vunpack.c.l.b16 %v1785
        %v4593 = vunpack.c.h.b16 %v1785
        %v4594 = vunpack.c.l.b16 %v1786
        %v4595 = vunpack.c.h.b16 %v1786
        %v4596 = vunpack.c.l.b16 %v1787
        %v4597 = vunpack.c.h.b16 %v1787
        %v4598 = vunpack.c.l.b16 %v1788
        %v4599 = vunpack.c.h.b16 %v1788
        %v4600 = vunpack.c.l.b16 %v1789
        %v4601 = vunpack.c.h.b16 %v1789
        %v4602 = vunpack.c.l.b16 %v1790
        %v4603 = vunpack.c.h.b16 %v1790
        %v4604 = vunpack.c.l.b16 %v1791
        %v4605 = vunpack.c.h.b16 %v1791
        %v4606 = vunpack.c.l.b16 %v1792
        %v4607 = vunpack.c.h.b16 %v1792
        %v4608 = vunpack.c.l.b16 %v1793
        %v4609 = vunpack.c.h.b16 %v1793
        %v4610 = vunpack.c.l.b16 %v1794
        %v4611 = vunpack.c.h.b16 %v1794
        %v4612 = vunpack.c.l.b16 %v1795
        %v4613 = vunpack.c.h.b16 %v1795
        %v4614 = vunpack.c.l.b16 %v1796
        %v4615 = vunpack.c.h.b16 %v1796
        %v4616 = vunpack.c.l.b16 %v1797
        %v4617 = vunpack.c.h.b16 %v1797
        %v4618 = vunpack.c.l.b16 %v1798
        %v4619 = vunpack.c.h.b16 %v1798
        %v4620 = vunpack.c.l.b16 %v1799
        %v4621 = vunpack.c.h.b16 %v1799
        %v4622 = vunpack.c.l.b16 %v1800
        %v4623 = vunpack.c.h.b16 %v1800
        %v4624 = vunpack.c.l.b16 %v1801
        %v4625 = vunpack.c.h.b16 %v1801
        %v4626 = vunpack.c.l.b16 %v1802
        %v4627 = vunpack.c.h.b16 %v1802
        %v4628 = vunpack.c.l.b16 %v1803
        %v4629 = vunpack.c.h.b16 %v1803
        %v4630 = vunpack.c.l.b16 %v1804
        %v4631 = vunpack.c.h.b16 %v1804
        %v4632 = vunpack.c.l.b16 %v1805
        %v4633 = vunpack.c.h.b16 %v1805
        %v4634 = vunpack.c.l.b16 %v1806
        %v4635 = vunpack.c.h.b16 %v1806
        %v4636 = vunpack.c.l.b16 %v1807
        %v4637 = vunpack.c.h.b16 %v1807
        %v4638 = vunpack.c.l.b16 %v1808
        %v4639 = vunpack.c.h.b16 %v1808
        %v4640 = vunpack.c.l.b16 %v1809
        %v4641 = vunpack.c.h.b16 %v1809
        %v4642 = vunpack.c.l.b16 %v1810
        %v4643 = vunpack.c.h.b16 %v1810
        %v4644 = vunpack.c.l.b16 %v1811
        %v4645 = vunpack.c.h.b16 %v1811
        %v4646 = vunpack.c.l.b16 %v1812
        %v4647 = vunpack.c.h.b16 %v1812
        %v4648 = vunpack.c.l.b16 %v1813
        %v4649 = vunpack.c.h.b16 %v1813
        %v4650 = vunpack.c.l.b16 %v1814
        %v4651 = vunpack.c.h.b16 %v1814
        %v4652 = vunpack.c.l.b16 %v1815
        %v4653 = vunpack.c.h.b16 %v1815
        %v4654 = vunpack.c.l.b16 %v1816
        %v4655 = vunpack.c.h.b16 %v1816
        %v4656 = vunpack.c.l.b16 %v1817
        %v4657 = vunpack.c.h.b16 %v1817
        %v4658 = vunpack.c.l.b16 %v1818
        %v4659 = vunpack.c.h.b16 %v1818
        %v4660 = vunpack.c.l.b16 %v1819
        %v4661 = vunpack.c.h.b16 %v1819
        %v4662 = vunpack.c.l.b16 %v1820
        %v4663 = vunpack.c.h.b16 %v1820
        %v4664 = vunpack.c.l.b16 %v1821
        %v4665 = vunpack.c.h.b16 %v1821
        %v4666 = vunpack.c.l.b16 %v1822
        %v4667 = vunpack.c.h.b16 %v1822
        %v4668 = vunpack.c.l.b16 %v1823
        %v4669 = vunpack.c.h.b16 %v1823
        %v4670 = vunpack.c.l.b16 %v1824
        %v4671 = vunpack.c.h.b16 %v1824
        %v4672 = vunpack.c.l.b16 %v1825
        %v4673 = vunpack.c.h.b16 %v1825
        %v4674 = vunpack.c.l.b16 %v1826
        %v4675 = vunpack.c.h.b16 %v1826
        %v4676 = vunpack.c.l.b16 %v1827
        %v4677 = vunpack.c.h.b16 %v1827
        %v4678 = vunpack.c.l.b16 %v1828
        %v4679 = vunpack.c.h.b16 %v1828
        %v4680 = vunpack.c.l.b16 %v1829
        %v4681 = vunpack.c.h.b16 %v1829
        %v4682 = vunpack.c.l.b16 %v1830
        %v4683 = vunpack.c.h.b16 %v1830
        %v4684 = vunpack.c.l.b16 %v1831
        %v4685 = vunpack.c.h.b16 %v1831
        %v4686 = vunpack.c.l.b16 %v1832
        %v4687 = vunpack.c.h.b16 %v1832
        %v4688 = vunpack.c.l.b16 %v1833
        %v4689 = vunpack.c.h.b16 %v1833
        %v4690 = vunpack.c.l.b16 %v1834
        %v4691 = vunpack.c.h.b16 %v1834
        %v4692 = vunpack.c.l.b16 %v1835
        %v4693 = vunpack.c.h.b16 %v1835
        %v4694 = vunpack.c.l.b16 %v1836
        %v4695 = vunpack.c.h.b16 %v1836
        %v4696 = vunpack.c.l.b16 %v1837
        %v4697 = vunpack.c.h.b16 %v1837
        %v4698 = vunpack.c.l.b16 %v1838
        %v4699 = vunpack.c.h.b16 %v1838
        %v4700 = vunpack.c.l.b16 %v1839
        %v4701 = vunpack.c.h.b16 %v1839
        %v4702 = vunpack.c.l.b16 %v1840
        %v4703 = vunpack.c.h.b16 %v1840
        %v4704 = vunpack.c.l.b16 %v1841
        %v4705 = vunpack.c.h.b16 %v1841
        %v4706 = vunpack.c.l.b16 %v1842
        %v4707 = vunpack.c.h.b16 %v1842
        %v4708 = vunpack.c.l.b16 %v1843
        %v4709 = vunpack.c.h.b16 %v1843
        %v4710 = vunpack.c.l.b16 %v1844
        %v4711 = vunpack.c.h.b16 %v1844
        %v4712 = vunpack.c.l.b16 %v1845
        %v4713 = vunpack.c.h.b16 %v1845
        %v4714 = vunpack.c.l.b16 %v1846
        %v4715 = vunpack.c.h.b16 %v1846
        %v4716 = vunpack.c.l.b16 %v1847
        %v4717 = vunpack.c.h.b16 %v1847
        %v4718 = vunpack.c.l.b16 %v1848
        %v4719 = vunpack.c.h.b16 %v1848
        %v4720 = vunpack.c.l.b16 %v1849
        %v4721 = vunpack.c.h.b16 %v1849
        %v4722 = vunpack.c.l.b16 %v1850
        %v4723 = vunpack.c.h.b16 %v1850
        %v4724 = vunpack.c.l.b16 %v1851
        %v4725 = vunpack.c.h.b16 %v1851
        %v4726 = vunpack.c.l.b16 %v1852
        %v4727 = vunpack.c.h.b16 %v1852
        %v4728 = vunpack.c.l.b16 %v1853
        %v4729 = vunpack.c.h.b16 %v1853
        %v4730 = vunpack.c.l.b16 %v1854
        %v4731 = vunpack.c.h.b16 %v1854
        %v4732 = vunpack.c.l.b16 %v1855
        %v4733 = vunpack.c.h.b16 %v1855
        %v4734 = vunpack.c.l.b16 %v1856
        %v4735 = vunpack.c.h.b16 %v1856
        %v4736 = vunpack.c.l.b16 %v1857
        %v4737 = vunpack.c.h.b16 %v1857
        %v4738 = vunpack.c.l.b16 %v1858
        %v4739 = vunpack.c.h.b16 %v1858
        %v4740 = vunpack.c.l.b16 %v1859
        %v4741 = vunpack.c.h.b16 %v1859
        %v4742 = vunpack.c.l.b16 %v1860
        %v4743 = vunpack.c.h.b16 %v1860
        %v4744 = vunpack.c.l.b16 %v1861
        %v4745 = vunpack.c.h.b16 %v1861
        %v4746 = vunpack.c.l.b16 %v1862
        %v4747 = vunpack.c.h.b16 %v1862
        %v4748 = vunpack.c.l.b16 %v1863
        %v4749 = vunpack.c.h.b16 %v1863
        %v4750 = vunpack.c.l.b16 %v1864
        %v4751 = vunpack.c.h.b16 %v1864
        %v4752 = vunpack.c.l.b16 %v1865
        %v4753 = vunpack.c.h.b16 %v1865
        %v4754 = vunpack.c.l.b16 %v1866
        %v4755 = vunpack.c.h.b16 %v1866
        %v4756 = vunpack.c.l.b16 %v1867
        %v4757 = vunpack.c.h.b16 %v1867
        %v4758 = vunpack.c.l.b16 %v1868
        %v4759 = vunpack.c.h.b16 %v1868
        %v4760 = vunpack.c.l.b16 %v1869
        %v4761 = vunpack.c.h.b16 %v1869
        %v4762 = vunpack.c.l.b16 %v1870
        %v4763 = vunpack.c.h.b16 %v1870
        %v4764 = vunpack.c.l.b16 %v1871
        %v4765 = vunpack.c.h.b16 %v1871
        %v4766 = vunpack.c.l.b16 %v1872
        %v4767 = vunpack.c.h.b16 %v1872
        %v4768 = vunpack.c.l.b16 %v1873
        %v4769 = vunpack.c.h.b16 %v1873
        %v4770 = vunpack.c.l.b16 %v1874
        %v4771 = vunpack.c.h.b16 %v1874
        %v4772 = vunpack.c.l.b16 %v1875
        %v4773 = vunpack.c.h.b16 %v1875
        %v4774 = vunpack.c.l.b16 %v1876
        %v4775 = vunpack.c.h.b16 %v1876
        %v4776 = vunpack.c.l.b16 %v1877
        %v4777 = vunpack.c.h.b16 %v1877
        %v4778 = vunpack.c.l.b16 %v1878
        %v4779 = vunpack.c.h.b16 %v1878
        %v4780 = vunpack.c.l.b16 %v1879
        %v4781 = vunpack.c.h.b16 %v1879
        %v4782 = vunpack.c.l.b16 %v1880
        %v4783 = vunpack.c.h.b16 %v1880
        %v4784 = vunpack.c.l.b16 %v1881
        %v4785 = vunpack.c.h.b16 %v1881
        %v4786 = vunpack.c.l.b16 %v1882
        %v4787 = vunpack.c.h.b16 %v1882
        %v4788 = vunpack.c.l.b16 %v1883
        %v4789 = vunpack.c.h.b16 %v1883
        %v4790 = vunpack.c.l.b16 %v1884
        %v4791 = vunpack.c.h.b16 %v1884
        %v4792 = vunpack.c.l.b16 %v1885
        %v4793 = vunpack.c.h.b16 %v1885
        %v4794 = vunpack.c.l.b16 %v1886
        %v4795 = vunpack.c.h.b16 %v1886
        %v4796 = vunpack.c.l.b16 %v1887
        %v4797 = vunpack.c.h.b16 %v1887
        %v4798 = vunpack.c.l.b16 %v1888
        %v4799 = vunpack.c.h.b16 %v1888
        %v4800 = vunpack.c.l.b16 %v1889
        %v4801 = vunpack.c.h.b16 %v1889
        %v4802 = vunpack.c.l.b16 %v1890
        %v4803 = vunpack.c.h.b16 %v1890
        %v4804 = vunpack.c.l.b16 %v1891
        %v4805 = vunpack.c.h.b16 %v1891
        %v4806 = vunpack.c.l.b16 %v1892
        %v4807 = vunpack.c.h.b16 %v1892
        %v4808 = vunpack.c.l.b16 %v1893
        %v4809 = vunpack.c.h.b16 %v1893
        %v4810 = vunpack.c.l.b16 %v1894
        %v4811 = vunpack.c.h.b16 %v1894
        %v4812 = vunpack.c.l.b16 %v1895
        %v4813 = vunpack.c.h.b16 %v1895
        %v4814 = vunpack.c.l.b16 %v1896
        %v4815 = vunpack.c.h.b16 %v1896
        %v4816 = vunpack.c.l.b16 %v1897
        %v4817 = vunpack.c.h.b16 %v1897
        %v4818 = vunpack.c.l.b16 %v1898
        %v4819 = vunpack.c.h.b16 %v1898
        %v4820 = vunpack.c.l.b16 %v1899
        %v4821 = vunpack.c.h.b16 %v1899
        %v4822 = vunpack.c.l.b16 %v1900
        %v4823 = vunpack.c.h.b16 %v1900
        %v4824 = vunpack.c.l.b16 %v1901
        %v4825 = vunpack.c.h.b16 %v1901
        %v4826 = vunpack.c.l.b16 %v1902
        %v4827 = vunpack.c.h.b16 %v1902
        %v4828 = vunpack.c.l.b16 %v1903
        %v4829 = vunpack.c.h.b16 %v1903
        %v4830 = vunpack.c.l.b16 %v1904
        %v4831 = vunpack.c.h.b16 %v1904
        %v4832 = vunpack.c.l.b16 %v1905
        %v4833 = vunpack.c.h.b16 %v1905
        %v4834 = vunpack.c.l.b16 %v1906
        %v4835 = vunpack.c.h.b16 %v1906
        %v4836 = vunpack.c.l.b16 %v1907
        %v4837 = vunpack.c.h.b16 %v1907
        %v4838 = vunpack.c.l.b16 %v1908
        %v4839 = vunpack.c.h.b16 %v1908
        %v4840 = vunpack.c.l.b16 %v1909
        %v4841 = vunpack.c.h.b16 %v1909
        %v4842 = vunpack.c.l.b16 %v1910
        %v4843 = vunpack.c.h.b16 %v1910
        %v4844 = vunpack.c.l.b16 %v1911
        %v4845 = vunpack.c.h.b16 %v1911
        %v4846 = vunpack.c.l.b16 %v1912
        %v4847 = vunpack.c.h.b16 %v1912
        %v4848 = vunpack.c.l.b16 %v1913
        %v4849 = vunpack.c.h.b16 %v1913
        %v4850 = vunpack.c.l.b16 %v1914
        %v4851 = vunpack.c.h.b16 %v1914
        %v4852 = vunpack.c.l.b16 %v1915
        %v4853 = vunpack.c.h.b16 %v1915
        %v4854 = vunpack.c.l.b16 %v1916
        %v4855 = vunpack.c.h.b16 %v1916
        %v4856 = vunpack.c.l.b16 %v1917
        %v4857 = vunpack.c.h.b16 %v1917
        %v4858 = vunpack.c.l.b16 %v1918
        %v4859 = vunpack.c.h.b16 %v1918
        %v4860 = vunpack.c.l.b16 %v1919
        %v4861 = vunpack.c.h.b16 %v1919
        %v4862 = vunpack.c.l.b16 %v1920
        %v4863 = vunpack.c.h.b16 %v1920
        %v4864 = vunpack.c.l.b16 %v1921
        %v4865 = vunpack.c.h.b16 %v1921
        %v4866 = vunpack.c.l.b16 %v1922
        %v4867 = vunpack.c.h.b16 %v1922
        %v4868 = vunpack.c.l.b16 %v1923
        %v4869 = vunpack.c.h.b16 %v1923
        %v4870 = vunpack.c.l.b16 %v1924
        %v4871 = vunpack.c.h.b16 %v1924
        %v4872 = vunpack.c.l.b16 %v1925
        %v4873 = vunpack.c.h.b16 %v1925
        %v4874 = vunpack.c.l.b16 %v1926
        %v4875 = vunpack.c.h.b16 %v1926
        %v4876 = vunpack.c.l.b16 %v1927
        %v4877 = vunpack.c.h.b16 %v1927
        %v4878 = vunpack.c.l.b16 %v1928
        %v4879 = vunpack.c.h.b16 %v1928
        %v4880 = vunpack.c.l.b16 %v1929
        %v4881 = vunpack.c.h.b16 %v1929
        %v4882 = vunpack.c.l.b16 %v1930
        %v4883 = vunpack.c.h.b16 %v1930
        %v4884 = vunpack.c.l.b16 %v1931
        %v4885 = vunpack.c.h.b16 %v1931
        %v4886 = vunpack.c.l.b16 %v1932
        %v4887 = vunpack.c.h.b16 %v1932
        %v4888 = vunpack.c.l.b16 %v1933
        %v4889 = vunpack.c.h.b16 %v1933
        %v4890 = vunpack.c.l.b16 %v1934
        %v4891 = vunpack.c.h.b16 %v1934
        %v4892 = vunpack.c.l.b16 %v1935
        %v4893 = vunpack.c.h.b16 %v1935
        %v4894 = vunpack.c.l.b16 %v1936
        %v4895 = vunpack.c.h.b16 %v1936
        %v4896 = vunpack.c.l.b16 %v1937
        %v4897 = vunpack.c.h.b16 %v1937
        %v4898 = vunpack.c.l.b16 %v1938
        %v4899 = vunpack.c.h.b16 %v1938
        %v4900 = vunpack.c.l.b16 %v1939
        %v4901 = vunpack.c.h.b16 %v1939
        %v4902 = vunpack.c.l.b16 %v1940
        %v4903 = vunpack.c.h.b16 %v1940
        %v4904 = vunpack.c.l.b16 %v1941
        %v4905 = vunpack.c.h.b16 %v1941
        %v4906 = vunpack.c.l.b16 %v1942
        %v4907 = vunpack.c.h.b16 %v1942
        %v4908 = vunpack.c.l.b16 %v1943
        %v4909 = vunpack.c.h.b16 %v1943
        %v4910 = vunpack.c.l.b16 %v1944
        %v4911 = vunpack.c.h.b16 %v1944
        %v4912 = vunpack.c.l.b16 %v1945
        %v4913 = vunpack.c.h.b16 %v1945
        %v4914 = vunpack.c.l.b16 %v1946
        %v4915 = vunpack.c.h.b16 %v1946
        %v4916 = vunpack.c.l.b16 %v1947
        %v4917 = vunpack.c.h.b16 %v1947
        %v4918 = vunpack.c.l.b16 %v1948
        %v4919 = vunpack.c.h.b16 %v1948
        %v4920 = vunpack.c.l.b16 %v1949
        %v4921 = vunpack.c.h.b16 %v1949
        %v4922 = vunpack.c.l.b16 %v1950
        %v4923 = vunpack.c.h.b16 %v1950
        %v4924 = vunpack.c.l.b16 %v1951
        %v4925 = vunpack.c.h.b16 %v1951
        %v4926 = vunpack.c.l.b16 %v1952
        %v4927 = vunpack.c.h.b16 %v1952
        %v4928 = vunpack.c.l.b16 %v1953
        %v4929 = vunpack.c.h.b16 %v1953
        %v4930 = vunpack.c.l.b16 %v1954
        %v4931 = vunpack.c.h.b16 %v1954
        %v4932 = vunpack.c.l.b16 %v1955
        %v4933 = vunpack.c.h.b16 %v1955
        %v4934 = vunpack.c.l.b16 %v1956
        %v4935 = vunpack.c.h.b16 %v1956
        %v4936 = vunpack.c.l.b16 %v1957
        %v4937 = vunpack.c.h.b16 %v1957
        %v4938 = vunpack.c.l.b16 %v1958
        %v4939 = vunpack.c.h.b16 %v1958
        %v4940 = vunpack.c.l.b16 %v1959
        %v4941 = vunpack.c.h.b16 %v1959
        %v4942 = vunpack.c.l.b16 %v1960
        %v4943 = vunpack.c.h.b16 %v1960
        %v4944 = vunpack.c.l.b16 %v1961
        %v4945 = vunpack.c.h.b16 %v1961
        %v4946 = vunpack.c.l.b16 %v1962
        %v4947 = vunpack.c.h.b16 %v1962
        %v4948 = vunpack.c.l.b16 %v1963
        %v4949 = vunpack.c.h.b16 %v1963
        %v4950 = vunpack.c.l.b16 %v1964
        %v4951 = vunpack.c.h.b16 %v1964
        %v4952 = vunpack.c.l.b16 %v1965
        %v4953 = vunpack.c.h.b16 %v1965
        %v4954 = vunpack.c.l.b16 %v1966
        %v4955 = vunpack.c.h.b16 %v1966
        %v4956 = vunpack.c.l.b16 %v1967
        %v4957 = vunpack.c.h.b16 %v1967
        %v4958 = vunpack.c.l.b16 %v1968
        %v4959 = vunpack.c.h.b16 %v1968
        %v4960 = vunpack.c.l.b16 %v1969
        %v4961 = vunpack.c.h.b16 %v1969
        %v4962 = vunpack.c.l.b16 %v1970
        %v4963 = vunpack.c.h.b16 %v1970
        %v4964 = vunpack.c.l.b16 %v1971
        %v4965 = vunpack.c.h.b16 %v1971
        %v4966 = vunpack.c.l.b16 %v1972
        %v4967 = vunpack.c.h.b16 %v1972
        %v4968 = vunpack.c.l.b16 %v1973
        %v4969 = vunpack.c.h.b16 %v1973
        %v4970 = vunpack.c.l.b16 %v1974
        %v4971 = vunpack.c.h.b16 %v1974
        %v4972 = vunpack.c.l.b16 %v1975
        %v4973 = vunpack.c.h.b16 %v1975
        %v4974 = vunpack.c.l.b16 %v1976
        %v4975 = vunpack.c.h.b16 %v1976
        %v4976 = vunpack.c.l.b16 %v1977
        %v4977 = vunpack.c.h.b16 %v1977
        %v4978 = vunpack.c.l.b16 %v1978
        %v4979 = vunpack.c.h.b16 %v1978
        %v4980 = vunpack.c.l.b16 %v1979
        %v4981 = vunpack.c.h.b16 %v1979
        %v4982 = vunpack.c.l.b16 %v1980
        %v4983 = vunpack.c.h.b16 %v1980
        %v4984 = vunpack.c.l.b16 %v1981
        %v4985 = vunpack.c.h.b16 %v1981
        %v4986 = vunpack.c.l.b16 %v1982
        %v4987 = vunpack.c.h.b16 %v1982
        %v4988 = vunpack.c.l.b16 %v1983
        %v4989 = vunpack.c.h.b16 %v1983
        %v4990 = vunpack.c.l.b16 %v1984
        %v4991 = vunpack.c.h.b16 %v1984
        %v4992 = vunpack.c.l.b16 %v1985
        %v4993 = vunpack.c.h.b16 %v1985
        %v4994 = vunpack.c.l.b16 %v1986
        %v4995 = vunpack.c.h.b16 %v1986
        %v4996 = vunpack.c.l.b16 %v1987
        %v4997 = vunpack.c.h.b16 %v1987
        %v4998 = vunpack.c.l.b16 %v1988
        %v4999 = vunpack.c.h.b16 %v1988
        %v5000 = vunpack.c.l.b16 %v1989
        %v5001 = vunpack.c.h.b16 %v1989
        %v5002 = vunpack.c.l.b16 %v1990
        %v5003 = vunpack.c.h.b16 %v1990
        %v5004 = vunpack.c.l.b16 %v1991
        %v5005 = vunpack.c.h.b16 %v1991
        %v5006 = vunpack.c.l.b16 %v1992
        %v5007 = vunpack.c.h.b16 %v1992
        %v5008 = vunpack.c.l.b16 %v1993
        %v5009 = vunpack.c.h.b16 %v1993
        %v5010 = vunpack.c.l.b16 %v1994
        %v5011 = vunpack.c.h.b16 %v1994
        %v5012 = vunpack.c.l.b16 %v1995
        %v5013 = vunpack.c.h.b16 %v1995
        %v5014 = vunpack.c.l.b16 %v1996
        %v5015 = vunpack.c.h.b16 %v1996
        %v5016 = vunpack.c.l.b16 %v1997
        %v5017 = vunpack.c.h.b16 %v1997
        %v5018 = vunpack.c.l.b16 %v1998
        %v5019 = vunpack.c.h.b16 %v1998
        %v5020 = vunpack.c.l.b16 %v1999
        %v5021 = vunpack.c.h.b16 %v1999
        %v5022 = vunpack.c.l.b16 %v2000
        %v5023 = vunpack.c.h.b16 %v2000
        %v5024 = vunpack.c.l.b16 %v2001
        %v5025 = vunpack.c.h.b16 %v2001
        %v5026 = vunpack.c.l.b16 %v2002
        %v5027 = vunpack.c.h.b16 %v2002
        %v5028 = vunpack.c.l.b16 %v2003
        %v5029 = vunpack.c.h.b16 %v2003
        %v5030 = vunpack.c.l.b16 %v2004
        %v5031 = vunpack.c.h.b16 %v2004
        %v5032 = vunpack.c.l.b16 %v2005
        %v5033 = vunpack.c.h.b16 %v2005
        %v5034 = vunpack.c.l.b16 %v2006
        %v5035 = vunpack.c.h.b16 %v2006
        %v5036 = vunpack.c.l.b16 %v2007
        %v5037 = vunpack.c.h.b16 %v2007
        %v5038 = vunpack.c.l.b16 %v2008
        %v5039 = vunpack.c.h.b16 %v2008
        %v5040 = vunpack.c.l.b16 %v2009
        %v5041 = vunpack.c.h.b16 %v2009
        %v5042 = vunpack.c.l.b16 %v2010
        %v5043 = vunpack.c.h.b16 %v2010
        %v5044 = vunpack.c.l.b16 %v2011
        %v5045 = vunpack.c.h.b16 %v2011
        %v5046 = vunpack.c.l.b16 %v2012
        %v5047 = vunpack.c.h.b16 %v2012
        %v5048 = vunpack.c.l.b16 %v2013
        %v5049 = vunpack.c.h.b16 %v2013
        %v5050 = vunpack.c.l.b16 %v2014
        %v5051 = vunpack.c.h.b16 %v2014
        %v5052 = vunpack.c.l.b16 %v2015
        %v5053 = vunpack.c.h.b16 %v2015
        %v5054 = vunpack.c.l.b16 %v2016
        %v5055 = vunpack.c.h.b16 %v2016
        %v5056 = vunpack.c.l.b16 %v2017
        %v5057 = vunpack.c.h.b16 %v2017
        %v5058 = vunpack.c.l.b16 %v2018
        %v5059 = vunpack.c.h.b16 %v2018
        %v5060 = vunpack.c.l.b16 %v2019
        %v5061 = vunpack.c.h.b16 %v2019
        %v5062 = vunpack.c.l.b16 %v2020
        %v5063 = vunpack.c.h.b16 %v2020
        %v5064 = vunpack.c.l.b16 %v2021
        %v5065 = vunpack.c.h.b16 %v2021
        %v5066 = vunpack.c.l.b16 %v2022
        %v5067 = vunpack.c.h.b16 %v2022
        %v5068 = vunpack.c.l.b16 %v2023
        %v5069 = vunpack.c.h.b16 %v2023
        %v5070 = vunpack.c.l.b16 %v2024
        %v5071 = vunpack.c.h.b16 %v2024
        %v5072 = vunpack.c.l.b16 %v2025
        %v5073 = vunpack.c.h.b16 %v2025
        %v5074 = vunpack.c.l.b16 %v2026
        %v5075 = vunpack.c.h.b16 %v2026
        %v5076 = vunpack.c.l.b16 %v2027
        %v5077 = vunpack.c.h.b16 %v2027
        %v5078 = vunpack.c.l.b16 %v2028
        %v5079 = vunpack.c.h.b16 %v2028
        %v5080 = vunpack.c.l.b16 %v2029
        %v5081 = vunpack.c.h.b16 %v2029
        %v5082 = vunpack.c.l.b16 %v2030
        %v5083 = vunpack.c.h.b16 %v2030
        %v5084 = vunpack.c.l.b16 %v2031
        %v5085 = vunpack.c.h.b16 %v2031
        %v5086 = vunpack.c.l.b16 %v2032
        %v5087 = vunpack.c.h.b16 %v2032
        %v5088 = vunpack.c.l.b16 %v2033
        %v5089 = vunpack.c.h.b16 %v2033
        %v5090 = vunpack.c.l.b16 %v2034
        %v5091 = vunpack.c.h.b16 %v2034
        %v5092 = vunpack.c.l.b16 %v2035
        %v5093 = vunpack.c.h.b16 %v2035
        %v5094 = vunpack.c.l.b16 %v2036
        %v5095 = vunpack.c.h.b16 %v2036
        %v5096 = vunpack.c.l.b16 %v2037
        %v5097 = vunpack.c.h.b16 %v2037
        %v5098 = vunpack.c.l.b16 %v2038
        %v5099 = vunpack.c.h.b16 %v2038
        %v5100 = vunpack.c.l.b16 %v2039
        %v5101 = vunpack.c.h.b16 %v2039
        %v5102 = vunpack.c.l.b16 %v2040
        %v5103 = vunpack.c.h.b16 %v2040
        %v5104 = vunpack.c.l.b16 %v2041
        %v5105 = vunpack.c.h.b16 %v2041
        %v5106 = vunpack.c.l.b16 %v2042
        %v5107 = vunpack.c.h.b16 %v2042
        %v5108 = vunpack.c.l.b16 %v2043
        %v5109 = vunpack.c.h.b16 %v2043
        %v5110 = vunpack.c.l.b16 %v2044
        %v5111 = vunpack.c.h.b16 %v2044
        %v5112 = vunpack.c.l.b16 %v2045
        %v5113 = vunpack.c.h.b16 %v2045
        %v5114 = vunpack.c.l.b16 %v2046
        %v5115 = vunpack.c.h.b16 %v2046
        %v5116 = vunpack.c.l.b16 %v2047
        %v5117 = vunpack.c.h.b16 %v2047
        %v5118 = vunpack.c.l.b16 %v2048
        %v5119 = vunpack.c.h.b16 %v2048
        %v5120 = vunpack.c.l.b16 %v2049
        %v5121 = vunpack.c.h.b16 %v2049
        %v5122 = vpack.c.b16 %v3082, %v3074
        %v5123 = vpack.c.b16 %v3083, %v3075
        %v5124 = vpack.c.b16 %v3084, %v3076
        %v5125 = vpack.c.b16 %v3085, %v3077
        %v5126 = vpack.c.b16 %v3086, %v3078
        %v5127 = vpack.c.b16 %v3087, %v3079
        %v5128 = vpack.c.b16 %v3088, %v3080
        %v5129 = vpack.c.b16 %v3089, %v3081
        %v5130 = vpack.c.b16 %v3098, %v3090
        %v5131 = vpack.c.b16 %v3099, %v3091
        %v5132 = vpack.c.b16 %v3100, %v3092
        %v5133 = vpack.c.b16 %v3101, %v3093
        %v5134 = vpack.c.b16 %v3102, %v3094
        %v5135 = vpack.c.b16 %v3103, %v3095
        %v5136 = vpack.c.b16 %v3104, %v3096
        %v5137 = vpack.c.b16 %v3105, %v3097
        %v5138 = vpack.c.b16 %v3114, %v3106
        %v5139 = vpack.c.b16 %v3115, %v3107
        %v5140 = vpack.c.b16 %v3116, %v3108
        %v5141 = vpack.c.b16 %v3117, %v3109
        %v5142 = vpack.c.b16 %v3118, %v3110
        %v5143 = vpack.c.b16 %v3119, %v3111
        %v5144 = vpack.c.b16 %v3120, %v3112
        %v5145 = vpack.c.b16 %v3121, %v3113
        %v5146 = vpack.c.b16 %v3130, %v3122
        %v5147 = vpack.c.b16 %v3131, %v3123
        %v5148 = vpack.c.b16 %v3132, %v3124
        %v5149 = vpack.c.b16 %v3133, %v3125
        %v5150 = vpack.c.b16 %v3134, %v3126
        %v5151 = vpack.c.b16 %v3135, %v3127
        %v5152 = vpack.c.b16 %v3136, %v3128
        %v5153 = vpack.c.b16 %v3137, %v3129
        %v5154 = vpack.c.b16 %v3146, %v3138
        %v5155 = vpack.c.b16 %v3147, %v3139
        %v5156 = vpack.c.b16 %v3148, %v3140
        %v5157 = vpack.c.b16 %v3149, %v3141
        %v5158 = vpack.c.b16 %v3150, %v3142
        %v5159 = vpack.c.b16 %v3151, %v3143
        %v5160 = vpack.c.b16 %v3152, %v3144
        %v5161 = vpack.c.b16 %v3153, %v3145
        %v5162 = vpack.c.b16 %v3162, %v3154
        %v5163 = vpack.c.b16 %v3163, %v3155
        %v5164 = vpack.c.b16 %v3164, %v3156
        %v5165 = vpack.c.b16 %v3165, %v3157
        %v5166 = vpack.c.b16 %v3166, %v3158
        %v5167 = vpack.c.b16 %v3167, %v3159
        %v5168 = vpack.c.b16 %v3168, %v3160
        %v5169 = vpack.c.b16 %v3169, %v3161
        %v5170 = vpack.c.b16 %v3178, %v3170
        %v5171 = vpack.c.b16 %v3179, %v3171
        %v5172 = vpack.c.b16 %v3180, %v3172
        %v5173 = vpack.c.b16 %v3181, %v3173
        %v5174 = vpack.c.b16 %v3182, %v3174
        %v5175 = vpack.c.b16 %v3183, %v3175
        %v5176 = vpack.c.b16 %v3184, %v3176
        %v5177 = vpack.c.b16 %v3185, %v3177
        %v5178 = vpack.c.b16 %v3194, %v3186
        %v5179 = vpack.c.b16 %v3195, %v3187
        %v5180 = vpack.c.b16 %v3196, %v3188
        %v5181 = vpack.c.b16 %v3197, %v3189
        %v5182 = vpack.c.b16 %v3198, %v3190
        %v5183 = vpack.c.b16 %v3199, %v3191
        %v5184 = vpack.c.b16 %v3200, %v3192
        %v5185 = vpack.c.b16 %v3201, %v3193
        %v5186 = vpack.c.b16 %v3210, %v3202
        %v5187 = vpack.c.b16 %v3211, %v3203
        %v5188 = vpack.c.b16 %v3212, %v3204
        %v5189 = vpack.c.b16 %v3213, %v3205
        %v5190 = vpack.c.b16 %v3214, %v3206
        %v5191 = vpack.c.b16 %v3215, %v3207
        %v5192 = vpack.c.b16 %v3216, %v3208
        %v5193 = vpack.c.b16 %v3217, %v3209
        %v5194 = vpack.c.b16 %v3226, %v3218
        %v5195 = vpack.c.b16 %v3227, %v3219
        %v5196 = vpack.c.b16 %v3228, %v3220
        %v5197 = vpack.c.b16 %v3229, %v3221
        %v5198 = vpack.c.b16 %v3230, %v3222
        %v5199 = vpack.c.b16 %v3231, %v3223
        %v5200 = vpack.c.b16 %v3232, %v3224
        %v5201 = vpack.c.b16 %v3233, %v3225
        %v5202 = vpack.c.b16 %v3242, %v3234
        %v5203 = vpack.c.b16 %v3243, %v3235
        %v5204 = vpack.c.b16 %v3244, %v3236
        %v5205 = vpack.c.b16 %v3245, %v3237
        %v5206 = vpack.c.b16 %v3246, %v3238
        %v5207 = vpack.c.b16 %v3247, %v3239
        %v5208 = vpack.c.b16 %v3248, %v3240
        %v5209 = vpack.c.b16 %v3249, %v3241
        %v5210 = vpack.c.b16 %v3258, %v3250
        %v5211 = vpack.c.b16 %v3259, %v3251
        %v5212 = vpack.c.b16 %v3260, %v3252
        %v5213 = vpack.c.b16 %v3261, %v3253
        %v5214 = vpack.c.b16 %v3262, %v3254
        %v5215 = vpack.c.b16 %v3263, %v3255
        %v5216 = vpack.c.b16 %v3264, %v3256
        %v5217 = vpack.c.b16 %v3265, %v3257
        %v5218 = vpack.c.b16 %v3274, %v3266
        %v5219 = vpack.c.b16 %v3275, %v3267
        %v5220 = vpack.c.b16 %v3276, %v3268
        %v5221 = vpack.c.b16 %v3277, %v3269
        %v5222 = vpack.c.b16 %v3278, %v3270
        %v5223 = vpack.c.b16 %v3279, %v3271
        %v5224 = vpack.c.b16 %v3280, %v3272
        %v5225 = vpack.c.b16 %v3281, %v3273
        %v5226 = vpack.c.b16 %v3290, %v3282
        %v5227 = vpack.c.b16 %v3291, %v3283
        %v5228 = vpack.c.b16 %v3292, %v3284
        %v5229 = vpack.c.b16 %v3293, %v3285
        %v5230 = vpack.c.b16 %v3294, %v3286
        %v5231 = vpack.c.b16 %v3295, %v3287
        %v5232 = vpack.c.b16 %v3296, %v3288
        %v5233 = vpack.c.b16 %v3297, %v3289
        %v5234 = vpack.c.b16 %v3306, %v3298
        %v5235 = vpack.c.b16 %v3307, %v3299
        %v5236 = vpack.c.b16 %v3308, %v3300
        %v5237 = vpack.c.b16 %v3309, %v3301
        %v5238 = vpack.c.b16 %v3310, %v3302
        %v5239 = vpack.c.b16 %v3311, %v3303
        %v5240 = vpack.c.b16 %v3312, %v3304
        %v5241 = vpack.c.b16 %v3313, %v3305
        %v5242 = vpack.c.b16 %v3322, %v3314
        %v5243 = vpack.c.b16 %v3323, %v3315
        %v5244 = vpack.c.b16 %v3324, %v3316
        %v5245 = vpack.c.b16 %v3325, %v3317
        %v5246 = vpack.c.b16 %v3326, %v3318
        %v5247 = vpack.c.b16 %v3327, %v3319
        %v5248 = vpack.c.b16 %v3328, %v3320
        %v5249 = vpack.c.b16 %v3329, %v3321
        %v5250 = vpack.c.b16 %v3338, %v3330
        %v5251 = vpack.c.b16 %v3339, %v3331
        %v5252 = vpack.c.b16 %v3340, %v3332
        %v5253 = vpack.c.b16 %v3341, %v3333
        %v5254 = vpack.c.b16 %v3342, %v3334
        %v5255 = vpack.c.b16 %v3343, %v3335
        %v5256 = vpack.c.b16 %v3344, %v3336
        %v5257 = vpack.c.b16 %v3345, %v3337
        %v5258 = vpack.c.b16 %v3354, %v3346
        %v5259 = vpack.c.b16 %v3355, %v3347
        %v5260 = vpack.c.b16 %v3356, %v3348
        %v5261 = vpack.c.b16 %v3357, %v3349
        %v5262 = vpack.c.b16 %v3358, %v3350
        %v5263 = vpack.c.b16 %v3359, %v3351
        %v5264 = vpack.c.b16 %v3360, %v3352
        %v5265 = vpack.c.b16 %v3361, %v3353
        %v5266 = vpack.c.b16 %v3370, %v3362
        %v5267 = vpack.c.b16 %v3371, %v3363
        %v5268 = vpack.c.b16 %v3372, %v3364
        %v5269 = vpack.c.b16 %v3373, %v3365
        %v5270 = vpack.c.b16 %v3374, %v3366
        %v5271 = vpack.c.b16 %v3375, %v3367
        %v5272 = vpack.c.b16 %v3376, %v3368
        %v5273 = vpack.c.b16 %v3377, %v3369
        %v5274 = vpack.c.b16 %v3386, %v3378
        %v5275 = vpack.c.b16 %v3387, %v3379
        %v5276 = vpack.c.b16 %v3388, %v3380
        %v5277 = vpack.c.b16 %v3389, %v3381
        %v5278 = vpack.c.b16 %v3390, %v3382
        %v5279 = vpack.c.b16 %v3391, %v3383
        %v5280 = vpack.c.b16 %v3392, %v3384
        %v5281 = vpack.c.b16 %v3393, %v3385
        %v5282 = vpack.c.b16 %v3402, %v3394
        %v5283 = vpack.c.b16 %v3403, %v3395
        %v5284 = vpack.c.b16 %v3404, %v3396
        %v5285 = vpack.c.b16 %v3405, %v3397
        %v5286 = vpack.c.b16 %v3406, %v3398
        %v5287 = vpack.c.b16 %v3407, %v3399
        %v5288 = vpack.c.b16 %v3408, %v3400
        %v5289 = vpack.c.b16 %v3409, %v3401
        %v5290 = vpack.c.b16 %v3418, %v3410
        %v5291 = vpack.c.b16 %v3419, %v3411
        %v5292 = vpack.c.b16 %v3420, %v3412
        %v5293 = vpack.c.b16 %v3421, %v3413
        %v5294 = vpack.c.b16 %v3422, %v3414
        %v5295 = vpack.c.b16 %v3423, %v3415
        %v5296 = vpack.c.b16 %v3424, %v3416
        %v5297 = vpack.c.b16 %v3425, %v3417
        %v5298 = vpack.c.b16 %v3434, %v3426
        %v5299 = vpack.c.b16 %v3435, %v3427
        %v5300 = vpack.c.b16 %v3436, %v3428
        %v5301 = vpack.c.b16 %v3437, %v3429
        %v5302 = vpack.c.b16 %v3438, %v3430
        %v5303 = vpack.c.b16 %v3439, %v3431
        %v5304 = vpack.c.b16 %v3440, %v3432
        %v5305 = vpack.c.b16 %v3441, %v3433
        %v5306 = vpack.c.b16 %v3450, %v3442
        %v5307 = vpack.c.b16 %v3451, %v3443
        %v5308 = vpack.c.b16 %v3452, %v3444
        %v5309 = vpack.c.b16 %v3453, %v3445
        %v5310 = vpack.c.b16 %v3454, %v3446
        %v5311 = vpack.c.b16 %v3455, %v3447
        %v5312 = vpack.c.b16 %v3456, %v3448
        %v5313 = vpack.c.b16 %v3457, %v3449
        %v5314 = vpack.c.b16 %v3466, %v3458
        %v5315 = vpack.c.b16 %v3467, %v3459
        %v5316 = vpack.c.b16 %v3468, %v3460
        %v5317 = vpack.c.b16 %v3469, %v3461
        %v5318 = vpack.c.b16 %v3470, %v3462
        %v5319 = vpack.c.b16 %v3471, %v3463
        %v5320 = vpack.c.b16 %v3472, %v3464
        %v5321 = vpack.c.b16 %v3473, %v3465
        %v5322 = vpack.c.b16 %v3482, %v3474
        %v5323 = vpack.c.b16 %v3483, %v3475
        %v5324 = vpack.c.b16 %v3484, %v3476
        %v5325 = vpack.c.b16 %v3485, %v3477
        %v5326 = vpack.c.b16 %v3486, %v3478
        %v5327 = vpack.c.b16 %v3487, %v3479
        %v5328 = vpack.c.b16 %v3488, %v3480
        %v5329 = vpack.c.b16 %v3489, %v3481
        %v5330 = vpack.c.b16 %v3498, %v3490
        %v5331 = vpack.c.b16 %v3499, %v3491
        %v5332 = vpack.c.b16 %v3500, %v3492
        %v5333 = vpack.c.b16 %v3501, %v3493
        %v5334 = vpack.c.b16 %v3502, %v3494
        %v5335 = vpack.c.b16 %v3503, %v3495
        %v5336 = vpack.c.b16 %v3504, %v3496
        %v5337 = vpack.c.b16 %v3505, %v3497
        %v5338 = vpack.c.b16 %v3514, %v3506
        %v5339 = vpack.c.b16 %v3515, %v3507
        %v5340 = vpack.c.b16 %v3516, %v3508
        %v5341 = vpack.c.b16 %v3517, %v3509
        %v5342 = vpack.c.b16 %v3518, %v3510
        %v5343 = vpack.c.b16 %v3519, %v3511
        %v5344 = vpack.c.b16 %v3520, %v3512
        %v5345 = vpack.c.b16 %v3521, %v3513
        %v5346 = vpack.c.b16 %v3530, %v3522
        %v5347 = vpack.c.b16 %v3531, %v3523
        %v5348 = vpack.c.b16 %v3532, %v3524
        %v5349 = vpack.c.b16 %v3533, %v3525
        %v5350 = vpack.c.b16 %v3534, %v3526
        %v5351 = vpack.c.b16 %v3535, %v3527
        %v5352 = vpack.c.b16 %v3536, %v3528
        %v5353 = vpack.c.b16 %v3537, %v3529
        %v5354 = vpack.c.b16 %v3546, %v3538
        %v5355 = vpack.c.b16 %v3547, %v3539
        %v5356 = vpack.c.b16 %v3548, %v3540
        %v5357 = vpack.c.b16 %v3549, %v3541
        %v5358 = vpack.c.b16 %v3550, %v3542
        %v5359 = vpack.c.b16 %v3551, %v3543
        %v5360 = vpack.c.b16 %v3552, %v3544
        %v5361 = vpack.c.b16 %v3553, %v3545
        %v5362 = vpack.c.b16 %v3562, %v3554
        %v5363 = vpack.c.b16 %v3563, %v3555
        %v5364 = vpack.c.b16 %v3564, %v3556
        %v5365 = vpack.c.b16 %v3565, %v3557
        %v5366 = vpack.c.b16 %v3566, %v3558
        %v5367 = vpack.c.b16 %v3567, %v3559
        %v5368 = vpack.c.b16 %v3568, %v3560
        %v5369 = vpack.c.b16 %v3569, %v3561
        %v5370 = vpack.c.b16 %v3578, %v3570
        %v5371 = vpack.c.b16 %v3579, %v3571
        %v5372 = vpack.c.b16 %v3580, %v3572
        %v5373 = vpack.c.b16 %v3581, %v3573
        %v5374 = vpack.c.b16 %v3582, %v3574
        %v5375 = vpack.c.b16 %v3583, %v3575
        %v5376 = vpack.c.b16 %v3584, %v3576
        %v5377 = vpack.c.b16 %v3585, %v3577
        %v5378 = vpack.c.b16 %v3594, %v3586
        %v5379 = vpack.c.b16 %v3595, %v3587
        %v5380 = vpack.c.b16 %v3596, %v3588
        %v5381 = vpack.c.b16 %v3597, %v3589
        %v5382 = vpack.c.b16 %v3598, %v3590
        %v5383 = vpack.c.b16 %v3599, %v3591
        %v5384 = vpack.c.b16 %v3600, %v3592
        %v5385 = vpack.c.b16 %v3601, %v3593
        %v5386 = vpack.c.b16 %v3610, %v3602
        %v5387 = vpack.c.b16 %v3611, %v3603
        %v5388 = vpack.c.b16 %v3612, %v3604
        %v5389 = vpack.c.b16 %v3613, %v3605
        %v5390 = vpack.c.b16 %v3614, %v3606
        %v5391 = vpack.c.b16 %v3615, %v3607
        %v5392 = vpack.c.b16 %v3616, %v3608
        %v5393 = vpack.c.b16 %v3617, %v3609
        %v5394 = vpack.c.b16 %v3626, %v3618
        %v5395 = vpack.c.b16 %v3627, %v3619
        %v5396 = vpack.c.b16 %v3628, %v3620
        %v5397 = vpack.c.b16 %v3629, %v3621
        %v5398 = vpack.c.b16 %v3630, %v3622
        %v5399 = vpack.c.b16 %v3631, %v3623
        %v5400 = vpack.c.b16 %v3632, %v3624
        %v5401 = vpack.c.b16 %v3633, %v3625
        %v5402 = vpack.c.b16 %v3642, %v3634
        %v5403 = vpack.c.b16 %v3643, %v3635
        %v5404 = vpack.c.b16 %v3644, %v3636
        %v5405 = vpack.c.b16 %v3645, %v3637
        %v5406 = vpack.c.b16 %v3646, %v3638
        %v5407 = vpack.c.b16 %v3647, %v3639
        %v5408 = vpack.c.b16 %v3648, %v3640
        %v5409 = vpack.c.b16 %v3649, %v3641
        %v5410 = vpack.c.b16 %v3658, %v3650
        %v5411 = vpack.c.b16 %v3659, %v3651
        %v5412 = vpack.c.b16 %v3660, %v3652
        %v5413 = vpack.c.b16 %v3661, %v3653
        %v5414 = vpack.c.b16 %v3662, %v3654
        %v5415 = vpack.c.b16 %v3663, %v3655
        %v5416 = vpack.c.b16 %v3664, %v3656
        %v5417 = vpack.c.b16 %v3665, %v3657
        %v5418 = vpack.c.b16 %v3674, %v3666
        %v5419 = vpack.c.b16 %v3675, %v3667
        %v5420 = vpack.c.b16 %v3676, %v3668
        %v5421 = vpack.c.b16 %v3677, %v3669
        %v5422 = vpack.c.b16 %v3678, %v3670
        %v5423 = vpack.c.b16 %v3679, %v3671
        %v5424 = vpack.c.b16 %v3680, %v3672
        %v5425 = vpack.c.b16 %v3681, %v3673
        %v5426 = vpack.c.b16 %v3690, %v3682
        %v5427 = vpack.c.b16 %v3691, %v3683
        %v5428 = vpack.c.b16 %v3692, %v3684
        %v5429 = vpack.c.b16 %v3693, %v3685
        %v5430 = vpack.c.b16 %v3694, %v3686
        %v5431 = vpack.c.b16 %v3695, %v3687
        %v5432 = vpack.c.b16 %v3696, %v3688
        %v5433 = vpack.c.b16 %v3697, %v3689
        %v5434 = vpack.c.b16 %v3706, %v3698
        %v5435 = vpack.c.b16 %v3707, %v3699
        %v5436 = vpack.c.b16 %v3708, %v3700
        %v5437 = vpack.c.b16 %v3709, %v3701
        %v5438 = vpack.c.b16 %v3710, %v3702
        %v5439 = vpack.c.b16 %v3711, %v3703
        %v5440 = vpack.c.b16 %v3712, %v3704
        %v5441 = vpack.c.b16 %v3713, %v3705
        %v5442 = vpack.c.b16 %v3722, %v3714
        %v5443 = vpack.c.b16 %v3723, %v3715
        %v5444 = vpack.c.b16 %v3724, %v3716
        %v5445 = vpack.c.b16 %v3725, %v3717
        %v5446 = vpack.c.b16 %v3726, %v3718
        %v5447 = vpack.c.b16 %v3727, %v3719
        %v5448 = vpack.c.b16 %v3728, %v3720
        %v5449 = vpack.c.b16 %v3729, %v3721
        %v5450 = vpack.c.b16 %v3738, %v3730
        %v5451 = vpack.c.b16 %v3739, %v3731
        %v5452 = vpack.c.b16 %v3740, %v3732
        %v5453 = vpack.c.b16 %v3741, %v3733
        %v5454 = vpack.c.b16 %v3742, %v3734
        %v5455 = vpack.c.b16 %v3743, %v3735
        %v5456 = vpack.c.b16 %v3744, %v3736
        %v5457 = vpack.c.b16 %v3745, %v3737
        %v5458 = vpack.c.b16 %v3754, %v3746
        %v5459 = vpack.c.b16 %v3755, %v3747
        %v5460 = vpack.c.b16 %v3756, %v3748
        %v5461 = vpack.c.b16 %v3757, %v3749
        %v5462 = vpack.c.b16 %v3758, %v3750
        %v5463 = vpack.c.b16 %v3759, %v3751
        %v5464 = vpack.c.b16 %v3760, %v3752
        %v5465 = vpack.c.b16 %v3761, %v3753
        %v5466 = vpack.c.b16 %v3770, %v3762
        %v5467 = vpack.c.b16 %v3771, %v3763
        %v5468 = vpack.c.b16 %v3772, %v3764
        %v5469 = vpack.c.b16 %v3773, %v3765
        %v5470 = vpack.c.b16 %v3774, %v3766
        %v5471 = vpack.c.b16 %v3775, %v3767
        %v5472 = vpack.c.b16 %v3776, %v3768
        %v5473 = vpack.c.b16 %v3777, %v3769
        %v5474 = vpack.c.b16 %v3786, %v3778
        %v5475 = vpack.c.b16 %v3787, %v3779
        %v5476 = vpack.c.b16 %v3788, %v3780
        %v5477 = vpack.c.b16 %v3789, %v3781
        %v5478 = vpack.c.b16 %v3790, %v3782
        %v5479 = vpack.c.b16 %v3791, %v3783
        %v5480 = vpack.c.b16 %v3792, %v3784
        %v5481 = vpack.c.b16 %v3793, %v3785
        %v5482 = vpack.c.b16 %v3802, %v3794
        %v5483 = vpack.c.b16 %v3803, %v3795
        %v5484 = vpack.c.b16 %v3804, %v3796
        %v5485 = vpack.c.b16 %v3805, %v3797
        %v5486 = vpack.c.b16 %v3806, %v3798
        %v5487 = vpack.c.b16 %v3807, %v3799
        %v5488 = vpack.c.b16 %v3808, %v3800
        %v5489 = vpack.c.b16 %v3809, %v3801
        %v5490 = vpack.c.b16 %v3818, %v3810
        %v5491 = vpack.c.b16 %v3819, %v3811
        %v5492 = vpack.c.b16 %v3820, %v3812
        %v5493 = vpack.c.b16 %v3821, %v3813
        %v5494 = vpack.c.b16 %v3822, %v3814
        %v5495 = vpack.c.b16 %v3823, %v3815
        %v5496 = vpack.c.b16 %v3824, %v3816
        %v5497 = vpack.c.b16 %v3825, %v3817
        %v5498 = vpack.c.b16 %v3834, %v3826
        %v5499 = vpack.c.b16 %v3835, %v3827
        %v5500 = vpack.c.b16 %v3836, %v3828
        %v5501 = vpack.c.b16 %v3837, %v3829
        %v5502 = vpack.c.b16 %v3838, %v3830
        %v5503 = vpack.c.b16 %v3839, %v3831
        %v5504 = vpack.c.b16 %v3840, %v3832
        %v5505 = vpack.c.b16 %v3841, %v3833
        %v5506 = vpack.c.b16 %v3850, %v3842
        %v5507 = vpack.c.b16 %v3851, %v3843
        %v5508 = vpack.c.b16 %v3852, %v3844
        %v5509 = vpack.c.b16 %v3853, %v3845
        %v5510 = vpack.c.b16 %v3854, %v3846
        %v5511 = vpack.c.b16 %v3855, %v3847
        %v5512 = vpack.c.b16 %v3856, %v3848
        %v5513 = vpack.c.b16 %v3857, %v3849
        %v5514 = vpack.c.b16 %v3866, %v3858
        %v5515 = vpack.c.b16 %v3867, %v3859
        %v5516 = vpack.c.b16 %v3868, %v3860
        %v5517 = vpack.c.b16 %v3869, %v3861
        %v5518 = vpack.c.b16 %v3870, %v3862
        %v5519 = vpack.c.b16 %v3871, %v3863
        %v5520 = vpack.c.b16 %v3872, %v3864
        %v5521 = vpack.c.b16 %v3873, %v3865
        %v5522 = vpack.c.b16 %v3882, %v3874
        %v5523 = vpack.c.b16 %v3883, %v3875
        %v5524 = vpack.c.b16 %v3884, %v3876
        %v5525 = vpack.c.b16 %v3885, %v3877
        %v5526 = vpack.c.b16 %v3886, %v3878
        %v5527 = vpack.c.b16 %v3887, %v3879
        %v5528 = vpack.c.b16 %v3888, %v3880
        %v5529 = vpack.c.b16 %v3889, %v3881
        %v5530 = vpack.c.b16 %v3898, %v3890
        %v5531 = vpack.c.b16 %v3899, %v3891
        %v5532 = vpack.c.b16 %v3900, %v3892
        %v5533 = vpack.c.b16 %v3901, %v3893
        %v5534 = vpack.c.b16 %v3902, %v3894
        %v5535 = vpack.c.b16 %v3903, %v3895
        %v5536 = vpack.c.b16 %v3904, %v3896
        %v5537 = vpack.c.b16 %v3905, %v3897
        %v5538 = vpack.c.b16 %v3914, %v3906
        %v5539 = vpack.c.b16 %v3915, %v3907
        %v5540 = vpack.c.b16 %v3916, %v3908
        %v5541 = vpack.c.b16 %v3917, %v3909
        %v5542 = vpack.c.b16 %v3918, %v3910
        %v5543 = vpack.c.b16 %v3919, %v3911
        %v5544 = vpack.c.b16 %v3920, %v3912
        %v5545 = vpack.c.b16 %v3921, %v3913
        %v5546 = vpack.c.b16 %v3930, %v3922
        %v5547 = vpack.c.b16 %v3931, %v3923
        %v5548 = vpack.c.b16 %v3932, %v3924
        %v5549 = vpack.c.b16 %v3933, %v3925
        %v5550 = vpack.c.b16 %v3934, %v3926
        %v5551 = vpack.c.b16 %v3935, %v3927
        %v5552 = vpack.c.b16 %v3936, %v3928
        %v5553 = vpack.c.b16 %v3937, %v3929
        %v5554 = vpack.c.b16 %v3946, %v3938
        %v5555 = vpack.c.b16 %v3947, %v3939
        %v5556 = vpack.c.b16 %v3948, %v3940
        %v5557 = vpack.c.b16 %v3949, %v3941
        %v5558 = vpack.c.b16 %v3950, %v3942
        %v5559 = vpack.c.b16 %v3951, %v3943
        %v5560 = vpack.c.b16 %v3952, %v3944
        %v5561 = vpack.c.b16 %v3953, %v3945
        %v5562 = vpack.c.b16 %v3962, %v3954
        %v5563 = vpack.c.b16 %v3963, %v3955
        %v5564 = vpack.c.b16 %v3964, %v3956
        %v5565 = vpack.c.b16 %v3965, %v3957
        %v5566 = vpack.c.b16 %v3966, %v3958
        %v5567 = vpack.c.b16 %v3967, %v3959
        %v5568 = vpack.c.b16 %v3968, %v3960
        %v5569 = vpack.c.b16 %v3969, %v3961
        %v5570 = vpack.c.b16 %v3978, %v3970
        %v5571 = vpack.c.b16 %v3979, %v3971
        %v5572 = vpack.c.b16 %v3980, %v3972
        %v5573 = vpack.c.b16 %v3981, %v3973
        %v5574 = vpack.c.b16 %v3982, %v3974
        %v5575 = vpack.c.b16 %v3983, %v3975
        %v5576 = vpack.c.b16 %v3984, %v3976
        %v5577 = vpack.c.b16 %v3985, %v3977
        %v5578 = vpack.c.b16 %v3994, %v3986
        %v5579 = vpack.c.b16 %v3995, %v3987
        %v5580 = vpack.c.b16 %v3996, %v3988
        %v5581 = vpack.c.b16 %v3997, %v3989
        %v5582 = vpack.c.b16 %v3998, %v3990
        %v5583 = vpack.c.b16 %v3999, %v3991
        %v5584 = vpack.c.b16 %v4000, %v3992
        %v5585 = vpack.c.b16 %v4001, %v3993
        %v5586 = vpack.c.b16 %v4010, %v4002
        %v5587 = vpack.c.b16 %v4011, %v4003
        %v5588 = vpack.c.b16 %v4012, %v4004
        %v5589 = vpack.c.b16 %v4013, %v4005
        %v5590 = vpack.c.b16 %v4014, %v4006
        %v5591 = vpack.c.b16 %v4015, %v4007
        %v5592 = vpack.c.b16 %v4016, %v4008
        %v5593 = vpack.c.b16 %v4017, %v4009
        %v5594 = vpack.c.b16 %v4026, %v4018
        %v5595 = vpack.c.b16 %v4027, %v4019
        %v5596 = vpack.c.b16 %v4028, %v4020
        %v5597 = vpack.c.b16 %v4029, %v4021
        %v5598 = vpack.c.b16 %v4030, %v4022
        %v5599 = vpack.c.b16 %v4031, %v4023
        %v5600 = vpack.c.b16 %v4032, %v4024
        %v5601 = vpack.c.b16 %v4033, %v4025
        %v5602 = vpack.c.b16 %v4042, %v4034
        %v5603 = vpack.c.b16 %v4043, %v4035
        %v5604 = vpack.c.b16 %v4044, %v4036
        %v5605 = vpack.c.b16 %v4045, %v4037
        %v5606 = vpack.c.b16 %v4046, %v4038
        %v5607 = vpack.c.b16 %v4047, %v4039
        %v5608 = vpack.c.b16 %v4048, %v4040
        %v5609 = vpack.c.b16 %v4049, %v4041
        %v5610 = vpack.c.b16 %v4058, %v4050
        %v5611 = vpack.c.b16 %v4059, %v4051
        %v5612 = vpack.c.b16 %v4060, %v4052
        %v5613 = vpack.c.b16 %v4061, %v4053
        %v5614 = vpack.c.b16 %v4062, %v4054
        %v5615 = vpack.c.b16 %v4063, %v4055
        %v5616 = vpack.c.b16 %v4064, %v4056
        %v5617 = vpack.c.b16 %v4065, %v4057
        %v5618 = vpack.c.b16 %v4074, %v4066
        %v5619 = vpack.c.b16 %v4075, %v4067
        %v5620 = vpack.c.b16 %v4076, %v4068
        %v5621 = vpack.c.b16 %v4077, %v4069
        %v5622 = vpack.c.b16 %v4078, %v4070
        %v5623 = vpack.c.b16 %v4079, %v4071
        %v5624 = vpack.c.b16 %v4080, %v4072
        %v5625 = vpack.c.b16 %v4081, %v4073
        %v5626 = vpack.c.b16 %v4090, %v4082
        %v5627 = vpack.c.b16 %v4091, %v4083
        %v5628 = vpack.c.b16 %v4092, %v4084
        %v5629 = vpack.c.b16 %v4093, %v4085
        %v5630 = vpack.c.b16 %v4094, %v4086
        %v5631 = vpack.c.b16 %v4095, %v4087
        %v5632 = vpack.c.b16 %v4096, %v4088
        %v5633 = vpack.c.b16 %v4097, %v4089
        %v5634 = vpack.c.b16 %v4106, %v4098
        %v5635 = vpack.c.b16 %v4107, %v4099
        %v5636 = vpack.c.b16 %v4108, %v4100
        %v5637 = vpack.c.b16 %v4109, %v4101
        %v5638 = vpack.c.b16 %v4110, %v4102
        %v5639 = vpack.c.b16 %v4111, %v4103
        %v5640 = vpack.c.b16 %v4112, %v4104
        %v5641 = vpack.c.b16 %v4113, %v4105
        %v5642 = vpack.c.b16 %v4122, %v4114
        %v5643 = vpack.c.b16 %v4123, %v4115
        %v5644 = vpack.c.b16 %v4124, %v4116
        %v5645 = vpack.c.b16 %v4125, %v4117
        %v5646 = vpack.c.b16 %v4126, %v4118
        %v5647 = vpack.c.b16 %v4127, %v4119
        %v5648 = vpack.c.b16 %v4128, %v4120
        %v5649 = vpack.c.b16 %v4129, %v4121
        %v5650 = vpack.c.b16 %v4138, %v4130
        %v5651 = vpack.c.b16 %v4139, %v4131
        %v5652 = vpack.c.b16 %v4140, %v4132
        %v5653 = vpack.c.b16 %v4141, %v4133
        %v5654 = vpack.c.b16 %v4142, %v4134
        %v5655 = vpack.c.b16 %v4143, %v4135
        %v5656 = vpack.c.b16 %v4144, %v4136
        %v5657 = vpack.c.b16 %v4145, %v4137
        %v5658 = vpack.c.b16 %v4154, %v4146
        %v5659 = vpack.c.b16 %v4155, %v4147
        %v5660 = vpack.c.b16 %v4156, %v4148
        %v5661 = vpack.c.b16 %v4157, %v4149
        %v5662 = vpack.c.b16 %v4158, %v4150
        %v5663 = vpack.c.b16 %v4159, %v4151
        %v5664 = vpack.c.b16 %v4160, %v4152
        %v5665 = vpack.c.b16 %v4161, %v4153
        %v5666 = vpack.c.b16 %v4170, %v4162
        %v5667 = vpack.c.b16 %v4171, %v4163
        %v5668 = vpack.c.b16 %v4172, %v4164
        %v5669 = vpack.c.b16 %v4173, %v4165
        %v5670 = vpack.c.b16 %v4174, %v4166
        %v5671 = vpack.c.b16 %v4175, %v4167
        %v5672 = vpack.c.b16 %v4176, %v4168
        %v5673 = vpack.c.b16 %v4177, %v4169
        %v5674 = vpack.c.b16 %v4186, %v4178
        %v5675 = vpack.c.b16 %v4187, %v4179
        %v5676 = vpack.c.b16 %v4188, %v4180
        %v5677 = vpack.c.b16 %v4189, %v4181
        %v5678 = vpack.c.b16 %v4190, %v4182
        %v5679 = vpack.c.b16 %v4191, %v4183
        %v5680 = vpack.c.b16 %v4192, %v4184
        %v5681 = vpack.c.b16 %v4193, %v4185
        %v5682 = vpack.c.b16 %v4202, %v4194
        %v5683 = vpack.c.b16 %v4203, %v4195
        %v5684 = vpack.c.b16 %v4204, %v4196
        %v5685 = vpack.c.b16 %v4205, %v4197
        %v5686 = vpack.c.b16 %v4206, %v4198
        %v5687 = vpack.c.b16 %v4207, %v4199
        %v5688 = vpack.c.b16 %v4208, %v4200
        %v5689 = vpack.c.b16 %v4209, %v4201
        %v5690 = vpack.c.b16 %v4218, %v4210
        %v5691 = vpack.c.b16 %v4219, %v4211
        %v5692 = vpack.c.b16 %v4220, %v4212
        %v5693 = vpack.c.b16 %v4221, %v4213
        %v5694 = vpack.c.b16 %v4222, %v4214
        %v5695 = vpack.c.b16 %v4223, %v4215
        %v5696 = vpack.c.b16 %v4224, %v4216
        %v5697 = vpack.c.b16 %v4225, %v4217
        %v5698 = vpack.c.b16 %v4234, %v4226
        %v5699 = vpack.c.b16 %v4235, %v4227
        %v5700 = vpack.c.b16 %v4236, %v4228
        %v5701 = vpack.c.b16 %v4237, %v4229
        %v5702 = vpack.c.b16 %v4238, %v4230
        %v5703 = vpack.c.b16 %v4239, %v4231
        %v5704 = vpack.c.b16 %v4240, %v4232
        %v5705 = vpack.c.b16 %v4241, %v4233
        %v5706 = vpack.c.b16 %v4250, %v4242
        %v5707 = vpack.c.b16 %v4251, %v4243
        %v5708 = vpack.c.b16 %v4252, %v4244
        %v5709 = vpack.c.b16 %v4253, %v4245
        %v5710 = vpack.c.b16 %v4254, %v4246
        %v5711 = vpack.c.b16 %v4255, %v4247
        %v5712 = vpack.c.b16 %v4256, %v4248
        %v5713 = vpack.c.b16 %v4257, %v4249
        %v5714 = vpack.c.b16 %v4266, %v4258
        %v5715 = vpack.c.b16 %v4267, %v4259
        %v5716 = vpack.c.b16 %v4268, %v4260
        %v5717 = vpack.c.b16 %v4269, %v4261
        %v5718 = vpack.c.b16 %v4270, %v4262
        %v5719 = vpack.c.b16 %v4271, %v4263
        %v5720 = vpack.c.b16 %v4272, %v4264
        %v5721 = vpack.c.b16 %v4273, %v4265
        %v5722 = vpack.c.b16 %v4282, %v4274
        %v5723 = vpack.c.b16 %v4283, %v4275
        %v5724 = vpack.c.b16 %v4284, %v4276
        %v5725 = vpack.c.b16 %v4285, %v4277
        %v5726 = vpack.c.b16 %v4286, %v4278
        %v5727 = vpack.c.b16 %v4287, %v4279
        %v5728 = vpack.c.b16 %v4288, %v4280
        %v5729 = vpack.c.b16 %v4289, %v4281
        %v5730 = vpack.c.b16 %v4298, %v4290
        %v5731 = vpack.c.b16 %v4299, %v4291
        %v5732 = vpack.c.b16 %v4300, %v4292
        %v5733 = vpack.c.b16 %v4301, %v4293
        %v5734 = vpack.c.b16 %v4302, %v4294
        %v5735 = vpack.c.b16 %v4303, %v4295
        %v5736 = vpack.c.b16 %v4304, %v4296
        %v5737 = vpack.c.b16 %v4305, %v4297
        %v5738 = vpack.c.b16 %v4314, %v4306
        %v5739 = vpack.c.b16 %v4315, %v4307
        %v5740 = vpack.c.b16 %v4316, %v4308
        %v5741 = vpack.c.b16 %v4317, %v4309
        %v5742 = vpack.c.b16 %v4318, %v4310
        %v5743 = vpack.c.b16 %v4319, %v4311
        %v5744 = vpack.c.b16 %v4320, %v4312
        %v5745 = vpack.c.b16 %v4321, %v4313
        %v5746 = vpack.c.b16 %v4330, %v4322
        %v5747 = vpack.c.b16 %v4331, %v4323
        %v5748 = vpack.c.b16 %v4332, %v4324
        %v5749 = vpack.c.b16 %v4333, %v4325
        %v5750 = vpack.c.b16 %v4334, %v4326
        %v5751 = vpack.c.b16 %v4335, %v4327
        %v5752 = vpack.c.b16 %v4336, %v4328
        %v5753 = vpack.c.b16 %v4337, %v4329
        %v5754 = vpack.c.b16 %v4346, %v4338
        %v5755 = vpack.c.b16 %v4347, %v4339
        %v5756 = vpack.c.b16 %v4348, %v4340
        %v5757 = vpack.c.b16 %v4349, %v4341
        %v5758 = vpack.c.b16 %v4350, %v4342
        %v5759 = vpack.c.b16 %v4351, %v4343
        %v5760 = vpack.c.b16 %v4352, %v4344
        %v5761 = vpack.c.b16 %v4353, %v4345
        %v5762 = vpack.c.b16 %v4362, %v4354
        %v5763 = vpack.c.b16 %v4363, %v4355
        %v5764 = vpack.c.b16 %v4364, %v4356
        %v5765 = vpack.c.b16 %v4365, %v4357
        %v5766 = vpack.c.b16 %v4366, %v4358
        %v5767 = vpack.c.b16 %v4367, %v4359
        %v5768 = vpack.c.b16 %v4368, %v4360
        %v5769 = vpack.c.b16 %v4369, %v4361
        %v5770 = vpack.c.b16 %v4378, %v4370
        %v5771 = vpack.c.b16 %v4379, %v4371
        %v5772 = vpack.c.b16 %v4380, %v4372
        %v5773 = vpack.c.b16 %v4381, %v4373
        %v5774 = vpack.c.b16 %v4382, %v4374
        %v5775 = vpack.c.b16 %v4383, %v4375
        %v5776 = vpack.c.b16 %v4384, %v4376
        %v5777 = vpack.c.b16 %v4385, %v4377
        %v5778 = vpack.c.b16 %v4394, %v4386
        %v5779 = vpack.c.b16 %v4395, %v4387
        %v5780 = vpack.c.b16 %v4396, %v4388
        %v5781 = vpack.c.b16 %v4397, %v4389
        %v5782 = vpack.c.b16 %v4398, %v4390
        %v5783 = vpack.c.b16 %v4399, %v4391
        %v5784 = vpack.c.b16 %v4400, %v4392
        %v5785 = vpack.c.b16 %v4401, %v4393
        %v5786 = vpack.c.b16 %v4410, %v4402
        %v5787 = vpack.c.b16 %v4411, %v4403
        %v5788 = vpack.c.b16 %v4412, %v4404
        %v5789 = vpack.c.b16 %v4413, %v4405
        %v5790 = vpack.c.b16 %v4414, %v4406
        %v5791 = vpack.c.b16 %v4415, %v4407
        %v5792 = vpack.c.b16 %v4416, %v4408
        %v5793 = vpack.c.b16 %v4417, %v4409
        %v5794 = vpack.c.b16 %v4426, %v4418
        %v5795 = vpack.c.b16 %v4427, %v4419
        %v5796 = vpack.c.b16 %v4428, %v4420
        %v5797 = vpack.c.b16 %v4429, %v4421
        %v5798 = vpack.c.b16 %v4430, %v4422
        %v5799 = vpack.c.b16 %v4431, %v4423
        %v5800 = vpack.c.b16 %v4432, %v4424
        %v5801 = vpack.c.b16 %v4433, %v4425
        %v5802 = vpack.c.b16 %v4442, %v4434
        %v5803 = vpack.c.b16 %v4443, %v4435
        %v5804 = vpack.c.b16 %v4444, %v4436
        %v5805 = vpack.c.b16 %v4445, %v4437
        %v5806 = vpack.c.b16 %v4446, %v4438
        %v5807 = vpack.c.b16 %v4447, %v4439
        %v5808 = vpack.c.b16 %v4448, %v4440
        %v5809 = vpack.c.b16 %v4449, %v4441
        %v5810 = vpack.c.b16 %v4458, %v4450
        %v5811 = vpack.c.b16 %v4459, %v4451
        %v5812 = vpack.c.b16 %v4460, %v4452
        %v5813 = vpack.c.b16 %v4461, %v4453
        %v5814 = vpack.c.b16 %v4462, %v4454
        %v5815 = vpack.c.b16 %v4463, %v4455
        %v5816 = vpack.c.b16 %v4464, %v4456
        %v5817 = vpack.c.b16 %v4465, %v4457
        %v5818 = vpack.c.b16 %v4474, %v4466
        %v5819 = vpack.c.b16 %v4475, %v4467
        %v5820 = vpack.c.b16 %v4476, %v4468
        %v5821 = vpack.c.b16 %v4477, %v4469
        %v5822 = vpack.c.b16 %v4478, %v4470
        %v5823 = vpack.c.b16 %v4479, %v4471
        %v5824 = vpack.c.b16 %v4480, %v4472
        %v5825 = vpack.c.b16 %v4481, %v4473
        %v5826 = vpack.c.b16 %v4490, %v4482
        %v5827 = vpack.c.b16 %v4491, %v4483
        %v5828 = vpack.c.b16 %v4492, %v4484
        %v5829 = vpack.c.b16 %v4493, %v4485
        %v5830 = vpack.c.b16 %v4494, %v4486
        %v5831 = vpack.c.b16 %v4495, %v4487
        %v5832 = vpack.c.b16 %v4496, %v4488
        %v5833 = vpack.c.b16 %v4497, %v4489
        %v5834 = vpack.c.b16 %v4506, %v4498
        %v5835 = vpack.c.b16 %v4507, %v4499
        %v5836 = vpack.c.b16 %v4508, %v4500
        %v5837 = vpack.c.b16 %v4509, %v4501
        %v5838 = vpack.c.b16 %v4510, %v4502
        %v5839 = vpack.c.b16 %v4511, %v4503
        %v5840 = vpack.c.b16 %v4512, %v4504
        %v5841 = vpack.c.b16 %v4513, %v4505
        %v5842 = vpack.c.b16 %v4522, %v4514
        %v5843 = vpack.c.b16 %v4523, %v4515
        %v5844 = vpack.c.b16 %v4524, %v4516
        %v5845 = vpack.c.b16 %v4525, %v4517
        %v5846 = vpack.c.b16 %v4526, %v4518
        %v5847 = vpack.c.b16 %v4527, %v4519
        %v5848 = vpack.c.b16 %v4528, %v4520
        %v5849 = vpack.c.b16 %v4529, %v4521
        %v5850 = vpack.c.b16 %v4538, %v4530
        %v5851 = vpack.c.b16 %v4539, %v4531
        %v5852 = vpack.c.b16 %v4540, %v4532
        %v5853 = vpack.c.b16 %v4541, %v4533
        %v5854 = vpack.c.b16 %v4542, %v4534
        %v5855 = vpack.c.b16 %v4543, %v4535
        %v5856 = vpack.c.b16 %v4544, %v4536
        %v5857 = vpack.c.b16 %v4545, %v4537
        %v5858 = vpack.c.b16 %v4554, %v4546
        %v5859 = vpack.c.b16 %v4555, %v4547
        %v5860 = vpack.c.b16 %v4556, %v4548
        %v5861 = vpack.c.b16 %v4557, %v4549
        %v5862 = vpack.c.b16 %v4558, %v4550
        %v5863 = vpack.c.b16 %v4559, %v4551
        %v5864 = vpack.c.b16 %v4560, %v4552
        %v5865 = vpack.c.b16 %v4561, %v4553
        %v5866 = vpack.c.b16 %v4570, %v4562
        %v5867 = vpack.c.b16 %v4571, %v4563
        %v5868 = vpack.c.b16 %v4572, %v4564
        %v5869 = vpack.c.b16 %v4573, %v4565
        %v5870 = vpack.c.b16 %v4574, %v4566
        %v5871 = vpack.c.b16 %v4575, %v4567
        %v5872 = vpack.c.b16 %v4576, %v4568
        %v5873 = vpack.c.b16 %v4577, %v4569
        %v5874 = vpack.c.b16 %v4586, %v4578
        %v5875 = vpack.c.b16 %v4587, %v4579
        %v5876 = vpack.c.b16 %v4588, %v4580
        %v5877 = vpack.c.b16 %v4589, %v4581
        %v5878 = vpack.c.b16 %v4590, %v4582
        %v5879 = vpack.c.b16 %v4591, %v4583
        %v5880 = vpack.c.b16 %v4592, %v4584
        %v5881 = vpack.c.b16 %v4593, %v4585
        %v5882 = vpack.c.b16 %v4602, %v4594
        %v5883 = vpack.c.b16 %v4603, %v4595
        %v5884 = vpack.c.b16 %v4604, %v4596
        %v5885 = vpack.c.b16 %v4605, %v4597
        %v5886 = vpack.c.b16 %v4606, %v4598
        %v5887 = vpack.c.b16 %v4607, %v4599
        %v5888 = vpack.c.b16 %v4608, %v4600
        %v5889 = vpack.c.b16 %v4609, %v4601
        %v5890 = vpack.c.b16 %v4618, %v4610
        %v5891 = vpack.c.b16 %v4619, %v4611
        %v5892 = vpack.c.b16 %v4620, %v4612
        %v5893 = vpack.c.b16 %v4621, %v4613
        %v5894 = vpack.c.b16 %v4622, %v4614
        %v5895 = vpack.c.b16 %v4623, %v4615
        %v5896 = vpack.c.b16 %v4624, %v4616
        %v5897 = vpack.c.b16 %v4625, %v4617
        %v5898 = vpack.c.b16 %v4634, %v4626
        %v5899 = vpack.c.b16 %v4635, %v4627
        %v5900 = vpack.c.b16 %v4636, %v4628
        %v5901 = vpack.c.b16 %v4637, %v4629
        %v5902 = vpack.c.b16 %v4638, %v4630
        %v5903 = vpack.c.b16 %v4639, %v4631
        %v5904 = vpack.c.b16 %v4640, %v4632
        %v5905 = vpack.c.b16 %v4641, %v4633
        %v5906 = vpack.c.b16 %v4650, %v4642
        %v5907 = vpack.c.b16 %v4651, %v4643
        %v5908 = vpack.c.b16 %v4652, %v4644
        %v5909 = vpack.c.b16 %v4653, %v4645
        %v5910 = vpack.c.b16 %v4654, %v4646
        %v5911 = vpack.c.b16 %v4655, %v4647
        %v5912 = vpack.c.b16 %v4656, %v4648
        %v5913 = vpack.c.b16 %v4657, %v4649
        %v5914 = vpack.c.b16 %v4666, %v4658
        %v5915 = vpack.c.b16 %v4667, %v4659
        %v5916 = vpack.c.b16 %v4668, %v4660
        %v5917 = vpack.c.b16 %v4669, %v4661
        %v5918 = vpack.c.b16 %v4670, %v4662
        %v5919 = vpack.c.b16 %v4671, %v4663
        %v5920 = vpack.c.b16 %v4672, %v4664
        %v5921 = vpack.c.b16 %v4673, %v4665
        %v5922 = vpack.c.b16 %v4682, %v4674
        %v5923 = vpack.c.b16 %v4683, %v4675
        %v5924 = vpack.c.b16 %v4684, %v4676
        %v5925 = vpack.c.b16 %v4685, %v4677
        %v5926 = vpack.c.b16 %v4686, %v4678
        %v5927 = vpack.c.b16 %v4687, %v4679
        %v5928 = vpack.c.b16 %v4688, %v4680
        %v5929 = vpack.c.b16 %v4689, %v4681
        %v5930 = vpack.c.b16 %v4698, %v4690
        %v5931 = vpack.c.b16 %v4699, %v4691
        %v5932 = vpack.c.b16 %v4700, %v4692
        %v5933 = vpack.c.b16 %v4701, %v4693
        %v5934 = vpack.c.b16 %v4702, %v4694
        %v5935 = vpack.c.b16 %v4703, %v4695
        %v5936 = vpack.c.b16 %v4704, %v4696
        %v5937 = vpack.c.b16 %v4705, %v4697
        %v5938 = vpack.c.b16 %v4714, %v4706
        %v5939 = vpack.c.b16 %v4715, %v4707
        %v5940 = vpack.c.b16 %v4716, %v4708
        %v5941 = vpack.c.b16 %v4717, %v4709
        %v5942 = vpack.c.b16 %v4718, %v4710
        %v5943 = vpack.c.b16 %v4719, %v4711
        %v5944 = vpack.c.b16 %v4720, %v4712
        %v5945 = vpack.c.b16 %v4721, %v4713
        %v5946 = vpack.c.b16 %v4730, %v4722
        %v5947 = vpack.c.b16 %v4731, %v4723
        %v5948 = vpack.c.b16 %v4732, %v4724
        %v5949 = vpack.c.b16 %v4733, %v4725
        %v5950 = vpack.c.b16 %v4734, %v4726
        %v5951 = vpack.c.b16 %v4735, %v4727
        %v5952 = vpack.c.b16 %v4736, %v4728
        %v5953 = vpack.c.b16 %v4737, %v4729
        %v5954 = vpack.c.b16 %v4746, %v4738
        %v5955 = vpack.c.b16 %v4747, %v4739
        %v5956 = vpack.c.b16 %v4748, %v4740
        %v5957 = vpack.c.b16 %v4749, %v4741
        %v5958 = vpack.c.b16 %v4750, %v4742
        %v5959 = vpack.c.b16 %v4751, %v4743
        %v5960 = vpack.c.b16 %v4752, %v4744
        %v5961 = vpack.c.b16 %v4753, %v4745
        %v5962 = vpack.c.b16 %v4762, %v4754
        %v5963 = vpack.c.b16 %v4763, %v4755
        %v5964 = vpack.c.b16 %v4764, %v4756
        %v5965 = vpack.c.b16 %v4765, %v4757
        %v5966 = vpack.c.b16 %v4766, %v4758
        %v5967 = vpack.c.b16 %v4767, %v4759
        %v5968 = vpack.c.b16 %v4768, %v4760
        %v5969 = vpack.c.b16 %v4769, %v4761
        %v5970 = vpack.c.b16 %v4778, %v4770
        %v5971 = vpack.c.b16 %v4779, %v4771
        %v5972 = vpack.c.b16 %v4780, %v4772
        %v5973 = vpack.c.b16 %v4781, %v4773
        %v5974 = vpack.c.b16 %v4782, %v4774
        %v5975 = vpack.c.b16 %v4783, %v4775
        %v5976 = vpack.c.b16 %v4784, %v4776
        %v5977 = vpack.c.b16 %v4785, %v4777
        %v5978 = vpack.c.b16 %v4794, %v4786
        %v5979 = vpack.c.b16 %v4795, %v4787
        %v5980 = vpack.c.b16 %v4796, %v4788
        %v5981 = vpack.c.b16 %v4797, %v4789
        %v5982 = vpack.c.b16 %v4798, %v4790
        %v5983 = vpack.c.b16 %v4799, %v4791
        %v5984 = vpack.c.b16 %v4800, %v4792
        %v5985 = vpack.c.b16 %v4801, %v4793
        %v5986 = vpack.c.b16 %v4810, %v4802
        %v5987 = vpack.c.b16 %v4811, %v4803
        %v5988 = vpack.c.b16 %v4812, %v4804
        %v5989 = vpack.c.b16 %v4813, %v4805
        %v5990 = vpack.c.b16 %v4814, %v4806
        %v5991 = vpack.c.b16 %v4815, %v4807
        %v5992 = vpack.c.b16 %v4816, %v4808
        %v5993 = vpack.c.b16 %v4817, %v4809
        %v5994 = vpack.c.b16 %v4826, %v4818
        %v5995 = vpack.c.b16 %v4827, %v4819
        %v5996 = vpack.c.b16 %v4828, %v4820
        %v5997 = vpack.c.b16 %v4829, %v4821
        %v5998 = vpack.c.b16 %v4830, %v4822
        %v5999 = vpack.c.b16 %v4831, %v4823
        %v6000 = vpack.c.b16 %v4832, %v4824
        %v6001 = vpack.c.b16 %v4833, %v4825
        %v6002 = vpack.c.b16 %v4842, %v4834
        %v6003 = vpack.c.b16 %v4843, %v4835
        %v6004 = vpack.c.b16 %v4844, %v4836
        %v6005 = vpack.c.b16 %v4845, %v4837
        %v6006 = vpack.c.b16 %v4846, %v4838
        %v6007 = vpack.c.b16 %v4847, %v4839
        %v6008 = vpack.c.b16 %v4848, %v4840
        %v6009 = vpack.c.b16 %v4849, %v4841
        %v6010 = vpack.c.b16 %v4858, %v4850
        %v6011 = vpack.c.b16 %v4859, %v4851
        %v6012 = vpack.c.b16 %v4860, %v4852
        %v6013 = vpack.c.b16 %v4861, %v4853
        %v6014 = vpack.c.b16 %v4862, %v4854
        %v6015 = vpack.c.b16 %v4863, %v4855
        %v6016 = vpack.c.b16 %v4864, %v4856
        %v6017 = vpack.c.b16 %v4865, %v4857
        %v6018 = vpack.c.b16 %v4874, %v4866
        %v6019 = vpack.c.b16 %v4875, %v4867
        %v6020 = vpack.c.b16 %v4876, %v4868
        %v6021 = vpack.c.b16 %v4877, %v4869
        %v6022 = vpack.c.b16 %v4878, %v4870
        %v6023 = vpack.c.b16 %v4879, %v4871
        %v6024 = vpack.c.b16 %v4880, %v4872
        %v6025 = vpack.c.b16 %v4881, %v4873
        %v6026 = vpack.c.b16 %v4890, %v4882
        %v6027 = vpack.c.b16 %v4891, %v4883
        %v6028 = vpack.c.b16 %v4892, %v4884
        %v6029 = vpack.c.b16 %v4893, %v4885
        %v6030 = vpack.c.b16 %v4894, %v4886
        %v6031 = vpack.c.b16 %v4895, %v4887
        %v6032 = vpack.c.b16 %v4896, %v4888
        %v6033 = vpack.c.b16 %v4897, %v4889
        %v6034 = vpack.c.b16 %v4906, %v4898
        %v6035 = vpack.c.b16 %v4907, %v4899
        %v6036 = vpack.c.b16 %v4908, %v4900
        %v6037 = vpack.c.b16 %v4909, %v4901
        %v6038 = vpack.c.b16 %v4910, %v4902
        %v6039 = vpack.c.b16 %v4911, %v4903
        %v6040 = vpack.c.b16 %v4912, %v4904
        %v6041 = vpack.c.b16 %v4913, %v4905
        %v6042 = vpack.c.b16 %v4922, %v4914
        %v6043 = vpack.c.b16 %v4923, %v4915
        %v6044 = vpack.c.b16 %v4924, %v4916
        %v6045 = vpack.c.b16 %v4925, %v4917
        %v6046 = vpack.c.b16 %v4926, %v4918
        %v6047 = vpack.c.b16 %v4927, %v4919
        %v6048 = vpack.c.b16 %v4928, %v4920
        %v6049 = vpack.c.b16 %v4929, %v4921
        %v6050 = vpack.c.b16 %v4938, %v4930
        %v6051 = vpack.c.b16 %v4939, %v4931
        %v6052 = vpack.c.b16 %v4940, %v4932
        %v6053 = vpack.c.b16 %v4941, %v4933
        %v6054 = vpack.c.b16 %v4942, %v4934
        %v6055 = vpack.c.b16 %v4943, %v4935
        %v6056 = vpack.c.b16 %v4944, %v4936
        %v6057 = vpack.c.b16 %v4945, %v4937
        %v6058 = vpack.c.b16 %v4954, %v4946
        %v6059 = vpack.c.b16 %v4955, %v4947
        %v6060 = vpack.c.b16 %v4956, %v4948
        %v6061 = vpack.c.b16 %v4957, %v4949
        %v6062 = vpack.c.b16 %v4958, %v4950
        %v6063 = vpack.c.b16 %v4959, %v4951
        %v6064 = vpack.c.b16 %v4960, %v4952
        %v6065 = vpack.c.b16 %v4961, %v4953
        %v6066 = vpack.c.b16 %v4970, %v4962
        %v6067 = vpack.c.b16 %v4971, %v4963
        %v6068 = vpack.c.b16 %v4972, %v4964
        %v6069 = vpack.c.b16 %v4973, %v4965
        %v6070 = vpack.c.b16 %v4974, %v4966
        %v6071 = vpack.c.b16 %v4975, %v4967
        %v6072 = vpack.c.b16 %v4976, %v4968
        %v6073 = vpack.c.b16 %v4977, %v4969
        %v6074 = vpack.c.b16 %v4986, %v4978
        %v6075 = vpack.c.b16 %v4987, %v4979
        %v6076 = vpack.c.b16 %v4988, %v4980
        %v6077 = vpack.c.b16 %v4989, %v4981
        %v6078 = vpack.c.b16 %v4990, %v4982
        %v6079 = vpack.c.b16 %v4991, %v4983
        %v6080 = vpack.c.b16 %v4992, %v4984
        %v6081 = vpack.c.b16 %v4993, %v4985
        %v6082 = vpack.c.b16 %v5002, %v4994
        %v6083 = vpack.c.b16 %v5003, %v4995
        %v6084 = vpack.c.b16 %v5004, %v4996
        %v6085 = vpack.c.b16 %v5005, %v4997
        %v6086 = vpack.c.b16 %v5006, %v4998
        %v6087 = vpack.c.b16 %v5007, %v4999
        %v6088 = vpack.c.b16 %v5008, %v5000
        %v6089 = vpack.c.b16 %v5009, %v5001
        %v6090 = vpack.c.b16 %v5018, %v5010
        %v6091 = vpack.c.b16 %v5019, %v5011
        %v6092 = vpack.c.b16 %v5020, %v5012
        %v6093 = vpack.c.b16 %v5021, %v5013
        %v6094 = vpack.c.b16 %v5022, %v5014
        %v6095 = vpack.c.b16 %v5023, %v5015
        %v6096 = vpack.c.b16 %v5024, %v5016
        %v6097 = vpack.c.b16 %v5025, %v5017
        %v6098 = vpack.c.b16 %v5034, %v5026
        %v6099 = vpack.c.b16 %v5035, %v5027
        %v6100 = vpack.c.b16 %v5036, %v5028
        %v6101 = vpack.c.b16 %v5037, %v5029
        %v6102 = vpack.c.b16 %v5038, %v5030
        %v6103 = vpack.c.b16 %v5039, %v5031
        %v6104 = vpack.c.b16 %v5040, %v5032
        %v6105 = vpack.c.b16 %v5041, %v5033
        %v6106 = vpack.c.b16 %v5050, %v5042
        %v6107 = vpack.c.b16 %v5051, %v5043
        %v6108 = vpack.c.b16 %v5052, %v5044
        %v6109 = vpack.c.b16 %v5053, %v5045
        %v6110 = vpack.c.b16 %v5054, %v5046
        %v6111 = vpack.c.b16 %v5055, %v5047
        %v6112 = vpack.c.b16 %v5056, %v5048
        %v6113 = vpack.c.b16 %v5057, %v5049
        %v6114 = vpack.c.b16 %v5066, %v5058
        %v6115 = vpack.c.b16 %v5067, %v5059
        %v6116 = vpack.c.b16 %v5068, %v5060
        %v6117 = vpack.c.b16 %v5069, %v5061
        %v6118 = vpack.c.b16 %v5070, %v5062
        %v6119 = vpack.c.b16 %v5071, %v5063
        %v6120 = vpack.c.b16 %v5072, %v5064
        %v6121 = vpack.c.b16 %v5073, %v5065
        %v6122 = vpack.c.b16 %v5082, %v5074
        %v6123 = vpack.c.b16 %v5083, %v5075
        %v6124 = vpack.c.b16 %v5084, %v5076
        %v6125 = vpack.c.b16 %v5085, %v5077
        %v6126 = vpack.c.b16 %v5086, %v5078
        %v6127 = vpack.c.b16 %v5087, %v5079
        %v6128 = vpack.c.b16 %v5088, %v5080
        %v6129 = vpack.c.b16 %v5089, %v5081
        %v6130 = vpack.c.b16 %v5098, %v5090
        %v6131 = vpack.c.b16 %v5099, %v5091
        %v6132 = vpack.c.b16 %v5100, %v5092
        %v6133 = vpack.c.b16 %v5101, %v5093
        %v6134 = vpack.c.b16 %v5102, %v5094
        %v6135 = vpack.c.b16 %v5103, %v5095
        %v6136 = vpack.c.b16 %v5104, %v5096
        %v6137 = vpack.c.b16 %v5105, %v5097
        %v6138 = vpack.c.b16 %v5114, %v5106
        %v6139 = vpack.c.b16 %v5115, %v5107
        %v6140 = vpack.c.b16 %v5116, %v5108
        %v6141 = vpack.c.b16 %v5117, %v5109
        %v6142 = vpack.c.b16 %v5118, %v5110
        %v6143 = vpack.c.b16 %v5119, %v5111
        %v6144 = vpack.c.b16 %v5120, %v5112
        %v6145 = vpack.c.b16 %v5121, %v5113
        %7170 = vmatprep.subr.bf16.mxu0 %v5123
        %7171 = vmatpush1.bf16.msra.mxu0 %v5122
        %7172 = vmatprep.subr.bf16.mxu0 %v5131
        %7173 = vmatpush1.bf16.msra.mxu0 %v5130
        %7174 = vmatprep.subr.bf16.mxu0 %v5139
        %7175 = vmatpush1.bf16.msra.mxu0 %v5138
        %7176 = vmatprep.subr.bf16.mxu0 %v5147
        %7177 = vmatpush1.bf16.msra.mxu0 %v5146
        %7178 = vmatprep.subr.bf16.mxu0 %v5155
        %7179 = vmatpush1.bf16.msra.mxu0 %v5154
        %7180 = vmatprep.subr.bf16.mxu0 %v5163
        %7181 = vmatpush1.bf16.msra.mxu0 %v5162
        %7182 = vmatprep.subr.bf16.mxu0 %v5171
        %7183 = vmatpush1.bf16.msra.mxu0 %v5170
        %7184 = vmatprep.subr.bf16.mxu0 %v5179
        %7185 = vmatpush1.bf16.msra.mxu0 %v5178
        %7186 = vmatprep.subr.bf16.mxu0 %v5187
        %7187 = vmatpush1.bf16.msra.mxu0 %v5186
        %7188 = vmatprep.subr.bf16.mxu0 %v5195
        %7189 = vmatpush1.bf16.msra.mxu0 %v5194
        %7190 = vmatprep.subr.bf16.mxu0 %v5203
        %7191 = vmatpush1.bf16.msra.mxu0 %v5202
        %7192 = vmatprep.subr.bf16.mxu0 %v5211
        %7193 = vmatpush1.bf16.msra.mxu0 %v5210
        %7194 = vmatprep.subr.bf16.mxu0 %v5219
        %7195 = vmatpush1.bf16.msra.mxu0 %v5218
        %7196 = vmatprep.subr.bf16.mxu0 %v5227
        %7197 = vmatpush1.bf16.msra.mxu0 %v5226
        %7198 = vmatprep.subr.bf16.mxu0 %v5235
        %7199 = vmatpush1.bf16.msra.mxu0 %v5234
        %7200 = vmatprep.subr.bf16.mxu0 %v5243
        %7201 = vmatpush1.bf16.msra.mxu0 %v5242
        %7202 = vmatprep.mubr.bf16.mxu0 %v1011
        %7203 = vmatmul.mubr.bf16.gmra.mrb[0].mxu0 %v1010
        %v7204 = vpop.f32.mrb[0].mxu0
        %v7205 = vadd.f32 0.0, %v7204
        %v7206 = vpop.f32.mrb[0].mxu0
        %v7207 = vadd.f32 0.0, %v7206
        %v7208 = vpop.f32.mrb[0].mxu0
        %v7209 = vpop.f32.mrb[0].mxu0
        %7210 = vdwg.mxu0
        %7211 = vmatprep.subr.bf16.mxu0 %v5251
        %7212 = vmatpush1.bf16.msra.mxu0 %v5250
        %7213 = vmatprep.subr.bf16.mxu0 %v5259
        %7214 = vmatpush1.bf16.msra.mxu0 %v5258
        %7215 = vmatprep.subr.bf16.mxu0 %v5267
        %7216 = vmatpush1.bf16.msra.mxu0 %v5266
        %7217 = vmatprep.subr.bf16.mxu0 %v5275
        %7218 = vmatpush1.bf16.msra.mxu0 %v5274
        %7219 = vmatprep.subr.bf16.mxu0 %v5283
        %7220 = vmatpush1.bf16.msra.mxu0 %v5282
        %7221 = vmatprep.subr.bf16.mxu0 %v5291
        %7222 = vmatpush1.bf16.msra.mxu0 %v5290
        %7223 = vmatprep.subr.bf16.mxu0 %v5299
        %7224 = vmatpush1.bf16.msra.mxu0 %v5298
        %7225 = vmatprep.subr.bf16.mxu0 %v5307
        %7226 = vmatpush1.bf16.msra.mxu0 %v5306
        %7227 = vmatprep.subr.bf16.mxu0 %v5315
        %7228 = vmatpush1.bf16.msra.mxu0 %v5314
        %7229 = vmatprep.subr.bf16.mxu0 %v5323
        %7230 = vmatpush1.bf16.msra.mxu0 %v5322
        %7231 = vmatprep.subr.bf16.mxu0 %v5331
        %7232 = vmatpush1.bf16.msra.mxu0 %v5330
        %7233 = vmatprep.subr.bf16.mxu0 %v5339
        %7234 = vmatpush1.bf16.msra.mxu0 %v5338
        %7235 = vmatprep.subr.bf16.mxu0 %v5347
        %7236 = vmatpush1.bf16.msra.mxu0 %v5346
        %7237 = vmatprep.subr.bf16.mxu0 %v5355
        %7238 = vmatpush1.bf16.msra.mxu0 %v5354
        %7239 = vmatprep.subr.bf16.mxu0 %v5363
        %7240 = vmatpush1.bf16.msra.mxu0 %v5362
        %7241 = vmatprep.subr.bf16.mxu0 %v5371
        %7242 = vmatpush1.bf16.msra.mxu0 %v5370
        %7243 = vmatprep.mubr.bf16.mxu0 %v1013
        %7244 = vmatmul.mubr.bf16.gmra.mrb[0].mxu0 %v1012
        %v7245 = vpop.f32.mrb[0].mxu0
        %v7246 = vadd.f32 %v7205, %v7245
        %v7247 = vpop.f32.mrb[0].mxu0
        %v7248 = vadd.f32 %v7207, %v7247
        %v7249 = vpop.f32.mrb[0].mxu0
        %v7250 = vpop.f32.mrb[0].mxu0
        %7251 = vdwg.mxu0
        %7252 = vmatprep.subr.bf16.mxu0 %v5379
        %7253 = vmatpush1.bf16.msra.mxu0 %v5378
        %7254 = vmatprep.subr.bf16.mxu0 %v5387
        %7255 = vmatpush1.bf16.msra.mxu0 %v5386
        %7256 = vmatprep.subr.bf16.mxu0 %v5395
        %7257 = vmatpush1.bf16.msra.mxu0 %v5394
        %7258 = vmatprep.subr.bf16.mxu0 %v5403
        %7259 = vmatpush1.bf16.msra.mxu0 %v5402
        %7260 = vmatprep.subr.bf16.mxu0 %v5411
        %7261 = vmatpush1.bf16.msra.mxu0 %v5410
        %7262 = vmatprep.subr.bf16.mxu0 %v5419
        %7263 = vmatpush1.bf16.msra.mxu0 %v5418
        %7264 = vmatprep.subr.bf16.mxu0 %v5427
        %7265 = vmatpush1.bf16.msra.mxu0 %v5426
        %7266 = vmatprep.subr.bf16.mxu0 %v5435
        %7267 = vmatpush1.bf16.msra.mxu0 %v5434
        %7268 = vmatprep.subr.bf16.mxu0 %v5443
        %7269 = vmatpush1.bf16.msra.mxu0 %v5442
        %7270 = vmatprep.subr.bf16.mxu0 %v5451
        %7271 = vmatpush1.bf16.msra.mxu0 %v5450
        %7272 = vmatprep.subr.bf16.mxu0 %v5459
        %7273 = vmatpush1.bf16.msra.mxu0 %v5458
        %7274 = vmatprep.subr.bf16.mxu0 %v5467
        %7275 = vmatpush1.bf16.msra.mxu0 %v5466
        %7276 = vmatprep.subr.bf16.mxu0 %v5475
        %7277 = vmatpush1.bf16.msra.mxu0 %v5474
        %7278 = vmatprep.subr.bf16.mxu0 %v5483
        %7279 = vmatpush1.bf16.msra.mxu0 %v5482
        %7280 = vmatprep.subr.bf16.mxu0 %v5491
        %7281 = vmatpush1.bf16.msra.mxu0 %v5490
        %7282 = vmatprep.subr.bf16.mxu0 %v5499
        %7283 = vmatpush1.bf16.msra.mxu0 %v5498
        %7284 = vmatprep.mubr.bf16.mxu0 %v1015
        %7285 = vmatmul.mubr.bf16.gmra.mrb[0].mxu0 %v1014
        %v7286 = vpop.f32.mrb[0].mxu0
        %v7287 = vadd.f32 %v7246, %v7286
        %v7288 = vpop.f32.mrb[0].mxu0
        %v7289 = vadd.f32 %v7248, %v7288
        %v7290 = vpop.f32.mrb[0].mxu0
        %v7291 = vpop.f32.mrb[0].mxu0
        %7292 = vdwg.mxu0
        %7293 = vmatprep.subr.bf16.mxu0 %v5507
        %7294 = vmatpush1.bf16.msra.mxu0 %v5506
        %7295 = vmatprep.subr.bf16.mxu0 %v5515
        %7296 = vmatpush1.bf16.msra.mxu0 %v5514
        %7297 = vmatprep.subr.bf16.mxu0 %v5523
        %7298 = vmatpush1.bf16.msra.mxu0 %v5522
        %7299 = vmatprep.subr.bf16.mxu0 %v5531
        %7300 = vmatpush1.bf16.msra.mxu0 %v5530
        %7301 = vmatprep.subr.bf16.mxu0 %v5539
        %7302 = vmatpush1.bf16.msra.mxu0 %v5538
        %7303 = vmatprep.subr.bf16.mxu0 %v5547
        %7304 = vmatpush1.bf16.msra.mxu0 %v5546
        %7305 = vmatprep.subr.bf16.mxu0 %v5555
        %7306 = vmatpush1.bf16.msra.mxu0 %v5554
        %7307 = vmatprep.subr.bf16.mxu0 %v5563
        %7308 = vmatpush1.bf16.msra.mxu0 %v5562
        %7309 = vmatprep.subr.bf16.mxu0 %v5571
        %7310 = vmatpush1.bf16.msra.mxu0 %v5570
        %7311 = vmatprep.subr.bf16.mxu0 %v5579
        %7312 = vmatpush1.bf16.msra.mxu0 %v5578
        %7313 = vmatprep.subr.bf16.mxu0 %v5587
        %7314 = vmatpush1.bf16.msra.mxu0 %v5586
        %7315 = vmatprep.subr.bf16.mxu0 %v5595
        %7316 = vmatpush1.bf16.msra.mxu0 %v5594
        %7317 = vmatprep.subr.bf16.mxu0 %v5603
        %7318 = vmatpush1.bf16.msra.mxu0 %v5602
        %7319 = vmatprep.subr.bf16.mxu0 %v5611
        %7320 = vmatpush1.bf16.msra.mxu0 %v5610
        %7321 = vmatprep.subr.bf16.mxu0 %v5619
        %7322 = vmatpush1.bf16.msra.mxu0 %v5618
        %7323 = vmatprep.subr.bf16.mxu0 %v5627
        %7324 = vmatpush1.bf16.msra.mxu0 %v5626
        %7325 = vmatprep.mubr.bf16.mxu0 %v1017
        %7326 = vmatmul.mubr.bf16.gmra.mrb[0].mxu0 %v1016
        %v7327 = vpop.f32.mrb[0].mxu0
        %v7328 = vadd.f32 %v7287, %v7327
        %v7329 = vpop.f32.mrb[0].mxu0
        %v7330 = vadd.f32 %v7289, %v7329
        %v7331 = vpop.f32.mrb[0].mxu0
        %v7332 = vpop.f32.mrb[0].mxu0
        %7333 = vdwg.mxu0
        %7334 = vmatprep.subr.bf16.mxu0 %v5635
        %7335 = vmatpush1.bf16.msra.mxu0 %v5634
        %7336 = vmatprep.subr.bf16.mxu0 %v5643
        %7337 = vmatpush1.bf16.msra.mxu0 %v5642
        %7338 = vmatprep.subr.bf16.mxu0 %v5651
        %7339 = vmatpush1.bf16.msra.mxu0 %v5650
        %7340 = vmatprep.subr.bf16.mxu0 %v5659
        %7341 = vmatpush1.bf16.msra.mxu0 %v5658
        %7342 = vmatprep.subr.bf16.mxu0 %v5667
        %7343 = vmatpush1.bf16.msra.mxu0 %v5666
        %7344 = vmatprep.subr.bf16.mxu0 %v5675
        %7345 = vmatpush1.bf16.msra.mxu0 %v5674
        %7346 = vmatprep.subr.bf16.mxu0 %v5683
        %7347 = vmatpush1.bf16.msra.mxu0 %v5682
        %7348 = vmatprep.subr.bf16.mxu0 %v5691
        %7349 = vmatpush1.bf16.msra.mxu0 %v5690
        %7350 = vmatprep.subr.bf16.mxu0 %v5699
        %7351 = vmatpush1.bf16.msra.mxu0 %v5698
        %7352 = vmatprep.subr.bf16.mxu0 %v5707
        %7353 = vmatpush1.bf16.msra.mxu0 %v5706
        %7354 = vmatprep.subr.bf16.mxu0 %v5715
        %7355 = vmatpush1.bf16.msra.mxu0 %v5714
        %7356 = vmatprep.subr.bf16.mxu0 %v5723
        %7357 = vmatpush1.bf16.msra.mxu0 %v5722
        %7358 = vmatprep.subr.bf16.mxu0 %v5731
        %7359 = vmatpush1.bf16.msra.mxu0 %v5730
        %7360 = vmatprep.subr.bf16.mxu0 %v5739
        %7361 = vmatpush1.bf16.msra.mxu0 %v5738
        %7362 = vmatprep.subr.bf16.mxu0 %v5747
        %7363 = vmatpush1.bf16.msra.mxu0 %v5746
        %7364 = vmatprep.subr.bf16.mxu0 %v5755
        %7365 = vmatpush1.bf16.msra.mxu0 %v5754
        %7366 = vmatprep.mubr.bf16.mxu0 %v1019
        %7367 = vmatmul.mubr.bf16.gmra.mrb[0].mxu0 %v1018
        %v7368 = vpop.f32.mrb[0].mxu0
        %v7369 = vadd.f32 %v7328, %v7368
        %v7370 = vpop.f32.mrb[0].mxu0
        %v7371 = vadd.f32 %v7330, %v7370
        %v7372 = vpop.f32.mrb[0].mxu0
        %v7373 = vpop.f32.mrb[0].mxu0
        %7374 = vdwg.mxu0
        %7375 = vmatprep.subr.bf16.mxu0 %v5763
        %7376 = vmatpush1.bf16.msra.mxu0 %v5762
        %7377 = vmatprep.subr.bf16.mxu0 %v5771
        %7378 = vmatpush1.bf16.msra.mxu0 %v5770
        %7379 = vmatprep.subr.bf16.mxu0 %v5779
        %7380 = vmatpush1.bf16.msra.mxu0 %v5778
        %7381 = vmatprep.subr.bf16.mxu0 %v5787
        %7382 = vmatpush1.bf16.msra.mxu0 %v5786
        %7383 = vmatprep.subr.bf16.mxu0 %v5795
        %7384 = vmatpush1.bf16.msra.mxu0 %v5794
        %7385 = vmatprep.subr.bf16.mxu0 %v5803
        %7386 = vmatpush1.bf16.msra.mxu0 %v5802
        %7387 = vmatprep.subr.bf16.mxu0 %v5811
        %7388 = vmatpush1.bf16.msra.mxu0 %v5810
        %7389 = vmatprep.subr.bf16.mxu0 %v5819
        %7390 = vmatpush1.bf16.msra.mxu0 %v5818
        %7391 = vmatprep.subr.bf16.mxu0 %v5827
        %7392 = vmatpush1.bf16.msra.mxu0 %v5826
        %7393 = vmatprep.subr.bf16.mxu0 %v5835
        %7394 = vmatpush1.bf16.msra.mxu0 %v5834
        %7395 = vmatprep.subr.bf16.mxu0 %v5843
        %7396 = vmatpush1.bf16.msra.mxu0 %v5842
        %7397 = vmatprep.subr.bf16.mxu0 %v5851
        %7398 = vmatpush1.bf16.msra.mxu0 %v5850
        %7399 = vmatprep.subr.bf16.mxu0 %v5859
        %7400 = vmatpush1.bf16.msra.mxu0 %v5858
        %7401 = vmatprep.subr.bf16.mxu0 %v5867
        %7402 = vmatpush1.bf16.msra.mxu0 %v5866
        %7403 = vmatprep.subr.bf16.mxu0 %v5875
        %7404 = vmatpush1.bf16.msra.mxu0 %v5874
        %7405 = vmatprep.subr.bf16.mxu0 %v5883
        %7406 = vmatpush1.bf16.msra.mxu0 %v5882
        %7407 = vmatprep.mubr.bf16.mxu0 %v1021
        %7408 = vmatmul.mubr.bf16.gmra.mrb[0].mxu0 %v1020
        %v7409 = vpop.f32.mrb[0].mxu0
        %v7410 = vadd.f32 %v7369, %v7409
        %v7411 = vpop.f32.mrb[0].mxu0
        %v7412 = vadd.f32 %v7371, %v7411
        %v7413 = vpop.f32.mrb[0].mxu0
        %v7414 = vpop.f32.mrb[0].mxu0
        %7415 = vdwg.mxu0
        %7416 = vmatprep.subr.bf16.mxu0 %v5891
        %7417 = vmatpush1.bf16.msra.mxu0 %v5890
        %7418 = vmatprep.subr.bf16.mxu0 %v5899
        %7419 = vmatpush1.bf16.msra.mxu0 %v5898
        %7420 = vmatprep.subr.bf16.mxu0 %v5907
        %7421 = vmatpush1.bf16.msra.mxu0 %v5906
        %7422 = vmatprep.subr.bf16.mxu0 %v5915
        %7423 = vmatpush1.bf16.msra.mxu0 %v5914
        %7424 = vmatprep.subr.bf16.mxu0 %v5923
        %7425 = vmatpush1.bf16.msra.mxu0 %v5922
        %7426 = vmatprep.subr.bf16.mxu0 %v5931
        %7427 = vmatpush1.bf16.msra.mxu0 %v5930
        %7428 = vmatprep.subr.bf16.mxu0 %v5939
        %7429 = vmatpush1.bf16.msra.mxu0 %v5938
        %7430 = vmatprep.subr.bf16.mxu0 %v5947
        %7431 = vmatpush1.bf16.msra.mxu0 %v5946
        %7432 = vmatprep.subr.bf16.mxu0 %v5955
        %7433 = vmatpush1.bf16.msra.mxu0 %v5954
        %7434 = vmatprep.subr.bf16.mxu0 %v5963
        %7435 = vmatpush1.bf16.msra.mxu0 %v5962
        %7436 = vmatprep.subr.bf16.mxu0 %v5971
        %7437 = vmatpush1.bf16.msra.mxu0 %v5970
        %7438 = vmatprep.subr.bf16.mxu0 %v5979
        %7439 = vmatpush1.bf16.msra.mxu0 %v5978
        %7440 = vmatprep.subr.bf16.mxu0 %v5987
        %7441 = vmatpush1.bf16.msra.mxu0 %v5986
        %7442 = vmatprep.subr.bf16.mxu0 %v5995
        %7443 = vmatpush1.bf16.msra.mxu0 %v5994
        %7444 = vmatprep.subr.bf16.mxu0 %v6003
        %7445 = vmatpush1.bf16.msra.mxu0 %v6002
        %7446 = vmatprep.subr.bf16.mxu0 %v6011
        %7447 = vmatpush1.bf16.msra.mxu0 %v6010
        %7448 = vmatprep.mubr.bf16.mxu0 %v1023
        %7449 = vmatmul.mubr.bf16.gmra.mrb[0].mxu0 %v1022
        %v7450 = vpop.f32.mrb[0].mxu0
        %v7451 = vadd.f32 %v7410, %v7450
        %v7452 = vpop.f32.mrb[0].mxu0
        %v7453 = vadd.f32 %v7412, %v7452
        %v7454 = vpop.f32.mrb[0].mxu0
        %v7455 = vpop.f32.mrb[0].mxu0
        %7456 = vdwg.mxu0
        %7457 = vmatprep.subr.bf16.mxu0 %v6019
        %7458 = vmatpush1.bf16.msra.mxu0 %v6018
        %7459 = vmatprep.subr.bf16.mxu0 %v6027
        %7460 = vmatpush1.bf16.msra.mxu0 %v6026
        %7461 = vmatprep.subr.bf16.mxu0 %v6035
        %7462 = vmatpush1.bf16.msra.mxu0 %v6034
        %7463 = vmatprep.subr.bf16.mxu0 %v6043
        %7464 = vmatpush1.bf16.msra.mxu0 %v6042
        %7465 = vmatprep.subr.bf16.mxu0 %v6051
        %7466 = vmatpush1.bf16.msra.mxu0 %v6050
        %7467 = vmatprep.subr.bf16.mxu0 %v6059
        %7468 = vmatpush1.bf16.msra.mxu0 %v6058
        %7469 = vmatprep.subr.bf16.mxu0 %v6067
        %7470 = vmatpush1.bf16.msra.mxu0 %v6066
        %7471 = vmatprep.subr.bf16.mxu0 %v6075
        %7472 = vmatpush1.bf16.msra.mxu0 %v6074
        %7473 = vmatprep.subr.bf16.mxu0 %v6083
        %7474 = vmatpush1.bf16.msra.mxu0 %v6082
        %7475 = vmatprep.subr.bf16.mxu0 %v6091
        %7476 = vmatpush1.bf16.msra.mxu0 %v6090
        %7477 = vmatprep.subr.bf16.mxu0 %v6099
        %7478 = vmatpush1.bf16.msra.mxu0 %v6098
        %7479 = vmatprep.subr.bf16.mxu0 %v6107
        %7480 = vmatpush1.bf16.msra.mxu0 %v6106
        %7481 = vmatprep.subr.bf16.mxu0 %v6115
        %7482 = vmatpush1.bf16.msra.mxu0 %v6114
        %7483 = vmatprep.subr.bf16.mxu0 %v6123
        %7484 = vmatpush1.bf16.msra.mxu0 %v6122
        %7485 = vmatprep.subr.bf16.mxu0 %v6131
        %7486 = vmatpush1.bf16.msra.mxu0 %v6130
        %7487 = vmatprep.subr.bf16.mxu0 %v6139
        %7488 = vmatpush1.bf16.msra.mxu0 %v6138
        %7489 = vmatprep.mubr.bf16.mxu0 %v1025
        %7490 = vmatmul.mubr.bf16.gmra.mrb[0].mxu0 %v1024
        %v7491 = vpop.f32.mrb[0].mxu0
        %v7492 = vadd.f32 %v7451, %v7491
        %v7493 = vpop.f32.mrb[0].mxu0
        %v7494 = vadd.f32 %v7453, %v7493
        %v7495 = vpop.f32.mrb[0].mxu0
        %v7496 = vpop.f32.mrb[0].mxu0
        %7497 = vdwg.mxu0
        %7498 = vmatprep.subr.bf16.mxu0 %v5125
        %7499 = vmatpush1.bf16.msra.mxu0 %v5124
        %7500 = vmatprep.subr.bf16.mxu0 %v5133
        %7501 = vmatpush1.bf16.msra.mxu0 %v5132
        %7502 = vmatprep.subr.bf16.mxu0 %v5141
        %7503 = vmatpush1.bf16.msra.mxu0 %v5140
        %7504 = vmatprep.subr.bf16.mxu0 %v5149
        %7505 = vmatpush1.bf16.msra.mxu0 %v5148
        %7506 = vmatprep.subr.bf16.mxu0 %v5157
        %7507 = vmatpush1.bf16.msra.mxu0 %v5156
        %7508 = vmatprep.subr.bf16.mxu0 %v5165
        %7509 = vmatpush1.bf16.msra.mxu0 %v5164
        %7510 = vmatprep.subr.bf16.mxu0 %v5173
        %7511 = vmatpush1.bf16.msra.mxu0 %v5172
        %7512 = vmatprep.subr.bf16.mxu0 %v5181
        %7513 = vmatpush1.bf16.msra.mxu0 %v5180
        %7514 = vmatprep.subr.bf16.mxu0 %v5189
        %7515 = vmatpush1.bf16.msra.mxu0 %v5188
        %7516 = vmatprep.subr.bf16.mxu0 %v5197
        %7517 = vmatpush1.bf16.msra.mxu0 %v5196
        %7518 = vmatprep.subr.bf16.mxu0 %v5205
        %7519 = vmatpush1.bf16.msra.mxu0 %v5204
        %7520 = vmatprep.subr.bf16.mxu0 %v5213
        %7521 = vmatpush1.bf16.msra.mxu0 %v5212
        %7522 = vmatprep.subr.bf16.mxu0 %v5221
        %7523 = vmatpush1.bf16.msra.mxu0 %v5220
        %7524 = vmatprep.subr.bf16.mxu0 %v5229
        %7525 = vmatpush1.bf16.msra.mxu0 %v5228
        %7526 = vmatprep.subr.bf16.mxu0 %v5237
        %7527 = vmatpush1.bf16.msra.mxu0 %v5236
        %7528 = vmatprep.subr.bf16.mxu0 %v5245
        %7529 = vmatpush1.bf16.msra.mxu0 %v5244
        %7530 = vmatprep.mubr.bf16.mxu0 %v1011
        %7531 = vmatmul.mubr.bf16.gmra.mrb[0].mxu0 %v1010
        %v7532 = vpop.f32.mrb[0].mxu0
        %v7533 = vadd.f32 0.0, %v7532
        %v7534 = vpop.f32.mrb[0].mxu0
        %v7535 = vadd.f32 0.0, %v7534
        %v7536 = vpop.f32.mrb[0].mxu0
        %v7537 = vpop.f32.mrb[0].mxu0
        %7538 = vdwg.mxu0
        %7539 = vmatprep.subr.bf16.mxu0 %v5253
        %7540 = vmatpush1.bf16.msra.mxu0 %v5252
        %7541 = vmatprep.subr.bf16.mxu0 %v5261
        %7542 = vmatpush1.bf16.msra.mxu0 %v5260
        %7543 = vmatprep.subr.bf16.mxu0 %v5269
        %7544 = vmatpush1.bf16.msra.mxu0 %v5268
        %7545 = vmatprep.subr.bf16.mxu0 %v5277
        %7546 = vmatpush1.bf16.msra.mxu0 %v5276
        %7547 = vmatprep.subr.bf16.mxu0 %v5285
        %7548 = vmatpush1.bf16.msra.mxu0 %v5284
        %7549 = vmatprep.subr.bf16.mxu0 %v5293
        %7550 = vmatpush1.bf16.msra.mxu0 %v5292
        %7551 = vmatprep.subr.bf16.mxu0 %v5301
        %7552 = vmatpush1.bf16.msra.mxu0 %v5300
        %7553 = vmatprep.subr.bf16.mxu0 %v5309
        %7554 = vmatpush1.bf16.msra.mxu0 %v5308
        %7555 = vmatprep.subr.bf16.mxu0 %v5317
        %7556 = vmatpush1.bf16.msra.mxu0 %v5316
        %7557 = vmatprep.subr.bf16.mxu0 %v5325
        %7558 = vmatpush1.bf16.msra.mxu0 %v5324
        %7559 = vmatprep.subr.bf16.mxu0 %v5333
        %7560 = vmatpush1.bf16.msra.mxu0 %v5332
        %7561 = vmatprep.subr.bf16.mxu0 %v5341
        %7562 = vmatpush1.bf16.msra.mxu0 %v5340
        %7563 = vmatprep.subr.bf16.mxu0 %v5349
        %7564 = vmatpush1.bf16.msra.mxu0 %v5348
        %7565 = vmatprep.subr.bf16.mxu0 %v5357
        %7566 = vmatpush1.bf16.msra.mxu0 %v5356
        %7567 = vmatprep.subr.bf16.mxu0 %v5365
        %7568 = vmatpush1.bf16.msra.mxu0 %v5364
        %7569 = vmatprep.subr.bf16.mxu0 %v5373
        %7570 = vmatpush1.bf16.msra.mxu0 %v5372
        %7571 = vmatprep.mubr.bf16.mxu0 %v1013
        %7572 = vmatmul.mubr.bf16.gmra.mrb[0].mxu0 %v1012
        %v7573 = vpop.f32.mrb[0].mxu0
        %v7574 = vadd.f32 %v7533, %v7573
        %v7575 = vpop.f32.mrb[0].mxu0
        %v7576 = vadd.f32 %v7535, %v7575
        %v7577 = vpop.f32.mrb[0].mxu0
        %v7578 = vpop.f32.mrb[0].mxu0
        %7579 = vdwg.mxu0
        %7580 = vmatprep.subr.bf16.mxu0 %v5381
        %7581 = vmatpush1.bf16.msra.mxu0 %v5380
        %7582 = vmatprep.subr.bf16.mxu0 %v5389
        %7583 = vmatpush1.bf16.msra.mxu0 %v5388
        %7584 = vmatprep.subr.bf16.mxu0 %v5397
        %7585 = vmatpush1.bf16.msra.mxu0 %v5396
        %7586 = vmatprep.subr.bf16.mxu0 %v5405
        %7587 = vmatpush1.bf16.msra.mxu0 %v5404
        %7588 = vmatprep.subr.bf16.mxu0 %v5413
        %7589 = vmatpush1.bf16.msra.mxu0 %v5412
        %7590 = vmatprep.subr.bf16.mxu0 %v5421
        %7591 = vmatpush1.bf16.msra.mxu0 %v5420
        %7592 = vmatprep.subr.bf16.mxu0 %v5429
        %7593 = vmatpush1.bf16.msra.mxu0 %v5428
        %7594 = vmatprep.subr.bf16.mxu0 %v5437
        %7595 = vmatpush1.bf16.msra.mxu0 %v5436
        %7596 = vmatprep.subr.bf16.mxu0 %v5445
        %7597 = vmatpush1.bf16.msra.mxu0 %v5444
        %7598 = vmatprep.subr.bf16.mxu0 %v5453
        %7599 = vmatpush1.bf16.msra.mxu0 %v5452
        %7600 = vmatprep.subr.bf16.mxu0 %v5461
        %7601 = vmatpush1.bf16.msra.mxu0 %v5460
        %7602 = vmatprep.subr.bf16.mxu0 %v5469
        %7603 = vmatpush1.bf16.msra.mxu0 %v5468
        %7604 = vmatprep.subr.bf16.mxu0 %v5477
        %7605 = vmatpush1.bf16.msra.mxu0 %v5476
        %7606 = vmatprep.subr.bf16.mxu0 %v5485
        %7607 = vmatpush1.bf16.msra.mxu0 %v5484
        %7608 = vmatprep.subr.bf16.mxu0 %v5493
        %7609 = vmatpush1.bf16.msra.mxu0 %v5492
        %7610 = vmatprep.subr.bf16.mxu0 %v5501
        %7611 = vmatpush1.bf16.msra.mxu0 %v5500
        %7612 = vmatprep.mubr.bf16.mxu0 %v1015
        %7613 = vmatmul.mubr.bf16.gmra.mrb[0].mxu0 %v1014
        %v7614 = vpop.f32.mrb[0].mxu0
        %v7615 = vadd.f32 %v7574, %v7614
        %v7616 = vpop.f32.mrb[0].mxu0
        %v7617 = vadd.f32 %v7576, %v7616
        %v7618 = vpop.f32.mrb[0].mxu0
        %v7619 = vpop.f32.mrb[0].mxu0
        %7620 = vdwg.mxu0
        %7621 = vmatprep.subr.bf16.mxu0 %v5509
        %7622 = vmatpush1.bf16.msra.mxu0 %v5508
        %7623 = vmatprep.subr.bf16.mxu0 %v5517
        %7624 = vmatpush1.bf16.msra.mxu0 %v5516
        %7625 = vmatprep.subr.bf16.mxu0 %v5525
        %7626 = vmatpush1.bf16.msra.mxu0 %v5524
        %7627 = vmatprep.subr.bf16.mxu0 %v5533
        %7628 = vmatpush1.bf16.msra.mxu0 %v5532
        %7629 = vmatprep.subr.bf16.mxu0 %v5541
        %7630 = vmatpush1.bf16.msra.mxu0 %v5540
        %7631 = vmatprep.subr.bf16.mxu0 %v5549
        %7632 = vmatpush1.bf16.msra.mxu0 %v5548
        %7633 = vmatprep.subr.bf16.mxu0 %v5557
        %7634 = vmatpush1.bf16.msra.mxu0 %v5556
        %7635 = vmatprep.subr.bf16.mxu0 %v5565
        %7636 = vmatpush1.bf16.msra.mxu0 %v5564
        %7637 = vmatprep.subr.bf16.mxu0 %v5573
        %7638 = vmatpush1.bf16.msra.mxu0 %v5572
        %7639 = vmatprep.subr.bf16.mxu0 %v5581
        %7640 = vmatpush1.bf16.msra.mxu0 %v5580
        %7641 = vmatprep.subr.bf16.mxu0 %v5589
        %7642 = vmatpush1.bf16.msra.mxu0 %v5588
        %7643 = vmatprep.subr.bf16.mxu0 %v5597
        %7644 = vmatpush1.bf16.msra.mxu0 %v5596
        %7645 = vmatprep.subr.bf16.mxu0 %v5605
        %7646 = vmatpush1.bf16.msra.mxu0 %v5604
        %7647 = vmatprep.subr.bf16.mxu0 %v5613
        %7648 = vmatpush1.bf16.msra.mxu0 %v5612
        %7649 = vmatprep.subr.bf16.mxu0 %v5621
        %7650 = vmatpush1.bf16.msra.mxu0 %v5620
        %7651 = vmatprep.subr.bf16.mxu0 %v5629
        %7652 = vmatpush1.bf16.msra.mxu0 %v5628
        %7653 = vmatprep.mubr.bf16.mxu0 %v1017
        %7654 = vmatmul.mubr.bf16.gmra.mrb[0].mxu0 %v1016
        %v7655 = vpop.f32.mrb[0].mxu0
        %v7656 = vadd.f32 %v7615, %v7655
        %v7657 = vpop.f32.mrb[0].mxu0
        %v7658 = vadd.f32 %v7617, %v7657
        %v7659 = vpop.f32.mrb[0].mxu0
        %v7660 = vpop.f32.mrb[0].mxu0
        %7661 = vdwg.mxu0
        %7662 = vmatprep.subr.bf16.mxu0 %v5637
        %7663 = vmatpush1.bf16.msra.mxu0 %v5636
        %7664 = vmatprep.subr.bf16.mxu0 %v5645
        %7665 = vmatpush1.bf16.msra.mxu0 %v5644
        %7666 = vmatprep.subr.bf16.mxu0 %v5653
        %7667 = vmatpush1.bf16.msra.mxu0 %v5652
        %7668 = vmatprep.subr.bf16.mxu0 %v5661
        %7669 = vmatpush1.bf16.msra.mxu0 %v5660
        %7670 = vmatprep.subr.bf16.mxu0 %v5669
        %7671 = vmatpush1.bf16.msra.mxu0 %v5668
        %7672 = vmatprep.subr.bf16.mxu0 %v5677
        %7673 = vmatpush1.bf16.msra.mxu0 %v5676
        %7674 = vmatprep.subr.bf16.mxu0 %v5685
        %7675 = vmatpush1.bf16.msra.mxu0 %v5684
        %7676 = vmatprep.subr.bf16.mxu0 %v5693
        %7677 = vmatpush1.bf16.msra.mxu0 %v5692
        %7678 = vmatprep.subr.bf16.mxu0 %v5701
        %7679 = vmatpush1.bf16.msra.mxu0 %v5700
        %7680 = vmatprep.subr.bf16.mxu0 %v5709
        %7681 = vmatpush1.bf16.msra.mxu0 %v5708
        %7682 = vmatprep.subr.bf16.mxu0 %v5717
        %7683 = vmatpush1.bf16.msra.mxu0 %v5716
        %7684 = vmatprep.subr.bf16.mxu0 %v5725
        %7685 = vmatpush1.bf16.msra.mxu0 %v5724
        %7686 = vmatprep.subr.bf16.mxu0 %v5733
        %7687 = vmatpush1.bf16.msra.mxu0 %v5732
        %7688 = vmatprep.subr.bf16.mxu0 %v5741
        %7689 = vmatpush1.bf16.msra.mxu0 %v5740
        %7690 = vmatprep.subr.bf16.mxu0 %v5749
        %7691 = vmatpush1.bf16.msra.mxu0 %v5748
        %7692 = vmatprep.subr.bf16.mxu0 %v5757
        %7693 = vmatpush1.bf16.msra.mxu0 %v5756
        %7694 = vmatprep.mubr.bf16.mxu0 %v1019
        %7695 = vmatmul.mubr.bf16.gmra.mrb[0].mxu0 %v1018
        %v7696 = vpop.f32.mrb[0].mxu0
        %v7697 = vadd.f32 %v7656, %v7696
        %v7698 = vpop.f32.mrb[0].mxu0
        %v7699 = vadd.f32 %v7658, %v7698
        %v7700 = vpop.f32.mrb[0].mxu0
        %v7701 = vpop.f32.mrb[0].mxu0
        %7702 = vdwg.mxu0
        %7703 = vmatprep.subr.bf16.mxu0 %v5765
        %7704 = vmatpush1.bf16.msra.mxu0 %v5764
        %7705 = vmatprep.subr.bf16.mxu0 %v5773
        %7706 = vmatpush1.bf16.msra.mxu0 %v5772
        %7707 = vmatprep.subr.bf16.mxu0 %v5781
        %7708 = vmatpush1.bf16.msra.mxu0 %v5780
        %7709 = vmatprep.subr.bf16.mxu0 %v5789
        %7710 = vmatpush1.bf16.msra.mxu0 %v5788
        %7711 = vmatprep.subr.bf16.mxu0 %v5797
        %7712 = vmatpush1.bf16.msra.mxu0 %v5796
        %7713 = vmatprep.subr.bf16.mxu0 %v5805
        %7714 = vmatpush1.bf16.msra.mxu0 %v5804
        %7715 = vmatprep.subr.bf16.mxu0 %v5813
        %7716 = vmatpush1.bf16.msra.mxu0 %v5812
        %7717 = vmatprep.subr.bf16.mxu0 %v5821
        %7718 = vmatpush1.bf16.msra.mxu0 %v5820
        %7719 = vmatprep.subr.bf16.mxu0 %v5829
        %7720 = vmatpush1.bf16.msra.mxu0 %v5828
        %7721 = vmatprep.subr.bf16.mxu0 %v5837
        %7722 = vmatpush1.bf16.msra.mxu0 %v5836
        %7723 = vmatprep.subr.bf16.mxu0 %v5845
        %7724 = vmatpush1.bf16.msra.mxu0 %v5844
        %7725 = vmatprep.subr.bf16.mxu0 %v5853
        %7726 = vmatpush1.bf16.msra.mxu0 %v5852
        %7727 = vmatprep.subr.bf16.mxu0 %v5861
        %7728 = vmatpush1.bf16.msra.mxu0 %v5860
        %7729 = vmatprep.subr.bf16.mxu0 %v5869
        %7730 = vmatpush1.bf16.msra.mxu0 %v5868
        %7731 = vmatprep.subr.bf16.mxu0 %v5877
        %7732 = vmatpush1.bf16.msra.mxu0 %v5876
        %7733 = vmatprep.subr.bf16.mxu0 %v5885
        %7734 = vmatpush1.bf16.msra.mxu0 %v5884
        %7735 = vmatprep.mubr.bf16.mxu0 %v1021
        %7736 = vmatmul.mubr.bf16.gmra.mrb[0].mxu0 %v1020
        %v7737 = vpop.f32.mrb[0].mxu0
        %v7738 = vadd.f32 %v7697, %v7737
        %v7739 = vpop.f32.mrb[0].mxu0
        %v7740 = vadd.f32 %v7699, %v7739
        %v7741 = vpop.f32.mrb[0].mxu0
        %v7742 = vpop.f32.mrb[0].mxu0
        %7743 = vdwg.mxu0
        %7744 = vmatprep.subr.bf16.mxu0 %v5893
        %7745 = vmatpush1.bf16.msra.mxu0 %v5892
        %7746 = vmatprep.subr.bf16.mxu0 %v5901
        %7747 = vmatpush1.bf16.msra.mxu0 %v5900
        %7748 = vmatprep.subr.bf16.mxu0 %v5909
        %7749 = vmatpush1.bf16.msra.mxu0 %v5908
        %7750 = vmatprep.subr.bf16.mxu0 %v5917
        %7751 = vmatpush1.bf16.msra.mxu0 %v5916
        %7752 = vmatprep.subr.bf16.mxu0 %v5925
        %7753 = vmatpush1.bf16.msra.mxu0 %v5924
        %7754 = vmatprep.subr.bf16.mxu0 %v5933
        %7755 = vmatpush1.bf16.msra.mxu0 %v5932
        %7756 = vmatprep.subr.bf16.mxu0 %v5941
        %7757 = vmatpush1.bf16.msra.mxu0 %v5940
        %7758 = vmatprep.subr.bf16.mxu0 %v5949
        %7759 = vmatpush1.bf16.msra.mxu0 %v5948
        %7760 = vmatprep.subr.bf16.mxu0 %v5957
        %7761 = vmatpush1.bf16.msra.mxu0 %v5956
        %7762 = vmatprep.subr.bf16.mxu0 %v5965
        %7763 = vmatpush1.bf16.msra.mxu0 %v5964
        %7764 = vmatprep.subr.bf16.mxu0 %v5973
        %7765 = vmatpush1.bf16.msra.mxu0 %v5972
        %7766 = vmatprep.subr.bf16.mxu0 %v5981
        %7767 = vmatpush1.bf16.msra.mxu0 %v5980
        %7768 = vmatprep.subr.bf16.mxu0 %v5989
        %7769 = vmatpush1.bf16.msra.mxu0 %v5988
        %7770 = vmatprep.subr.bf16.mxu0 %v5997
        %7771 = vmatpush1.bf16.msra.mxu0 %v5996
        %7772 = vmatprep.subr.bf16.mxu0 %v6005
        %7773 = vmatpush1.bf16.msra.mxu0 %v6004
        %7774 = vmatprep.subr.bf16.mxu0 %v6013
        %7775 = vmatpush1.bf16.msra.mxu0 %v6012
        %7776 = vmatprep.mubr.bf16.mxu0 %v1023
        %7777 = vmatmul.mubr.bf16.gmra.mrb[0].mxu0 %v1022
        %v7778 = vpop.f32.mrb[0].mxu0
        %v7779 = vadd.f32 %v7738, %v7778
        %v7780 = vpop.f32.mrb[0].mxu0
        %v7781 = vadd.f32 %v7740, %v7780
        %v7782 = vpop.f32.mrb[0].mxu0
        %v7783 = vpop.f32.mrb[0].mxu0
        %7784 = vdwg.mxu0
        %7785 = vmatprep.subr.bf16.mxu0 %v6021
        %7786 = vmatpush1.bf16.msra.mxu0 %v6020
        %7787 = vmatprep.subr.bf16.mxu0 %v6029
        %7788 = vmatpush1.bf16.msra.mxu0 %v6028
        %7789 = vmatprep.subr.bf16.mxu0 %v6037
        %7790 = vmatpush1.bf16.msra.mxu0 %v6036
        %7791 = vmatprep.subr.bf16.mxu0 %v6045
        %7792 = vmatpush1.bf16.msra.mxu0 %v6044
        %7793 = vmatprep.subr.bf16.mxu0 %v6053
        %7794 = vmatpush1.bf16.msra.mxu0 %v6052
        %7795 = vmatprep.subr.bf16.mxu0 %v6061
        %7796 = vmatpush1.bf16.msra.mxu0 %v6060
        %7797 = vmatprep.subr.bf16.mxu0 %v6069
        %7798 = vmatpush1.bf16.msra.mxu0 %v6068
        %7799 = vmatprep.subr.bf16.mxu0 %v6077
        %7800 = vmatpush1.bf16.msra.mxu0 %v6076
        %7801 = vmatprep.subr.bf16.mxu0 %v6085
        %7802 = vmatpush1.bf16.msra.mxu0 %v6084
        %7803 = vmatprep.subr.bf16.mxu0 %v6093
        %7804 = vmatpush1.bf16.msra.mxu0 %v6092
        %7805 = vmatprep.subr.bf16.mxu0 %v6101
        %7806 = vmatpush1.bf16.msra.mxu0 %v6100
        %7807 = vmatprep.subr.bf16.mxu0 %v6109
        %7808 = vmatpush1.bf16.msra.mxu0 %v6108
        %7809 = vmatprep.subr.bf16.mxu0 %v6117
        %7810 = vmatpush1.bf16.msra.mxu0 %v6116
        %7811 = vmatprep.subr.bf16.mxu0 %v6125
        %7812 = vmatpush1.bf16.msra.mxu0 %v6124
        %7813 = vmatprep.subr.bf16.mxu0 %v6133
        %7814 = vmatpush1.bf16.msra.mxu0 %v6132
        %7815 = vmatprep.subr.bf16.mxu0 %v6141
        %7816 = vmatpush1.bf16.msra.mxu0 %v6140
        %7817 = vmatprep.mubr.bf16.mxu0 %v1025
        %7818 = vmatmul.mubr.bf16.gmra.mrb[0].mxu0 %v1024
        %v7819 = vpop.f32.mrb[0].mxu0
        %v7820 = vadd.f32 %v7779, %v7819
        %v7821 = vpop.f32.mrb[0].mxu0
        %v7822 = vadd.f32 %v7781, %v7821
        %v7823 = vpop.f32.mrb[0].mxu0
        %v7824 = vpop.f32.mrb[0].mxu0
        %7825 = vdwg.mxu0
        %7826 = vmatprep.subr.bf16.mxu0 %v5127
        %7827 = vmatpush1.bf16.msra.mxu0 %v5126
        %7828 = vmatprep.subr.bf16.mxu0 %v5135
        %7829 = vmatpush1.bf16.msra.mxu0 %v5134
        %7830 = vmatprep.subr.bf16.mxu0 %v5143
        %7831 = vmatpush1.bf16.msra.mxu0 %v5142
        %7832 = vmatprep.subr.bf16.mxu0 %v5151
        %7833 = vmatpush1.bf16.msra.mxu0 %v5150
        %7834 = vmatprep.subr.bf16.mxu0 %v5159
        %7835 = vmatpush1.bf16.msra.mxu0 %v5158
        %7836 = vmatprep.subr.bf16.mxu0 %v5167
        %7837 = vmatpush1.bf16.msra.mxu0 %v5166
        %7838 = vmatprep.subr.bf16.mxu0 %v5175
        %7839 = vmatpush1.bf16.msra.mxu0 %v5174
        %7840 = vmatprep.subr.bf16.mxu0 %v5183
        %7841 = vmatpush1.bf16.msra.mxu0 %v5182
        %7842 = vmatprep.subr.bf16.mxu0 %v5191
        %7843 = vmatpush1.bf16.msra.mxu0 %v5190
        %7844 = vmatprep.subr.bf16.mxu0 %v5199
        %7845 = vmatpush1.bf16.msra.mxu0 %v5198
        %7846 = vmatprep.subr.bf16.mxu0 %v5207
        %7847 = vmatpush1.bf16.msra.mxu0 %v5206
        %7848 = vmatprep.subr.bf16.mxu0 %v5215
        %7849 = vmatpush1.bf16.msra.mxu0 %v5214
        %7850 = vmatprep.subr.bf16.mxu0 %v5223
        %7851 = vmatpush1.bf16.msra.mxu0 %v5222
        %7852 = vmatprep.subr.bf16.mxu0 %v5231
        %7853 = vmatpush1.bf16.msra.mxu0 %v5230
        %7854 = vmatprep.subr.bf16.mxu0 %v5239
        %7855 = vmatpush1.bf16.msra.mxu0 %v5238
        %7856 = vmatprep.subr.bf16.mxu0 %v5247
        %7857 = vmatpush1.bf16.msra.mxu0 %v5246
        %7858 = vmatprep.mubr.bf16.mxu0 %v1011
        %7859 = vmatmul.mubr.bf16.gmra.mrb[0].mxu0 %v1010
        %v7860 = vpop.f32.mrb[0].mxu0
        %v7861 = vadd.f32 0.0, %v7860
        %v7862 = vpop.f32.mrb[0].mxu0
        %v7863 = vadd.f32 0.0, %v7862
        %v7864 = vpop.f32.mrb[0].mxu0
        %v7865 = vpop.f32.mrb[0].mxu0
        %7866 = vdwg.mxu0
        %7867 = vmatprep.subr.bf16.mxu0 %v5255
        %7868 = vmatpush1.bf16.msra.mxu0 %v5254
        %7869 = vmatprep.subr.bf16.mxu0 %v5263
        %7870 = vmatpush1.bf16.msra.mxu0 %v5262
        %7871 = vmatprep.subr.bf16.mxu0 %v5271
        %7872 = vmatpush1.bf16.msra.mxu0 %v5270
        %7873 = vmatprep.subr.bf16.mxu0 %v5279
        %7874 = vmatpush1.bf16.msra.mxu0 %v5278
        %7875 = vmatprep.subr.bf16.mxu0 %v5287
        %7876 = vmatpush1.bf16.msra.mxu0 %v5286
        %7877 = vmatprep.subr.bf16.mxu0 %v5295
        %7878 = vmatpush1.bf16.msra.mxu0 %v5294
        %7879 = vmatprep.subr.bf16.mxu0 %v5303
        %7880 = vmatpush1.bf16.msra.mxu0 %v5302
        %7881 = vmatprep.subr.bf16.mxu0 %v5311
        %7882 = vmatpush1.bf16.msra.mxu0 %v5310
        %7883 = vmatprep.subr.bf16.mxu0 %v5319
        %7884 = vmatpush1.bf16.msra.mxu0 %v5318
        %7885 = vmatprep.subr.bf16.mxu0 %v5327
        %7886 = vmatpush1.bf16.msra.mxu0 %v5326
        %7887 = vmatprep.subr.bf16.mxu0 %v5335
        %7888 = vmatpush1.bf16.msra.mxu0 %v5334
        %7889 = vmatprep.subr.bf16.mxu0 %v5343
        %7890 = vmatpush1.bf16.msra.mxu0 %v5342
        %7891 = vmatprep.subr.bf16.mxu0 %v5351
        %7892 = vmatpush1.bf16.msra.mxu0 %v5350
        %7893 = vmatprep.subr.bf16.mxu0 %v5359
        %7894 = vmatpush1.bf16.msra.mxu0 %v5358
        %7895 = vmatprep.subr.bf16.mxu0 %v5367
        %7896 = vmatpush1.bf16.msra.mxu0 %v5366
        %7897 = vmatprep.subr.bf16.mxu0 %v5375
        %7898 = vmatpush1.bf16.msra.mxu0 %v5374
        %7899 = vmatprep.mubr.bf16.mxu0 %v1013
        %7900 = vmatmul.mubr.bf16.gmra.mrb[0].mxu0 %v1012
        %v7901 = vpop.f32.mrb[0].mxu0
        %v7902 = vadd.f32 %v7861, %v7901
        %v7903 = vpop.f32.mrb[0].mxu0
        %v7904 = vadd.f32 %v7863, %v7903
        %v7905 = vpop.f32.mrb[0].mxu0
        %v7906 = vpop.f32.mrb[0].mxu0
        %7907 = vdwg.mxu0
        %7908 = vmatprep.subr.bf16.mxu0 %v5383
        %7909 = vmatpush1.bf16.msra.mxu0 %v5382
        %7910 = vmatprep.subr.bf16.mxu0 %v5391
        %7911 = vmatpush1.bf16.msra.mxu0 %v5390
        %7912 = vmatprep.subr.bf16.mxu0 %v5399
        %7913 = vmatpush1.bf16.msra.mxu0 %v5398
        %7914 = vmatprep.subr.bf16.mxu0 %v5407
        %7915 = vmatpush1.bf16.msra.mxu0 %v5406
        %7916 = vmatprep.subr.bf16.mxu0 %v5415
        %7917 = vmatpush1.bf16.msra.mxu0 %v5414
        %7918 = vmatprep.subr.bf16.mxu0 %v5423
        %7919 = vmatpush1.bf16.msra.mxu0 %v5422
        %7920 = vmatprep.subr.bf16.mxu0 %v5431
        %7921 = vmatpush1.bf16.msra.mxu0 %v5430
        %7922 = vmatprep.subr.bf16.mxu0 %v5439
        %7923 = vmatpush1.bf16.msra.mxu0 %v5438
        %7924 = vmatprep.subr.bf16.mxu0 %v5447
        %7925 = vmatpush1.bf16.msra.mxu0 %v5446
        %7926 = vmatprep.subr.bf16.mxu0 %v5455
        %7927 = vmatpush1.bf16.msra.mxu0 %v5454
        %7928 = vmatprep.subr.bf16.mxu0 %v5463
        %7929 = vmatpush1.bf16.msra.mxu0 %v5462
        %7930 = vmatprep.subr.bf16.mxu0 %v5471
        %7931 = vmatpush1.bf16.msra.mxu0 %v5470
        %7932 = vmatprep.subr.bf16.mxu0 %v5479
        %7933 = vmatpush1.bf16.msra.mxu0 %v5478
        %7934 = vmatprep.subr.bf16.mxu0 %v5487
        %7935 = vmatpush1.bf16.msra.mxu0 %v5486
        %7936 = vmatprep.subr.bf16.mxu0 %v5495
        %7937 = vmatpush1.bf16.msra.mxu0 %v5494
        %7938 = vmatprep.subr.bf16.mxu0 %v5503
        %7939 = vmatpush1.bf16.msra.mxu0 %v5502
        %7940 = vmatprep.mubr.bf16.mxu0 %v1015
        %7941 = vmatmul.mubr.bf16.gmra.mrb[0].mxu0 %v1014
        %v7942 = vpop.f32.mrb[0].mxu0
        %v7943 = vadd.f32 %v7902, %v7942
        %v7944 = vpop.f32.mrb[0].mxu0
        %v7945 = vadd.f32 %v7904, %v7944
        %v7946 = vpop.f32.mrb[0].mxu0
        %v7947 = vpop.f32.mrb[0].mxu0
        %7948 = vdwg.mxu0
        %7949 = vmatprep.subr.bf16.mxu0 %v5511
        %7950 = vmatpush1.bf16.msra.mxu0 %v5510
        %7951 = vmatprep.subr.bf16.mxu0 %v5519
        %7952 = vmatpush1.bf16.msra.mxu0 %v5518
        %7953 = vmatprep.subr.bf16.mxu0 %v5527
        %7954 = vmatpush1.bf16.msra.mxu0 %v5526
        %7955 = vmatprep.subr.bf16.mxu0 %v5535
        %7956 = vmatpush1.bf16.msra.mxu0 %v5534
        %7957 = vmatprep.subr.bf16.mxu0 %v5543
        %7958 = vmatpush1.bf16.msra.mxu0 %v5542
        %7959 = vmatprep.subr.bf16.mxu0 %v5551
        %7960 = vmatpush1.bf16.msra.mxu0 %v5550
        %7961 = vmatprep.subr.bf16.mxu0 %v5559
        %7962 = vmatpush1.bf16.msra.mxu0 %v5558
        %7963 = vmatprep.subr.bf16.mxu0 %v5567
        %7964 = vmatpush1.bf16.msra.mxu0 %v5566
        %7965 = vmatprep.subr.bf16.mxu0 %v5575
        %7966 = vmatpush1.bf16.msra.mxu0 %v5574
        %7967 = vmatprep.subr.bf16.mxu0 %v5583
        %7968 = vmatpush1.bf16.msra.mxu0 %v5582
        %7969 = vmatprep.subr.bf16.mxu0 %v5591
        %7970 = vmatpush1.bf16.msra.mxu0 %v5590
        %7971 = vmatprep.subr.bf16.mxu0 %v5599
        %7972 = vmatpush1.bf16.msra.mxu0 %v5598
        %7973 = vmatprep.subr.bf16.mxu0 %v5607
        %7974 = vmatpush1.bf16.msra.mxu0 %v5606
        %7975 = vmatprep.subr.bf16.mxu0 %v5615
        %7976 = vmatpush1.bf16.msra.mxu0 %v5614
        %7977 = vmatprep.subr.bf16.mxu0 %v5623
        %7978 = vmatpush1.bf16.msra.mxu0 %v5622
        %7979 = vmatprep.subr.bf16.mxu0 %v5631
        %7980 = vmatpush1.bf16.msra.mxu0 %v5630
        %7981 = vmatprep.mubr.bf16.mxu0 %v1017
        %7982 = vmatmul.mubr.bf16.gmra.mrb[0].mxu0 %v1016
        %v7983 = vpop.f32.mrb[0].mxu0
        %v7984 = vadd.f32 %v7943, %v7983
        %v7985 = vpop.f32.mrb[0].mxu0
        %v7986 = vadd.f32 %v7945, %v7985
        %v7987 = vpop.f32.mrb[0].mxu0
        %v7988 = vpop.f32.mrb[0].mxu0
        %7989 = vdwg.mxu0
        %7990 = vmatprep.subr.bf16.mxu0 %v5639
        %7991 = vmatpush1.bf16.msra.mxu0 %v5638
        %7992 = vmatprep.subr.bf16.mxu0 %v5647
        %7993 = vmatpush1.bf16.msra.mxu0 %v5646
        %7994 = vmatprep.subr.bf16.mxu0 %v5655
        %7995 = vmatpush1.bf16.msra.mxu0 %v5654
        %7996 = vmatprep.subr.bf16.mxu0 %v5663
        %7997 = vmatpush1.bf16.msra.mxu0 %v5662
        %7998 = vmatprep.subr.bf16.mxu0 %v5671
        %7999 = vmatpush1.bf16.msra.mxu0 %v5670
        %8000 = vmatprep.subr.bf16.mxu0 %v5679
        %8001 = vmatpush1.bf16.msra.mxu0 %v5678
        %8002 = vmatprep.subr.bf16.mxu0 %v5687
        %8003 = vmatpush1.bf16.msra.mxu0 %v5686
        %8004 = vmatprep.subr.bf16.mxu0 %v5695
        %8005 = vmatpush1.bf16.msra.mxu0 %v5694
        %8006 = vmatprep.subr.bf16.mxu0 %v5703
        %8007 = vmatpush1.bf16.msra.mxu0 %v5702
        %8008 = vmatprep.subr.bf16.mxu0 %v5711
        %8009 = vmatpush1.bf16.msra.mxu0 %v5710
        %8010 = vmatprep.subr.bf16.mxu0 %v5719
        %8011 = vmatpush1.bf16.msra.mxu0 %v5718
        %8012 = vmatprep.subr.bf16.mxu0 %v5727
        %8013 = vmatpush1.bf16.msra.mxu0 %v5726
        %8014 = vmatprep.subr.bf16.mxu0 %v5735
        %8015 = vmatpush1.bf16.msra.mxu0 %v5734
        %8016 = vmatprep.subr.bf16.mxu0 %v5743
        %8017 = vmatpush1.bf16.msra.mxu0 %v5742
        %8018 = vmatprep.subr.bf16.mxu0 %v5751
        %8019 = vmatpush1.bf16.msra.mxu0 %v5750
        %8020 = vmatprep.subr.bf16.mxu0 %v5759
        %8021 = vmatpush1.bf16.msra.mxu0 %v5758
        %8022 = vmatprep.mubr.bf16.mxu0 %v1019
        %8023 = vmatmul.mubr.bf16.gmra.mrb[0].mxu0 %v1018
        %v8024 = vpop.f32.mrb[0].mxu0
        %v8025 = vadd.f32 %v7984, %v8024
        %v8026 = vpop.f32.mrb[0].mxu0
        %v8027 = vadd.f32 %v7986, %v8026
        %v8028 = vpop.f32.mrb[0].mxu0
        %v8029 = vpop.f32.mrb[0].mxu0
        %8030 = vdwg.mxu0
        %8031 = vmatprep.subr.bf16.mxu0 %v5767
        %8032 = vmatpush1.bf16.msra.mxu0 %v5766
        %8033 = vmatprep.subr.bf16.mxu0 %v5775
        %8034 = vmatpush1.bf16.msra.mxu0 %v5774
        %8035 = vmatprep.subr.bf16.mxu0 %v5783
        %8036 = vmatpush1.bf16.msra.mxu0 %v5782
        %8037 = vmatprep.subr.bf16.mxu0 %v5791
        %8038 = vmatpush1.bf16.msra.mxu0 %v5790
        %8039 = vmatprep.subr.bf16.mxu0 %v5799
        %8040 = vmatpush1.bf16.msra.mxu0 %v5798
        %8041 = vmatprep.subr.bf16.mxu0 %v5807
        %8042 = vmatpush1.bf16.msra.mxu0 %v5806
        %8043 = vmatprep.subr.bf16.mxu0 %v5815
        %8044 = vmatpush1.bf16.msra.mxu0 %v5814
        %8045 = vmatprep.subr.bf16.mxu0 %v5823
        %8046 = vmatpush1.bf16.msra.mxu0 %v5822
        %8047 = vmatprep.subr.bf16.mxu0 %v5831
        %8048 = vmatpush1.bf16.msra.mxu0 %v5830
        %8049 = vmatprep.subr.bf16.mxu0 %v5839
        %8050 = vmatpush1.bf16.msra.mxu0 %v5838
        %8051 = vmatprep.subr.bf16.mxu0 %v5847
        %8052 = vmatpush1.bf16.msra.mxu0 %v5846
        %8053 = vmatprep.subr.bf16.mxu0 %v5855
        %8054 = vmatpush1.bf16.msra.mxu0 %v5854
        %8055 = vmatprep.subr.bf16.mxu0 %v5863
        %8056 = vmatpush1.bf16.msra.mxu0 %v5862
        %8057 = vmatprep.subr.bf16.mxu0 %v5871
        %8058 = vmatpush1.bf16.msra.mxu0 %v5870
        %8059 = vmatprep.subr.bf16.mxu0 %v5879
        %8060 = vmatpush1.bf16.msra.mxu0 %v5878
        %8061 = vmatprep.subr.bf16.mxu0 %v5887
        %8062 = vmatpush1.bf16.msra.mxu0 %v5886
        %8063 = vmatprep.mubr.bf16.mxu0 %v1021
        %8064 = vmatmul.mubr.bf16.gmra.mrb[0].mxu0 %v1020
        %v8065 = vpop.f32.mrb[0].mxu0
        %v8066 = vadd.f32 %v8025, %v8065
        %v8067 = vpop.f32.mrb[0].mxu0
        %v8068 = vadd.f32 %v8027, %v8067
        %v8069 = vpop.f32.mrb[0].mxu0
        %v8070 = vpop.f32.mrb[0].mxu0
        %8071 = vdwg.mxu0
        %8072 = vmatprep.subr.bf16.mxu0 %v5895
        %8073 = vmatpush1.bf16.msra.mxu0 %v5894
        %8074 = vmatprep.subr.bf16.mxu0 %v5903
        %8075 = vmatpush1.bf16.msra.mxu0 %v5902
        %8076 = vmatprep.subr.bf16.mxu0 %v5911
        %8077 = vmatpush1.bf16.msra.mxu0 %v5910
        %8078 = vmatprep.subr.bf16.mxu0 %v5919
        %8079 = vmatpush1.bf16.msra.mxu0 %v5918
        %8080 = vmatprep.subr.bf16.mxu0 %v5927
        %8081 = vmatpush1.bf16.msra.mxu0 %v5926
        %8082 = vmatprep.subr.bf16.mxu0 %v5935
        %8083 = vmatpush1.bf16.msra.mxu0 %v5934
        %8084 = vmatprep.subr.bf16.mxu0 %v5943
        %8085 = vmatpush1.bf16.msra.mxu0 %v5942
        %8086 = vmatprep.subr.bf16.mxu0 %v5951
        %8087 = vmatpush1.bf16.msra.mxu0 %v5950
        %8088 = vmatprep.subr.bf16.mxu0 %v5959
        %8089 = vmatpush1.bf16.msra.mxu0 %v5958
        %8090 = vmatprep.subr.bf16.mxu0 %v5967
        %8091 = vmatpush1.bf16.msra.mxu0 %v5966
        %8092 = vmatprep.subr.bf16.mxu0 %v5975
        %8093 = vmatpush1.bf16.msra.mxu0 %v5974
        %8094 = vmatprep.subr.bf16.mxu0 %v5983
        %8095 = vmatpush1.bf16.msra.mxu0 %v5982
        %8096 = vmatprep.subr.bf16.mxu0 %v5991
        %8097 = vmatpush1.bf16.msra.mxu0 %v5990
        %8098 = vmatprep.subr.bf16.mxu0 %v5999
        %8099 = vmatpush1.bf16.msra.mxu0 %v5998
        %8100 = vmatprep.subr.bf16.mxu0 %v6007
        %8101 = vmatpush1.bf16.msra.mxu0 %v6006
        %8102 = vmatprep.subr.bf16.mxu0 %v6015
        %8103 = vmatpush1.bf16.msra.mxu0 %v6014
        %8104 = vmatprep.mubr.bf16.mxu0 %v1023
        %8105 = vmatmul.mubr.bf16.gmra.mrb[0].mxu0 %v1022
        %v8106 = vpop.f32.mrb[0].mxu0
        %v8107 = vadd.f32 %v8066, %v8106
        %v8108 = vpop.f32.mrb[0].mxu0
        %v8109 = vadd.f32 %v8068, %v8108
        %v8110 = vpop.f32.mrb[0].mxu0
        %v8111 = vpop.f32.mrb[0].mxu0
        %8112 = vdwg.mxu0
        %8113 = vmatprep.subr.bf16.mxu0 %v6023
        %8114 = vmatpush1.bf16.msra.mxu0 %v6022
        %8115 = vmatprep.subr.bf16.mxu0 %v6031
        %8116 = vmatpush1.bf16.msra.mxu0 %v6030
        %8117 = vmatprep.subr.bf16.mxu0 %v6039
        %8118 = vmatpush1.bf16.msra.mxu0 %v6038
        %8119 = vmatprep.subr.bf16.mxu0 %v6047
        %8120 = vmatpush1.bf16.msra.mxu0 %v6046
        %8121 = vmatprep.subr.bf16.mxu0 %v6055
        %8122 = vmatpush1.bf16.msra.mxu0 %v6054
        %8123 = vmatprep.subr.bf16.mxu0 %v6063
        %8124 = vmatpush1.bf16.msra.mxu0 %v6062
        %8125 = vmatprep.subr.bf16.mxu0 %v6071
        %8126 = vmatpush1.bf16.msra.mxu0 %v6070
        %8127 = vmatprep.subr.bf16.mxu0 %v6079
        %8128 = vmatpush1.bf16.msra.mxu0 %v6078
        %8129 = vmatprep.subr.bf16.mxu0 %v6087
        %8130 = vmatpush1.bf16.msra.mxu0 %v6086
        %8131 = vmatprep.subr.bf16.mxu0 %v6095
        %8132 = vmatpush1.bf16.msra.mxu0 %v6094
        %8133 = vmatprep.subr.bf16.mxu0 %v6103
        %8134 = vmatpush1.bf16.msra.mxu0 %v6102
        %8135 = vmatprep.subr.bf16.mxu0 %v6111
        %8136 = vmatpush1.bf16.msra.mxu0 %v6110
        %8137 = vmatprep.subr.bf16.mxu0 %v6119
        %8138 = vmatpush1.bf16.msra.mxu0 %v6118
        %8139 = vmatprep.subr.bf16.mxu0 %v6127
        %8140 = vmatpush1.bf16.msra.mxu0 %v6126
        %8141 = vmatprep.subr.bf16.mxu0 %v6135
        %8142 = vmatpush1.bf16.msra.mxu0 %v6134
        %8143 = vmatprep.subr.bf16.mxu0 %v6143
        %8144 = vmatpush1.bf16.msra.mxu0 %v6142
        %8145 = vmatprep.mubr.bf16.mxu0 %v1025
        %8146 = vmatmul.mubr.bf16.gmra.mrb[0].mxu0 %v1024
        %v8147 = vpop.f32.mrb[0].mxu0
        %v8148 = vadd.f32 %v8107, %v8147
        %v8149 = vpop.f32.mrb[0].mxu0
        %v8150 = vadd.f32 %v8109, %v8149
        %v8151 = vpop.f32.mrb[0].mxu0
        %v8152 = vpop.f32.mrb[0].mxu0
        %8153 = vdwg.mxu0
        %8154 = vmatprep.subr.bf16.mxu0 %v5129
        %8155 = vmatpush1.bf16.msra.mxu0 %v5128
        %8156 = vmatprep.subr.bf16.mxu0 %v5137
        %8157 = vmatpush1.bf16.msra.mxu0 %v5136
        %8158 = vmatprep.subr.bf16.mxu0 %v5145
        %8159 = vmatpush1.bf16.msra.mxu0 %v5144
        %8160 = vmatprep.subr.bf16.mxu0 %v5153
        %8161 = vmatpush1.bf16.msra.mxu0 %v5152
        %8162 = vmatprep.subr.bf16.mxu0 %v5161
        %8163 = vmatpush1.bf16.msra.mxu0 %v5160
        %8164 = vmatprep.subr.bf16.mxu0 %v5169
        %8165 = vmatpush1.bf16.msra.mxu0 %v5168
        %8166 = vmatprep.subr.bf16.mxu0 %v5177
        %8167 = vmatpush1.bf16.msra.mxu0 %v5176
        %8168 = vmatprep.subr.bf16.mxu0 %v5185
        %8169 = vmatpush1.bf16.msra.mxu0 %v5184
        %8170 = vmatprep.subr.bf16.mxu0 %v5193
        %8171 = vmatpush1.bf16.msra.mxu0 %v5192
        %8172 = vmatprep.subr.bf16.mxu0 %v5201
        %8173 = vmatpush1.bf16.msra.mxu0 %v5200
        %8174 = vmatprep.subr.bf16.mxu0 %v5209
        %8175 = vmatpush1.bf16.msra.mxu0 %v5208
        %8176 = vmatprep.subr.bf16.mxu0 %v5217
        %8177 = vmatpush1.bf16.msra.mxu0 %v5216
        %8178 = vmatprep.subr.bf16.mxu0 %v5225
        %8179 = vmatpush1.bf16.msra.mxu0 %v5224
        %8180 = vmatprep.subr.bf16.mxu0 %v5233
        %8181 = vmatpush1.bf16.msra.mxu0 %v5232
        %8182 = vmatprep.subr.bf16.mxu0 %v5241
        %8183 = vmatpush1.bf16.msra.mxu0 %v5240
        %8184 = vmatprep.subr.bf16.mxu0 %v5249
        %8185 = vmatpush1.bf16.msra.mxu0 %v5248
        %8186 = vmatprep.mubr.bf16.mxu0 %v1011
        %8187 = vmatmul.mubr.bf16.gmra.mrb[0].mxu0 %v1010
        %v8188 = vpop.f32.mrb[0].mxu0
        %v8189 = vadd.f32 0.0, %v8188
        %v8190 = vpop.f32.mrb[0].mxu0
        %v8191 = vadd.f32 0.0, %v8190
        %v8192 = vpop.f32.mrb[0].mxu0
        %v8193 = vpop.f32.mrb[0].mxu0
        %8194 = vdwg.mxu0
        %8195 = vmatprep.subr.bf16.mxu0 %v5257
        %8196 = vmatpush1.bf16.msra.mxu0 %v5256
        %8197 = vmatprep.subr.bf16.mxu0 %v5265
        %8198 = vmatpush1.bf16.msra.mxu0 %v5264
        %8199 = vmatprep.subr.bf16.mxu0 %v5273
        %8200 = vmatpush1.bf16.msra.mxu0 %v5272
        %8201 = vmatprep.subr.bf16.mxu0 %v5281
        %8202 = vmatpush1.bf16.msra.mxu0 %v5280
        %8203 = vmatprep.subr.bf16.mxu0 %v5289
        %8204 = vmatpush1.bf16.msra.mxu0 %v5288
        %8205 = vmatprep.subr.bf16.mxu0 %v5297
        %8206 = vmatpush1.bf16.msra.mxu0 %v5296
        %8207 = vmatprep.subr.bf16.mxu0 %v5305
        %8208 = vmatpush1.bf16.msra.mxu0 %v5304
        %8209 = vmatprep.subr.bf16.mxu0 %v5313
        %8210 = vmatpush1.bf16.msra.mxu0 %v5312
        %8211 = vmatprep.subr.bf16.mxu0 %v5321
        %8212 = vmatpush1.bf16.msra.mxu0 %v5320
        %8213 = vmatprep.subr.bf16.mxu0 %v5329
        %8214 = vmatpush1.bf16.msra.mxu0 %v5328
        %8215 = vmatprep.subr.bf16.mxu0 %v5337
        %8216 = vmatpush1.bf16.msra.mxu0 %v5336
        %8217 = vmatprep.subr.bf16.mxu0 %v5345
        %8218 = vmatpush1.bf16.msra.mxu0 %v5344
        %8219 = vmatprep.subr.bf16.mxu0 %v5353
        %8220 = vmatpush1.bf16.msra.mxu0 %v5352
        %8221 = vmatprep.subr.bf16.mxu0 %v5361
        %8222 = vmatpush1.bf16.msra.mxu0 %v5360
        %8223 = vmatprep.subr.bf16.mxu0 %v5369
        %8224 = vmatpush1.bf16.msra.mxu0 %v5368
        %8225 = vmatprep.subr.bf16.mxu0 %v5377
        %8226 = vmatpush1.bf16.msra.mxu0 %v5376
        %8227 = vmatprep.mubr.bf16.mxu0 %v1013
        %8228 = vmatmul.mubr.bf16.gmra.mrb[0].mxu0 %v1012
        %v8229 = vpop.f32.mrb[0].mxu0
        %v8230 = vadd.f32 %v8189, %v8229
        %v8231 = vpop.f32.mrb[0].mxu0
        %v8232 = vadd.f32 %v8191, %v8231
        %v8233 = vpop.f32.mrb[0].mxu0
        %v8234 = vpop.f32.mrb[0].mxu0
        %8235 = vdwg.mxu0
        %8236 = vmatprep.subr.bf16.mxu0 %v5385
        %8237 = vmatpush1.bf16.msra.mxu0 %v5384
        %8238 = vmatprep.subr.bf16.mxu0 %v5393
        %8239 = vmatpush1.bf16.msra.mxu0 %v5392
        %8240 = vmatprep.subr.bf16.mxu0 %v5401
        %8241 = vmatpush1.bf16.msra.mxu0 %v5400
        %8242 = vmatprep.subr.bf16.mxu0 %v5409
        %8243 = vmatpush1.bf16.msra.mxu0 %v5408
        %8244 = vmatprep.subr.bf16.mxu0 %v5417
        %8245 = vmatpush1.bf16.msra.mxu0 %v5416
        %8246 = vmatprep.subr.bf16.mxu0 %v5425
        %8247 = vmatpush1.bf16.msra.mxu0 %v5424
        %8248 = vmatprep.subr.bf16.mxu0 %v5433
        %8249 = vmatpush1.bf16.msra.mxu0 %v5432
        %8250 = vmatprep.subr.bf16.mxu0 %v5441
        %8251 = vmatpush1.bf16.msra.mxu0 %v5440
        %8252 = vmatprep.subr.bf16.mxu0 %v5449
        %8253 = vmatpush1.bf16.msra.mxu0 %v5448
        %8254 = vmatprep.subr.bf16.mxu0 %v5457
        %8255 = vmatpush1.bf16.msra.mxu0 %v5456
        %8256 = vmatprep.subr.bf16.mxu0 %v5465
        %8257 = vmatpush1.bf16.msra.mxu0 %v5464
        %8258 = vmatprep.subr.bf16.mxu0 %v5473
        %8259 = vmatpush1.bf16.msra.mxu0 %v5472
        %8260 = vmatprep.subr.bf16.mxu0 %v5481
        %8261 = vmatpush1.bf16.msra.mxu0 %v5480
        %8262 = vmatprep.subr.bf16.mxu0 %v5489
        %8263 = vmatpush1.bf16.msra.mxu0 %v5488
        %8264 = vmatprep.subr.bf16.mxu0 %v5497
        %8265 = vmatpush1.bf16.msra.mxu0 %v5496
        %8266 = vmatprep.subr.bf16.mxu0 %v5505
        %8267 = vmatpush1.bf16.msra.mxu0 %v5504
        %8268 = vmatprep.mubr.bf16.mxu0 %v1015
        %8269 = vmatmul.mubr.bf16.gmra.mrb[0].mxu0 %v1014
        %v8270 = vpop.f32.mrb[0].mxu0
        %v8271 = vadd.f32 %v8230, %v8270
        %v8272 = vpop.f32.mrb[0].mxu0
        %v8273 = vadd.f32 %v8232, %v8272
        %v8274 = vpop.f32.mrb[0].mxu0
        %v8275 = vpop.f32.mrb[0].mxu0
        %8276 = vdwg.mxu0
        %8277 = vmatprep.subr.bf16.mxu0 %v5513
        %8278 = vmatpush1.bf16.msra.mxu0 %v5512
        %8279 = vmatprep.subr.bf16.mxu0 %v5521
        %8280 = vmatpush1.bf16.msra.mxu0 %v5520
        %8281 = vmatprep.subr.bf16.mxu0 %v5529
        %8282 = vmatpush1.bf16.msra.mxu0 %v5528
        %8283 = vmatprep.subr.bf16.mxu0 %v5537
        %8284 = vmatpush1.bf16.msra.mxu0 %v5536
        %8285 = vmatprep.subr.bf16.mxu0 %v5545
        %8286 = vmatpush1.bf16.msra.mxu0 %v5544
        %8287 = vmatprep.subr.bf16.mxu0 %v5553
        %8288 = vmatpush1.bf16.msra.mxu0 %v5552
        %8289 = vmatprep.subr.bf16.mxu0 %v5561
        %8290 = vmatpush1.bf16.msra.mxu0 %v5560
        %8291 = vmatprep.subr.bf16.mxu0 %v5569
        %8292 = vmatpush1.bf16.msra.mxu0 %v5568
        %8293 = vmatprep.subr.bf16.mxu0 %v5577
        %8294 = vmatpush1.bf16.msra.mxu0 %v5576
        %8295 = vmatprep.subr.bf16.mxu0 %v5585
        %8296 = vmatpush1.bf16.msra.mxu0 %v5584
        %8297 = vmatprep.subr.bf16.mxu0 %v5593
        %8298 = vmatpush1.bf16.msra.mxu0 %v5592
        %8299 = vmatprep.subr.bf16.mxu0 %v5601
        %8300 = vmatpush1.bf16.msra.mxu0 %v5600
        %8301 = vmatprep.subr.bf16.mxu0 %v5609
        %8302 = vmatpush1.bf16.msra.mxu0 %v5608
        %8303 = vmatprep.subr.bf16.mxu0 %v5617
        %8304 = vmatpush1.bf16.msra.mxu0 %v5616
        %8305 = vmatprep.subr.bf16.mxu0 %v5625
        %8306 = vmatpush1.bf16.msra.mxu0 %v5624
        %8307 = vmatprep.subr.bf16.mxu0 %v5633
        %8308 = vmatpush1.bf16.msra.mxu0 %v5632
        %8309 = vmatprep.mubr.bf16.mxu0 %v1017
        %8310 = vmatmul.mubr.bf16.gmra.mrb[0].mxu0 %v1016
        %v8311 = vpop.f32.mrb[0].mxu0
        %v8312 = vadd.f32 %v8271, %v8311
        %v8313 = vpop.f32.mrb[0].mxu0
        %v8314 = vadd.f32 %v8273, %v8313
        %v8315 = vpop.f32.mrb[0].mxu0
        %v8316 = vpop.f32.mrb[0].mxu0
        %8317 = vdwg.mxu0
        %8318 = vmatprep.subr.bf16.mxu0 %v5641
        %8319 = vmatpush1.bf16.msra.mxu0 %v5640
        %8320 = vmatprep.subr.bf16.mxu0 %v5649
        %8321 = vmatpush1.bf16.msra.mxu0 %v5648
        %8322 = vmatprep.subr.bf16.mxu0 %v5657
        %8323 = vmatpush1.bf16.msra.mxu0 %v5656
        %8324 = vmatprep.subr.bf16.mxu0 %v5665
        %8325 = vmatpush1.bf16.msra.mxu0 %v5664
        %8326 = vmatprep.subr.bf16.mxu0 %v5673
        %8327 = vmatpush1.bf16.msra.mxu0 %v5672
        %8328 = vmatprep.subr.bf16.mxu0 %v5681
        %8329 = vmatpush1.bf16.msra.mxu0 %v5680
        %8330 = vmatprep.subr.bf16.mxu0 %v5689
        %8331 = vmatpush1.bf16.msra.mxu0 %v5688
        %8332 = vmatprep.subr.bf16.mxu0 %v5697
        %8333 = vmatpush1.bf16.msra.mxu0 %v5696
        %8334 = vmatprep.subr.bf16.mxu0 %v5705
        %8335 = vmatpush1.bf16.msra.mxu0 %v5704
        %8336 = vmatprep.subr.bf16.mxu0 %v5713
        %8337 = vmatpush1.bf16.msra.mxu0 %v5712
        %8338 = vmatprep.subr.bf16.mxu0 %v5721
        %8339 = vmatpush1.bf16.msra.mxu0 %v5720
        %8340 = vmatprep.subr.bf16.mxu0 %v5729
        %8341 = vmatpush1.bf16.msra.mxu0 %v5728
        %8342 = vmatprep.subr.bf16.mxu0 %v5737
        %8343 = vmatpush1.bf16.msra.mxu0 %v5736
        %8344 = vmatprep.subr.bf16.mxu0 %v5745
        %8345 = vmatpush1.bf16.msra.mxu0 %v5744
        %8346 = vmatprep.subr.bf16.mxu0 %v5753
        %8347 = vmatpush1.bf16.msra.mxu0 %v5752
        %8348 = vmatprep.subr.bf16.mxu0 %v5761
        %8349 = vmatpush1.bf16.msra.mxu0 %v5760
        %8350 = vmatprep.mubr.bf16.mxu0 %v1019
        %8351 = vmatmul.mubr.bf16.gmra.mrb[0].mxu0 %v1018
        %v8352 = vpop.f32.mrb[0].mxu0
        %v8353 = vadd.f32 %v8312, %v8352
        %v8354 = vpop.f32.mrb[0].mxu0
        %v8355 = vadd.f32 %v8314, %v8354
        %v8356 = vpop.f32.mrb[0].mxu0
        %v8357 = vpop.f32.mrb[0].mxu0
        %8358 = vdwg.mxu0
        %8359 = vmatprep.subr.bf16.mxu0 %v5769
        %8360 = vmatpush1.bf16.msra.mxu0 %v5768
        %8361 = vmatprep.subr.bf16.mxu0 %v5777
        %8362 = vmatpush1.bf16.msra.mxu0 %v5776
        %8363 = vmatprep.subr.bf16.mxu0 %v5785
        %8364 = vmatpush1.bf16.msra.mxu0 %v5784
        %8365 = vmatprep.subr.bf16.mxu0 %v5793
        %8366 = vmatpush1.bf16.msra.mxu0 %v5792
        %8367 = vmatprep.subr.bf16.mxu0 %v5801
        %8368 = vmatpush1.bf16.msra.mxu0 %v5800
        %8369 = vmatprep.subr.bf16.mxu0 %v5809
        %8370 = vmatpush1.bf16.msra.mxu0 %v5808
        %8371 = vmatprep.subr.bf16.mxu0 %v5817
        %8372 = vmatpush1.bf16.msra.mxu0 %v5816
        %8373 = vmatprep.subr.bf16.mxu0 %v5825
        %8374 = vmatpush1.bf16.msra.mxu0 %v5824
        %8375 = vmatprep.subr.bf16.mxu0 %v5833
        %8376 = vmatpush1.bf16.msra.mxu0 %v5832
        %8377 = vmatprep.subr.bf16.mxu0 %v5841
        %8378 = vmatpush1.bf16.msra.mxu0 %v5840
        %8379 = vmatprep.subr.bf16.mxu0 %v5849
        %8380 = vmatpush1.bf16.msra.mxu0 %v5848
        %8381 = vmatprep.subr.bf16.mxu0 %v5857
        %8382 = vmatpush1.bf16.msra.mxu0 %v5856
        %8383 = vmatprep.subr.bf16.mxu0 %v5865
        %8384 = vmatpush1.bf16.msra.mxu0 %v5864
        %8385 = vmatprep.subr.bf16.mxu0 %v5873
        %8386 = vmatpush1.bf16.msra.mxu0 %v5872
        %8387 = vmatprep.subr.bf16.mxu0 %v5881
        %8388 = vmatpush1.bf16.msra.mxu0 %v5880
        %8389 = vmatprep.subr.bf16.mxu0 %v5889
        %8390 = vmatpush1.bf16.msra.mxu0 %v5888
        %8391 = vmatprep.mubr.bf16.mxu0 %v1021
        %8392 = vmatmul.mubr.bf16.gmra.mrb[0].mxu0 %v1020
        %v8393 = vpop.f32.mrb[0].mxu0
        %v8394 = vadd.f32 %v8353, %v8393
        %v8395 = vpop.f32.mrb[0].mxu0
        %v8396 = vadd.f32 %v8355, %v8395
        %v8397 = vpop.f32.mrb[0].mxu0
        %v8398 = vpop.f32.mrb[0].mxu0
        %8399 = vdwg.mxu0
        %8400 = vmatprep.subr.bf16.mxu0 %v5897
        %8401 = vmatpush1.bf16.msra.mxu0 %v5896
        %8402 = vmatprep.subr.bf16.mxu0 %v5905
        %8403 = vmatpush1.bf16.msra.mxu0 %v5904
        %8404 = vmatprep.subr.bf16.mxu0 %v5913
        %8405 = vmatpush1.bf16.msra.mxu0 %v5912
        %8406 = vmatprep.subr.bf16.mxu0 %v5921
        %8407 = vmatpush1.bf16.msra.mxu0 %v5920
        %8408 = vmatprep.subr.bf16.mxu0 %v5929
        %8409 = vmatpush1.bf16.msra.mxu0 %v5928
        %8410 = vmatprep.subr.bf16.mxu0 %v5937
        %8411 = vmatpush1.bf16.msra.mxu0 %v5936
        %8412 = vmatprep.subr.bf16.mxu0 %v5945
        %8413 = vmatpush1.bf16.msra.mxu0 %v5944
        %8414 = vmatprep.subr.bf16.mxu0 %v5953
        %8415 = vmatpush1.bf16.msra.mxu0 %v5952
        %8416 = vmatprep.subr.bf16.mxu0 %v5961
        %8417 = vmatpush1.bf16.msra.mxu0 %v5960
        %8418 = vmatprep.subr.bf16.mxu0 %v5969
        %8419 = vmatpush1.bf16.msra.mxu0 %v5968
        %8420 = vmatprep.subr.bf16.mxu0 %v5977
        %8421 = vmatpush1.bf16.msra.mxu0 %v5976
        %8422 = vmatprep.subr.bf16.mxu0 %v5985
        %8423 = vmatpush1.bf16.msra.mxu0 %v5984
        %8424 = vmatprep.subr.bf16.mxu0 %v5993
        %8425 = vmatpush1.bf16.msra.mxu0 %v5992
        %8426 = vmatprep.subr.bf16.mxu0 %v6001
        %8427 = vmatpush1.bf16.msra.mxu0 %v6000
        %8428 = vmatprep.subr.bf16.mxu0 %v6009
        %8429 = vmatpush1.bf16.msra.mxu0 %v6008
        %8430 = vmatprep.subr.bf16.mxu0 %v6017
        %8431 = vmatpush1.bf16.msra.mxu0 %v6016
        %8432 = vmatprep.mubr.bf16.mxu0 %v1023
        %8433 = vmatmul.mubr.bf16.gmra.mrb[0].mxu0 %v1022
        %v8434 = vpop.f32.mrb[0].mxu0
        %v8435 = vadd.f32 %v8394, %v8434
        %v8436 = vpop.f32.mrb[0].mxu0
        %v8437 = vadd.f32 %v8396, %v8436
        %v8438 = vpop.f32.mrb[0].mxu0
        %v8439 = vpop.f32.mrb[0].mxu0
        %8440 = vdwg.mxu0
        %8441 = vmatprep.subr.bf16.mxu0 %v6025
        %8442 = vmatpush1.bf16.msra.mxu0 %v6024
        %8443 = vmatprep.subr.bf16.mxu0 %v6033
        %8444 = vmatpush1.bf16.msra.mxu0 %v6032
        %8445 = vmatprep.subr.bf16.mxu0 %v6041
        %8446 = vmatpush1.bf16.msra.mxu0 %v6040
        %8447 = vmatprep.subr.bf16.mxu0 %v6049
        %8448 = vmatpush1.bf16.msra.mxu0 %v6048
        %8449 = vmatprep.subr.bf16.mxu0 %v6057
        %8450 = vmatpush1.bf16.msra.mxu0 %v6056
        %8451 = vmatprep.subr.bf16.mxu0 %v6065
        %8452 = vmatpush1.bf16.msra.mxu0 %v6064
        %8453 = vmatprep.subr.bf16.mxu0 %v6073
        %8454 = vmatpush1.bf16.msra.mxu0 %v6072
        %8455 = vmatprep.subr.bf16.mxu0 %v6081
        %8456 = vmatpush1.bf16.msra.mxu0 %v6080
        %8457 = vmatprep.subr.bf16.mxu0 %v6089
        %8458 = vmatpush1.bf16.msra.mxu0 %v6088
        %8459 = vmatprep.subr.bf16.mxu0 %v6097
        %8460 = vmatpush1.bf16.msra.mxu0 %v6096
        %8461 = vmatprep.subr.bf16.mxu0 %v6105
        %8462 = vmatpush1.bf16.msra.mxu0 %v6104
        %8463 = vmatprep.subr.bf16.mxu0 %v6113
        %8464 = vmatpush1.bf16.msra.mxu0 %v6112
        %8465 = vmatprep.subr.bf16.mxu0 %v6121
        %8466 = vmatpush1.bf16.msra.mxu0 %v6120
        %8467 = vmatprep.subr.bf16.mxu0 %v6129
        %8468 = vmatpush1.bf16.msra.mxu0 %v6128
        %8469 = vmatprep.subr.bf16.mxu0 %v6137
        %8470 = vmatpush1.bf16.msra.mxu0 %v6136
        %8471 = vmatprep.subr.bf16.mxu0 %v6145
        %8472 = vmatpush1.bf16.msra.mxu0 %v6144
        %8473 = vmatprep.mubr.bf16.mxu0 %v1025
        %8474 = vmatmul.mubr.bf16.gmra.mrb[0].mxu0 %v1024
        %v8475 = vpop.f32.mrb[0].mxu0
        %v8476 = vadd.f32 %v8435, %v8475
        %v8477 = vpop.f32.mrb[0].mxu0
        %v8478 = vadd.f32 %v8437, %v8477
        %v8479 = vpop.f32.mrb[0].mxu0
        %v8480 = vpop.f32.mrb[0].mxu0
        %8481 = vdwg.mxu0
        %v8482 = vadd.f32 %v1002, %v7492
        %v8483 = vadd.f32 %v1003, %v7494
        %v8484 = vadd.f32 %v1004, %v7820
        %v8485 = vadd.f32 %v1005, %v7822
        %v8486 = vadd.f32 %v1006, %v8148
        %v8487 = vadd.f32 %v1007, %v8150
        %v8488 = vadd.f32 %v1008, %v8476
        %v8489 = vadd.f32 %v1009, %v8478
        %8490 = vst [vmem:[#allocation2] sm:$0xff] %v8482
        %8491 = vst [vmem:[#allocation2 + $0x8] sm:$0xff] %v8483
        %8492 = vst [vmem:[#allocation2 + $0x10] sm:$0xff] %v8484
        %8493 = vst [vmem:[#allocation2 + $0x18] sm:$0xff] %v8485
        %8494 = vst [vmem:[#allocation2 + $0x20] sm:$0xff] %v8486
        %8495 = vst [vmem:[#allocation2 + $0x28] sm:$0xff] %v8487
        %8496 = vst [vmem:[#allocation2 + $0x30] sm:$0xff] %v8488
        %8497 = vst [vmem:[#allocation2 + $0x38] sm:$0xff] %v8489
        %p8498 = scmp.eq.s32.totalorder %s26, 1
        // Predicated region
        $region65: #{tpu_custom_call.1} parent=39 // pred_check
          %p8499 = pneg %p8498
        $region66: #{tpu_custom_call.1} parent=39 // pred_check_branch
          %8501 = sbr.rel (%p8499) target = $region68
        $region67: #{tpu_custom_call.1} parent=39 // pred_region
          %v8502 = vld [vmem:[#allocation2] sm:$0xff]
          %v8503 = vld [vmem:[#allocation2 + $0x8] sm:$0xff]
          %v8504 = vld [vmem:[#allocation2 + $0x10] sm:$0xff]
          %v8505 = vld [vmem:[#allocation2 + $0x18] sm:$0xff]
          %v8506 = vld [vmem:[#allocation2 + $0x20] sm:$0xff]
          %v8507 = vld [vmem:[#allocation2 + $0x28] sm:$0xff]
          %v8508 = vld [vmem:[#allocation2 + $0x30] sm:$0xff]
          %v8509 = vld [vmem:[#allocation2 + $0x38] sm:$0xff]
          %v8510 = vld [vmem:[%s320] sm:$0xff]
          %v8512 = vlaneseq
          %v8513 = vshrl.u32 %v8512, 7
          %v8514 = vsub.s32 0, %v8513
          %v8515 = vrot.slane %v8510, %v8514
          %v8516 = vlaneseq
          %v8517 = vshrl.u32 %v8516, 7
          %v8518 = vsub.s32 1, %v8517
          %v8519 = vrot.slane %v8510, %v8518
          %v8520 = vlaneseq
          %v8521 = vshrl.u32 %v8520, 7
          %v8522 = vsub.s32 2, %v8521
          %v8523 = vrot.slane %v8510, %v8522
          %v8524 = vlaneseq
          %v8525 = vshrl.u32 %v8524, 7
          %v8526 = vsub.s32 3, %v8525
          %v8527 = vrot.slane %v8510, %v8526
          %v8528 = vlaneseq
          %v8529 = vshrl.u32 %v8528, 7
          %v8530 = vsub.s32 4, %v8529
          %v8531 = vrot.slane %v8510, %v8530
          %v8532 = vlaneseq
          %v8533 = vshrl.u32 %v8532, 7
          %v8534 = vsub.s32 5, %v8533
          %v8535 = vrot.slane %v8510, %v8534
          %v8536 = vlaneseq
          %v8537 = vshrl.u32 %v8536, 7
          %v8538 = vsub.s32 6, %v8537
          %v8539 = vrot.slane %v8510, %v8538
          %v8540 = vlaneseq
          %v8541 = vshrl.u32 %v8540, 7
          %v8542 = vsub.s32 7, %v8541
          %v8543 = vrot.slane %v8510, %v8542
          %v8552 = vadd.f32 %v8502, %v8515
          %v8553 = vadd.f32 %v8503, %v8519
          %v8554 = vadd.f32 %v8504, %v8523
          %v8555 = vadd.f32 %v8505, %v8527
          %v8556 = vadd.f32 %v8506, %v8531
          %v8557 = vadd.f32 %v8507, %v8535
          %v8558 = vadd.f32 %v8508, %v8539
          %v8559 = vadd.f32 %v8509, %v8543
          %v8560 = vmax.f32 %v8552, 0.0
          %v8561 = vmax.f32 %v8553, 0.0
          %v8562 = vmax.f32 %v8554, 0.0
          %v8563 = vmax.f32 %v8555, 0.0
          %v8564 = vmax.f32 %v8556, 0.0
          %v8565 = vmax.f32 %v8557, 0.0
          %v8566 = vmax.f32 %v8558, 0.0
          %v8567 = vmax.f32 %v8559, 0.0
          %8568 = vst [vmem:[%s356] sm:$0xff] %v8560
          %8569 = vst [vmem:[%s356 + $0x8] sm:$0xff] %v8561
          %8570 = vst [vmem:[%s356 + $0x10] sm:$0xff] %v8562
          %8571 = vst [vmem:[%s356 + $0x18] sm:$0xff] %v8563
          %8572 = vst [vmem:[%s356 + $0x20] sm:$0xff] %v8564
          %8573 = vst [vmem:[%s356 + $0x28] sm:$0xff] %v8565
          %8574 = vst [vmem:[%s356 + $0x30] sm:$0xff] %v8566
          %8575 = vst [vmem:[%s356 + $0x38] sm:$0xff] %v8567
        $region68: #{tpu_custom_call.1} parent=39 // pred_fallthru
          _
        %s8576 = sand.u32 %s163, 1
        %s8577 = scalar_lea.sflag [#allocation5], %s8576
        %s8578 = sand.u32 %s163, 1
        %s8579 = smul.addr %s8578, 64
        %s8580 = scalar_lea.vmem [#allocation11], %s8579
        // Predicated region
        $region69: #{tpu_custom_call.1} parent=39 // pred_check
          %p8581 = pneg %p173
        $region70: #{tpu_custom_call.1} parent=39 // pred_check_branch
          %8583 = sbr.rel (%p8581) target = $region72
        $region71: #{tpu_custom_call.1} parent=39 // pred_region
          %s8584 = smul.u32 8, %s25
          %s8586 = ssub.s32 1024, 1024
          %8587 = vsyncadd %s8577, %s8586
          %s8588 = smul.addr %s8584, 128
          %s8589 = scalar_lea.hbm %s5, %s8588
          %s8591 = sshll.u32 %s8580, 4
          %s8592 = int_to_ptr.vmem [resolvable:$true] %s8591
          %8594 = dma.vmem_to_hbm [thread:$0]  %s8592, 1024, %s8589, %s8577
        $region72: #{tpu_custom_call.1} parent=39 // pred_fallthru
          _
      $region40: #{tpu_custom_call.1} parent=5 // pred_fallthru
        _
      %p8595 = scmp.le.s32.totalorder 2, %s16
      // Predicated region
      $region73: #{tpu_custom_call.1} parent=5 // pred_check
        %p8596 = pneg %p8595
      $region74: #{tpu_custom_call.1} parent=5 // pred_check_branch
        %8598 = sbr.rel (%p8596) target = $region76
      $region75: #{tpu_custom_call.1} parent=5 // pred_region
        %s8599 = ssub.s32 %s16, 2
        // Predicated region
        $region77: #{tpu_custom_call.1} parent=75 // pred_check
          %p8600 = pneg %p179
        $region78: #{tpu_custom_call.1} parent=75 // pred_check_branch
          %8602 = sbr.rel (%p8600) target = $region80
        $region79: #{tpu_custom_call.1} parent=75 // pred_region
          %s8603 = sand.u32 %s164, 1
          %s8604 = scalar_lea.sflag [#allocation5], %s8603
          %s8605 = sand.u32 %s164, 1
          %s8606 = smul.addr %s8605, 64
          %s8607 = scalar_lea.vmem [#allocation11], %s8606
          %8608 = dma.done %s8604, 1024
        $region80: #{tpu_custom_call.1} parent=75 // pred_fallthru
          _
      $region76: #{tpu_custom_call.1} parent=5 // pred_fallthru
        _
    $region6: #{tpu_custom_call.1} parent=1 // loop_footer
      %s20 = sadd.s32 1, %s16
    $region7: #{tpu_custom_call.1} parent=1 // loop_footer_branch
      %15 = sbr.rel target = $region3
    $region8: #{tpu_custom_call.1} parent=1 // loop_exit
      _
    %8609 = vsyncpa [#allocation4], 1
    %s8610 = scalar_lea.sflag [#allocation4], 1
    %8611 = vsyncpa %s8610, 1
    %8612 = vsyncpa [#allocation7], 1
    %8613 = vsyncpa [#allocation5], 1
    %s8614 = scalar_lea.sflag [#allocation5], 1
    %8615 = vsyncpa %s8614, 1

</llo_original>
